<compile_context>
chip_gen: v7x
topology: tpu7x:2x2x1
jax: 0.10.0
libtpu: 0.0.40
codegen_flags: <defaults>
</compile_context>

<pallas_src>
from functools import partial

import numpy as np
import jax
import jax.numpy as jnp
from jax.experimental import pallas as pl
from jax.experimental.pallas import tpu as pltpu


# ----------------------------------------------------------------------------
# Bicubic row operators, PyTorch semantics: cubic kernel A=-0.75,
# align_corners=False, border indices clamped (coefficients accumulated).
# ----------------------------------------------------------------------------
def _bicubic_matrix(out_size, in_size, scale):
    A = -0.75

    def c1(t):  # |t| <= 1
        return ((A + 2.0) * t - (A + 3.0)) * t * t + 1.0

    def c2(t):  # 1 < |t| < 2
        return ((A * t - 5.0 * A) * t + 8.0 * A) * t - 4.0 * A

    M = np.zeros((out_size, in_size), np.float64)
    for o in range(out_size):
        src = (o + 0.5) / scale - 0.5
        i0 = int(np.floor(src))
        t = src - i0
        coeffs = [c2(t + 1.0), c1(t), c1(1.0 - t), c2(2.0 - t)]
        for k in range(4):
            idx = min(max(i0 - 1 + k, 0), in_size - 1)
            M[o, idx] += coeffs[k]
    return M.astype(np.float32)


def make_upsample_operators(h, w, scale):
    """Separable bicubic: Mh (Ho, H) applied on the left, Mw^T (W, Wo) on the
    right.  Replaces the old 4 MiB kron(Mh, Mw) operator with ~8 KiB."""
    mh = jnp.asarray(_bicubic_matrix(h * scale, h, scale))      # (Ho, H)
    mwt = jnp.asarray(_bicubic_matrix(w * scale, w, scale).T)   # (W, Wo)
    return mh, mwt


# ----------------------------------------------------------------------------
# Fused kernel: conv1(5x5)+ReLU -> conv2(3x3)+ReLU -> conv3(3x3) -> bicubic x4.
# One grid step == one batch element; every intermediate stays in VMEM.
# ----------------------------------------------------------------------------
def _srcnn_fused_kernel(xp_ref, w1_ref, b1_ref, w2_ref, b2_ref, w3_ref, b3_ref,
                        mh_ref, mwt_ref, o_ref,
                        y1p_ref, y2p_ref, y3_ref, y3chw_ref, *, H, W, C):
    f32 = jnp.float32
    bf16 = jnp.bfloat16
    HW = H * W

    # ---- conv1: 5x5, C -> 64, ReLU.  Patches built in the wrapper, so this is
    # a single bf16 MXU matmul (K = 25*C) with f32 accumulation. ---------------
    p1 = xp_ref[0]                                                   # (HW, 25C)
    y1 = jnp.dot(p1, w1_ref[...], preferred_element_type=f32) + b1_ref[...]
    y1 = jnp.maximum(y1, 0.0)                                        # (HW, 64)

    # SAME padding: zero the persistent VMEM scratch, store the interior once.
    y1p_ref[...] = jnp.zeros_like(y1p_ref)
    y1p_ref[pl.ds(1, H), pl.ds(1, W), :] = y1.reshape(H, W, 64)

    # ---- conv2: 3x3, 64 -> 32, ReLU.  9 accumulating per-tap bf16 matmuls on
    # sublane-shifted views of the padded scratch (no 576-wide lane concat). ---
    acc2 = None
    for idx in range(9):
        i, j = idx // 3, idx % 3
        tap = y1p_ref[pl.ds(i, H), pl.ds(j, W), :].reshape(HW, 64).astype(bf16)
        d = jnp.dot(tap, w2_ref[idx], preferred_element_type=f32)
        acc2 = d if acc2 is None else acc2 + d
    y2 = jnp.maximum(acc2 + b2_ref[...], 0.0)                        # (HW, 32)

    y2p_ref[...] = jnp.zeros_like(y2p_ref)
    y2p_ref[pl.ds(1, H), pl.ds(1, W), :] = y2.reshape(H, W, 32)

    # ---- conv3: 3x3, 32 -> C, no ReLU.  Channel-major A @ B^T taps -> (C, HW);
    # the per-channel bias is deferred to after the upsample (rows of Mh/Mw sum
    # to 1, so this is exact). -------------------------------------------------
    acc3 = None
    for idx in range(9):
        i, j = idx // 3, idx % 3
        tap = y2p_ref[pl.ds(i, H), pl.ds(j, W), :].reshape(HW, 32).astype(bf16)
        d = jax.lax.dot_general(w3_ref[idx], tap,
                                dimension_numbers=(((1,), (1,)), ((), ())),
                                preferred_element_type=f32)          # (C, HW)
        acc3 = d if acc3 is None else acc3 + d
    y3_ref[...] = acc3                                               # (C, H*W)

    # (C, H*W) -> (C, H, W): move W onto the lane dim via H small static
    # windowed row copies through VMEM (no big reshape / transpose needed).
    for h in range(H):
        y3chw_ref[:, h, :] = y3_ref[:, pl.ds(h * W, W)]

    # ---- separable bicubic x4 (tiny, f32): W stage as one matmul, H stage as
    # one matmul per channel written straight into the NCHW output block. ------
    t1 = jnp.dot(y3chw_ref[...].reshape(C * H, W), mwt_ref[...],
                 preferred_element_type=f32)                         # (C*H, Wo)
    mh = mh_ref[...]                                                 # (Ho, H)
    for c in range(C):
        out_c = jnp.dot(mh, t1[c * H:(c + 1) * H, :],
                        preferred_element_type=f32)                  # (Ho, Wo)
        o_ref[0, c] = (out_c + b3_ref[c]).astype(o_ref.dtype)


@jax.jit
def super_resolution_forward(params, x_nchw, mh, mwt):
    N, C, H, W = x_nchw.shape
    Ho, Wo = mh.shape[0], mwt.shape[1]

    # conv1 im2col in the wrapper: pure layout plumbing on a tiny tensor
    # (~75 KiB/image), removes the messiest 3-lane relayout from the kernel.
    x_nhwc = jnp.transpose(x_nchw, (0, 2, 3, 1))
    xpad = jnp.pad(x_nhwc, ((0, 0), (2, 2), (2, 2), (0, 0)))
    taps = [xpad[:, i:i + H, j:j + W, :] for i in range(5) for j in range(5)]
    patches = jnp.concatenate(taps, axis=-1).reshape(N, H * W, 25 * C)
    patches = patches.astype(jnp.bfloat16)

    w1, b1 = params["w1"], params["b1"]      # (75, 64) bf16,  (1, 64) f32
    w2, b2 = params["w2"], params["b2"]      # (9, 64, 32) bf16, (1, 32) f32
    w3, b3 = params["w3"], params["b3"]      # (9, C, 32) bf16, (C,) f32

    kern = partial(_srcnn_fused_kernel, H=H, W=W, C=C)
    # TODO(synk): for large N, stack cdiv(N, num_cores) images into the matmul
    # M dimension per grid step instead of one image per step.
    out = pl.pallas_call(
        kern,
        out_shape=jax.ShapeDtypeStruct((N, C, Ho, Wo), jnp.float32),
        grid=(N,),
        in_specs=[
            pl.BlockSpec((1, H * W, 25 * C), lambda n: (n, 0, 0)),
            pl.BlockSpec(w1.shape, lambda n: (0, 0)),
            pl.BlockSpec(b1.shape, lambda n: (0, 0)),
            pl.BlockSpec(w2.shape, lambda n: (0, 0, 0)),
            pl.BlockSpec(b2.shape, lambda n: (0, 0)),
            pl.BlockSpec(w3.shape, lambda n: (0, 0, 0)),
            pl.BlockSpec(memory_space=pltpu.MemorySpace.SMEM),   # b3 (C,)
            pl.BlockSpec(mh.shape, lambda n: (0, 0)),
            pl.BlockSpec(mwt.shape, lambda n: (0, 0)),
        ],
        out_specs=pl.BlockSpec((1, C, Ho, Wo), lambda n: (n, 0, 0, 0)),
        scratch_shapes=[
            pltpu.VMEM((H + 2, W + 2, 64), jnp.float32),   # zero-padded y1
            pltpu.VMEM((H + 2, W + 2, 32), jnp.float32),   # zero-padded y2
            pltpu.VMEM((C, H * W), jnp.float32),           # conv3 out (chan-major)
            pltpu.VMEM((C, H, W), jnp.float32),            # relayout buffer
        ],
        compiler_params=pltpu.CompilerParams(
            dimension_semantics=("parallel",),             # N>=2 -> both v7x TCs
            vmem_limit_bytes=16 * 1024 * 1024,
        ),
    )(patches, w1, b1, w2, b2, w3, b3, mh, mwt)
    return out


# ----------------------------------------------------------------------------
# Parameters (kernel-ready layouts, converted from PyTorch conventions).
# ----------------------------------------------------------------------------
def init_params(key, num_channels=3):
    k1, k2, k3, k4, k5, k6 = jax.random.split(key, 6)

    def conv_w(k, cout, cin, kh, kw):
        return jax.random.normal(k, (cout, cin, kh, kw), jnp.float32) * 0.05

    w1 = conv_w(k1, 64, num_channels, 5, 5)
    b1 = jax.random.normal(k2, (64,), jnp.float32) * 0.05
    w2 = conv_w(k3, 32, 64, 3, 3)
    b2 = jax.random.normal(k4, (32,), jnp.float32) * 0.05
    w3 = conv_w(k5, num_channels, 32, 3, 3)
    b3 = jax.random.normal(k6, (num_channels,), jnp.float32) * 0.05

    # conv1: PyTorch (Cout, Cin, 5, 5) -> flattened (i, j, c)-ordered (75, 64).
    w1_flat = jnp.transpose(w1, (2, 3, 1, 0)).reshape(25 * num_channels, 64)
    # conv2: per-tap (Cin, Cout): (9, 64, 32).
    w2_taps = jnp.transpose(w2, (2, 3, 1, 0)).reshape(9, 64, 32)
    # conv3: per-tap channel-major (Cout, Cin): (9, C, 32) for A @ B^T taps.
    w3_taps = jnp.transpose(w3, (2, 3, 0, 1)).reshape(9, num_channels, 32)

    return dict(
        w1=w1_flat.astype(jnp.bfloat16), b1=b1.reshape(1, 64),
        w2=w2_taps.astype(jnp.bfloat16), b2=b2.reshape(1, 32),
        w3=w3_taps.astype(jnp.bfloat16), b3=b3,
    )


if __name__ == "__main__":
    key = jax.random.PRNGKey(0)
    k_params, k_input = jax.random.split(key)

    num_channels = 3
    N, H, W, scale = 2, 16, 16, 4

    params = init_params(k_params, num_channels=num_channels)
    mh, mwt = make_upsample_operators(H, W, scale)
    x = jax.random.normal(k_input, (N, num_channels, H, W), jnp.float32)

    out = super_resolution_forward(params, x, mh, mwt)
    out = jax.block_until_ready(out)

    assert out.shape == (N, num_channels, H * scale, W * scale), out.shape
    assert out.dtype == jnp.float32
    assert bool(jnp.all(jnp.isfinite(out)))
    print("KERNEL_OK")
</pallas_src>

<mosaic_0001>
module attributes {stable_mosaic.version = 11 : i64} {
  func.func @_srcnn_fused_kernel(%arg0: i32, %arg1: memref<1x256x75xbf16, #tpu.memory_space<vmem>>, %arg2: memref<75x64xbf16, #tpu.memory_space<vmem>>, %arg3: memref<1x64xf32, #tpu.memory_space<vmem>>, %arg4: memref<9x64x32xbf16, #tpu.memory_space<vmem>>, %arg5: memref<1x32xf32, #tpu.memory_space<vmem>>, %arg6: memref<9x3x32xbf16, #tpu.memory_space<vmem>>, %arg7: memref<3xf32, #tpu.memory_space<smem>>, %arg8: memref<64x16xf32, #tpu.memory_space<vmem>>, %arg9: memref<16x64xf32, #tpu.memory_space<vmem>>, %arg10: memref<1x3x64x64xf32, #tpu.memory_space<vmem>>, %arg11: memref<18x18x64xf32, #tpu.memory_space<vmem>>, %arg12: memref<18x18x32xf32, #tpu.memory_space<vmem>>, %arg13: memref<3x256xf32, #tpu.memory_space<vmem>>, %arg14: memref<3x16x16xf32, #tpu.memory_space<vmem>>) attributes {dimension_semantics = [#tpu.dimension_semantics<parallel>], iteration_bounds = array<i64: 2>, scalar_prefetch = 0 : i64, scratch_operands = 4 : i64, tpu.core_type = #tpu.core_type<tc>, window_params = [{transform_indices = @transform_0, window_bounds = array<i64: 1, 256, 75>}, {pipeline_mode = #tpu.pipeline_mode<synchronous>, transform_indices = @transform_1, window_bounds = array<i64: 75, 64>}, {pipeline_mode = #tpu.pipeline_mode<synchronous>, transform_indices = @transform_2, window_bounds = array<i64: 1, 64>}, {pipeline_mode = #tpu.pipeline_mode<synchronous>, transform_indices = @transform_3, window_bounds = array<i64: 9, 64, 32>}, {pipeline_mode = #tpu.pipeline_mode<synchronous>, transform_indices = @transform_4, window_bounds = array<i64: 1, 32>}, {pipeline_mode = #tpu.pipeline_mode<synchronous>, transform_indices = @transform_5, window_bounds = array<i64: 9, 3, 32>}, {transform_indices = @transform_6, window_bounds = array<i64: 3>}, {pipeline_mode = #tpu.pipeline_mode<synchronous>, transform_indices = @transform_7, window_bounds = array<i64: 64, 16>}, {pipeline_mode = #tpu.pipeline_mode<synchronous>, transform_indices = @transform_8, window_bounds = array<i64: 16, 64>}, {transform_indices = @transform_9, window_bounds = array<i64: 1, 3, 64, 64>}]} {
    %c0 = arith.constant 0 : index
    %c0_0 = arith.constant 0 : index
    %c0_1 = arith.constant 0 : index
    %0 = vector.load %arg1[%c0, %c0_0, %c0_1] : memref<1x256x75xbf16, #tpu.memory_space<vmem>>, vector<1x256x75xbf16>
    %1 = vector.shape_cast %0 : vector<1x256x75xbf16> to vector<256x75xbf16>
    %c0_2 = arith.constant 0 : index
    %c0_3 = arith.constant 0 : index
    %2 = vector.load %arg2[%c0_2, %c0_3] : memref<75x64xbf16, #tpu.memory_space<vmem>>, vector<75x64xbf16>
    %cst = arith.constant dense<0.000000e+00> : vector<256x64xf32>
    %3 = tpu.matmul %1, %2, %cst {dimension_numbers = #tpu.dot_dimension_numbers<[1], [0], [0], [1], [0, 0, 1, 1], [], []>} : vector<256x75xbf16>, vector<75x64xbf16>, vector<256x64xf32> -> vector<256x64xf32>
    %c0_4 = arith.constant 0 : index
    %c0_5 = arith.constant 0 : index
    %4 = vector.load %arg3[%c0_4, %c0_5] : memref<1x64xf32, #tpu.memory_space<vmem>>, vector<1x64xf32>
    %5 = vector.broadcast %4 : vector<1x64xf32> to vector<256x64xf32>
    %6 = arith.addf %3, %5 : vector<256x64xf32>
    %cst_6 = arith.constant 0.000000e+00 : f32
    %7 = vector.broadcast %cst_6 : f32 to vector<256x64xf32>
    %8 = arith.maximumf %6, %7 : vector<256x64xf32>
    %cst_7 = arith.constant 0.000000e+00 : f32
    %9 = vector.broadcast %cst_7 : f32 to vector<18x18x64xf32>
    %c0_8 = arith.constant 0 : index
    %c0_9 = arith.constant 0 : index
    %c0_10 = arith.constant 0 : index
    %10 = vector.load %arg11[%c0_8, %c0_9, %c0_10] : memref<18x18x64xf32, #tpu.memory_space<vmem>>, vector<18x18x64xf32>
    tpu.vector_store %arg11[%c0_8, %c0_9, %c0_10], %9 {strides = array<i32>} : memref<18x18x64xf32, #tpu.memory_space<vmem>>, vector<18x18x64xf32>,
    %11 = vector.shape_cast %8 : vector<256x64xf32> to vector<16x16x64xf32>
    %c1 = arith.constant 1 : index
    %c1_11 = arith.constant 1 : index
    %c0_12 = arith.constant 0 : index
    %12 = vector.load %arg11[%c1, %c1_11, %c0_12] : memref<18x18x64xf32, #tpu.memory_space<vmem>>, vector<16x16x64xf32>
    tpu.vector_store %arg11[%c1, %c1_11, %c0_12], %11 {strides = array<i32>} : memref<18x18x64xf32, #tpu.memory_space<vmem>>, vector<16x16x64xf32>,
    %c0_13 = arith.constant 0 : index
    %c0_14 = arith.constant 0 : index
    %c0_15 = arith.constant 0 : index
    %13 = vector.load %arg11[%c0_13, %c0_14, %c0_15] : memref<18x18x64xf32, #tpu.memory_space<vmem>>, vector<16x16x64xf32>
    %14 = vector.shape_cast %13 : vector<16x16x64xf32> to vector<256x64xf32>
    %15 = arith.truncf %14 : vector<256x64xf32> to vector<256x64xbf16>
    %c0_16 = arith.constant 0 : index
    %c0_17 = arith.constant 0 : index
    %c0_18 = arith.constant 0 : index
    %16 = vector.load %arg4[%c0_16, %c0_17, %c0_18] : memref<9x64x32xbf16, #tpu.memory_space<vmem>>, vector<1x64x32xbf16>
    %17 = vector.shape_cast %16 : vector<1x64x32xbf16> to vector<64x32xbf16>
    %cst_19 = arith.constant dense<0.000000e+00> : vector<256x32xf32>
    %18 = tpu.matmul %15, %17, %cst_19 {dimension_numbers = #tpu.dot_dimension_numbers<[1], [0], [0], [1], [0, 0, 1, 1], [], []>} : vector<256x64xbf16>, vector<64x32xbf16>, vector<256x32xf32> -> vector<256x32xf32>
    %c0_20 = arith.constant 0 : index
    %c1_21 = arith.constant 1 : index
    %c0_22 = arith.constant 0 : index
    %19 = vector.load %arg11[%c0_20, %c1_21, %c0_22] : memref<18x18x64xf32, #tpu.memory_space<vmem>>, vector<16x16x64xf32>
    %20 = vector.shape_cast %19 : vector<16x16x64xf32> to vector<256x64xf32>
    %21 = arith.truncf %20 : vector<256x64xf32> to vector<256x64xbf16>
    %c1_23 = arith.constant 1 : index
    %c0_24 = arith.constant 0 : index
    %c0_25 = arith.constant 0 : index
    %22 = vector.load %arg4[%c1_23, %c0_24, %c0_25] : memref<9x64x32xbf16, #tpu.memory_space<vmem>>, vector<1x64x32xbf16>
    %23 = vector.shape_cast %22 : vector<1x64x32xbf16> to vector<64x32xbf16>
    %cst_26 = arith.constant dense<0.000000e+00> : vector<256x32xf32>
    %24 = tpu.matmul %21, %23, %cst_26 {dimension_numbers = #tpu.dot_dimension_numbers<[1], [0], [0], [1], [0, 0, 1, 1], [], []>} : vector<256x64xbf16>, vector<64x32xbf16>, vector<256x32xf32> -> vector<256x32xf32>
    %25 = arith.addf %18, %24 : vector<256x32xf32>
    %c0_27 = arith.constant 0 : index
    %c2 = arith.constant 2 : index
    %c0_28 = arith.constant 0 : index
    %26 = vector.load %arg11[%c0_27, %c2, %c0_28] : memref<18x18x64xf32, #tpu.memory_space<vmem>>, vector<16x16x64xf32>
    %27 = vector.shape_cast %26 : vector<16x16x64xf32> to vector<256x64xf32>
    %28 = arith.truncf %27 : vector<256x64xf32> to vector<256x64xbf16>
    %c2_29 = arith.constant 2 : index
    %c0_30 = arith.constant 0 : index
    %c0_31 = arith.constant 0 : index
    %29 = vector.load %arg4[%c2_29, %c0_30, %c0_31] : memref<9x64x32xbf16, #tpu.memory_space<vmem>>, vector<1x64x32xbf16>
    %30 = vector.shape_cast %29 : vector<1x64x32xbf16> to vector<64x32xbf16>
    %cst_32 = arith.constant dense<0.000000e+00> : vector<256x32xf32>
    %31 = tpu.matmul %28, %30, %cst_32 {dimension_numbers = #tpu.dot_dimension_numbers<[1], [0], [0], [1], [0, 0, 1, 1], [], []>} : vector<256x64xbf16>, vector<64x32xbf16>, vector<256x32xf32> -> vector<256x32xf32>
    %32 = arith.addf %25, %31 : vector<256x32xf32>
    %c1_33 = arith.constant 1 : index
    %c0_34 = arith.constant 0 : index
    %c0_35 = arith.constant 0 : index
    %33 = vector.load %arg11[%c1_33, %c0_34, %c0_35] : memref<18x18x64xf32, #tpu.memory_space<vmem>>, vector<16x16x64xf32>
    %34 = vector.shape_cast %33 : vector<16x16x64xf32> to vector<256x64xf32>
    %35 = arith.truncf %34 : vector<256x64xf32> to vector<256x64xbf16>
    %c3 = arith.constant 3 : index
    %c0_36 = arith.constant 0 : index
    %c0_37 = arith.constant 0 : index
    %36 = vector.load %arg4[%c3, %c0_36, %c0_37] : memref<9x64x32xbf16, #tpu.memory_space<vmem>>, vector<1x64x32xbf16>
    %37 = vector.shape_cast %36 : vector<1x64x32xbf16> to vector<64x32xbf16>
    %cst_38 = arith.constant dense<0.000000e+00> : vector<256x32xf32>
    %38 = tpu.matmul %35, %37, %cst_38 {dimension_numbers = #tpu.dot_dimension_numbers<[1], [0], [0], [1], [0, 0, 1, 1], [], []>} : vector<256x64xbf16>, vector<64x32xbf16>, vector<256x32xf32> -> vector<256x32xf32>
    %39 = arith.addf %32, %38 : vector<256x32xf32>
    %c1_39 = arith.constant 1 : index
    %c1_40 = arith.constant 1 : index
    %c0_41 = arith.constant 0 : index
    %40 = vector.load %arg11[%c1_39, %c1_40, %c0_41] : memref<18x18x64xf32, #tpu.memory_space<vmem>>, vector<16x16x64xf32>
    %41 = vector.shape_cast %40 : vector<16x16x64xf32> to vector<256x64xf32>
    %42 = arith.truncf %41 : vector<256x64xf32> to vector<256x64xbf16>
    %c4 = arith.constant 4 : index
    %c0_42 = arith.constant 0 : index
    %c0_43 = arith.constant 0 : index
    %43 = vector.load %arg4[%c4, %c0_42, %c0_43] : memref<9x64x32xbf16, #tpu.memory_space<vmem>>, vector<1x64x32xbf16>
    %44 = vector.shape_cast %43 : vector<1x64x32xbf16> to vector<64x32xbf16>
    %cst_44 = arith.constant dense<0.000000e+00> : vector<256x32xf32>
    %45 = tpu.matmul %42, %44, %cst_44 {dimension_numbers = #tpu.dot_dimension_numbers<[1], [0], [0], [1], [0, 0, 1, 1], [], []>} : vector<256x64xbf16>, vector<64x32xbf16>, vector<256x32xf32> -> vector<256x32xf32>
    %46 = arith.addf %39, %45 : vector<256x32xf32>
    %c1_45 = arith.constant 1 : index
    %c2_46 = arith.constant 2 : index
    %c0_47 = arith.constant 0 : index
    %47 = vector.load %arg11[%c1_45, %c2_46, %c0_47] : memref<18x18x64xf32, #tpu.memory_space<vmem>>, vector<16x16x64xf32>
    %48 = vector.shape_cast %47 : vector<16x16x64xf32> to vector<256x64xf32>
    %49 = arith.truncf %48 : vector<256x64xf32> to vector<256x64xbf16>
    %c5 = arith.constant 5 : index
    %c0_48 = arith.constant 0 : index
    %c0_49 = arith.constant 0 : index
    %50 = vector.load %arg4[%c5, %c0_48, %c0_49] : memref<9x64x32xbf16, #tpu.memory_space<vmem>>, vector<1x64x32xbf16>
    %51 = vector.shape_cast %50 : vector<1x64x32xbf16> to vector<64x32xbf16>
    %cst_50 = arith.constant dense<0.000000e+00> : vector<256x32xf32>
    %52 = tpu.matmul %49, %51, %cst_50 {dimension_numbers = #tpu.dot_dimension_numbers<[1], [0], [0], [1], [0, 0, 1, 1], [], []>} : vector<256x64xbf16>, vector<64x32xbf16>, vector<256x32xf32> -> vector<256x32xf32>
    %53 = arith.addf %46, %52 : vector<256x32xf32>
    %c2_51 = arith.constant 2 : index
    %c0_52 = arith.constant 0 : index
    %c0_53 = arith.constant 0 : index
    %54 = vector.load %arg11[%c2_51, %c0_52, %c0_53] : memref<18x18x64xf32, #tpu.memory_space<vmem>>, vector<16x16x64xf32>
    %55 = vector.shape_cast %54 : vector<16x16x64xf32> to vector<256x64xf32>
    %56 = arith.truncf %55 : vector<256x64xf32> to vector<256x64xbf16>
    %c6 = arith.constant 6 : index
    %c0_54 = arith.constant 0 : index
    %c0_55 = arith.constant 0 : index
    %57 = vector.load %arg4[%c6, %c0_54, %c0_55] : memref<9x64x32xbf16, #tpu.memory_space<vmem>>, vector<1x64x32xbf16>
    %58 = vector.shape_cast %57 : vector<1x64x32xbf16> to vector<64x32xbf16>
    %cst_56 = arith.constant dense<0.000000e+00> : vector<256x32xf32>
    %59 = tpu.matmul %56, %58, %cst_56 {dimension_numbers = #tpu.dot_dimension_numbers<[1], [0], [0], [1], [0, 0, 1, 1], [], []>} : vector<256x64xbf16>, vector<64x32xbf16>, vector<256x32xf32> -> vector<256x32xf32>
    %60 = arith.addf %53, %59 : vector<256x32xf32>
    %c2_57 = arith.constant 2 : index
    %c1_58 = arith.constant 1 : index
    %c0_59 = arith.constant 0 : index
    %61 = vector.load %arg11[%c2_57, %c1_58, %c0_59] : memref<18x18x64xf32, #tpu.memory_space<vmem>>, vector<16x16x64xf32>
    %62 = vector.shape_cast %61 : vector<16x16x64xf32> to vector<256x64xf32>
    %63 = arith.truncf %62 : vector<256x64xf32> to vector<256x64xbf16>
    %c7 = arith.constant 7 : index
    %c0_60 = arith.constant 0 : index
    %c0_61 = arith.constant 0 : index
    %64 = vector.load %arg4[%c7, %c0_60, %c0_61] : memref<9x64x32xbf16, #tpu.memory_space<vmem>>, vector<1x64x32xbf16>
    %65 = vector.shape_cast %64 : vector<1x64x32xbf16> to vector<64x32xbf16>
    %cst_62 = arith.constant dense<0.000000e+00> : vector<256x32xf32>
    %66 = tpu.matmul %63, %65, %cst_62 {dimension_numbers = #tpu.dot_dimension_numbers<[1], [0], [0], [1], [0, 0, 1, 1], [], []>} : vector<256x64xbf16>, vector<64x32xbf16>, vector<256x32xf32> -> vector<256x32xf32>
    %67 = arith.addf %60, %66 : vector<256x32xf32>
    %c2_63 = arith.constant 2 : index
    %c2_64 = arith.constant 2 : index
    %c0_65 = arith.constant 0 : index
    %68 = vector.load %arg11[%c2_63, %c2_64, %c0_65] : memref<18x18x64xf32, #tpu.memory_space<vmem>>, vector<16x16x64xf32>
    %69 = vector.shape_cast %68 : vector<16x16x64xf32> to vector<256x64xf32>
    %70 = arith.truncf %69 : vector<256x64xf32> to vector<256x64xbf16>
    %c8 = arith.constant 8 : index
    %c0_66 = arith.constant 0 : index
    %c0_67 = arith.constant 0 : index
    %71 = vector.load %arg4[%c8, %c0_66, %c0_67] : memref<9x64x32xbf16, #tpu.memory_space<vmem>>, vector<1x64x32xbf16>
    %72 = vector.shape_cast %71 : vector<1x64x32xbf16> to vector<64x32xbf16>
    %cst_68 = arith.constant dense<0.000000e+00> : vector<256x32xf32>
    %73 = tpu.matmul %70, %72, %cst_68 {dimension_numbers = #tpu.dot_dimension_numbers<[1], [0], [0], [1], [0, 0, 1, 1], [], []>} : vector<256x64xbf16>, vector<64x32xbf16>, vector<256x32xf32> -> vector<256x32xf32>
    %74 = arith.addf %67, %73 : vector<256x32xf32>
    %c0_69 = arith.constant 0 : index
    %c0_70 = arith.constant 0 : index
    %75 = vector.load %arg5[%c0_69, %c0_70] : memref<1x32xf32, #tpu.memory_space<vmem>>, vector<1x32xf32>
    %76 = vector.broadcast %75 : vector<1x32xf32> to vector<256x32xf32>
    %77 = arith.addf %74, %76 : vector<256x32xf32>
    %cst_71 = arith.constant 0.000000e+00 : f32
    %78 = vector.broadcast %cst_71 : f32 to vector<256x32xf32>
    %79 = arith.maximumf %77, %78 : vector<256x32xf32>
    %cst_72 = arith.constant 0.000000e+00 : f32
    %80 = vector.broadcast %cst_72 : f32 to vector<18x18x32xf32>
    %c0_73 = arith.constant 0 : index
    %c0_74 = arith.constant 0 : index
    %c0_75 = arith.constant 0 : index
    %81 = vector.load %arg12[%c0_73, %c0_74, %c0_75] : memref<18x18x32xf32, #tpu.memory_space<vmem>>, vector<18x18x32xf32>
    tpu.vector_store %arg12[%c0_73, %c0_74, %c0_75], %80 {strides = array<i32>} : memref<18x18x32xf32, #tpu.memory_space<vmem>>, vector<18x18x32xf32>,
    %82 = vector.shape_cast %79 : vector<256x32xf32> to vector<16x16x32xf32>
    %c1_76 = arith.constant 1 : index
    %c1_77 = arith.constant 1 : index
    %c0_78 = arith.constant 0 : index
    %83 = vector.load %arg12[%c1_76, %c1_77, %c0_78] : memref<18x18x32xf32, #tpu.memory_space<vmem>>, vector<16x16x32xf32>
    tpu.vector_store %arg12[%c1_76, %c1_77, %c0_78], %82 {strides = array<i32>} : memref<18x18x32xf32, #tpu.memory_space<vmem>>, vector<16x16x32xf32>,
    %c0_79 = arith.constant 0 : index
    %c0_80 = arith.constant 0 : index
    %c0_81 = arith.constant 0 : index
    %84 = vector.load %arg12[%c0_79, %c0_80, %c0_81] : memref<18x18x32xf32, #tpu.memory_space<vmem>>, vector<16x16x32xf32>
    %85 = vector.shape_cast %84 : vector<16x16x32xf32> to vector<256x32xf32>
    %86 = arith.truncf %85 : vector<256x32xf32> to vector<256x32xbf16>
    %c0_82 = arith.constant 0 : index
    %c0_83 = arith.constant 0 : index
    %c0_84 = arith.constant 0 : index
    %87 = vector.load %arg6[%c0_82, %c0_83, %c0_84] : memref<9x3x32xbf16, #tpu.memory_space<vmem>>, vector<1x3x32xbf16>
    %88 = vector.shape_cast %87 : vector<1x3x32xbf16> to vector<3x32xbf16>
    %cst_85 = arith.constant dense<0.000000e+00> : vector<3x256xf32>
    %89 = tpu.matmul %88, %86, %cst_85 {dimension_numbers = #tpu.dot_dimension_numbers<[1], [1], [0], [0], [0, 0, 1, 0], [], []>} : vector<3x32xbf16>, vector<256x32xbf16>, vector<3x256xf32> -> vector<3x256xf32>
    %c0_86 = arith.constant 0 : index
    %c1_87 = arith.constant 1 : index
    %c0_88 = arith.constant 0 : index
    %90 = vector.load %arg12[%c0_86, %c1_87, %c0_88] : memref<18x18x32xf32, #tpu.memory_space<vmem>>, vector<16x16x32xf32>
    %91 = vector.shape_cast %90 : vector<16x16x32xf32> to vector<256x32xf32>
    %92 = arith.truncf %91 : vector<256x32xf32> to vector<256x32xbf16>
    %c1_89 = arith.constant 1 : index
    %c0_90 = arith.constant 0 : index
    %c0_91 = arith.constant 0 : index
    %93 = vector.load %arg6[%c1_89, %c0_90, %c0_91] : memref<9x3x32xbf16, #tpu.memory_space<vmem>>, vector<1x3x32xbf16>
    %94 = vector.shape_cast %93 : vector<1x3x32xbf16> to vector<3x32xbf16>
    %cst_92 = arith.constant dense<0.000000e+00> : vector<3x256xf32>
    %95 = tpu.matmul %94, %92, %cst_92 {dimension_numbers = #tpu.dot_dimension_numbers<[1], [1], [0], [0], [0, 0, 1, 0], [], []>} : vector<3x32xbf16>, vector<256x32xbf16>, vector<3x256xf32> -> vector<3x256xf32>
    %96 = arith.addf %89, %95 : vector<3x256xf32>
    %c0_93 = arith.constant 0 : index
    %c2_94 = arith.constant 2 : index
    %c0_95 = arith.constant 0 : index
    %97 = vector.load %arg12[%c0_93, %c2_94, %c0_95] : memref<18x18x32xf32, #tpu.memory_space<vmem>>, vector<16x16x32xf32>
    %98 = vector.shape_cast %97 : vector<16x16x32xf32> to vector<256x32xf32>
    %99 = arith.truncf %98 : vector<256x32xf32> to vector<256x32xbf16>
    %c2_96 = arith.constant 2 : index
    %c0_97 = arith.constant 0 : index
    %c0_98 = arith.constant 0 : index
    %100 = vector.load %arg6[%c2_96, %c0_97, %c0_98] : memref<9x3x32xbf16, #tpu.memory_space<vmem>>, vector<1x3x32xbf16>
    %101 = vector.shape_cast %100 : vector<1x3x32xbf16> to vector<3x32xbf16>
    %cst_99 = arith.constant dense<0.000000e+00> : vector<3x256xf32>
    %102 = tpu.matmul %101, %99, %cst_99 {dimension_numbers = #tpu.dot_dimension_numbers<[1], [1], [0], [0], [0, 0, 1, 0], [], []>} : vector<3x32xbf16>, vector<256x32xbf16>, vector<3x256xf32> -> vector<3x256xf32>
    %103 = arith.addf %96, %102 : vector<3x256xf32>
    %c1_100 = arith.constant 1 : index
    %c0_101 = arith.constant 0 : index
    %c0_102 = arith.constant 0 : index
    %104 = vector.load %arg12[%c1_100, %c0_101, %c0_102] : memref<18x18x32xf32, #tpu.memory_space<vmem>>, vector<16x16x32xf32>
    %105 = vector.shape_cast %104 : vector<16x16x32xf32> to vector<256x32xf32>
    %106 = arith.truncf %105 : vector<256x32xf32> to vector<256x32xbf16>
    %c3_103 = arith.constant 3 : index
    %c0_104 = arith.constant 0 : index
    %c0_105 = arith.constant 0 : index
    %107 = vector.load %arg6[%c3_103, %c0_104, %c0_105] : memref<9x3x32xbf16, #tpu.memory_space<vmem>>, vector<1x3x32xbf16>
    %108 = vector.shape_cast %107 : vector<1x3x32xbf16> to vector<3x32xbf16>
    %cst_106 = arith.constant dense<0.000000e+00> : vector<3x256xf32>
    %109 = tpu.matmul %108, %106, %cst_106 {dimension_numbers = #tpu.dot_dimension_numbers<[1], [1], [0], [0], [0, 0, 1, 0], [], []>} : vector<3x32xbf16>, vector<256x32xbf16>, vector<3x256xf32> -> vector<3x256xf32>
    %110 = arith.addf %103, %109 : vector<3x256xf32>
    %c1_107 = arith.constant 1 : index
    %c1_108 = arith.constant 1 : index
    %c0_109 = arith.constant 0 : index
    %111 = vector.load %arg12[%c1_107, %c1_108, %c0_109] : memref<18x18x32xf32, #tpu.memory_space<vmem>>, vector<16x16x32xf32>
    %112 = vector.shape_cast %111 : vector<16x16x32xf32> to vector<256x32xf32>
    %113 = arith.truncf %112 : vector<256x32xf32> to vector<256x32xbf16>
    %c4_110 = arith.constant 4 : index
    %c0_111 = arith.constant 0 : index
    %c0_112 = arith.constant 0 : index
    %114 = vector.load %arg6[%c4_110, %c0_111, %c0_112] : memref<9x3x32xbf16, #tpu.memory_space<vmem>>, vector<1x3x32xbf16>
    %115 = vector.shape_cast %114 : vector<1x3x32xbf16> to vector<3x32xbf16>
    %cst_113 = arith.constant dense<0.000000e+00> : vector<3x256xf32>
    %116 = tpu.matmul %115, %113, %cst_113 {dimension_numbers = #tpu.dot_dimension_numbers<[1], [1], [0], [0], [0, 0, 1, 0], [], []>} : vector<3x32xbf16>, vector<256x32xbf16>, vector<3x256xf32> -> vector<3x256xf32>
    %117 = arith.addf %110, %116 : vector<3x256xf32>
    %c1_114 = arith.constant 1 : index
    %c2_115 = arith.constant 2 : index
    %c0_116 = arith.constant 0 : index
    %118 = vector.load %arg12[%c1_114, %c2_115, %c0_116] : memref<18x18x32xf32, #tpu.memory_space<vmem>>, vector<16x16x32xf32>
    %119 = vector.shape_cast %118 : vector<16x16x32xf32> to vector<256x32xf32>
    %120 = arith.truncf %119 : vector<256x32xf32> to vector<256x32xbf16>
    %c5_117 = arith.constant 5 : index
    %c0_118 = arith.constant 0 : index
    %c0_119 = arith.constant 0 : index
    %121 = vector.load %arg6[%c5_117, %c0_118, %c0_119] : memref<9x3x32xbf16, #tpu.memory_space<vmem>>, vector<1x3x32xbf16>
    %122 = vector.shape_cast %121 : vector<1x3x32xbf16> to vector<3x32xbf16>
    %cst_120 = arith.constant dense<0.000000e+00> : vector<3x256xf32>
    %123 = tpu.matmul %122, %120, %cst_120 {dimension_numbers = #tpu.dot_dimension_numbers<[1], [1], [0], [0], [0, 0, 1, 0], [], []>} : vector<3x32xbf16>, vector<256x32xbf16>, vector<3x256xf32> -> vector<3x256xf32>
    %124 = arith.addf %117, %123 : vector<3x256xf32>
    %c2_121 = arith.constant 2 : index
    %c0_122 = arith.constant 0 : index
    %c0_123 = arith.constant 0 : index
    %125 = vector.load %arg12[%c2_121, %c0_122, %c0_123] : memref<18x18x32xf32, #tpu.memory_space<vmem>>, vector<16x16x32xf32>
    %126 = vector.shape_cast %125 : vector<16x16x32xf32> to vector<256x32xf32>
    %127 = arith.truncf %126 : vector<256x32xf32> to vector<256x32xbf16>
    %c6_124 = arith.constant 6 : index
    %c0_125 = arith.constant 0 : index
    %c0_126 = arith.constant 0 : index
    %128 = vector.load %arg6[%c6_124, %c0_125, %c0_126] : memref<9x3x32xbf16, #tpu.memory_space<vmem>>, vector<1x3x32xbf16>
    %129 = vector.shape_cast %128 : vector<1x3x32xbf16> to vector<3x32xbf16>
    %cst_127 = arith.constant dense<0.000000e+00> : vector<3x256xf32>
    %130 = tpu.matmul %129, %127, %cst_127 {dimension_numbers = #tpu.dot_dimension_numbers<[1], [1], [0], [0], [0, 0, 1, 0], [], []>} : vector<3x32xbf16>, vector<256x32xbf16>, vector<3x256xf32> -> vector<3x256xf32>
    %131 = arith.addf %124, %130 : vector<3x256xf32>
    %c2_128 = arith.constant 2 : index
    %c1_129 = arith.constant 1 : index
    %c0_130 = arith.constant 0 : index
    %132 = vector.load %arg12[%c2_128, %c1_129, %c0_130] : memref<18x18x32xf32, #tpu.memory_space<vmem>>, vector<16x16x32xf32>
    %133 = vector.shape_cast %132 : vector<16x16x32xf32> to vector<256x32xf32>
    %134 = arith.truncf %133 : vector<256x32xf32> to vector<256x32xbf16>
    %c7_131 = arith.constant 7 : index
    %c0_132 = arith.constant 0 : index
    %c0_133 = arith.constant 0 : index
    %135 = vector.load %arg6[%c7_131, %c0_132, %c0_133] : memref<9x3x32xbf16, #tpu.memory_space<vmem>>, vector<1x3x32xbf16>
    %136 = vector.shape_cast %135 : vector<1x3x32xbf16> to vector<3x32xbf16>
    %cst_134 = arith.constant dense<0.000000e+00> : vector<3x256xf32>
    %137 = tpu.matmul %136, %134, %cst_134 {dimension_numbers = #tpu.dot_dimension_numbers<[1], [1], [0], [0], [0, 0, 1, 0], [], []>} : vector<3x32xbf16>, vector<256x32xbf16>, vector<3x256xf32> -> vector<3x256xf32>
    %138 = arith.addf %131, %137 : vector<3x256xf32>
    %c2_135 = arith.constant 2 : index
    %c2_136 = arith.constant 2 : index
    %c0_137 = arith.constant 0 : index
    %139 = vector.load %arg12[%c2_135, %c2_136, %c0_137] : memref<18x18x32xf32, #tpu.memory_space<vmem>>, vector<16x16x32xf32>
    %140 = vector.shape_cast %139 : vector<16x16x32xf32> to vector<256x32xf32>
    %141 = arith.truncf %140 : vector<256x32xf32> to vector<256x32xbf16>
    %c8_138 = arith.constant 8 : index
    %c0_139 = arith.constant 0 : index
    %c0_140 = arith.constant 0 : index
    %142 = vector.load %arg6[%c8_138, %c0_139, %c0_140] : memref<9x3x32xbf16, #tpu.memory_space<vmem>>, vector<1x3x32xbf16>
    %143 = vector.shape_cast %142 : vector<1x3x32xbf16> to vector<3x32xbf16>
    %cst_141 = arith.constant dense<0.000000e+00> : vector<3x256xf32>
    %144 = tpu.matmul %143, %141, %cst_141 {dimension_numbers = #tpu.dot_dimension_numbers<[1], [1], [0], [0], [0, 0, 1, 0], [], []>} : vector<3x32xbf16>, vector<256x32xbf16>, vector<3x256xf32> -> vector<3x256xf32>
    %145 = arith.addf %138, %144 : vector<3x256xf32>
    %c0_142 = arith.constant 0 : index
    %c0_143 = arith.constant 0 : index
    %146 = vector.load %arg13[%c0_142, %c0_143] : memref<3x256xf32, #tpu.memory_space<vmem>>, vector<3x256xf32>
    tpu.vector_store %arg13[%c0_142, %c0_143], %145 {strides = array<i32>} : memref<3x256xf32, #tpu.memory_space<vmem>>, vector<3x256xf32>,
    %c0_144 = arith.constant 0 : index
    %c0_145 = arith.constant 0 : index
    %147 = vector.load %arg13[%c0_144, %c0_145] : memref<3x256xf32, #tpu.memory_space<vmem>>, vector<3x16xf32>
    %c0_146 = arith.constant 0 : index
    %c0_147 = arith.constant 0 : index
    %c0_148 = arith.constant 0 : index
    %148 = vector.load %arg14[%c0_146, %c0_147, %c0_148] : memref<3x16x16xf32, #tpu.memory_space<vmem>>, vector<3x1x16xf32>
    %149 = vector.shape_cast %148 : vector<3x1x16xf32> to vector<3x16xf32>
    %150 = vector.shape_cast %147 : vector<3x16xf32> to vector<3x1x16xf32>
    tpu.vector_store %arg14[%c0_146, %c0_147, %c0_148], %150 {strides = array<i32>} : memref<3x16x16xf32, #tpu.memory_space<vmem>>, vector<3x1x16xf32>,
    %c0_149 = arith.constant 0 : index
    %c16 = arith.constant 16 : index
    %151 = vector.load %arg13[%c0_149, %c16] : memref<3x256xf32, #tpu.memory_space<vmem>>, vector<3x16xf32>
    %c0_150 = arith.constant 0 : index
    %c1_151 = arith.constant 1 : index
    %c0_152 = arith.constant 0 : index
    %152 = vector.load %arg14[%c0_150, %c1_151, %c0_152] : memref<3x16x16xf32, #tpu.memory_space<vmem>>, vector<3x1x16xf32>
    %153 = vector.shape_cast %152 : vector<3x1x16xf32> to vector<3x16xf32>
    %154 = vector.shape_cast %151 : vector<3x16xf32> to vector<3x1x16xf32>
    tpu.vector_store %arg14[%c0_150, %c1_151, %c0_152], %154 {strides = array<i32>} : memref<3x16x16xf32, #tpu.memory_space<vmem>>, vector<3x1x16xf32>,
    %c0_153 = arith.constant 0 : index
    %c32 = arith.constant 32 : index
    %155 = vector.load %arg13[%c0_153, %c32] : memref<3x256xf32, #tpu.memory_space<vmem>>, vector<3x16xf32>
    %c0_154 = arith.constant 0 : index
    %c2_155 = arith.constant 2 : index
    %c0_156 = arith.constant 0 : index
    %156 = vector.load %arg14[%c0_154, %c2_155, %c0_156] : memref<3x16x16xf32, #tpu.memory_space<vmem>>, vector<3x1x16xf32>
    %157 = vector.shape_cast %156 : vector<3x1x16xf32> to vector<3x16xf32>
    %158 = vector.shape_cast %155 : vector<3x16xf32> to vector<3x1x16xf32>
    tpu.vector_store %arg14[%c0_154, %c2_155, %c0_156], %158 {strides = array<i32>} : memref<3x16x16xf32, #tpu.memory_space<vmem>>, vector<3x1x16xf32>,
    %c0_157 = arith.constant 0 : index
    %c48 = arith.constant 48 : index
    %159 = vector.load %arg13[%c0_157, %c48] : memref<3x256xf32, #tpu.memory_space<vmem>>, vector<3x16xf32>
    %c0_158 = arith.constant 0 : index
    %c3_159 = arith.constant 3 : index
    %c0_160 = arith.constant 0 : index
    %160 = vector.load %arg14[%c0_158, %c3_159, %c0_160] : memref<3x16x16xf32, #tpu.memory_space<vmem>>, vector<3x1x16xf32>
    %161 = vector.shape_cast %160 : vector<3x1x16xf32> to vector<3x16xf32>
    %162 = vector.shape_cast %159 : vector<3x16xf32> to vector<3x1x16xf32>
    tpu.vector_store %arg14[%c0_158, %c3_159, %c0_160], %162 {strides = array<i32>} : memref<3x16x16xf32, #tpu.memory_space<vmem>>, vector<3x1x16xf32>,
    %c0_161 = arith.constant 0 : index
    %c64 = arith.constant 64 : index
    %163 = vector.load %arg13[%c0_161, %c64] : memref<3x256xf32, #tpu.memory_space<vmem>>, vector<3x16xf32>
    %c0_162 = arith.constant 0 : index
    %c4_163 = arith.constant 4 : index
    %c0_164 = arith.constant 0 : index
    %164 = vector.load %arg14[%c0_162, %c4_163, %c0_164] : memref<3x16x16xf32, #tpu.memory_space<vmem>>, vector<3x1x16xf32>
    %165 = vector.shape_cast %164 : vector<3x1x16xf32> to vector<3x16xf32>
    %166 = vector.shape_cast %163 : vector<3x16xf32> to vector<3x1x16xf32>
    tpu.vector_store %arg14[%c0_162, %c4_163, %c0_164], %166 {strides = array<i32>} : memref<3x16x16xf32, #tpu.memory_space<vmem>>, vector<3x1x16xf32>,
    %c0_165 = arith.constant 0 : index
    %c80 = arith.constant 80 : index
    %167 = vector.load %arg13[%c0_165, %c80] : memref<3x256xf32, #tpu.memory_space<vmem>>, vector<3x16xf32>
    %c0_166 = arith.constant 0 : index
    %c5_167 = arith.constant 5 : index
    %c0_168 = arith.constant 0 : index
    %168 = vector.load %arg14[%c0_166, %c5_167, %c0_168] : memref<3x16x16xf32, #tpu.memory_space<vmem>>, vector<3x1x16xf32>
    %169 = vector.shape_cast %168 : vector<3x1x16xf32> to vector<3x16xf32>
    %170 = vector.shape_cast %167 : vector<3x16xf32> to vector<3x1x16xf32>
    tpu.vector_store %arg14[%c0_166, %c5_167, %c0_168], %170 {strides = array<i32>} : memref<3x16x16xf32, #tpu.memory_space<vmem>>, vector<3x1x16xf32>,
    %c0_169 = arith.constant 0 : index
    %c96 = arith.constant 96 : index
    %171 = vector.load %arg13[%c0_169, %c96] : memref<3x256xf32, #tpu.memory_space<vmem>>, vector<3x16xf32>
    %c0_170 = arith.constant 0 : index
    %c6_171 = arith.constant 6 : index
    %c0_172 = arith.constant 0 : index
    %172 = vector.load %arg14[%c0_170, %c6_171, %c0_172] : memref<3x16x16xf32, #tpu.memory_space<vmem>>, vector<3x1x16xf32>
    %173 = vector.shape_cast %172 : vector<3x1x16xf32> to vector<3x16xf32>
    %174 = vector.shape_cast %171 : vector<3x16xf32> to vector<3x1x16xf32>
    tpu.vector_store %arg14[%c0_170, %c6_171, %c0_172], %174 {strides = array<i32>} : memref<3x16x16xf32, #tpu.memory_space<vmem>>, vector<3x1x16xf32>,
    %c0_173 = arith.constant 0 : index
    %c112 = arith.constant 112 : index
    %175 = vector.load %arg13[%c0_173, %c112] : memref<3x256xf32, #tpu.memory_space<vmem>>, vector<3x16xf32>
    %c0_174 = arith.constant 0 : index
    %c7_175 = arith.constant 7 : index
    %c0_176 = arith.constant 0 : index
    %176 = vector.load %arg14[%c0_174, %c7_175, %c0_176] : memref<3x16x16xf32, #tpu.memory_space<vmem>>, vector<3x1x16xf32>
    %177 = vector.shape_cast %176 : vector<3x1x16xf32> to vector<3x16xf32>
    %178 = vector.shape_cast %175 : vector<3x16xf32> to vector<3x1x16xf32>
    tpu.vector_store %arg14[%c0_174, %c7_175, %c0_176], %178 {strides = array<i32>} : memref<3x16x16xf32, #tpu.memory_space<vmem>>, vector<3x1x16xf32>,
    %c0_177 = arith.constant 0 : index
    %c128 = arith.constant 128 : index
    %179 = vector.load %arg13[%c0_177, %c128] : memref<3x256xf32, #tpu.memory_space<vmem>>, vector<3x16xf32>
    %c0_178 = arith.constant 0 : index
    %c8_179 = arith.constant 8 : index
    %c0_180 = arith.constant 0 : index
    %180 = vector.load %arg14[%c0_178, %c8_179, %c0_180] : memref<3x16x16xf32, #tpu.memory_space<vmem>>, vector<3x1x16xf32>
    %181 = vector.shape_cast %180 : vector<3x1x16xf32> to vector<3x16xf32>
    %182 = vector.shape_cast %179 : vector<3x16xf32> to vector<3x1x16xf32>
    tpu.vector_store %arg14[%c0_178, %c8_179, %c0_180], %182 {strides = array<i32>} : memref<3x16x16xf32, #tpu.memory_space<vmem>>, vector<3x1x16xf32>,
    %c0_181 = arith.constant 0 : index
    %c144 = arith.constant 144 : index
    %183 = vector.load %arg13[%c0_181, %c144] : memref<3x256xf32, #tpu.memory_space<vmem>>, vector<3x16xf32>
    %c0_182 = arith.constant 0 : index
    %c9 = arith.constant 9 : index
    %c0_183 = arith.constant 0 : index
    %184 = vector.load %arg14[%c0_182, %c9, %c0_183] : memref<3x16x16xf32, #tpu.memory_space<vmem>>, vector<3x1x16xf32>
    %185 = vector.shape_cast %184 : vector<3x1x16xf32> to vector<3x16xf32>
    %186 = vector.shape_cast %183 : vector<3x16xf32> to vector<3x1x16xf32>
    tpu.vector_store %arg14[%c0_182, %c9, %c0_183], %186 {strides = array<i32>} : memref<3x16x16xf32, #tpu.memory_space<vmem>>, vector<3x1x16xf32>,
    %c0_184 = arith.constant 0 : index
    %c160 = arith.constant 160 : index
    %187 = vector.load %arg13[%c0_184, %c160] : memref<3x256xf32, #tpu.memory_space<vmem>>, vector<3x16xf32>
    %c0_185 = arith.constant 0 : index
    %c10 = arith.constant 10 : index
    %c0_186 = arith.constant 0 : index
    %188 = vector.load %arg14[%c0_185, %c10, %c0_186] : memref<3x16x16xf32, #tpu.memory_space<vmem>>, vector<3x1x16xf32>
    %189 = vector.shape_cast %188 : vector<3x1x16xf32> to vector<3x16xf32>
    %190 = vector.shape_cast %187 : vector<3x16xf32> to vector<3x1x16xf32>
    tpu.vector_store %arg14[%c0_185, %c10, %c0_186], %190 {strides = array<i32>} : memref<3x16x16xf32, #tpu.memory_space<vmem>>, vector<3x1x16xf32>,
    %c0_187 = arith.constant 0 : index
    %c176 = arith.constant 176 : index
    %191 = vector.load %arg13[%c0_187, %c176] : memref<3x256xf32, #tpu.memory_space<vmem>>, vector<3x16xf32>
    %c0_188 = arith.constant 0 : index
    %c11 = arith.constant 11 : index
    %c0_189 = arith.constant 0 : index
    %192 = vector.load %arg14[%c0_188, %c11, %c0_189] : memref<3x16x16xf32, #tpu.memory_space<vmem>>, vector<3x1x16xf32>
    %193 = vector.shape_cast %192 : vector<3x1x16xf32> to vector<3x16xf32>
    %194 = vector.shape_cast %191 : vector<3x16xf32> to vector<3x1x16xf32>
    tpu.vector_store %arg14[%c0_188, %c11, %c0_189], %194 {strides = array<i32>} : memref<3x16x16xf32, #tpu.memory_space<vmem>>, vector<3x1x16xf32>,
    %c0_190 = arith.constant 0 : index
    %c192 = arith.constant 192 : index
    %195 = vector.load %arg13[%c0_190, %c192] : memref<3x256xf32, #tpu.memory_space<vmem>>, vector<3x16xf32>
    %c0_191 = arith.constant 0 : index
    %c12 = arith.constant 12 : index
    %c0_192 = arith.constant 0 : index
    %196 = vector.load %arg14[%c0_191, %c12, %c0_192] : memref<3x16x16xf32, #tpu.memory_space<vmem>>, vector<3x1x16xf32>
    %197 = vector.shape_cast %196 : vector<3x1x16xf32> to vector<3x16xf32>
    %198 = vector.shape_cast %195 : vector<3x16xf32> to vector<3x1x16xf32>
    tpu.vector_store %arg14[%c0_191, %c12, %c0_192], %198 {strides = array<i32>} : memref<3x16x16xf32, #tpu.memory_space<vmem>>, vector<3x1x16xf32>,
    %c0_193 = arith.constant 0 : index
    %c208 = arith.constant 208 : index
    %199 = vector.load %arg13[%c0_193, %c208] : memref<3x256xf32, #tpu.memory_space<vmem>>, vector<3x16xf32>
    %c0_194 = arith.constant 0 : index
    %c13 = arith.constant 13 : index
    %c0_195 = arith.constant 0 : index
    %200 = vector.load %arg14[%c0_194, %c13, %c0_195] : memref<3x16x16xf32, #tpu.memory_space<vmem>>, vector<3x1x16xf32>
    %201 = vector.shape_cast %200 : vector<3x1x16xf32> to vector<3x16xf32>
    %202 = vector.shape_cast %199 : vector<3x16xf32> to vector<3x1x16xf32>
    tpu.vector_store %arg14[%c0_194, %c13, %c0_195], %202 {strides = array<i32>} : memref<3x16x16xf32, #tpu.memory_space<vmem>>, vector<3x1x16xf32>,
    %c0_196 = arith.constant 0 : index
    %c224 = arith.constant 224 : index
    %203 = vector.load %arg13[%c0_196, %c224] : memref<3x256xf32, #tpu.memory_space<vmem>>, vector<3x16xf32>
    %c0_197 = arith.constant 0 : index
    %c14 = arith.constant 14 : index
    %c0_198 = arith.constant 0 : index
    %204 = vector.load %arg14[%c0_197, %c14, %c0_198] : memref<3x16x16xf32, #tpu.memory_space<vmem>>, vector<3x1x16xf32>
    %205 = vector.shape_cast %204 : vector<3x1x16xf32> to vector<3x16xf32>
    %206 = vector.shape_cast %203 : vector<3x16xf32> to vector<3x1x16xf32>
    tpu.vector_store %arg14[%c0_197, %c14, %c0_198], %206 {strides = array<i32>} : memref<3x16x16xf32, #tpu.memory_space<vmem>>, vector<3x1x16xf32>,
    %c0_199 = arith.constant 0 : index
    %c240 = arith.constant 240 : index
    %207 = vector.load %arg13[%c0_199, %c240] : memref<3x256xf32, #tpu.memory_space<vmem>>, vector<3x16xf32>
    %c0_200 = arith.constant 0 : index
    %c15 = arith.constant 15 : index
    %c0_201 = arith.constant 0 : index
    %208 = vector.load %arg14[%c0_200, %c15, %c0_201] : memref<3x16x16xf32, #tpu.memory_space<vmem>>, vector<3x1x16xf32>
    %209 = vector.shape_cast %208 : vector<3x1x16xf32> to vector<3x16xf32>
    %210 = vector.shape_cast %207 : vector<3x16xf32> to vector<3x1x16xf32>
    tpu.vector_store %arg14[%c0_200, %c15, %c0_201], %210 {strides = array<i32>} : memref<3x16x16xf32, #tpu.memory_space<vmem>>, vector<3x1x16xf32>,
    %c0_202 = arith.constant 0 : index
    %c0_203 = arith.constant 0 : index
    %c0_204 = arith.constant 0 : index
    %211 = vector.load %arg14[%c0_202, %c0_203, %c0_204] : memref<3x16x16xf32, #tpu.memory_space<vmem>>, vector<3x16x16xf32>
    %212 = vector.shape_cast %211 : vector<3x16x16xf32> to vector<48x16xf32>
    %c0_205 = arith.constant 0 : index
    %c0_206 = arith.constant 0 : index
    %213 = vector.load %arg9[%c0_205, %c0_206] : memref<16x64xf32, #tpu.memory_space<vmem>>, vector<16x64xf32>
    %cst_207 = arith.constant dense<0.000000e+00> : vector<48x64xf32>
    %214 = tpu.matmul %212, %213, %cst_207 {dimension_numbers = #tpu.dot_dimension_numbers<[1], [0], [0], [1], [0, 0, 1, 1], [], []>} : vector<48x16xf32>, vector<16x64xf32>, vector<48x64xf32> -> vector<48x64xf32>
    %c0_208 = arith.constant 0 : index
    %c0_209 = arith.constant 0 : index
    %215 = vector.load %arg8[%c0_208, %c0_209] : memref<64x16xf32, #tpu.memory_space<vmem>>, vector<64x16xf32>
    %216 = vector.extract_strided_slice %214 {offsets = [0, 0], sizes = [16, 64], strides = [1, 1]} : vector<48x64xf32> to vector<16x64xf32>
    %cst_210 = arith.constant dense<0.000000e+00> : vector<64x64xf32>
    %217 = tpu.matmul %215, %216, %cst_210 {dimension_numbers = #tpu.dot_dimension_numbers<[1], [0], [0], [1], [0, 0, 1, 1], [], []>} : vector<64x16xf32>, vector<16x64xf32>, vector<64x64xf32> -> vector<64x64xf32>
    %c0_211 = arith.constant 0 : index
    %218 = memref.load %arg7[%c0_211] : memref<3xf32, #tpu.memory_space<smem>>
    %219 = vector.broadcast %218 : f32 to vector<64x64xf32>
    %220 = arith.addf %217, %219 : vector<64x64xf32>
    %c0_212 = arith.constant 0 : index
    %c0_213 = arith.constant 0 : index
    %c0_214 = arith.constant 0 : index
    %c0_215 = arith.constant 0 : index
    %221 = vector.load %arg10[%c0_212, %c0_213, %c0_214, %c0_215] : memref<1x3x64x64xf32, #tpu.memory_space<vmem>>, vector<1x1x64x64xf32>
    %222 = vector.shape_cast %221 : vector<1x1x64x64xf32> to vector<64x64xf32>
    %223 = vector.shape_cast %220 : vector<64x64xf32> to vector<1x1x64x64xf32>
    tpu.vector_store %arg10[%c0_212, %c0_213, %c0_214, %c0_215], %223 {strides = array<i32>} : memref<1x3x64x64xf32, #tpu.memory_space<vmem>>, vector<1x1x64x64xf32>,
    %224 = vector.extract_strided_slice %214 {offsets = [16, 0], sizes = [16, 64], strides = [1, 1]} : vector<48x64xf32> to vector<16x64xf32>
    %cst_216 = arith.constant dense<0.000000e+00> : vector<64x64xf32>
    %225 = tpu.matmul %215, %224, %cst_216 {dimension_numbers = #tpu.dot_dimension_numbers<[1], [0], [0], [1], [0, 0, 1, 1], [], []>} : vector<64x16xf32>, vector<16x64xf32>, vector<64x64xf32> -> vector<64x64xf32>
    %c1_217 = arith.constant 1 : index
    %226 = memref.load %arg7[%c1_217] : memref<3xf32, #tpu.memory_space<smem>>
    %227 = vector.broadcast %226 : f32 to vector<64x64xf32>
    %228 = arith.addf %225, %227 : vector<64x64xf32>
    %c0_218 = arith.constant 0 : index
    %c1_219 = arith.constant 1 : index
    %c0_220 = arith.constant 0 : index
    %c0_221 = arith.constant 0 : index
    %229 = vector.load %arg10[%c0_218, %c1_219, %c0_220, %c0_221] : memref<1x3x64x64xf32, #tpu.memory_space<vmem>>, vector<1x1x64x64xf32>
    %230 = vector.shape_cast %229 : vector<1x1x64x64xf32> to vector<64x64xf32>
    %231 = vector.shape_cast %228 : vector<64x64xf32> to vector<1x1x64x64xf32>
    tpu.vector_store %arg10[%c0_218, %c1_219, %c0_220, %c0_221], %231 {strides = array<i32>} : memref<1x3x64x64xf32, #tpu.memory_space<vmem>>, vector<1x1x64x64xf32>,
    %232 = vector.extract_strided_slice %214 {offsets = [32, 0], sizes = [16, 64], strides = [1, 1]} : vector<48x64xf32> to vector<16x64xf32>
    %cst_222 = arith.constant dense<0.000000e+00> : vector<64x64xf32>
    %233 = tpu.matmul %215, %232, %cst_222 {dimension_numbers = #tpu.dot_dimension_numbers<[1], [0], [0], [1], [0, 0, 1, 1], [], []>} : vector<64x16xf32>, vector<16x64xf32>, vector<64x64xf32> -> vector<64x64xf32>
    %c2_223 = arith.constant 2 : index
    %234 = memref.load %arg7[%c2_223] : memref<3xf32, #tpu.memory_space<smem>>
    %235 = vector.broadcast %234 : f32 to vector<64x64xf32>
    %236 = arith.addf %233, %235 : vector<64x64xf32>
    %c0_224 = arith.constant 0 : index
    %c2_225 = arith.constant 2 : index
    %c0_226 = arith.constant 0 : index
    %c0_227 = arith.constant 0 : index
    %237 = vector.load %arg10[%c0_224, %c2_225, %c0_226, %c0_227] : memref<1x3x64x64xf32, #tpu.memory_space<vmem>>, vector<1x1x64x64xf32>
    %238 = vector.shape_cast %237 : vector<1x1x64x64xf32> to vector<64x64xf32>
    %239 = vector.shape_cast %236 : vector<64x64xf32> to vector<1x1x64x64xf32>
    tpu.vector_store %arg10[%c0_224, %c2_225, %c0_226, %c0_227], %239 {strides = array<i32>} : memref<1x3x64x64xf32, #tpu.memory_space<vmem>>, vector<1x1x64x64xf32>,
    return
  }
  func.func @transform_0(%arg0: i32) -> (i32, i32, i32) {
    %c0_i32 = arith.constant 0 : i32
    %c0_i32_0 = arith.constant 0 : i32
    %c0_i32_1 = arith.constant 0 : i32
    return %arg0, %c0_i32, %c0_i32_0 : i32, i32, i32
  }
  func.func @transform_1(%arg0: i32) -> (i32, i32) {
    %c0_i32 = arith.constant 0 : i32
    %c0_i32_0 = arith.constant 0 : i32
    %c0_i32_1 = arith.constant 0 : i32
    return %c0_i32, %c0_i32_0 : i32, i32
  }
  func.func @transform_2(%arg0: i32) -> (i32, i32) {
    %c0_i32 = arith.constant 0 : i32
    %c0_i32_0 = arith.constant 0 : i32
    %c0_i32_1 = arith.constant 0 : i32
    return %c0_i32, %c0_i32_0 : i32, i32
  }
  func.func @transform_3(%arg0: i32) -> (i32, i32, i32) {
    %c0_i32 = arith.constant 0 : i32
    %c0_i32_0 = arith.constant 0 : i32
    %c0_i32_1 = arith.constant 0 : i32
    %c0_i32_2 = arith.constant 0 : i32
    return %c0_i32, %c0_i32_0, %c0_i32_1 : i32, i32, i32
  }
  func.func @transform_4(%arg0: i32) -> (i32, i32) {
    %c0_i32 = arith.constant 0 : i32
    %c0_i32_0 = arith.constant 0 : i32
    %c0_i32_1 = arith.constant 0 : i32
    return %c0_i32, %c0_i32_0 : i32, i32
  }
  func.func @transform_5(%arg0: i32) -> (i32, i32, i32) {
    %c0_i32 = arith.constant 0 : i32
    %c0_i32_0 = arith.constant 0 : i32
    %c0_i32_1 = arith.constant 0 : i32
    %c0_i32_2 = arith.constant 0 : i32
    return %c0_i32, %c0_i32_0, %c0_i32_1 : i32, i32, i32
  }
  func.func @transform_6(%arg0: i32) -> i32 {
    %c0_i32 = arith.constant 0 : i32
    %c0_i32_0 = arith.constant 0 : i32
    return %c0_i32 : i32
  }
  func.func @transform_7(%arg0: i32) -> (i32, i32) {
    %c0_i32 = arith.constant 0 : i32
    %c0_i32_0 = arith.constant 0 : i32
    %c0_i32_1 = arith.constant 0 : i32
    return %c0_i32, %c0_i32_0 : i32, i32
  }
  func.func @transform_8(%arg0: i32) -> (i32, i32) {
    %c0_i32 = arith.constant 0 : i32
    %c0_i32_0 = arith.constant 0 : i32
    %c0_i32_1 = arith.constant 0 : i32
    return %c0_i32, %c0_i32_0 : i32, i32
  }
  func.func @transform_9(%arg0: i32) -> (i32, i32, i32, i32) {
    %c0_i32 = arith.constant 0 : i32
    %c0_i32_0 = arith.constant 0 : i32
    %c0_i32_1 = arith.constant 0 : i32
    %c0_i32_2 = arith.constant 0 : i32
    return %arg0, %c0_i32, %c0_i32_0, %c0_i32_1 : i32, i32, i32, i32
  }
}

</mosaic_0001>

<llo_original>
// kernel: super_resolution_forward.1
$region0: #{super_resolution_forward.1}
  #allocation0 [shape = 'u32[]', space=smem, size = 0x4, offset = 0x4, fixed_abs, tag = 'smem constant byte address 0x4 - core index']
  #allocation1 [shape = 'u32[144,128]{1,0:T(1,128)}', space=vmem, size = 0x12000, scoped, tag = 'internal scratch']
  #allocation2 [shape = 'f32[18,18,64]{2,1,0:T(8,128)}', space=vmem, size = 0x36000, scoped, tag = 'scratch operand']
  #allocation3 [shape = 'f32[18,18,32]{2,1,0:T(8,128)}', space=vmem, size = 0x36000, scoped, tag = 'scratch operand']
  #allocation4 [shape = 'f32[3,256]{1,0:T(4,128)}', space=vmem, size = 0x1000, scoped, tag = 'scratch operand']
  #allocation5 [shape = 'f32[3,16,16]{2,1,0:T(8,128)}', space=vmem, size = 0x6000, scoped, tag = 'scratch operand']
  %s0 = inlined_call_operand.vmem [shape: bf16[2,256,75], index: 0, kind: input, shape index: {}]
  %s1 = inlined_call_operand.vmem [shape: bf16[75,64], index: 1, kind: input, shape index: {}]
  %s2 = inlined_call_operand.vmem [shape: f32[1,64], index: 2, kind: input, shape index: {}]
  %s3 = inlined_call_operand.vmem [shape: bf16[9,64,32], index: 3, kind: input, shape index: {}]
  %s4 = inlined_call_operand.vmem [shape: f32[1,32], index: 4, kind: input, shape index: {}]
  %s5 = inlined_call_operand.vmem [shape: bf16[9,3,32], index: 5, kind: input, shape index: {}]
  %s6 = inlined_call_operand.vmem [shape: f32[3], index: 6, kind: input, shape index: {}]
  %s7 = inlined_call_operand.vmem [shape: f32[64,16], index: 7, kind: input, shape index: {}]
  %s8 = inlined_call_operand.vmem [shape: f32[16,64], index: 8, kind: input, shape index: {}]
  %s9 = inlined_call_operand.hbm [shape: f32[2,3,64,64], index: 9, kind: output, shape index: {}]
  %s10 = sld [smem:[#allocation0]]
  $region73: #{super_resolution_forward.1} parent=0
    _
  %s12 = ssub.s32 1, %s10
  %s13 = scalar_select 0, %s12, %s10
  $region1: #{super_resolution_forward.1} parent=0
    #allocation6 [shape = 'u8[512]{0}', space=smem, size = 0x200, scoped, tag = 'input window, operand 6, single buffered']
    #allocation7 [shape = 's32[2]{0}', space=sflag, size = 0x8, scoped, tag = 'scoped memory for super_resolution_forward.1']
    #allocation8 [shape = 's32[2]{0}', space=sflag, size = 0x8, scoped, tag = 'scoped memory for super_resolution_forward.1']
    #allocation9 [shape = 'u8[196608]{0}', space=vmem, size = 0x30000, scoped, tag = 'output window, operand 0']
    %14 = vsyncpa [#allocation8], 0
    %15 = vsyncpa [#allocation7], 0
    %s16 = scalar_lea.sflag [#allocation7], 1
    %17 = vsyncpa %s16, 0
    loop: start=0, step=1, limit=4
    $region2: #{super_resolution_forward.1} parent=1 // loop_pre_header
      _
    $region3: #{super_resolution_forward.1} parent=1 // loop_header
      %s19 = sphi 0, %s23
      %p20 = scmp.ge.s32.totalorder %s19, 4
      %s29 = sphi 0, %s31
      %s32 = sphi 0, %s29
      %s33 = sphi 0, %s32
      %s49 = sphi 0, %s33
      %s53 = sphi 0, %s53
      %s55 = sphi 0, %s53
      %s56 = sphi 0, %s55
      %s70 = sphi 0, %s56
      %s74 = sphi 0, %s74
      %s76 = sphi 0, %s74
      %s77 = sphi 0, %s76
      %s91 = sphi 0, %s77
      %s95 = sphi 0, %s95
      %s97 = sphi 0, %s95
      %s98 = sphi 0, %s97
      %s112 = sphi 0, %s98
      %s116 = sphi 0, %s116
      %s118 = sphi 0, %s116
      %s119 = sphi 0, %s118
      %s133 = sphi 0, %s119
      %s137 = sphi 0, %s137
      %s139 = sphi 0, %s137
      %s140 = sphi 0, %s139
      %s154 = sphi 0, %s140
      %s158 = sphi 0, %s158
      %s160 = sphi 0, %s158
      %s161 = sphi 0, %s160
      %s175 = sphi 0, %s161
      %s179 = sphi 0, %s179
      %s181 = sphi 0, %s179
      %s182 = sphi 0, %s181
      %s196 = sphi 0, %s182
      %s200 = sphi 0, %s200
      %s202 = sphi 0, %s200
      %s203 = sphi 0, %s202
      %s217 = sphi 0, %s203
      %s223 = sphi 0, %s225
      %s226 = sphi 0, %s223
      %s227 = sphi 0, %s226
      %s243 = sphi 0, %s227
    $region4: #{super_resolution_forward.1} parent=1 // loop_header_branch
      %22 = sbr.rel (%p20) target = $region8
    $region5: #{super_resolution_forward.1} parent=1 // loop_body
      %s24 = ssub.s32 %s19, 1
      %s25 = ssub.s32 %s19, 2
      %s26 = sadd.s32 %s19, 1
      %s27 = ssub.s32 %s19, %s26
      %p28 = scmp.eq.s32.totalorder %s27, 0
      %s30 = sadd.s32 %s29, 1
      %s31 = scalar_select %p28, %s29, %s30
      %p34 = pneg %p28
      %p35 = scmp.eq.s32.totalorder %s19, 1
      %p36 = por %p34, %p35
      %p37 = scmp.ne.s32.totalorder %s29, %s32
      %p38 = scmp.eq.s32.totalorder %s19, 0
      %p39 = por %p37, %p38
      %p40 = scmp.ne.s32.totalorder %s29, %s32
      %p41 = scmp.eq.s32.totalorder %s24, 1
      %p42 = por %p40, %p41
      %p43 = scmp.ne.s32.totalorder %s32, %s33
      %p44 = scmp.eq.s32.totalorder %s24, 0
      %p45 = por %p43, %p44
      %p46 = scmp.ne.s32.totalorder %s32, %s33
      %p47 = scmp.eq.s32.totalorder %s25, 1
      %p48 = por %p46, %p47
      %p50 = scmp.ne.s32.totalorder %s33, %s49
      %p51 = scmp.eq.s32.totalorder %s25, 0
      %p52 = por %p50, %p51
      %s54 = sadd.s32 %s53, 1
      %p57 = scmp.eq.s32.totalorder %s19, 1
      %p58 = scmp.ne.s32.totalorder %s53, %s55
      %p59 = scmp.eq.s32.totalorder %s19, 0
      %p60 = por %p58, %p59
      %p61 = scmp.ne.s32.totalorder %s53, %s55
      %p62 = scmp.eq.s32.totalorder %s24, 1
      %p63 = por %p61, %p62
      %p64 = scmp.ne.s32.totalorder %s55, %s56
      %p65 = scmp.eq.s32.totalorder %s24, 0
      %p66 = por %p64, %p65
      %p67 = scmp.ne.s32.totalorder %s55, %s56
      %p68 = scmp.eq.s32.totalorder %s25, 1
      %p69 = por %p67, %p68
      %p71 = scmp.ne.s32.totalorder %s56, %s70
      %p72 = scmp.eq.s32.totalorder %s25, 0
      %p73 = por %p71, %p72
      %s75 = sadd.s32 %s74, 1
      %p78 = scmp.eq.s32.totalorder %s19, 1
      %p79 = scmp.ne.s32.totalorder %s74, %s76
      %p80 = scmp.eq.s32.totalorder %s19, 0
      %p81 = por %p79, %p80
      %p82 = scmp.ne.s32.totalorder %s74, %s76
      %p83 = scmp.eq.s32.totalorder %s24, 1
      %p84 = por %p82, %p83
      %p85 = scmp.ne.s32.totalorder %s76, %s77
      %p86 = scmp.eq.s32.totalorder %s24, 0
      %p87 = por %p85, %p86
      %p88 = scmp.ne.s32.totalorder %s76, %s77
      %p89 = scmp.eq.s32.totalorder %s25, 1
      %p90 = por %p88, %p89
      %p92 = scmp.ne.s32.totalorder %s77, %s91
      %p93 = scmp.eq.s32.totalorder %s25, 0
      %p94 = por %p92, %p93
      %s96 = sadd.s32 %s95, 1
      %p99 = scmp.eq.s32.totalorder %s19, 1
      %p100 = scmp.ne.s32.totalorder %s95, %s97
      %p101 = scmp.eq.s32.totalorder %s19, 0
      %p102 = por %p100, %p101
      %p103 = scmp.ne.s32.totalorder %s95, %s97
      %p104 = scmp.eq.s32.totalorder %s24, 1
      %p105 = por %p103, %p104
      %p106 = scmp.ne.s32.totalorder %s97, %s98
      %p107 = scmp.eq.s32.totalorder %s24, 0
      %p108 = por %p106, %p107
      %p109 = scmp.ne.s32.totalorder %s97, %s98
      %p110 = scmp.eq.s32.totalorder %s25, 1
      %p111 = por %p109, %p110
      %p113 = scmp.ne.s32.totalorder %s98, %s112
      %p114 = scmp.eq.s32.totalorder %s25, 0
      %p115 = por %p113, %p114
      %s117 = sadd.s32 %s116, 1
      %p120 = scmp.eq.s32.totalorder %s19, 1
      %p121 = scmp.ne.s32.totalorder %s116, %s118
      %p122 = scmp.eq.s32.totalorder %s19, 0
      %p123 = por %p121, %p122
      %p124 = scmp.ne.s32.totalorder %s116, %s118
      %p125 = scmp.eq.s32.totalorder %s24, 1
      %p126 = por %p124, %p125
      %p127 = scmp.ne.s32.totalorder %s118, %s119
      %p128 = scmp.eq.s32.totalorder %s24, 0
      %p129 = por %p127, %p128
      %p130 = scmp.ne.s32.totalorder %s118, %s119
      %p131 = scmp.eq.s32.totalorder %s25, 1
      %p132 = por %p130, %p131
      %p134 = scmp.ne.s32.totalorder %s119, %s133
      %p135 = scmp.eq.s32.totalorder %s25, 0
      %p136 = por %p134, %p135
      %s138 = sadd.s32 %s137, 1
      %p141 = scmp.eq.s32.totalorder %s19, 1
      %p142 = scmp.ne.s32.totalorder %s137, %s139
      %p143 = scmp.eq.s32.totalorder %s19, 0
      %p144 = por %p142, %p143
      %p145 = scmp.ne.s32.totalorder %s137, %s139
      %p146 = scmp.eq.s32.totalorder %s24, 1
      %p147 = por %p145, %p146
      %p148 = scmp.ne.s32.totalorder %s139, %s140
      %p149 = scmp.eq.s32.totalorder %s24, 0
      %p150 = por %p148, %p149
      %p151 = scmp.ne.s32.totalorder %s139, %s140
      %p152 = scmp.eq.s32.totalorder %s25, 1
      %p153 = por %p151, %p152
      %p155 = scmp.ne.s32.totalorder %s140, %s154
      %p156 = scmp.eq.s32.totalorder %s25, 0
      %p157 = por %p155, %p156
      %s159 = sadd.s32 %s158, 1
      %p162 = scmp.eq.s32.totalorder %s19, 1
      %p163 = scmp.ne.s32.totalorder %s158, %s160
      %p164 = scmp.eq.s32.totalorder %s19, 0
      %p165 = por %p163, %p164
      %p166 = scmp.ne.s32.totalorder %s158, %s160
      %p167 = scmp.eq.s32.totalorder %s24, 1
      %p168 = por %p166, %p167
      %p169 = scmp.ne.s32.totalorder %s160, %s161
      %p170 = scmp.eq.s32.totalorder %s24, 0
      %p171 = por %p169, %p170
      %p172 = scmp.ne.s32.totalorder %s160, %s161
      %p173 = scmp.eq.s32.totalorder %s25, 1
      %p174 = por %p172, %p173
      %p176 = scmp.ne.s32.totalorder %s161, %s175
      %p177 = scmp.eq.s32.totalorder %s25, 0
      %p178 = por %p176, %p177
      %s180 = sadd.s32 %s179, 1
      %p183 = scmp.eq.s32.totalorder %s19, 1
      %p184 = scmp.ne.s32.totalorder %s179, %s181
      %p185 = scmp.eq.s32.totalorder %s19, 0
      %p186 = por %p184, %p185
      %p187 = scmp.ne.s32.totalorder %s179, %s181
      %p188 = scmp.eq.s32.totalorder %s24, 1
      %p189 = por %p187, %p188
      %p190 = scmp.ne.s32.totalorder %s181, %s182
      %p191 = scmp.eq.s32.totalorder %s24, 0
      %p192 = por %p190, %p191
      %p193 = scmp.ne.s32.totalorder %s181, %s182
      %p194 = scmp.eq.s32.totalorder %s25, 1
      %p195 = por %p193, %p194
      %p197 = scmp.ne.s32.totalorder %s182, %s196
      %p198 = scmp.eq.s32.totalorder %s25, 0
      %p199 = por %p197, %p198
      %s201 = sadd.s32 %s200, 1
      %p204 = scmp.eq.s32.totalorder %s19, 1
      %p205 = scmp.ne.s32.totalorder %s200, %s202
      %p206 = scmp.eq.s32.totalorder %s19, 0
      %p207 = por %p205, %p206
      %p208 = scmp.ne.s32.totalorder %s200, %s202
      %p209 = scmp.eq.s32.totalorder %s24, 1
      %p210 = por %p208, %p209
      %p211 = scmp.ne.s32.totalorder %s202, %s203
      %p212 = scmp.eq.s32.totalorder %s24, 0
      %p213 = por %p211, %p212
      %p214 = scmp.ne.s32.totalorder %s202, %s203
      %p215 = scmp.eq.s32.totalorder %s25, 1
      %p216 = por %p214, %p215
      %p218 = scmp.ne.s32.totalorder %s203, %s217
      %p219 = scmp.eq.s32.totalorder %s25, 0
      %p220 = por %p218, %p219
      %s221 = ssub.s32 %s19, %s26
      %p222 = scmp.eq.s32.totalorder %s221, 0
      %s224 = sadd.s32 %s223, 1
      %s225 = scalar_select %p222, %s223, %s224
      %p228 = pneg %p222
      %p229 = scmp.eq.s32.totalorder %s19, 1
      %p230 = por %p228, %p229
      %p231 = scmp.ne.s32.totalorder %s223, %s226
      %p232 = scmp.eq.s32.totalorder %s19, 0
      %p233 = por %p231, %p232
      %p234 = scmp.ne.s32.totalorder %s223, %s226
      %p235 = scmp.eq.s32.totalorder %s24, 1
      %p236 = por %p234, %p235
      %p237 = scmp.ne.s32.totalorder %s226, %s227
      %p238 = scmp.eq.s32.totalorder %s24, 0
      %p239 = por %p237, %p238
      %p240 = scmp.ne.s32.totalorder %s226, %s227
      %p241 = scmp.eq.s32.totalorder %s25, 1
      %p242 = por %p240, %p241
      %p244 = scmp.ne.s32.totalorder %s227, %s243
      %p245 = scmp.eq.s32.totalorder %s25, 0
      %p246 = por %p244, %p245
      %p247 = scmp.le.s32.totalorder 1, %s19
      %p248 = scmp.lt.s32.totalorder %s19, 3
      %p249 = pnand %p247, %p248
      %p250 = pneg %p249
      // Predicated region
      $region9: #{super_resolution_forward.1} parent=5 // pred_check
        _
      $region10: #{super_resolution_forward.1} parent=5 // pred_check_branch
        %252 = sbr.rel (%p249) target = $region12
      $region11: #{super_resolution_forward.1} parent=5 // pred_region
        %s253 = ssub.s32 %s19, 1
        // Predicated region
        $region13: #{super_resolution_forward.1} parent=11 // pred_check
          %p254 = pneg %p66
        $region14: #{super_resolution_forward.1} parent=11 // pred_check_branch
          %256 = sbr.rel (%p254) target = $region16
        $region15: #{super_resolution_forward.1} parent=11 // pred_region
          _
        $region16: #{super_resolution_forward.1} parent=11 // pred_fallthru
          _
        // Predicated region
        $region17: #{super_resolution_forward.1} parent=11 // pred_check
          %p257 = pneg %p87
        $region18: #{super_resolution_forward.1} parent=11 // pred_check_branch
          %259 = sbr.rel (%p257) target = $region20
        $region19: #{super_resolution_forward.1} parent=11 // pred_region
          _
        $region20: #{super_resolution_forward.1} parent=11 // pred_fallthru
          _
        // Predicated region
        $region21: #{super_resolution_forward.1} parent=11 // pred_check
          %p260 = pneg %p108
        $region22: #{super_resolution_forward.1} parent=11 // pred_check_branch
          %262 = sbr.rel (%p260) target = $region24
        $region23: #{super_resolution_forward.1} parent=11 // pred_region
          _
        $region24: #{super_resolution_forward.1} parent=11 // pred_fallthru
          _
        // Predicated region
        $region25: #{super_resolution_forward.1} parent=11 // pred_check
          %p263 = pneg %p129
        $region26: #{super_resolution_forward.1} parent=11 // pred_check_branch
          %265 = sbr.rel (%p263) target = $region28
        $region27: #{super_resolution_forward.1} parent=11 // pred_region
          _
        $region28: #{super_resolution_forward.1} parent=11 // pred_fallthru
          _
        // Predicated region
        $region29: #{super_resolution_forward.1} parent=11 // pred_check
          %p266 = pneg %p150
        $region30: #{super_resolution_forward.1} parent=11 // pred_check_branch
          %268 = sbr.rel (%p266) target = $region32
        $region31: #{super_resolution_forward.1} parent=11 // pred_region
          _
        $region32: #{super_resolution_forward.1} parent=11 // pred_fallthru
          _
        // Predicated region
        $region33: #{super_resolution_forward.1} parent=11 // pred_check
          %p269 = pneg %p171
        $region34: #{super_resolution_forward.1} parent=11 // pred_check_branch
          %271 = sbr.rel (%p269) target = $region36
        $region35: #{super_resolution_forward.1} parent=11 // pred_region
          %s273 = ssub.s32 16, 16
          %274 = vsyncadd [#allocation8], %s273
          %s276 = sshll.u32 %s6, 4
          %s277 = int_to_ptr.vmem [resolvable:$true] %s276
          %279 = dma.vmem_to_smem %s277, 16, [#allocation6], [#allocation8]
        $region36: #{super_resolution_forward.1} parent=11 // pred_fallthru
          _
        // Predicated region
        $region37: #{super_resolution_forward.1} parent=11 // pred_check
          %p280 = pneg %p192
        $region38: #{super_resolution_forward.1} parent=11 // pred_check_branch
          %282 = sbr.rel (%p280) target = $region40
        $region39: #{super_resolution_forward.1} parent=11 // pred_region
          _
        $region40: #{super_resolution_forward.1} parent=11 // pred_fallthru
          _
        // Predicated region
        $region41: #{super_resolution_forward.1} parent=11 // pred_check
          %p283 = pneg %p213
        $region42: #{super_resolution_forward.1} parent=11 // pred_check_branch
          %285 = sbr.rel (%p283) target = $region44
        $region43: #{super_resolution_forward.1} parent=11 // pred_region
          _
        $region44: #{super_resolution_forward.1} parent=11 // pred_fallthru
          _
      $region12: #{super_resolution_forward.1} parent=5 // pred_fallthru
        _
      %p286 = scmp.lt.s32.totalorder %s19, 2
      // Predicated region
      $region45: #{super_resolution_forward.1} parent=5 // pred_check
        %p287 = pneg %p286
      $region46: #{super_resolution_forward.1} parent=5 // pred_check_branch
        %289 = sbr.rel (%p287) target = $region48
      $region47: #{super_resolution_forward.1} parent=5 // pred_region
        // Predicated region
        $region49: #{super_resolution_forward.1} parent=47 // pred_check
          %p290 = pneg %p39
        $region50: #{super_resolution_forward.1} parent=47 // pred_check_branch
          %292 = sbr.rel (%p290) target = $region52
        $region51: #{super_resolution_forward.1} parent=47 // pred_region
          %p293 = scmp.lt.s32.totalorder %s19, 1
          %s294 = scalar_select %p293, %s19, 1
          %s295 = smul.addr %s294, 32
          %s296 = smul.addr %s295, 4
          %s297 = scalar_lea.vmem %s0, %s296
        $region52: #{super_resolution_forward.1} parent=47 // pred_fallthru
          _
      $region48: #{super_resolution_forward.1} parent=5 // pred_fallthru
        _
      %p298 = scmp.le.s32.totalorder 1, %s19
      %p299 = scmp.lt.s32.totalorder %s19, 3
      %p300 = pnand %p298, %p299
      %p301 = pneg %p300
      // Predicated region
      $region53: #{super_resolution_forward.1} parent=5 // pred_check
        _
      $region54: #{super_resolution_forward.1} parent=5 // pred_check_branch
        %303 = sbr.rel (%p300) target = $region56
      $region55: #{super_resolution_forward.1} parent=5 // pred_region
        %s304 = ssub.s32 %s19, 1
        // Predicated region
        $region57: #{super_resolution_forward.1} parent=55 // pred_check
          %p305 = pneg %p171
        $region58: #{super_resolution_forward.1} parent=55 // pred_check_branch
          %307 = sbr.rel (%p305) target = $region60
        $region59: #{super_resolution_forward.1} parent=55 // pred_region
          %308 = dma.done [#allocation8], 16
        $region60: #{super_resolution_forward.1} parent=55 // pred_fallthru
          _
        %309 = sfence
        %p310 = scmp.lt.s32.totalorder %s24, 1
        %s311 = scalar_select %p310, %s24, 1
        %s312 = smul.addr %s311, 32
        %s313 = smul.addr %s312, 4
        %s314 = scalar_lea.vmem %s0, %s313
        %p315 = pneg %p45
        %p316 = pneg %p42
        %p317 = pneg %p66
        %p318 = pneg %p63
        %p319 = pneg %p87
        %p320 = pneg %p84
        %p321 = pneg %p108
        %p322 = pneg %p105
        %p323 = pneg %p129
        %p324 = pneg %p126
        %p325 = pneg %p150
        %p326 = pneg %p147
        %p327 = pneg %p171
        %p328 = pneg %p168
        %p329 = pneg %p192
        %p330 = pneg %p189
        %p331 = pneg %p213
        %p332 = pneg %p210
        %p333 = pneg %p239
        %p334 = pneg %p236
        %s335 = sand.u32 %s226, 1
        %s336 = scalar_lea.sflag [#allocation7], %s335
        %s337 = sand.u32 %s226, 1
        %s338 = smul.addr %s337, 192
        %s339 = scalar_lea.vmem [#allocation9], %s338
        %p340 = scmp.lt.s32.totalorder %s24, 1
        %s341 = scalar_select %p340, %s24, 1
        %s342 = smul.addr %s341, 32
        %s343 = smul.addr %s342, 4
        %s344 = scalar_lea.vmem %s0, %s343
        %v346 = vld [vmem:[%s344] sm:$0xf]
        %v347 = vld [vmem:[%s344 + $0x4] sm:$0xf]
        %v348 = vld [vmem:[%s344 + $0x8] sm:$0xf]
        %v349 = vld [vmem:[%s344 + $0xc] sm:$0xf]
        %v350 = vld [vmem:[%s344 + $0x10] sm:$0xf]
        %v351 = vld [vmem:[%s344 + $0x14] sm:$0xf]
        %v352 = vld [vmem:[%s344 + $0x18] sm:$0xf]
        %v353 = vld [vmem:[%s344 + $0x1c] sm:$0xf]
        %v354 = vld [vmem:[%s344 + $0x20] sm:$0xf]
        %v355 = vld [vmem:[%s344 + $0x24] sm:$0xf]
        %v356 = vld [vmem:[%s344 + $0x28] sm:$0xf]
        %v357 = vld [vmem:[%s344 + $0x2c] sm:$0xf]
        %v358 = vld [vmem:[%s344 + $0x30] sm:$0xf]
        %v359 = vld [vmem:[%s344 + $0x34] sm:$0xf]
        %v360 = vld [vmem:[%s344 + $0x38] sm:$0xf]
        %v361 = vld [vmem:[%s344 + $0x3c] sm:$0xf]
        %v362 = vld [vmem:[%s344 + $0x40] sm:$0xf]
        %v363 = vld [vmem:[%s344 + $0x44] sm:$0xf]
        %v364 = vld [vmem:[%s344 + $0x48] sm:$0xf]
        %v365 = vld [vmem:[%s344 + $0x4c] sm:$0xf]
        %v366 = vld [vmem:[%s344 + $0x50] sm:$0xf]
        %v367 = vld [vmem:[%s344 + $0x54] sm:$0xf]
        %v368 = vld [vmem:[%s344 + $0x58] sm:$0xf]
        %v369 = vld [vmem:[%s344 + $0x5c] sm:$0xf]
        %v370 = vld [vmem:[%s344 + $0x60] sm:$0xf]
        %v371 = vld [vmem:[%s344 + $0x64] sm:$0xf]
        %v372 = vld [vmem:[%s344 + $0x68] sm:$0xf]
        %v373 = vld [vmem:[%s344 + $0x6c] sm:$0xf]
        %v374 = vld [vmem:[%s344 + $0x70] sm:$0xf]
        %v375 = vld [vmem:[%s344 + $0x74] sm:$0xf]
        %v376 = vld [vmem:[%s344 + $0x78] sm:$0xf]
        %v377 = vld [vmem:[%s344 + $0x7c] sm:$0xf]
        %v378 = vld [vmem:[%s1] sm:$0xf]
        %v379 = vld [vmem:[%s1 + $0x4] sm:$0xf]
        %v380 = vld [vmem:[%s1 + $0x8] sm:$0xf]
        %v381 = vld [vmem:[%s1 + $0xc] sm:$0xf]
        %v382 = vld [vmem:[%s1 + $0x10] sm:$0xf]
        %v383 = vld [vmem:[%s1 + $0x14] sm:$0xf]
        %v384 = vld [vmem:[%s1 + $0x18] sm:$0xf]
        %v385 = vld [vmem:[%s1 + $0x1c] sm:$0xf]
        %v386 = vld [vmem:[%s1 + $0x20] sm:$0xf]
        %v387 = vld [vmem:[%s1 + $0x24] sm:$0x3]
        %v388 = vld [vmem:[%s2] sm:$0x1]
        %v390 = vlaneseq
        %v391 = vshrl.u32 %v390, 7
        %v392 = vsub.s32 0, %v391
        %v393 = vrot.slane %v388, %v392
        %v427 = vunpack.c.l.b16 %v346
        %v428 = vunpack.c.l.b16 %v347
        %v429 = vunpack.c.l.b16 %v348
        %v430 = vunpack.c.l.b16 %v349
        %v431 = vunpack.c.l.b16 %v350
        %v432 = vunpack.c.l.b16 %v351
        %v433 = vunpack.c.l.b16 %v352
        %v434 = vunpack.c.l.b16 %v353
        %v435 = vunpack.c.l.b16 %v354
        %v436 = vunpack.c.l.b16 %v355
        %v437 = vunpack.c.l.b16 %v356
        %v438 = vunpack.c.l.b16 %v357
        %v439 = vunpack.c.l.b16 %v358
        %v440 = vunpack.c.l.b16 %v359
        %v441 = vunpack.c.l.b16 %v360
        %v442 = vunpack.c.l.b16 %v361
        %v443 = vunpack.c.l.b16 %v362
        %v444 = vunpack.c.l.b16 %v363
        %v445 = vunpack.c.l.b16 %v364
        %v446 = vunpack.c.l.b16 %v365
        %v447 = vunpack.c.l.b16 %v366
        %v448 = vunpack.c.l.b16 %v367
        %v449 = vunpack.c.l.b16 %v368
        %v450 = vunpack.c.l.b16 %v369
        %v451 = vunpack.c.l.b16 %v370
        %v452 = vunpack.c.l.b16 %v371
        %v453 = vunpack.c.l.b16 %v372
        %v454 = vunpack.c.l.b16 %v373
        %v455 = vunpack.c.l.b16 %v374
        %v456 = vunpack.c.l.b16 %v375
        %v457 = vunpack.c.l.b16 %v376
        %v458 = vunpack.c.l.b16 %v377
        %v459 = vpack.c.b16 %v428, %v427
        %v460 = vpack.c.b16 %v430, %v429
        %v461 = vpack.c.b16 %v432, %v431
        %v462 = vpack.c.b16 %v434, %v433
        %v463 = vpack.c.b16 %v436, %v435
        %v464 = vpack.c.b16 %v438, %v437
        %v465 = vpack.c.b16 %v440, %v439
        %v466 = vpack.c.b16 %v442, %v441
        %v467 = vpack.c.b16 %v444, %v443
        %v468 = vpack.c.b16 %v446, %v445
        %v469 = vpack.c.b16 %v448, %v447
        %v470 = vpack.c.b16 %v450, %v449
        %v471 = vpack.c.b16 %v452, %v451
        %v472 = vpack.c.b16 %v454, %v453
        %v473 = vpack.c.b16 %v456, %v455
        %v474 = vpack.c.b16 %v458, %v457
        %v485 = vunpack.c.l.b16 %v378
        %v486 = vunpack.c.l.b16 %v379
        %v487 = vunpack.c.l.b16 %v380
        %v488 = vunpack.c.l.b16 %v381
        %v489 = vunpack.c.l.b16 %v382
        %v490 = vunpack.c.l.b16 %v383
        %v491 = vunpack.c.l.b16 %v384
        %v492 = vunpack.c.l.b16 %v385
        %v493 = vunpack.c.l.b16 %v386
        %v494 = vunpack.c.l.b16 %v387
        %v495 = vpack.c.b16 %v486, %v485
        %v496 = vpack.c.b16 %v488, %v487
        %v497 = vpack.c.b16 %v490, %v489
        %v498 = vpack.c.b16 %v492, %v491
        %v499 = vpack.c.b16 %v494, %v493
        %vm504 = vcmask 613376
        %v506 = vsel %vm504, %v459, 0
        %v509 = vsel %vm504, %v460, 0
        %v512 = vsel %vm504, %v461, 0
        %v515 = vsel %vm504, %v462, 0
        %v518 = vsel %vm504, %v463, 0
        %v521 = vsel %vm504, %v464, 0
        %v524 = vsel %vm504, %v465, 0
        %v527 = vsel %vm504, %v466, 0
        %v530 = vsel %vm504, %v467, 0
        %v533 = vsel %vm504, %v468, 0
        %v536 = vsel %vm504, %v469, 0
        %v539 = vsel %vm504, %v470, 0
        %v542 = vsel %vm504, %v471, 0
        %v545 = vsel %vm504, %v472, 0
        %v548 = vsel %vm504, %v473, 0
        %v551 = vsel %vm504, %v474, 0
        %vm553 = vcmask 1044480
        %vm554 = vcmask 1045504
        %v555 = vsel %vm553, 4294967295, 65535
        %v556 = vsel %vm554, %v555, 0
        %v558 = vand.u32 %v499, %v556
        %560 = vmatprep.subr.bf16.mxu0 0
        %561 = vmatpush1.bf16.msra.mxu0 %v495
        %562 = vmatprep.subr.bf16.mxu0 0
        %563 = vmatpush1.bf16.msra.mxu0 %v496
        %564 = vmatprep.subr.bf16.mxu0 0
        %565 = vmatpush1.bf16.msra.mxu0 %v497
        %566 = vmatprep.subr.bf16.mxu0 0
        %567 = vmatpush1.bf16.msra.mxu0 %v498
        %568 = vmatprep.subr.bf16.mxu0 0
        %569 = vmatpush1.bf16.msra.mxu0 %v558
        %570 = vmatprep.subr.bf16.mxu0 0
        %571 = vmatpush1.bf16.msra.mxu0 0
        %572 = vmatprep.subr.bf16.mxu0 0
        %573 = vmatpush1.bf16.msra.mxu0 0
        %574 = vmatprep.subr.bf16.mxu0 0
        %575 = vmatpush1.bf16.msra.mxu0 0
        %576 = vmatprep.subr.bf16.mxu0 0
        %577 = vmatpush1.bf16.msra.mxu0 0
        %578 = vmatprep.subr.bf16.mxu0 0
        %579 = vmatpush1.bf16.msra.mxu0 0
        %580 = vmatprep.subr.bf16.mxu0 0
        %581 = vmatpush1.bf16.msra.mxu0 0
        %582 = vmatprep.subr.bf16.mxu0 0
        %583 = vmatpush1.bf16.msra.mxu0 0
        %584 = vmatprep.subr.bf16.mxu0 0
        %585 = vmatpush1.bf16.msra.mxu0 0
        %586 = vmatprep.subr.bf16.mxu0 0
        %587 = vmatpush1.bf16.msra.mxu0 0
        %588 = vmatprep.subr.bf16.mxu0 0
        %589 = vmatpush1.bf16.msra.mxu0 0
        %590 = vmatprep.subr.bf16.mxu0 0
        %591 = vmatpush1.bf16.msra.mxu0 0
        %592 = vmatprep.mubr.bf16.mxu0 0
        %593 = vmatmul.mubr.bf16.gmra.mrb[0].mxu0 %v506
        %v594 = vpop.f32.mrb[0].mxu0
        %v595 = vadd.f32 %v393, %v594
        %v596 = vpop.f32.mrb[0].mxu0
        %v597 = vpop.f32.mrb[0].mxu0
        %v598 = vadd.f32 %v393, %v597
        %v599 = vpop.f32.mrb[0].mxu0
        %600 = vmatprep.mubr.bf16.mxu0 0
        %601 = vmatmul.mubr.bf16.gmra.mrb[0].mxu0 %v509
        %v602 = vpop.f32.mrb[0].mxu0
        %v603 = vadd.f32 %v393, %v602
        %v604 = vpop.f32.mrb[0].mxu0
        %v605 = vpop.f32.mrb[0].mxu0
        %v606 = vadd.f32 %v393, %v605
        %v607 = vpop.f32.mrb[0].mxu0
        %608 = vmatprep.mubr.bf16.mxu0 0
        %609 = vmatmul.mubr.bf16.gmra.mrb[0].mxu0 %v512
        %v610 = vpop.f32.mrb[0].mxu0
        %v611 = vadd.f32 %v393, %v610
        %v612 = vpop.f32.mrb[0].mxu0
        %v613 = vpop.f32.mrb[0].mxu0
        %v614 = vadd.f32 %v393, %v613
        %v615 = vpop.f32.mrb[0].mxu0
        %616 = vmatprep.mubr.bf16.mxu0 0
        %617 = vmatmul.mubr.bf16.gmra.mrb[0].mxu0 %v515
        %v618 = vpop.f32.mrb[0].mxu0
        %v619 = vadd.f32 %v393, %v618
        %v620 = vpop.f32.mrb[0].mxu0
        %v621 = vpop.f32.mrb[0].mxu0
        %v622 = vadd.f32 %v393, %v621
        %v623 = vpop.f32.mrb[0].mxu0
        %624 = vmatprep.mubr.bf16.mxu0 0
        %625 = vmatmul.mubr.bf16.gmra.mrb[0].mxu0 %v518
        %v626 = vpop.f32.mrb[0].mxu0
        %v627 = vadd.f32 %v393, %v626
        %v628 = vpop.f32.mrb[0].mxu0
        %v629 = vpop.f32.mrb[0].mxu0
        %v630 = vadd.f32 %v393, %v629
        %v631 = vpop.f32.mrb[0].mxu0
        %632 = vmatprep.mubr.bf16.mxu0 0
        %633 = vmatmul.mubr.bf16.gmra.mrb[0].mxu0 %v521
        %v634 = vpop.f32.mrb[0].mxu0
        %v635 = vadd.f32 %v393, %v634
        %v636 = vpop.f32.mrb[0].mxu0
        %v637 = vpop.f32.mrb[0].mxu0
        %v638 = vadd.f32 %v393, %v637
        %v639 = vpop.f32.mrb[0].mxu0
        %640 = vmatprep.mubr.bf16.mxu0 0
        %641 = vmatmul.mubr.bf16.gmra.mrb[0].mxu0 %v524
        %v642 = vpop.f32.mrb[0].mxu0
        %v643 = vadd.f32 %v393, %v642
        %v644 = vpop.f32.mrb[0].mxu0
        %v645 = vpop.f32.mrb[0].mxu0
        %v646 = vadd.f32 %v393, %v645
        %v647 = vpop.f32.mrb[0].mxu0
        %648 = vmatprep.mubr.bf16.mxu0 0
        %649 = vmatmul.mubr.bf16.gmra.mrb[0].mxu0 %v527
        %v650 = vpop.f32.mrb[0].mxu0
        %v651 = vadd.f32 %v393, %v650
        %v652 = vpop.f32.mrb[0].mxu0
        %v653 = vpop.f32.mrb[0].mxu0
        %v654 = vadd.f32 %v393, %v653
        %v655 = vpop.f32.mrb[0].mxu0
        %656 = vmatprep.mubr.bf16.mxu0 0
        %657 = vmatmul.mubr.bf16.gmra.mrb[0].mxu0 %v530
        %v658 = vpop.f32.mrb[0].mxu0
        %v659 = vadd.f32 %v393, %v658
        %v660 = vpop.f32.mrb[0].mxu0
        %v661 = vpop.f32.mrb[0].mxu0
        %v662 = vadd.f32 %v393, %v661
        %v663 = vpop.f32.mrb[0].mxu0
        %664 = vmatprep.mubr.bf16.mxu0 0
        %665 = vmatmul.mubr.bf16.gmra.mrb[0].mxu0 %v533
        %v666 = vpop.f32.mrb[0].mxu0
        %v667 = vadd.f32 %v393, %v666
        %v668 = vpop.f32.mrb[0].mxu0
        %v669 = vpop.f32.mrb[0].mxu0
        %v670 = vadd.f32 %v393, %v669
        %v671 = vpop.f32.mrb[0].mxu0
        %672 = vmatprep.mubr.bf16.mxu0 0
        %673 = vmatmul.mubr.bf16.gmra.mrb[0].mxu0 %v536
        %v674 = vpop.f32.mrb[0].mxu0
        %v675 = vadd.f32 %v393, %v674
        %v676 = vpop.f32.mrb[0].mxu0
        %v677 = vpop.f32.mrb[0].mxu0
        %v678 = vadd.f32 %v393, %v677
        %v679 = vpop.f32.mrb[0].mxu0
        %680 = vmatprep.mubr.bf16.mxu0 0
        %681 = vmatmul.mubr.bf16.gmra.mrb[0].mxu0 %v539
        %v682 = vpop.f32.mrb[0].mxu0
        %v683 = vadd.f32 %v393, %v682
        %v684 = vpop.f32.mrb[0].mxu0
        %v685 = vpop.f32.mrb[0].mxu0
        %v686 = vadd.f32 %v393, %v685
        %v687 = vpop.f32.mrb[0].mxu0
        %688 = vmatprep.mubr.bf16.mxu0 0
        %689 = vmatmul.mubr.bf16.gmra.mrb[0].mxu0 %v542
        %v690 = vpop.f32.mrb[0].mxu0
        %v691 = vadd.f32 %v393, %v690
        %v692 = vpop.f32.mrb[0].mxu0
        %v693 = vpop.f32.mrb[0].mxu0
        %v694 = vadd.f32 %v393, %v693
        %v695 = vpop.f32.mrb[0].mxu0
        %696 = vmatprep.mubr.bf16.mxu0 0
        %697 = vmatmul.mubr.bf16.gmra.mrb[0].mxu0 %v545
        %v698 = vpop.f32.mrb[0].mxu0
        %v699 = vadd.f32 %v393, %v698
        %v700 = vpop.f32.mrb[0].mxu0
        %v701 = vpop.f32.mrb[0].mxu0
        %v702 = vadd.f32 %v393, %v701
        %v703 = vpop.f32.mrb[0].mxu0
        %704 = vmatprep.mubr.bf16.mxu0 0
        %705 = vmatmul.mubr.bf16.gmra.mrb[0].mxu0 %v548
        %v706 = vpop.f32.mrb[0].mxu0
        %v707 = vadd.f32 %v393, %v706
        %v708 = vpop.f32.mrb[0].mxu0
        %v709 = vpop.f32.mrb[0].mxu0
        %v710 = vadd.f32 %v393, %v709
        %v711 = vpop.f32.mrb[0].mxu0
        %712 = vmatprep.mubr.bf16.mxu0 0
        %713 = vmatmul.mubr.bf16.gmra.mrb[0].mxu0 %v551
        %v714 = vpop.f32.mrb[0].mxu0
        %v715 = vadd.f32 %v393, %v714
        %v716 = vpop.f32.mrb[0].mxu0
        %v717 = vpop.f32.mrb[0].mxu0
        %v718 = vadd.f32 %v393, %v717
        %v719 = vpop.f32.mrb[0].mxu0
        %720 = vdwg.mxu0
        %v721 = vmax.f32 %v595, 0.0
        %v722 = vmax.f32 %v598, 0.0
        %v723 = vmax.f32 %v603, 0.0
        %v724 = vmax.f32 %v606, 0.0
        %v725 = vmax.f32 %v611, 0.0
        %v726 = vmax.f32 %v614, 0.0
        %v727 = vmax.f32 %v619, 0.0
        %v728 = vmax.f32 %v622, 0.0
        %v729 = vmax.f32 %v627, 0.0
        %v730 = vmax.f32 %v630, 0.0
        %v731 = vmax.f32 %v635, 0.0
        %v732 = vmax.f32 %v638, 0.0
        %v733 = vmax.f32 %v643, 0.0
        %v734 = vmax.f32 %v646, 0.0
        %v735 = vmax.f32 %v651, 0.0
        %v736 = vmax.f32 %v654, 0.0
        %v737 = vmax.f32 %v659, 0.0
        %v738 = vmax.f32 %v662, 0.0
        %v739 = vmax.f32 %v667, 0.0
        %v740 = vmax.f32 %v670, 0.0
        %v741 = vmax.f32 %v675, 0.0
        %v742 = vmax.f32 %v678, 0.0
        %v743 = vmax.f32 %v683, 0.0
        %v744 = vmax.f32 %v686, 0.0
        %v745 = vmax.f32 %v691, 0.0
        %v746 = vmax.f32 %v694, 0.0
        %v747 = vmax.f32 %v699, 0.0
        %v748 = vmax.f32 %v702, 0.0
        %v749 = vmax.f32 %v707, 0.0
        %v750 = vmax.f32 %v710, 0.0
        %v751 = vmax.f32 %v715, 0.0
        %v752 = vmax.f32 %v718, 0.0
        %vm753 = vcmask 523264
        %754 = vst.msk [vmem:[#allocation2] sm:$0xff] %vm753, 0.0
        %755 = vst.msk [vmem:[#allocation2 + $0x8] sm:$0xff] %vm753, 0.0
        %vm756 = vcmask 517120
        %757 = vst.msk [vmem:[#allocation2 + $0x10] sm:$0x3] %vm756, 0.0
        %758 = vst.msk [vmem:[#allocation2 + $0x18] sm:$0xff] %vm753, 0.0
        %759 = vst.msk [vmem:[#allocation2 + $0x20] sm:$0xff] %vm753, 0.0
        %760 = vst.msk [vmem:[#allocation2 + $0x28] sm:$0x3] %vm756, 0.0
        %761 = vst.msk [vmem:[#allocation2 + $0x30] sm:$0xff] %vm753, 0.0
        %762 = vst.msk [vmem:[#allocation2 + $0x38] sm:$0xff] %vm753, 0.0
        %763 = vst.msk [vmem:[#allocation2 + $0x40] sm:$0x3] %vm756, 0.0
        %764 = vst.msk [vmem:[#allocation2 + $0x48] sm:$0xff] %vm753, 0.0
        %765 = vst.msk [vmem:[#allocation2 + $0x50] sm:$0xff] %vm753, 0.0
        %766 = vst.msk [vmem:[#allocation2 + $0x58] sm:$0x3] %vm756, 0.0
        %767 = vst.msk [vmem:[#allocation2 + $0x60] sm:$0xff] %vm753, 0.0
        %768 = vst.msk [vmem:[#allocation2 + $0x68] sm:$0xff] %vm753, 0.0
        %769 = vst.msk [vmem:[#allocation2 + $0x70] sm:$0x3] %vm756, 0.0
        %770 = vst.msk [vmem:[#allocation2 + $0x78] sm:$0xff] %vm753, 0.0
        %771 = vst.msk [vmem:[#allocation2 + $0x80] sm:$0xff] %vm753, 0.0
        %772 = vst.msk [vmem:[#allocation2 + $0x88] sm:$0x3] %vm756, 0.0
        %773 = vst.msk [vmem:[#allocation2 + $0x90] sm:$0xff] %vm753, 0.0
        %774 = vst.msk [vmem:[#allocation2 + $0x98] sm:$0xff] %vm753, 0.0
        %775 = vst.msk [vmem:[#allocation2 + $0xa0] sm:$0x3] %vm756, 0.0
        %776 = vst.msk [vmem:[#allocation2 + $0xa8] sm:$0xff] %vm753, 0.0
        %777 = vst.msk [vmem:[#allocation2 + $0xb0] sm:$0xff] %vm753, 0.0
        %778 = vst.msk [vmem:[#allocation2 + $0xb8] sm:$0x3] %vm756, 0.0
        %779 = vst.msk [vmem:[#allocation2 + $0xc0] sm:$0xff] %vm753, 0.0
        %780 = vst.msk [vmem:[#allocation2 + $0xc8] sm:$0xff] %vm753, 0.0
        %781 = vst.msk [vmem:[#allocation2 + $0xd0] sm:$0x3] %vm756, 0.0
        %782 = vst.msk [vmem:[#allocation2 + $0xd8] sm:$0xff] %vm753, 0.0
        %783 = vst.msk [vmem:[#allocation2 + $0xe0] sm:$0xff] %vm753, 0.0
        %784 = vst.msk [vmem:[#allocation2 + $0xe8] sm:$0x3] %vm756, 0.0
        %785 = vst.msk [vmem:[#allocation2 + $0xf0] sm:$0xff] %vm753, 0.0
        %786 = vst.msk [vmem:[#allocation2 + $0xf8] sm:$0xff] %vm753, 0.0
        %787 = vst.msk [vmem:[#allocation2 + $0x100] sm:$0x3] %vm756, 0.0
        %788 = vst.msk [vmem:[#allocation2 + $0x108] sm:$0xff] %vm753, 0.0
        %789 = vst.msk [vmem:[#allocation2 + $0x110] sm:$0xff] %vm753, 0.0
        %790 = vst.msk [vmem:[#allocation2 + $0x118] sm:$0x3] %vm756, 0.0
        %791 = vst.msk [vmem:[#allocation2 + $0x120] sm:$0xff] %vm753, 0.0
        %792 = vst.msk [vmem:[#allocation2 + $0x128] sm:$0xff] %vm753, 0.0
        %793 = vst.msk [vmem:[#allocation2 + $0x130] sm:$0x3] %vm756, 0.0
        %794 = vst.msk [vmem:[#allocation2 + $0x138] sm:$0xff] %vm753, 0.0
        %795 = vst.msk [vmem:[#allocation2 + $0x140] sm:$0xff] %vm753, 0.0
        %796 = vst.msk [vmem:[#allocation2 + $0x148] sm:$0x3] %vm756, 0.0
        %797 = vst.msk [vmem:[#allocation2 + $0x150] sm:$0xff] %vm753, 0.0
        %798 = vst.msk [vmem:[#allocation2 + $0x158] sm:$0xff] %vm753, 0.0
        %799 = vst.msk [vmem:[#allocation2 + $0x160] sm:$0x3] %vm756, 0.0
        %800 = vst.msk [vmem:[#allocation2 + $0x168] sm:$0xff] %vm753, 0.0
        %801 = vst.msk [vmem:[#allocation2 + $0x170] sm:$0xff] %vm753, 0.0
        %802 = vst.msk [vmem:[#allocation2 + $0x178] sm:$0x3] %vm756, 0.0
        %803 = vst.msk [vmem:[#allocation2 + $0x180] sm:$0xff] %vm753, 0.0
        %804 = vst.msk [vmem:[#allocation2 + $0x188] sm:$0xff] %vm753, 0.0
        %805 = vst.msk [vmem:[#allocation2 + $0x190] sm:$0x3] %vm756, 0.0
        %806 = vst.msk [vmem:[#allocation2 + $0x198] sm:$0xff] %vm753, 0.0
        %807 = vst.msk [vmem:[#allocation2 + $0x1a0] sm:$0xff] %vm753, 0.0
        %808 = vst.msk [vmem:[#allocation2 + $0x1a8] sm:$0x3] %vm756, 0.0
        %s809 = scalar_lea.vmem [#allocation2], 24
        %810 = vst.msk [vmem:[%s809 + $0x1] sm:$0xff] %vm753, %v721
        %811 = vst.msk [vmem:[%s809 + $0x9] sm:$0xff] %vm753, %v722
        %812 = vst.msk [vmem:[%s809 + $0x19] sm:$0xff] %vm753, %v723
        %813 = vst.msk [vmem:[%s809 + $0x21] sm:$0xff] %vm753, %v724
        %814 = vst.msk [vmem:[%s809 + $0x31] sm:$0xff] %vm753, %v725
        %815 = vst.msk [vmem:[%s809 + $0x39] sm:$0xff] %vm753, %v726
        %816 = vst.msk [vmem:[%s809 + $0x49] sm:$0xff] %vm753, %v727
        %817 = vst.msk [vmem:[%s809 + $0x51] sm:$0xff] %vm753, %v728
        %818 = vst.msk [vmem:[%s809 + $0x61] sm:$0xff] %vm753, %v729
        %819 = vst.msk [vmem:[%s809 + $0x69] sm:$0xff] %vm753, %v730
        %820 = vst.msk [vmem:[%s809 + $0x79] sm:$0xff] %vm753, %v731
        %821 = vst.msk [vmem:[%s809 + $0x81] sm:$0xff] %vm753, %v732
        %822 = vst.msk [vmem:[%s809 + $0x91] sm:$0xff] %vm753, %v733
        %823 = vst.msk [vmem:[%s809 + $0x99] sm:$0xff] %vm753, %v734
        %824 = vst.msk [vmem:[%s809 + $0xa9] sm:$0xff] %vm753, %v735
        %825 = vst.msk [vmem:[%s809 + $0xb1] sm:$0xff] %vm753, %v736
        %826 = vst.msk [vmem:[%s809 + $0xc1] sm:$0xff] %vm753, %v737
        %827 = vst.msk [vmem:[%s809 + $0xc9] sm:$0xff] %vm753, %v738
        %828 = vst.msk [vmem:[%s809 + $0xd9] sm:$0xff] %vm753, %v739
        %829 = vst.msk [vmem:[%s809 + $0xe1] sm:$0xff] %vm753, %v740
        %830 = vst.msk [vmem:[%s809 + $0xf1] sm:$0xff] %vm753, %v741
        %831 = vst.msk [vmem:[%s809 + $0xf9] sm:$0xff] %vm753, %v742
        %832 = vst.msk [vmem:[%s809 + $0x109] sm:$0xff] %vm753, %v743
        %833 = vst.msk [vmem:[%s809 + $0x111] sm:$0xff] %vm753, %v744
        %834 = vst.msk [vmem:[%s809 + $0x121] sm:$0xff] %vm753, %v745
        %835 = vst.msk [vmem:[%s809 + $0x129] sm:$0xff] %vm753, %v746
        %836 = vst.msk [vmem:[%s809 + $0x139] sm:$0xff] %vm753, %v747
        %837 = vst.msk [vmem:[%s809 + $0x141] sm:$0xff] %vm753, %v748
        %838 = vst.msk [vmem:[%s809 + $0x151] sm:$0xff] %vm753, %v749
        %839 = vst.msk [vmem:[%s809 + $0x159] sm:$0xff] %vm753, %v750
        %840 = vst.msk [vmem:[%s809 + $0x169] sm:$0xff] %vm753, %v751
        %841 = vst.msk [vmem:[%s809 + $0x171] sm:$0xff] %vm753, %v752
        %v842 = vld [vmem:[#allocation2] sm:$0xff]
        %v843 = vld [vmem:[#allocation2 + $0x8] sm:$0xff]
        %v844 = vld [vmem:[#allocation2 + $0x18] sm:$0xff]
        %v845 = vld [vmem:[#allocation2 + $0x20] sm:$0xff]
        %v846 = vld [vmem:[#allocation2 + $0x30] sm:$0xff]
        %v847 = vld [vmem:[#allocation2 + $0x38] sm:$0xff]
        %v848 = vld [vmem:[#allocation2 + $0x48] sm:$0xff]
        %v849 = vld [vmem:[#allocation2 + $0x50] sm:$0xff]
        %v850 = vld [vmem:[#allocation2 + $0x60] sm:$0xff]
        %v851 = vld [vmem:[#allocation2 + $0x68] sm:$0xff]
        %v852 = vld [vmem:[#allocation2 + $0x78] sm:$0xff]
        %v853 = vld [vmem:[#allocation2 + $0x80] sm:$0xff]
        %v854 = vld [vmem:[#allocation2 + $0x90] sm:$0xff]
        %v855 = vld [vmem:[#allocation2 + $0x98] sm:$0xff]
        %v856 = vld [vmem:[#allocation2 + $0xa8] sm:$0xff]
        %v857 = vld [vmem:[#allocation2 + $0xb0] sm:$0xff]
        %v858 = vld [vmem:[#allocation2 + $0xc0] sm:$0xff]
        %v859 = vld [vmem:[#allocation2 + $0xc8] sm:$0xff]
        %v860 = vld [vmem:[#allocation2 + $0xd8] sm:$0xff]
        %v861 = vld [vmem:[#allocation2 + $0xe0] sm:$0xff]
        %v862 = vld [vmem:[#allocation2 + $0xf0] sm:$0xff]
        %v863 = vld [vmem:[#allocation2 + $0xf8] sm:$0xff]
        %v864 = vld [vmem:[#allocation2 + $0x108] sm:$0xff]
        %v865 = vld [vmem:[#allocation2 + $0x110] sm:$0xff]
        %v866 = vld [vmem:[#allocation2 + $0x120] sm:$0xff]
        %v867 = vld [vmem:[#allocation2 + $0x128] sm:$0xff]
        %v868 = vld [vmem:[#allocation2 + $0x138] sm:$0xff]
        %v869 = vld [vmem:[#allocation2 + $0x140] sm:$0xff]
        %v870 = vld [vmem:[#allocation2 + $0x150] sm:$0xff]
        %v871 = vld [vmem:[#allocation2 + $0x158] sm:$0xff]
        %v872 = vld [vmem:[#allocation2 + $0x168] sm:$0xff]
        %v873 = vld [vmem:[#allocation2 + $0x170] sm:$0xff]
        %v874 = vpack.c.bf16 %v843, %v842
        %v875 = vpack.c.bf16 %v845, %v844
        %v876 = vpack.c.bf16 %v847, %v846
        %v877 = vpack.c.bf16 %v849, %v848
        %v878 = vpack.c.bf16 %v851, %v850
        %v879 = vpack.c.bf16 %v853, %v852
        %v880 = vpack.c.bf16 %v855, %v854
        %v881 = vpack.c.bf16 %v857, %v856
        %v882 = vpack.c.bf16 %v859, %v858
        %v883 = vpack.c.bf16 %v861, %v860
        %v884 = vpack.c.bf16 %v863, %v862
        %v885 = vpack.c.bf16 %v865, %v864
        %v886 = vpack.c.bf16 %v867, %v866
        %v887 = vpack.c.bf16 %v869, %v868
        %v888 = vpack.c.bf16 %v871, %v870
        %v889 = vpack.c.bf16 %v873, %v872
        %v890 = vld [vmem:[%s3] sm:$0xf]
        %v891 = vld [vmem:[%s3 + $0x4] sm:$0xf]
        %v892 = vld [vmem:[%s3 + $0x8] sm:$0xf]
        %v893 = vld [vmem:[%s3 + $0xc] sm:$0xf]
        %v894 = vld [vmem:[%s3 + $0x10] sm:$0xf]
        %v895 = vld [vmem:[%s3 + $0x14] sm:$0xf]
        %v896 = vld [vmem:[%s3 + $0x18] sm:$0xf]
        %v897 = vld [vmem:[%s3 + $0x1c] sm:$0xf]
        %v898 = vld [vmem:[#allocation2 + $0x1] sm:$0xff]
        %v899 = vld [vmem:[#allocation2 + $0x9] sm:$0xff]
        %v900 = vld [vmem:[#allocation2 + $0x19] sm:$0xff]
        %v901 = vld [vmem:[#allocation2 + $0x21] sm:$0xff]
        %v902 = vld [vmem:[#allocation2 + $0x31] sm:$0xff]
        %v903 = vld [vmem:[#allocation2 + $0x39] sm:$0xff]
        %v904 = vld [vmem:[#allocation2 + $0x49] sm:$0xff]
        %v905 = vld [vmem:[#allocation2 + $0x51] sm:$0xff]
        %v906 = vld [vmem:[#allocation2 + $0x61] sm:$0xff]
        %v907 = vld [vmem:[#allocation2 + $0x69] sm:$0xff]
        %v908 = vld [vmem:[#allocation2 + $0x79] sm:$0xff]
        %v909 = vld [vmem:[#allocation2 + $0x81] sm:$0xff]
        %v910 = vld [vmem:[#allocation2 + $0x91] sm:$0xff]
        %v911 = vld [vmem:[#allocation2 + $0x99] sm:$0xff]
        %v912 = vld [vmem:[#allocation2 + $0xa9] sm:$0xff]
        %v913 = vld [vmem:[#allocation2 + $0xb1] sm:$0xff]
        %v914 = vld [vmem:[#allocation2 + $0xc1] sm:$0xff]
        %v915 = vld [vmem:[#allocation2 + $0xc9] sm:$0xff]
        %v916 = vld [vmem:[#allocation2 + $0xd9] sm:$0xff]
        %v917 = vld [vmem:[#allocation2 + $0xe1] sm:$0xff]
        %v918 = vld [vmem:[#allocation2 + $0xf1] sm:$0xff]
        %v919 = vld [vmem:[#allocation2 + $0xf9] sm:$0xff]
        %v920 = vld [vmem:[#allocation2 + $0x109] sm:$0xff]
        %v921 = vld [vmem:[#allocation2 + $0x111] sm:$0xff]
        %v922 = vld [vmem:[#allocation2 + $0x121] sm:$0xff]
        %v923 = vld [vmem:[#allocation2 + $0x129] sm:$0xff]
        %v924 = vld [vmem:[#allocation2 + $0x139] sm:$0xff]
        %v925 = vld [vmem:[#allocation2 + $0x141] sm:$0xff]
        %v926 = vld [vmem:[#allocation2 + $0x151] sm:$0xff]
        %v927 = vld [vmem:[#allocation2 + $0x159] sm:$0xff]
        %v928 = vld [vmem:[#allocation2 + $0x169] sm:$0xff]
        %v929 = vld [vmem:[#allocation2 + $0x171] sm:$0xff]
        %v930 = vpack.c.bf16 %v899, %v898
        %v931 = vpack.c.bf16 %v901, %v900
        %v932 = vpack.c.bf16 %v903, %v902
        %v933 = vpack.c.bf16 %v905, %v904
        %v934 = vpack.c.bf16 %v907, %v906
        %v935 = vpack.c.bf16 %v909, %v908
        %v936 = vpack.c.bf16 %v911, %v910
        %v937 = vpack.c.bf16 %v913, %v912
        %v938 = vpack.c.bf16 %v915, %v914
        %v939 = vpack.c.bf16 %v917, %v916
        %v940 = vpack.c.bf16 %v919, %v918
        %v941 = vpack.c.bf16 %v921, %v920
        %v942 = vpack.c.bf16 %v923, %v922
        %v943 = vpack.c.bf16 %v925, %v924
        %v944 = vpack.c.bf16 %v927, %v926
        %v945 = vpack.c.bf16 %v929, %v928
        %s946 = scalar_lea.vmem %s3, 32
        %v947 = vld [vmem:[%s946] sm:$0xf]
        %v948 = vld [vmem:[%s946 + $0x4] sm:$0xf]
        %v949 = vld [vmem:[%s946 + $0x8] sm:$0xf]
        %v950 = vld [vmem:[%s946 + $0xc] sm:$0xf]
        %v951 = vld [vmem:[%s946 + $0x10] sm:$0xf]
        %v952 = vld [vmem:[%s946 + $0x14] sm:$0xf]
        %v953 = vld [vmem:[%s946 + $0x18] sm:$0xf]
        %v954 = vld [vmem:[%s946 + $0x1c] sm:$0xf]
        %v963 = vunpack.c.l.b16 %v947
        %v964 = vunpack.c.l.b16 %v948
        %v965 = vunpack.c.l.b16 %v949
        %v966 = vunpack.c.l.b16 %v950
        %v967 = vunpack.c.l.b16 %v951
        %v968 = vunpack.c.l.b16 %v952
        %v969 = vunpack.c.l.b16 %v953
        %v970 = vunpack.c.l.b16 %v954
        %v971 = vpack.c.b16 %v964, %v963
        %v972 = vpack.c.b16 %v966, %v965
        %v973 = vpack.c.b16 %v968, %v967
        %v974 = vpack.c.b16 %v970, %v969
        %v980 = vsel %vm753, %v930, 0
        %v983 = vsel %vm753, %v931, 0
        %v986 = vsel %vm753, %v932, 0
        %v989 = vsel %vm753, %v933, 0
        %v992 = vsel %vm753, %v934, 0
        %v995 = vsel %vm753, %v935, 0
        %v998 = vsel %vm753, %v936, 0
        %v1001 = vsel %vm753, %v937, 0
        %v1004 = vsel %vm753, %v938, 0
        %v1007 = vsel %vm753, %v939, 0
        %v1010 = vsel %vm753, %v940, 0
        %v1013 = vsel %vm753, %v941, 0
        %v1016 = vsel %vm753, %v942, 0
        %v1019 = vsel %vm753, %v943, 0
        %v1022 = vsel %vm753, %v944, 0
        %v1025 = vsel %vm753, %v945, 0
        %1027 = vmatprep.subr.bf16.mxu0 0
        %1028 = vmatpush1.bf16.msra.mxu0 %v971
        %1029 = vmatprep.subr.bf16.mxu0 0
        %1030 = vmatpush1.bf16.msra.mxu0 %v972
        %1031 = vmatprep.subr.bf16.mxu0 0
        %1032 = vmatpush1.bf16.msra.mxu0 %v973
        %1033 = vmatprep.subr.bf16.mxu0 0
        %1034 = vmatpush1.bf16.msra.mxu0 %v974
        %1035 = vmatprep.subr.bf16.mxu0 0
        %1036 = vmatpush1.bf16.msra.mxu0 0
        %1037 = vmatprep.subr.bf16.mxu0 0
        %1038 = vmatpush1.bf16.msra.mxu0 0
        %1039 = vmatprep.subr.bf16.mxu0 0
        %1040 = vmatpush1.bf16.msra.mxu0 0
        %1041 = vmatprep.subr.bf16.mxu0 0
        %1042 = vmatpush1.bf16.msra.mxu0 0
        %1043 = vmatprep.subr.bf16.mxu0 0
        %1044 = vmatpush1.bf16.msra.mxu0 0
        %1045 = vmatprep.subr.bf16.mxu0 0
        %1046 = vmatpush1.bf16.msra.mxu0 0
        %1047 = vmatprep.subr.bf16.mxu0 0
        %1048 = vmatpush1.bf16.msra.mxu0 0
        %1049 = vmatprep.subr.bf16.mxu0 0
        %1050 = vmatpush1.bf16.msra.mxu0 0
        %1051 = vmatprep.subr.bf16.mxu0 0
        %1052 = vmatpush1.bf16.msra.mxu0 0
        %1053 = vmatprep.subr.bf16.mxu0 0
        %1054 = vmatpush1.bf16.msra.mxu0 0
        %1055 = vmatprep.subr.bf16.mxu0 0
        %1056 = vmatpush1.bf16.msra.mxu0 0
        %1057 = vmatprep.subr.bf16.mxu0 0
        %1058 = vmatpush1.bf16.msra.mxu0 0
        %1059 = vmatprep.mubr.bf16.mxu0 0
        %1060 = vmatmul.mubr.bf16.gmra.mrb[0].mxu0 %v980
        %v1061 = vpop.f32.mrb[0].mxu0
        %v1062 = vadd.f32 0.0, %v1061
        %v1063 = vpop.f32.mrb[0].mxu0
        %v1064 = vpop.f32.mrb[0].mxu0
        %v1065 = vadd.f32 0.0, %v1064
        %v1066 = vpop.f32.mrb[0].mxu0
        %1067 = vmatprep.mubr.bf16.mxu0 0
        %1068 = vmatmul.mubr.bf16.gmra.mrb[0].mxu0 %v983
        %v1069 = vpop.f32.mrb[0].mxu0
        %v1070 = vadd.f32 0.0, %v1069
        %v1071 = vpop.f32.mrb[0].mxu0
        %v1072 = vpop.f32.mrb[0].mxu0
        %v1073 = vadd.f32 0.0, %v1072
        %v1074 = vpop.f32.mrb[0].mxu0
        %1075 = vmatprep.mubr.bf16.mxu0 0
        %1076 = vmatmul.mubr.bf16.gmra.mrb[0].mxu0 %v986
        %v1077 = vpop.f32.mrb[0].mxu0
        %v1078 = vadd.f32 0.0, %v1077
        %v1079 = vpop.f32.mrb[0].mxu0
        %v1080 = vpop.f32.mrb[0].mxu0
        %v1081 = vadd.f32 0.0, %v1080
        %v1082 = vpop.f32.mrb[0].mxu0
        %1083 = vmatprep.mubr.bf16.mxu0 0
        %1084 = vmatmul.mubr.bf16.gmra.mrb[0].mxu0 %v989
        %v1085 = vpop.f32.mrb[0].mxu0
        %v1086 = vadd.f32 0.0, %v1085
        %v1087 = vpop.f32.mrb[0].mxu0
        %v1088 = vpop.f32.mrb[0].mxu0
        %v1089 = vadd.f32 0.0, %v1088
        %v1090 = vpop.f32.mrb[0].mxu0
        %1091 = vmatprep.mubr.bf16.mxu0 0
        %1092 = vmatmul.mubr.bf16.gmra.mrb[0].mxu0 %v992
        %v1093 = vpop.f32.mrb[0].mxu0
        %v1094 = vadd.f32 0.0, %v1093
        %v1095 = vpop.f32.mrb[0].mxu0
        %v1096 = vpop.f32.mrb[0].mxu0
        %v1097 = vadd.f32 0.0, %v1096
        %v1098 = vpop.f32.mrb[0].mxu0
        %1099 = vmatprep.mubr.bf16.mxu0 0
        %1100 = vmatmul.mubr.bf16.gmra.mrb[0].mxu0 %v995
        %v1101 = vpop.f32.mrb[0].mxu0
        %v1102 = vadd.f32 0.0, %v1101
        %v1103 = vpop.f32.mrb[0].mxu0
        %v1104 = vpop.f32.mrb[0].mxu0
        %v1105 = vadd.f32 0.0, %v1104
        %v1106 = vpop.f32.mrb[0].mxu0
        %1107 = vmatprep.mubr.bf16.mxu0 0
        %1108 = vmatmul.mubr.bf16.gmra.mrb[0].mxu0 %v998
        %v1109 = vpop.f32.mrb[0].mxu0
        %v1110 = vadd.f32 0.0, %v1109
        %v1111 = vpop.f32.mrb[0].mxu0
        %v1112 = vpop.f32.mrb[0].mxu0
        %v1113 = vadd.f32 0.0, %v1112
        %v1114 = vpop.f32.mrb[0].mxu0
        %1115 = vmatprep.mubr.bf16.mxu0 0
        %1116 = vmatmul.mubr.bf16.gmra.mrb[0].mxu0 %v1001
        %v1117 = vpop.f32.mrb[0].mxu0
        %v1118 = vadd.f32 0.0, %v1117
        %v1119 = vpop.f32.mrb[0].mxu0
        %v1120 = vpop.f32.mrb[0].mxu0
        %v1121 = vadd.f32 0.0, %v1120
        %v1122 = vpop.f32.mrb[0].mxu0
        %1123 = vmatprep.mubr.bf16.mxu0 0
        %1124 = vmatmul.mubr.bf16.gmra.mrb[0].mxu0 %v1004
        %v1125 = vpop.f32.mrb[0].mxu0
        %v1126 = vadd.f32 0.0, %v1125
        %v1127 = vpop.f32.mrb[0].mxu0
        %v1128 = vpop.f32.mrb[0].mxu0
        %v1129 = vadd.f32 0.0, %v1128
        %v1130 = vpop.f32.mrb[0].mxu0
        %1131 = vmatprep.mubr.bf16.mxu0 0
        %1132 = vmatmul.mubr.bf16.gmra.mrb[0].mxu0 %v1007
        %v1133 = vpop.f32.mrb[0].mxu0
        %v1134 = vadd.f32 0.0, %v1133
        %v1135 = vpop.f32.mrb[0].mxu0
        %v1136 = vpop.f32.mrb[0].mxu0
        %v1137 = vadd.f32 0.0, %v1136
        %v1138 = vpop.f32.mrb[0].mxu0
        %1139 = vmatprep.mubr.bf16.mxu0 0
        %1140 = vmatmul.mubr.bf16.gmra.mrb[0].mxu0 %v1010
        %v1141 = vpop.f32.mrb[0].mxu0
        %v1142 = vadd.f32 0.0, %v1141
        %v1143 = vpop.f32.mrb[0].mxu0
        %v1144 = vpop.f32.mrb[0].mxu0
        %v1145 = vadd.f32 0.0, %v1144
        %v1146 = vpop.f32.mrb[0].mxu0
        %1147 = vmatprep.mubr.bf16.mxu0 0
        %1148 = vmatmul.mubr.bf16.gmra.mrb[0].mxu0 %v1013
        %v1149 = vpop.f32.mrb[0].mxu0
        %v1150 = vadd.f32 0.0, %v1149
        %v1151 = vpop.f32.mrb[0].mxu0
        %v1152 = vpop.f32.mrb[0].mxu0
        %v1153 = vadd.f32 0.0, %v1152
        %v1154 = vpop.f32.mrb[0].mxu0
        %1155 = vmatprep.mubr.bf16.mxu0 0
        %1156 = vmatmul.mubr.bf16.gmra.mrb[0].mxu0 %v1016
        %v1157 = vpop.f32.mrb[0].mxu0
        %v1158 = vadd.f32 0.0, %v1157
        %v1159 = vpop.f32.mrb[0].mxu0
        %v1160 = vpop.f32.mrb[0].mxu0
        %v1161 = vadd.f32 0.0, %v1160
        %v1162 = vpop.f32.mrb[0].mxu0
        %1163 = vmatprep.mubr.bf16.mxu0 0
        %1164 = vmatmul.mubr.bf16.gmra.mrb[0].mxu0 %v1019
        %v1165 = vpop.f32.mrb[0].mxu0
        %v1166 = vadd.f32 0.0, %v1165
        %v1167 = vpop.f32.mrb[0].mxu0
        %v1168 = vpop.f32.mrb[0].mxu0
        %v1169 = vadd.f32 0.0, %v1168
        %v1170 = vpop.f32.mrb[0].mxu0
        %1171 = vmatprep.mubr.bf16.mxu0 0
        %1172 = vmatmul.mubr.bf16.gmra.mrb[0].mxu0 %v1022
        %v1173 = vpop.f32.mrb[0].mxu0
        %v1174 = vadd.f32 0.0, %v1173
        %v1175 = vpop.f32.mrb[0].mxu0
        %v1176 = vpop.f32.mrb[0].mxu0
        %v1177 = vadd.f32 0.0, %v1176
        %v1178 = vpop.f32.mrb[0].mxu0
        %1179 = vmatprep.mubr.bf16.mxu0 0
        %1180 = vmatmul.mubr.bf16.gmra.mrb[0].mxu0 %v1025
        %v1181 = vpop.f32.mrb[0].mxu0
        %v1182 = vadd.f32 0.0, %v1181
        %v1183 = vpop.f32.mrb[0].mxu0
        %v1184 = vpop.f32.mrb[0].mxu0
        %v1185 = vadd.f32 0.0, %v1184
        %v1186 = vpop.f32.mrb[0].mxu0
        %1187 = vdwg.mxu0
        %v1196 = vunpack.c.l.b16 %v890
        %v1197 = vunpack.c.l.b16 %v891
        %v1198 = vunpack.c.l.b16 %v892
        %v1199 = vunpack.c.l.b16 %v893
        %v1200 = vunpack.c.l.b16 %v894
        %v1201 = vunpack.c.l.b16 %v895
        %v1202 = vunpack.c.l.b16 %v896
        %v1203 = vunpack.c.l.b16 %v897
        %v1204 = vpack.c.b16 %v1197, %v1196
        %v1205 = vpack.c.b16 %v1199, %v1198
        %v1206 = vpack.c.b16 %v1201, %v1200
        %v1207 = vpack.c.b16 %v1203, %v1202
        %v1213 = vsel %vm753, %v874, 0
        %v1216 = vsel %vm753, %v875, 0
        %v1219 = vsel %vm753, %v876, 0
        %v1222 = vsel %vm753, %v877, 0
        %v1225 = vsel %vm753, %v878, 0
        %v1228 = vsel %vm753, %v879, 0
        %v1231 = vsel %vm753, %v880, 0
        %v1234 = vsel %vm753, %v881, 0
        %v1237 = vsel %vm753, %v882, 0
        %v1240 = vsel %vm753, %v883, 0
        %v1243 = vsel %vm753, %v884, 0
        %v1246 = vsel %vm753, %v885, 0
        %v1249 = vsel %vm753, %v886, 0
        %v1252 = vsel %vm753, %v887, 0
        %v1255 = vsel %vm753, %v888, 0
        %v1258 = vsel %vm753, %v889, 0
        %1260 = vmatprep.subr.bf16.mxu0 0
        %1261 = vmatpush1.bf16.msra.mxu0 %v1204
        %1262 = vmatprep.subr.bf16.mxu0 0
        %1263 = vmatpush1.bf16.msra.mxu0 %v1205
        %1264 = vmatprep.subr.bf16.mxu0 0
        %1265 = vmatpush1.bf16.msra.mxu0 %v1206
        %1266 = vmatprep.subr.bf16.mxu0 0
        %1267 = vmatpush1.bf16.msra.mxu0 %v1207
        %1268 = vmatprep.subr.bf16.mxu0 0
        %1269 = vmatpush1.bf16.msra.mxu0 0
        %1270 = vmatprep.subr.bf16.mxu0 0
        %1271 = vmatpush1.bf16.msra.mxu0 0
        %1272 = vmatprep.subr.bf16.mxu0 0
        %1273 = vmatpush1.bf16.msra.mxu0 0
        %1274 = vmatprep.subr.bf16.mxu0 0
        %1275 = vmatpush1.bf16.msra.mxu0 0
        %1276 = vmatprep.subr.bf16.mxu0 0
        %1277 = vmatpush1.bf16.msra.mxu0 0
        %1278 = vmatprep.subr.bf16.mxu0 0
        %1279 = vmatpush1.bf16.msra.mxu0 0
        %1280 = vmatprep.subr.bf16.mxu0 0
        %1281 = vmatpush1.bf16.msra.mxu0 0
        %1282 = vmatprep.subr.bf16.mxu0 0
        %1283 = vmatpush1.bf16.msra.mxu0 0
        %1284 = vmatprep.subr.bf16.mxu0 0
        %1285 = vmatpush1.bf16.msra.mxu0 0
        %1286 = vmatprep.subr.bf16.mxu0 0
        %1287 = vmatpush1.bf16.msra.mxu0 0
        %1288 = vmatprep.subr.bf16.mxu0 0
        %1289 = vmatpush1.bf16.msra.mxu0 0
        %1290 = vmatprep.subr.bf16.mxu0 0
        %1291 = vmatpush1.bf16.msra.mxu0 0
        %1292 = vmatprep.mubr.bf16.mxu0 0
        %1293 = vmatmul.mubr.bf16.gmra.mrb[0].mxu0 %v1213
        %v1294 = vpop.f32.mrb[0].mxu0
        %v1295 = vadd.f32 %v1062, %v1294
        %v1296 = vpop.f32.mrb[0].mxu0
        %v1297 = vpop.f32.mrb[0].mxu0
        %v1298 = vadd.f32 %v1065, %v1297
        %v1299 = vpop.f32.mrb[0].mxu0
        %1300 = vmatprep.mubr.bf16.mxu0 0
        %1301 = vmatmul.mubr.bf16.gmra.mrb[0].mxu0 %v1216
        %v1302 = vpop.f32.mrb[0].mxu0
        %v1303 = vadd.f32 %v1070, %v1302
        %v1304 = vpop.f32.mrb[0].mxu0
        %v1305 = vpop.f32.mrb[0].mxu0
        %v1306 = vadd.f32 %v1073, %v1305
        %v1307 = vpop.f32.mrb[0].mxu0
        %1308 = vmatprep.mubr.bf16.mxu0 0
        %1309 = vmatmul.mubr.bf16.gmra.mrb[0].mxu0 %v1219
        %v1310 = vpop.f32.mrb[0].mxu0
        %v1311 = vadd.f32 %v1078, %v1310
        %v1312 = vpop.f32.mrb[0].mxu0
        %v1313 = vpop.f32.mrb[0].mxu0
        %v1314 = vadd.f32 %v1081, %v1313
        %v1315 = vpop.f32.mrb[0].mxu0
        %1316 = vmatprep.mubr.bf16.mxu0 0
        %1317 = vmatmul.mubr.bf16.gmra.mrb[0].mxu0 %v1222
        %v1318 = vpop.f32.mrb[0].mxu0
        %v1319 = vadd.f32 %v1086, %v1318
        %v1320 = vpop.f32.mrb[0].mxu0
        %v1321 = vpop.f32.mrb[0].mxu0
        %v1322 = vadd.f32 %v1089, %v1321
        %v1323 = vpop.f32.mrb[0].mxu0
        %1324 = vmatprep.mubr.bf16.mxu0 0
        %1325 = vmatmul.mubr.bf16.gmra.mrb[0].mxu0 %v1225
        %v1326 = vpop.f32.mrb[0].mxu0
        %v1327 = vadd.f32 %v1094, %v1326
        %v1328 = vpop.f32.mrb[0].mxu0
        %v1329 = vpop.f32.mrb[0].mxu0
        %v1330 = vadd.f32 %v1097, %v1329
        %v1331 = vpop.f32.mrb[0].mxu0
        %1332 = vmatprep.mubr.bf16.mxu0 0
        %1333 = vmatmul.mubr.bf16.gmra.mrb[0].mxu0 %v1228
        %v1334 = vpop.f32.mrb[0].mxu0
        %v1335 = vadd.f32 %v1102, %v1334
        %v1336 = vpop.f32.mrb[0].mxu0
        %v1337 = vpop.f32.mrb[0].mxu0
        %v1338 = vadd.f32 %v1105, %v1337
        %v1339 = vpop.f32.mrb[0].mxu0
        %1340 = vmatprep.mubr.bf16.mxu0 0
        %1341 = vmatmul.mubr.bf16.gmra.mrb[0].mxu0 %v1231
        %v1342 = vpop.f32.mrb[0].mxu0
        %v1343 = vadd.f32 %v1110, %v1342
        %v1344 = vpop.f32.mrb[0].mxu0
        %v1345 = vpop.f32.mrb[0].mxu0
        %v1346 = vadd.f32 %v1113, %v1345
        %v1347 = vpop.f32.mrb[0].mxu0
        %1348 = vmatprep.mubr.bf16.mxu0 0
        %1349 = vmatmul.mubr.bf16.gmra.mrb[0].mxu0 %v1234
        %v1350 = vpop.f32.mrb[0].mxu0
        %v1351 = vadd.f32 %v1118, %v1350
        %v1352 = vpop.f32.mrb[0].mxu0
        %v1353 = vpop.f32.mrb[0].mxu0
        %v1354 = vadd.f32 %v1121, %v1353
        %v1355 = vpop.f32.mrb[0].mxu0
        %1356 = vmatprep.mubr.bf16.mxu0 0
        %1357 = vmatmul.mubr.bf16.gmra.mrb[0].mxu0 %v1237
        %v1358 = vpop.f32.mrb[0].mxu0
        %v1359 = vadd.f32 %v1126, %v1358
        %v1360 = vpop.f32.mrb[0].mxu0
        %v1361 = vpop.f32.mrb[0].mxu0
        %v1362 = vadd.f32 %v1129, %v1361
        %v1363 = vpop.f32.mrb[0].mxu0
        %1364 = vmatprep.mubr.bf16.mxu0 0
        %1365 = vmatmul.mubr.bf16.gmra.mrb[0].mxu0 %v1240
        %v1366 = vpop.f32.mrb[0].mxu0
        %v1367 = vadd.f32 %v1134, %v1366
        %v1368 = vpop.f32.mrb[0].mxu0
        %v1369 = vpop.f32.mrb[0].mxu0
        %v1370 = vadd.f32 %v1137, %v1369
        %v1371 = vpop.f32.mrb[0].mxu0
        %1372 = vmatprep.mubr.bf16.mxu0 0
        %1373 = vmatmul.mubr.bf16.gmra.mrb[0].mxu0 %v1243
        %v1374 = vpop.f32.mrb[0].mxu0
        %v1375 = vadd.f32 %v1142, %v1374
        %v1376 = vpop.f32.mrb[0].mxu0
        %v1377 = vpop.f32.mrb[0].mxu0
        %v1378 = vadd.f32 %v1145, %v1377
        %v1379 = vpop.f32.mrb[0].mxu0
        %1380 = vmatprep.mubr.bf16.mxu0 0
        %1381 = vmatmul.mubr.bf16.gmra.mrb[0].mxu0 %v1246
        %v1382 = vpop.f32.mrb[0].mxu0
        %v1383 = vadd.f32 %v1150, %v1382
        %v1384 = vpop.f32.mrb[0].mxu0
        %v1385 = vpop.f32.mrb[0].mxu0
        %v1386 = vadd.f32 %v1153, %v1385
        %v1387 = vpop.f32.mrb[0].mxu0
        %1388 = vmatprep.mubr.bf16.mxu0 0
        %1389 = vmatmul.mubr.bf16.gmra.mrb[0].mxu0 %v1249
        %v1390 = vpop.f32.mrb[0].mxu0
        %v1391 = vadd.f32 %v1158, %v1390
        %v1392 = vpop.f32.mrb[0].mxu0
        %v1393 = vpop.f32.mrb[0].mxu0
        %v1394 = vadd.f32 %v1161, %v1393
        %v1395 = vpop.f32.mrb[0].mxu0
        %1396 = vmatprep.mubr.bf16.mxu0 0
        %1397 = vmatmul.mubr.bf16.gmra.mrb[0].mxu0 %v1252
        %v1398 = vpop.f32.mrb[0].mxu0
        %v1399 = vadd.f32 %v1166, %v1398
        %v1400 = vpop.f32.mrb[0].mxu0
        %v1401 = vpop.f32.mrb[0].mxu0
        %v1402 = vadd.f32 %v1169, %v1401
        %v1403 = vpop.f32.mrb[0].mxu0
        %1404 = vmatprep.mubr.bf16.mxu0 0
        %1405 = vmatmul.mubr.bf16.gmra.mrb[0].mxu0 %v1255
        %v1406 = vpop.f32.mrb[0].mxu0
        %v1407 = vadd.f32 %v1174, %v1406
        %v1408 = vpop.f32.mrb[0].mxu0
        %v1409 = vpop.f32.mrb[0].mxu0
        %v1410 = vadd.f32 %v1177, %v1409
        %v1411 = vpop.f32.mrb[0].mxu0
        %1412 = vmatprep.mubr.bf16.mxu0 0
        %1413 = vmatmul.mubr.bf16.gmra.mrb[0].mxu0 %v1258
        %v1414 = vpop.f32.mrb[0].mxu0
        %v1415 = vadd.f32 %v1182, %v1414
        %v1416 = vpop.f32.mrb[0].mxu0
        %v1417 = vpop.f32.mrb[0].mxu0
        %v1418 = vadd.f32 %v1185, %v1417
        %v1419 = vpop.f32.mrb[0].mxu0
        %1420 = vdwg.mxu0
        %v1421 = vld [vmem:[#allocation2 + $0x2] sm:$0xff]
        %v1422 = vld [vmem:[#allocation2 + $0xa] sm:$0xff]
        %v1423 = vld [vmem:[#allocation2 + $0x1a] sm:$0xff]
        %v1424 = vld [vmem:[#allocation2 + $0x22] sm:$0xff]
        %v1425 = vld [vmem:[#allocation2 + $0x32] sm:$0xff]
        %v1426 = vld [vmem:[#allocation2 + $0x3a] sm:$0xff]
        %v1427 = vld [vmem:[#allocation2 + $0x4a] sm:$0xff]
        %v1428 = vld [vmem:[#allocation2 + $0x52] sm:$0xff]
        %v1429 = vld [vmem:[#allocation2 + $0x62] sm:$0xff]
        %v1430 = vld [vmem:[#allocation2 + $0x6a] sm:$0xff]
        %v1431 = vld [vmem:[#allocation2 + $0x7a] sm:$0xff]
        %v1432 = vld [vmem:[#allocation2 + $0x82] sm:$0xff]
        %v1433 = vld [vmem:[#allocation2 + $0x92] sm:$0xff]
        %v1434 = vld [vmem:[#allocation2 + $0x9a] sm:$0xff]
        %v1435 = vld [vmem:[#allocation2 + $0xaa] sm:$0xff]
        %v1436 = vld [vmem:[#allocation2 + $0xb2] sm:$0xff]
        %v1437 = vld [vmem:[#allocation2 + $0xc2] sm:$0xff]
        %v1438 = vld [vmem:[#allocation2 + $0xca] sm:$0xff]
        %v1439 = vld [vmem:[#allocation2 + $0xda] sm:$0xff]
        %v1440 = vld [vmem:[#allocation2 + $0xe2] sm:$0xff]
        %v1441 = vld [vmem:[#allocation2 + $0xf2] sm:$0xff]
        %v1442 = vld [vmem:[#allocation2 + $0xfa] sm:$0xff]
        %v1443 = vld [vmem:[#allocation2 + $0x10a] sm:$0xff]
        %v1444 = vld [vmem:[#allocation2 + $0x112] sm:$0xff]
        %v1445 = vld [vmem:[#allocation2 + $0x122] sm:$0xff]
        %v1446 = vld [vmem:[#allocation2 + $0x12a] sm:$0xff]
        %v1447 = vld [vmem:[#allocation2 + $0x13a] sm:$0xff]
        %v1448 = vld [vmem:[#allocation2 + $0x142] sm:$0xff]
        %v1449 = vld [vmem:[#allocation2 + $0x152] sm:$0xff]
        %v1450 = vld [vmem:[#allocation2 + $0x15a] sm:$0xff]
        %v1451 = vld [vmem:[#allocation2 + $0x16a] sm:$0xff]
        %v1452 = vld [vmem:[#allocation2 + $0x172] sm:$0xff]
        %v1453 = vpack.c.bf16 %v1422, %v1421
        %v1454 = vpack.c.bf16 %v1424, %v1423
        %v1455 = vpack.c.bf16 %v1426, %v1425
        %v1456 = vpack.c.bf16 %v1428, %v1427
        %v1457 = vpack.c.bf16 %v1430, %v1429
        %v1458 = vpack.c.bf16 %v1432, %v1431
        %v1459 = vpack.c.bf16 %v1434, %v1433
        %v1460 = vpack.c.bf16 %v1436, %v1435
        %v1461 = vpack.c.bf16 %v1438, %v1437
        %v1462 = vpack.c.bf16 %v1440, %v1439
        %v1463 = vpack.c.bf16 %v1442, %v1441
        %v1464 = vpack.c.bf16 %v1444, %v1443
        %v1465 = vpack.c.bf16 %v1446, %v1445
        %v1466 = vpack.c.bf16 %v1448, %v1447
        %v1467 = vpack.c.bf16 %v1450, %v1449
        %v1468 = vpack.c.bf16 %v1452, %v1451
        %s1469 = scalar_lea.vmem %s3, 64
        %v1470 = vld [vmem:[%s1469] sm:$0xf]
        %v1471 = vld [vmem:[%s1469 + $0x4] sm:$0xf]
        %v1472 = vld [vmem:[%s1469 + $0x8] sm:$0xf]
        %v1473 = vld [vmem:[%s1469 + $0xc] sm:$0xf]
        %v1474 = vld [vmem:[%s1469 + $0x10] sm:$0xf]
        %v1475 = vld [vmem:[%s1469 + $0x14] sm:$0xf]
        %v1476 = vld [vmem:[%s1469 + $0x18] sm:$0xf]
        %v1477 = vld [vmem:[%s1469 + $0x1c] sm:$0xf]
        %v1486 = vunpack.c.l.b16 %v1470
        %v1487 = vunpack.c.l.b16 %v1471
        %v1488 = vunpack.c.l.b16 %v1472
        %v1489 = vunpack.c.l.b16 %v1473
        %v1490 = vunpack.c.l.b16 %v1474
        %v1491 = vunpack.c.l.b16 %v1475
        %v1492 = vunpack.c.l.b16 %v1476
        %v1493 = vunpack.c.l.b16 %v1477
        %v1494 = vpack.c.b16 %v1487, %v1486
        %v1495 = vpack.c.b16 %v1489, %v1488
        %v1496 = vpack.c.b16 %v1491, %v1490
        %v1497 = vpack.c.b16 %v1493, %v1492
        %v1503 = vsel %vm753, %v1453, 0
        %v1506 = vsel %vm753, %v1454, 0
        %v1509 = vsel %vm753, %v1455, 0
        %v1512 = vsel %vm753, %v1456, 0
        %v1515 = vsel %vm753, %v1457, 0
        %v1518 = vsel %vm753, %v1458, 0
        %v1521 = vsel %vm753, %v1459, 0
        %v1524 = vsel %vm753, %v1460, 0
        %v1527 = vsel %vm753, %v1461, 0
        %v1530 = vsel %vm753, %v1462, 0
        %v1533 = vsel %vm753, %v1463, 0
        %v1536 = vsel %vm753, %v1464, 0
        %v1539 = vsel %vm753, %v1465, 0
        %v1542 = vsel %vm753, %v1466, 0
        %v1545 = vsel %vm753, %v1467, 0
        %v1548 = vsel %vm753, %v1468, 0
        %1550 = vmatprep.subr.bf16.mxu0 0
        %1551 = vmatpush1.bf16.msra.mxu0 %v1494
        %1552 = vmatprep.subr.bf16.mxu0 0
        %1553 = vmatpush1.bf16.msra.mxu0 %v1495
        %1554 = vmatprep.subr.bf16.mxu0 0
        %1555 = vmatpush1.bf16.msra.mxu0 %v1496
        %1556 = vmatprep.subr.bf16.mxu0 0
        %1557 = vmatpush1.bf16.msra.mxu0 %v1497
        %1558 = vmatprep.subr.bf16.mxu0 0
        %1559 = vmatpush1.bf16.msra.mxu0 0
        %1560 = vmatprep.subr.bf16.mxu0 0
        %1561 = vmatpush1.bf16.msra.mxu0 0
        %1562 = vmatprep.subr.bf16.mxu0 0
        %1563 = vmatpush1.bf16.msra.mxu0 0
        %1564 = vmatprep.subr.bf16.mxu0 0
        %1565 = vmatpush1.bf16.msra.mxu0 0
        %1566 = vmatprep.subr.bf16.mxu0 0
        %1567 = vmatpush1.bf16.msra.mxu0 0
        %1568 = vmatprep.subr.bf16.mxu0 0
        %1569 = vmatpush1.bf16.msra.mxu0 0
        %1570 = vmatprep.subr.bf16.mxu0 0
        %1571 = vmatpush1.bf16.msra.mxu0 0
        %1572 = vmatprep.subr.bf16.mxu0 0
        %1573 = vmatpush1.bf16.msra.mxu0 0
        %1574 = vmatprep.subr.bf16.mxu0 0
        %1575 = vmatpush1.bf16.msra.mxu0 0
        %1576 = vmatprep.subr.bf16.mxu0 0
        %1577 = vmatpush1.bf16.msra.mxu0 0
        %1578 = vmatprep.subr.bf16.mxu0 0
        %1579 = vmatpush1.bf16.msra.mxu0 0
        %1580 = vmatprep.subr.bf16.mxu0 0
        %1581 = vmatpush1.bf16.msra.mxu0 0
        %1582 = vmatprep.mubr.bf16.mxu0 0
        %1583 = vmatmul.mubr.bf16.gmra.mrb[0].mxu0 %v1503
        %v1584 = vpop.f32.mrb[0].mxu0
        %v1585 = vadd.f32 0.0, %v1584
        %v1586 = vpop.f32.mrb[0].mxu0
        %v1587 = vpop.f32.mrb[0].mxu0
        %v1588 = vadd.f32 0.0, %v1587
        %v1589 = vpop.f32.mrb[0].mxu0
        %1590 = vmatprep.mubr.bf16.mxu0 0
        %1591 = vmatmul.mubr.bf16.gmra.mrb[0].mxu0 %v1506
        %v1592 = vpop.f32.mrb[0].mxu0
        %v1593 = vadd.f32 0.0, %v1592
        %v1594 = vpop.f32.mrb[0].mxu0
        %v1595 = vpop.f32.mrb[0].mxu0
        %v1596 = vadd.f32 0.0, %v1595
        %v1597 = vpop.f32.mrb[0].mxu0
        %1598 = vmatprep.mubr.bf16.mxu0 0
        %1599 = vmatmul.mubr.bf16.gmra.mrb[0].mxu0 %v1509
        %v1600 = vpop.f32.mrb[0].mxu0
        %v1601 = vadd.f32 0.0, %v1600
        %v1602 = vpop.f32.mrb[0].mxu0
        %v1603 = vpop.f32.mrb[0].mxu0
        %v1604 = vadd.f32 0.0, %v1603
        %v1605 = vpop.f32.mrb[0].mxu0
        %1606 = vmatprep.mubr.bf16.mxu0 0
        %1607 = vmatmul.mubr.bf16.gmra.mrb[0].mxu0 %v1512
        %v1608 = vpop.f32.mrb[0].mxu0
        %v1609 = vadd.f32 0.0, %v1608
        %v1610 = vpop.f32.mrb[0].mxu0
        %v1611 = vpop.f32.mrb[0].mxu0
        %v1612 = vadd.f32 0.0, %v1611
        %v1613 = vpop.f32.mrb[0].mxu0
        %1614 = vmatprep.mubr.bf16.mxu0 0
        %1615 = vmatmul.mubr.bf16.gmra.mrb[0].mxu0 %v1515
        %v1616 = vpop.f32.mrb[0].mxu0
        %v1617 = vadd.f32 0.0, %v1616
        %v1618 = vpop.f32.mrb[0].mxu0
        %v1619 = vpop.f32.mrb[0].mxu0
        %v1620 = vadd.f32 0.0, %v1619
        %v1621 = vpop.f32.mrb[0].mxu0
        %1622 = vmatprep.mubr.bf16.mxu0 0
        %1623 = vmatmul.mubr.bf16.gmra.mrb[0].mxu0 %v1518
        %v1624 = vpop.f32.mrb[0].mxu0
        %v1625 = vadd.f32 0.0, %v1624
        %v1626 = vpop.f32.mrb[0].mxu0
        %v1627 = vpop.f32.mrb[0].mxu0
        %v1628 = vadd.f32 0.0, %v1627
        %v1629 = vpop.f32.mrb[0].mxu0
        %1630 = vmatprep.mubr.bf16.mxu0 0
        %1631 = vmatmul.mubr.bf16.gmra.mrb[0].mxu0 %v1521
        %v1632 = vpop.f32.mrb[0].mxu0
        %v1633 = vadd.f32 0.0, %v1632
        %v1634 = vpop.f32.mrb[0].mxu0
        %v1635 = vpop.f32.mrb[0].mxu0
        %v1636 = vadd.f32 0.0, %v1635
        %v1637 = vpop.f32.mrb[0].mxu0
        %1638 = vmatprep.mubr.bf16.mxu0 0
        %1639 = vmatmul.mubr.bf16.gmra.mrb[0].mxu0 %v1524
        %v1640 = vpop.f32.mrb[0].mxu0
        %v1641 = vadd.f32 0.0, %v1640
        %v1642 = vpop.f32.mrb[0].mxu0
        %v1643 = vpop.f32.mrb[0].mxu0
        %v1644 = vadd.f32 0.0, %v1643
        %v1645 = vpop.f32.mrb[0].mxu0
        %1646 = vmatprep.mubr.bf16.mxu0 0
        %1647 = vmatmul.mubr.bf16.gmra.mrb[0].mxu0 %v1527
        %v1648 = vpop.f32.mrb[0].mxu0
        %v1649 = vadd.f32 0.0, %v1648
        %v1650 = vpop.f32.mrb[0].mxu0
        %v1651 = vpop.f32.mrb[0].mxu0
        %v1652 = vadd.f32 0.0, %v1651
        %v1653 = vpop.f32.mrb[0].mxu0
        %1654 = vmatprep.mubr.bf16.mxu0 0
        %1655 = vmatmul.mubr.bf16.gmra.mrb[0].mxu0 %v1530
        %v1656 = vpop.f32.mrb[0].mxu0
        %v1657 = vadd.f32 0.0, %v1656
        %v1658 = vpop.f32.mrb[0].mxu0
        %v1659 = vpop.f32.mrb[0].mxu0
        %v1660 = vadd.f32 0.0, %v1659
        %v1661 = vpop.f32.mrb[0].mxu0
        %1662 = vmatprep.mubr.bf16.mxu0 0
        %1663 = vmatmul.mubr.bf16.gmra.mrb[0].mxu0 %v1533
        %v1664 = vpop.f32.mrb[0].mxu0
        %v1665 = vadd.f32 0.0, %v1664
        %v1666 = vpop.f32.mrb[0].mxu0
        %v1667 = vpop.f32.mrb[0].mxu0
        %v1668 = vadd.f32 0.0, %v1667
        %v1669 = vpop.f32.mrb[0].mxu0
        %1670 = vmatprep.mubr.bf16.mxu0 0
        %1671 = vmatmul.mubr.bf16.gmra.mrb[0].mxu0 %v1536
        %v1672 = vpop.f32.mrb[0].mxu0
        %v1673 = vadd.f32 0.0, %v1672
        %v1674 = vpop.f32.mrb[0].mxu0
        %v1675 = vpop.f32.mrb[0].mxu0
        %v1676 = vadd.f32 0.0, %v1675
        %v1677 = vpop.f32.mrb[0].mxu0
        %1678 = vmatprep.mubr.bf16.mxu0 0
        %1679 = vmatmul.mubr.bf16.gmra.mrb[0].mxu0 %v1539
        %v1680 = vpop.f32.mrb[0].mxu0
        %v1681 = vadd.f32 0.0, %v1680
        %v1682 = vpop.f32.mrb[0].mxu0
        %v1683 = vpop.f32.mrb[0].mxu0
        %v1684 = vadd.f32 0.0, %v1683
        %v1685 = vpop.f32.mrb[0].mxu0
        %1686 = vmatprep.mubr.bf16.mxu0 0
        %1687 = vmatmul.mubr.bf16.gmra.mrb[0].mxu0 %v1542
        %v1688 = vpop.f32.mrb[0].mxu0
        %v1689 = vadd.f32 0.0, %v1688
        %v1690 = vpop.f32.mrb[0].mxu0
        %v1691 = vpop.f32.mrb[0].mxu0
        %v1692 = vadd.f32 0.0, %v1691
        %v1693 = vpop.f32.mrb[0].mxu0
        %1694 = vmatprep.mubr.bf16.mxu0 0
        %1695 = vmatmul.mubr.bf16.gmra.mrb[0].mxu0 %v1545
        %v1696 = vpop.f32.mrb[0].mxu0
        %v1697 = vadd.f32 0.0, %v1696
        %v1698 = vpop.f32.mrb[0].mxu0
        %v1699 = vpop.f32.mrb[0].mxu0
        %v1700 = vadd.f32 0.0, %v1699
        %v1701 = vpop.f32.mrb[0].mxu0
        %1702 = vmatprep.mubr.bf16.mxu0 0
        %1703 = vmatmul.mubr.bf16.gmra.mrb[0].mxu0 %v1548
        %v1704 = vpop.f32.mrb[0].mxu0
        %v1705 = vadd.f32 0.0, %v1704
        %v1706 = vpop.f32.mrb[0].mxu0
        %v1707 = vpop.f32.mrb[0].mxu0
        %v1708 = vadd.f32 0.0, %v1707
        %v1709 = vpop.f32.mrb[0].mxu0
        %1710 = vdwg.mxu0
        %v1711 = vadd.f32 %v1295, %v1585
        %v1712 = vadd.f32 %v1298, %v1588
        %v1713 = vadd.f32 %v1303, %v1593
        %v1714 = vadd.f32 %v1306, %v1596
        %v1715 = vadd.f32 %v1311, %v1601
        %v1716 = vadd.f32 %v1314, %v1604
        %v1717 = vadd.f32 %v1319, %v1609
        %v1718 = vadd.f32 %v1322, %v1612
        %v1719 = vadd.f32 %v1327, %v1617
        %v1720 = vadd.f32 %v1330, %v1620
        %v1721 = vadd.f32 %v1335, %v1625
        %v1722 = vadd.f32 %v1338, %v1628
        %v1723 = vadd.f32 %v1343, %v1633
        %v1724 = vadd.f32 %v1346, %v1636
        %v1725 = vadd.f32 %v1351, %v1641
        %v1726 = vadd.f32 %v1354, %v1644
        %v1727 = vadd.f32 %v1359, %v1649
        %v1728 = vadd.f32 %v1362, %v1652
        %v1729 = vadd.f32 %v1367, %v1657
        %v1730 = vadd.f32 %v1370, %v1660
        %v1731 = vadd.f32 %v1375, %v1665
        %v1732 = vadd.f32 %v1378, %v1668
        %v1733 = vadd.f32 %v1383, %v1673
        %v1734 = vadd.f32 %v1386, %v1676
        %v1735 = vadd.f32 %v1391, %v1681
        %v1736 = vadd.f32 %v1394, %v1684
        %v1737 = vadd.f32 %v1399, %v1689
        %v1738 = vadd.f32 %v1402, %v1692
        %v1739 = vadd.f32 %v1407, %v1697
        %v1740 = vadd.f32 %v1410, %v1700
        %v1741 = vadd.f32 %v1415, %v1705
        %v1742 = vadd.f32 %v1418, %v1708
        %v1743 = vld [vmem:[%s809] sm:$0xff]
        %v1744 = vld [vmem:[%s809 + $0x8] sm:$0xff]
        %v1745 = vld [vmem:[%s809 + $0x18] sm:$0xff]
        %v1746 = vld [vmem:[%s809 + $0x20] sm:$0xff]
        %v1747 = vld [vmem:[%s809 + $0x30] sm:$0xff]
        %v1748 = vld [vmem:[%s809 + $0x38] sm:$0xff]
        %v1749 = vld [vmem:[%s809 + $0x48] sm:$0xff]
        %v1750 = vld [vmem:[%s809 + $0x50] sm:$0xff]
        %v1751 = vld [vmem:[%s809 + $0x60] sm:$0xff]
        %v1752 = vld [vmem:[%s809 + $0x68] sm:$0xff]
        %v1753 = vld [vmem:[%s809 + $0x78] sm:$0xff]
        %v1754 = vld [vmem:[%s809 + $0x80] sm:$0xff]
        %v1755 = vld [vmem:[%s809 + $0x90] sm:$0xff]
        %v1756 = vld [vmem:[%s809 + $0x98] sm:$0xff]
        %v1757 = vld [vmem:[%s809 + $0xa8] sm:$0xff]
        %v1758 = vld [vmem:[%s809 + $0xb0] sm:$0xff]
        %v1759 = vld [vmem:[%s809 + $0xc0] sm:$0xff]
        %v1760 = vld [vmem:[%s809 + $0xc8] sm:$0xff]
        %v1761 = vld [vmem:[%s809 + $0xd8] sm:$0xff]
        %v1762 = vld [vmem:[%s809 + $0xe0] sm:$0xff]
        %v1763 = vld [vmem:[%s809 + $0xf0] sm:$0xff]
        %v1764 = vld [vmem:[%s809 + $0xf8] sm:$0xff]
        %v1765 = vld [vmem:[%s809 + $0x108] sm:$0xff]
        %v1766 = vld [vmem:[%s809 + $0x110] sm:$0xff]
        %v1767 = vld [vmem:[%s809 + $0x120] sm:$0xff]
        %v1768 = vld [vmem:[%s809 + $0x128] sm:$0xff]
        %v1769 = vld [vmem:[%s809 + $0x138] sm:$0xff]
        %v1770 = vld [vmem:[%s809 + $0x140] sm:$0xff]
        %v1771 = vld [vmem:[%s809 + $0x150] sm:$0xff]
        %v1772 = vld [vmem:[%s809 + $0x158] sm:$0xff]
        %v1773 = vld [vmem:[%s809 + $0x168] sm:$0xff]
        %v1774 = vld [vmem:[%s809 + $0x170] sm:$0xff]
        %v1775 = vpack.c.bf16 %v1744, %v1743
        %v1776 = vpack.c.bf16 %v1746, %v1745
        %v1777 = vpack.c.bf16 %v1748, %v1747
        %v1778 = vpack.c.bf16 %v1750, %v1749
        %v1779 = vpack.c.bf16 %v1752, %v1751
        %v1780 = vpack.c.bf16 %v1754, %v1753
        %v1781 = vpack.c.bf16 %v1756, %v1755
        %v1782 = vpack.c.bf16 %v1758, %v1757
        %v1783 = vpack.c.bf16 %v1760, %v1759
        %v1784 = vpack.c.bf16 %v1762, %v1761
        %v1785 = vpack.c.bf16 %v1764, %v1763
        %v1786 = vpack.c.bf16 %v1766, %v1765
        %v1787 = vpack.c.bf16 %v1768, %v1767
        %v1788 = vpack.c.bf16 %v1770, %v1769
        %v1789 = vpack.c.bf16 %v1772, %v1771
        %v1790 = vpack.c.bf16 %v1774, %v1773
        %s1791 = scalar_lea.vmem %s3, 96
        %v1792 = vld [vmem:[%s1791] sm:$0xf]
        %v1793 = vld [vmem:[%s1791 + $0x4] sm:$0xf]
        %v1794 = vld [vmem:[%s1791 + $0x8] sm:$0xf]
        %v1795 = vld [vmem:[%s1791 + $0xc] sm:$0xf]
        %v1796 = vld [vmem:[%s1791 + $0x10] sm:$0xf]
        %v1797 = vld [vmem:[%s1791 + $0x14] sm:$0xf]
        %v1798 = vld [vmem:[%s1791 + $0x18] sm:$0xf]
        %v1799 = vld [vmem:[%s1791 + $0x1c] sm:$0xf]
        %v1808 = vunpack.c.l.b16 %v1792
        %v1809 = vunpack.c.l.b16 %v1793
        %v1810 = vunpack.c.l.b16 %v1794
        %v1811 = vunpack.c.l.b16 %v1795
        %v1812 = vunpack.c.l.b16 %v1796
        %v1813 = vunpack.c.l.b16 %v1797
        %v1814 = vunpack.c.l.b16 %v1798
        %v1815 = vunpack.c.l.b16 %v1799
        %v1816 = vpack.c.b16 %v1809, %v1808
        %v1817 = vpack.c.b16 %v1811, %v1810
        %v1818 = vpack.c.b16 %v1813, %v1812
        %v1819 = vpack.c.b16 %v1815, %v1814
        %v1825 = vsel %vm753, %v1775, 0
        %v1828 = vsel %vm753, %v1776, 0
        %v1831 = vsel %vm753, %v1777, 0
        %v1834 = vsel %vm753, %v1778, 0
        %v1837 = vsel %vm753, %v1779, 0
        %v1840 = vsel %vm753, %v1780, 0
        %v1843 = vsel %vm753, %v1781, 0
        %v1846 = vsel %vm753, %v1782, 0
        %v1849 = vsel %vm753, %v1783, 0
        %v1852 = vsel %vm753, %v1784, 0
        %v1855 = vsel %vm753, %v1785, 0
        %v1858 = vsel %vm753, %v1786, 0
        %v1861 = vsel %vm753, %v1787, 0
        %v1864 = vsel %vm753, %v1788, 0
        %v1867 = vsel %vm753, %v1789, 0
        %v1870 = vsel %vm753, %v1790, 0
        %1872 = vmatprep.subr.bf16.mxu0 0
        %1873 = vmatpush1.bf16.msra.mxu0 %v1816
        %1874 = vmatprep.subr.bf16.mxu0 0
        %1875 = vmatpush1.bf16.msra.mxu0 %v1817
        %1876 = vmatprep.subr.bf16.mxu0 0
        %1877 = vmatpush1.bf16.msra.mxu0 %v1818
        %1878 = vmatprep.subr.bf16.mxu0 0
        %1879 = vmatpush1.bf16.msra.mxu0 %v1819
        %1880 = vmatprep.subr.bf16.mxu0 0
        %1881 = vmatpush1.bf16.msra.mxu0 0
        %1882 = vmatprep.subr.bf16.mxu0 0
        %1883 = vmatpush1.bf16.msra.mxu0 0
        %1884 = vmatprep.subr.bf16.mxu0 0
        %1885 = vmatpush1.bf16.msra.mxu0 0
        %1886 = vmatprep.subr.bf16.mxu0 0
        %1887 = vmatpush1.bf16.msra.mxu0 0
        %1888 = vmatprep.subr.bf16.mxu0 0
        %1889 = vmatpush1.bf16.msra.mxu0 0
        %1890 = vmatprep.subr.bf16.mxu0 0
        %1891 = vmatpush1.bf16.msra.mxu0 0
        %1892 = vmatprep.subr.bf16.mxu0 0
        %1893 = vmatpush1.bf16.msra.mxu0 0
        %1894 = vmatprep.subr.bf16.mxu0 0
        %1895 = vmatpush1.bf16.msra.mxu0 0
        %1896 = vmatprep.subr.bf16.mxu0 0
        %1897 = vmatpush1.bf16.msra.mxu0 0
        %1898 = vmatprep.subr.bf16.mxu0 0
        %1899 = vmatpush1.bf16.msra.mxu0 0
        %1900 = vmatprep.subr.bf16.mxu0 0
        %1901 = vmatpush1.bf16.msra.mxu0 0
        %1902 = vmatprep.subr.bf16.mxu0 0
        %1903 = vmatpush1.bf16.msra.mxu0 0
        %1904 = vmatprep.mubr.bf16.mxu0 0
        %1905 = vmatmul.mubr.bf16.gmra.mrb[0].mxu0 %v1825
        %v1906 = vpop.f32.mrb[0].mxu0
        %v1907 = vadd.f32 0.0, %v1906
        %v1908 = vpop.f32.mrb[0].mxu0
        %v1909 = vpop.f32.mrb[0].mxu0
        %v1910 = vadd.f32 0.0, %v1909
        %v1911 = vpop.f32.mrb[0].mxu0
        %1912 = vmatprep.mubr.bf16.mxu0 0
        %1913 = vmatmul.mubr.bf16.gmra.mrb[0].mxu0 %v1828
        %v1914 = vpop.f32.mrb[0].mxu0
        %v1915 = vadd.f32 0.0, %v1914
        %v1916 = vpop.f32.mrb[0].mxu0
        %v1917 = vpop.f32.mrb[0].mxu0
        %v1918 = vadd.f32 0.0, %v1917
        %v1919 = vpop.f32.mrb[0].mxu0
        %1920 = vmatprep.mubr.bf16.mxu0 0
        %1921 = vmatmul.mubr.bf16.gmra.mrb[0].mxu0 %v1831
        %v1922 = vpop.f32.mrb[0].mxu0
        %v1923 = vadd.f32 0.0, %v1922
        %v1924 = vpop.f32.mrb[0].mxu0
        %v1925 = vpop.f32.mrb[0].mxu0
        %v1926 = vadd.f32 0.0, %v1925
        %v1927 = vpop.f32.mrb[0].mxu0
        %1928 = vmatprep.mubr.bf16.mxu0 0
        %1929 = vmatmul.mubr.bf16.gmra.mrb[0].mxu0 %v1834
        %v1930 = vpop.f32.mrb[0].mxu0
        %v1931 = vadd.f32 0.0, %v1930
        %v1932 = vpop.f32.mrb[0].mxu0
        %v1933 = vpop.f32.mrb[0].mxu0
        %v1934 = vadd.f32 0.0, %v1933
        %v1935 = vpop.f32.mrb[0].mxu0
        %1936 = vmatprep.mubr.bf16.mxu0 0
        %1937 = vmatmul.mubr.bf16.gmra.mrb[0].mxu0 %v1837
        %v1938 = vpop.f32.mrb[0].mxu0
        %v1939 = vadd.f32 0.0, %v1938
        %v1940 = vpop.f32.mrb[0].mxu0
        %v1941 = vpop.f32.mrb[0].mxu0
        %v1942 = vadd.f32 0.0, %v1941
        %v1943 = vpop.f32.mrb[0].mxu0
        %1944 = vmatprep.mubr.bf16.mxu0 0
        %1945 = vmatmul.mubr.bf16.gmra.mrb[0].mxu0 %v1840
        %v1946 = vpop.f32.mrb[0].mxu0
        %v1947 = vadd.f32 0.0, %v1946
        %v1948 = vpop.f32.mrb[0].mxu0
        %v1949 = vpop.f32.mrb[0].mxu0
        %v1950 = vadd.f32 0.0, %v1949
        %v1951 = vpop.f32.mrb[0].mxu0
        %1952 = vmatprep.mubr.bf16.mxu0 0
        %1953 = vmatmul.mubr.bf16.gmra.mrb[0].mxu0 %v1843
        %v1954 = vpop.f32.mrb[0].mxu0
        %v1955 = vadd.f32 0.0, %v1954
        %v1956 = vpop.f32.mrb[0].mxu0
        %v1957 = vpop.f32.mrb[0].mxu0
        %v1958 = vadd.f32 0.0, %v1957
        %v1959 = vpop.f32.mrb[0].mxu0
        %1960 = vmatprep.mubr.bf16.mxu0 0
        %1961 = vmatmul.mubr.bf16.gmra.mrb[0].mxu0 %v1846
        %v1962 = vpop.f32.mrb[0].mxu0
        %v1963 = vadd.f32 0.0, %v1962
        %v1964 = vpop.f32.mrb[0].mxu0
        %v1965 = vpop.f32.mrb[0].mxu0
        %v1966 = vadd.f32 0.0, %v1965
        %v1967 = vpop.f32.mrb[0].mxu0
        %1968 = vmatprep.mubr.bf16.mxu0 0
        %1969 = vmatmul.mubr.bf16.gmra.mrb[0].mxu0 %v1849
        %v1970 = vpop.f32.mrb[0].mxu0
        %v1971 = vadd.f32 0.0, %v1970
        %v1972 = vpop.f32.mrb[0].mxu0
        %v1973 = vpop.f32.mrb[0].mxu0
        %v1974 = vadd.f32 0.0, %v1973
        %v1975 = vpop.f32.mrb[0].mxu0
        %1976 = vmatprep.mubr.bf16.mxu0 0
        %1977 = vmatmul.mubr.bf16.gmra.mrb[0].mxu0 %v1852
        %v1978 = vpop.f32.mrb[0].mxu0
        %v1979 = vadd.f32 0.0, %v1978
        %v1980 = vpop.f32.mrb[0].mxu0
        %v1981 = vpop.f32.mrb[0].mxu0
        %v1982 = vadd.f32 0.0, %v1981
        %v1983 = vpop.f32.mrb[0].mxu0
        %1984 = vmatprep.mubr.bf16.mxu0 0
        %1985 = vmatmul.mubr.bf16.gmra.mrb[0].mxu0 %v1855
        %v1986 = vpop.f32.mrb[0].mxu0
        %v1987 = vadd.f32 0.0, %v1986
        %v1988 = vpop.f32.mrb[0].mxu0
        %v1989 = vpop.f32.mrb[0].mxu0
        %v1990 = vadd.f32 0.0, %v1989
        %v1991 = vpop.f32.mrb[0].mxu0
        %1992 = vmatprep.mubr.bf16.mxu0 0
        %1993 = vmatmul.mubr.bf16.gmra.mrb[0].mxu0 %v1858
        %v1994 = vpop.f32.mrb[0].mxu0
        %v1995 = vadd.f32 0.0, %v1994
        %v1996 = vpop.f32.mrb[0].mxu0
        %v1997 = vpop.f32.mrb[0].mxu0
        %v1998 = vadd.f32 0.0, %v1997
        %v1999 = vpop.f32.mrb[0].mxu0
        %2000 = vmatprep.mubr.bf16.mxu0 0
        %2001 = vmatmul.mubr.bf16.gmra.mrb[0].mxu0 %v1861
        %v2002 = vpop.f32.mrb[0].mxu0
        %v2003 = vadd.f32 0.0, %v2002
        %v2004 = vpop.f32.mrb[0].mxu0
        %v2005 = vpop.f32.mrb[0].mxu0
        %v2006 = vadd.f32 0.0, %v2005
        %v2007 = vpop.f32.mrb[0].mxu0
        %2008 = vmatprep.mubr.bf16.mxu0 0
        %2009 = vmatmul.mubr.bf16.gmra.mrb[0].mxu0 %v1864
        %v2010 = vpop.f32.mrb[0].mxu0
        %v2011 = vadd.f32 0.0, %v2010
        %v2012 = vpop.f32.mrb[0].mxu0
        %v2013 = vpop.f32.mrb[0].mxu0
        %v2014 = vadd.f32 0.0, %v2013
        %v2015 = vpop.f32.mrb[0].mxu0
        %2016 = vmatprep.mubr.bf16.mxu0 0
        %2017 = vmatmul.mubr.bf16.gmra.mrb[0].mxu0 %v1867
        %v2018 = vpop.f32.mrb[0].mxu0
        %v2019 = vadd.f32 0.0, %v2018
        %v2020 = vpop.f32.mrb[0].mxu0
        %v2021 = vpop.f32.mrb[0].mxu0
        %v2022 = vadd.f32 0.0, %v2021
        %v2023 = vpop.f32.mrb[0].mxu0
        %2024 = vmatprep.mubr.bf16.mxu0 0
        %2025 = vmatmul.mubr.bf16.gmra.mrb[0].mxu0 %v1870
        %v2026 = vpop.f32.mrb[0].mxu0
        %v2027 = vadd.f32 0.0, %v2026
        %v2028 = vpop.f32.mrb[0].mxu0
        %v2029 = vpop.f32.mrb[0].mxu0
        %v2030 = vadd.f32 0.0, %v2029
        %v2031 = vpop.f32.mrb[0].mxu0
        %2032 = vdwg.mxu0
        %v2033 = vadd.f32 %v1711, %v1907
        %v2034 = vadd.f32 %v1712, %v1910
        %v2035 = vadd.f32 %v1713, %v1915
        %v2036 = vadd.f32 %v1714, %v1918
        %v2037 = vadd.f32 %v1715, %v1923
        %v2038 = vadd.f32 %v1716, %v1926
        %v2039 = vadd.f32 %v1717, %v1931
        %v2040 = vadd.f32 %v1718, %v1934
        %v2041 = vadd.f32 %v1719, %v1939
        %v2042 = vadd.f32 %v1720, %v1942
        %v2043 = vadd.f32 %v1721, %v1947
        %v2044 = vadd.f32 %v1722, %v1950
        %v2045 = vadd.f32 %v1723, %v1955
        %v2046 = vadd.f32 %v1724, %v1958
        %v2047 = vadd.f32 %v1725, %v1963
        %v2048 = vadd.f32 %v1726, %v1966
        %v2049 = vadd.f32 %v1727, %v1971
        %v2050 = vadd.f32 %v1728, %v1974
        %v2051 = vadd.f32 %v1729, %v1979
        %v2052 = vadd.f32 %v1730, %v1982
        %v2053 = vadd.f32 %v1731, %v1987
        %v2054 = vadd.f32 %v1732, %v1990
        %v2055 = vadd.f32 %v1733, %v1995
        %v2056 = vadd.f32 %v1734, %v1998
        %v2057 = vadd.f32 %v1735, %v2003
        %v2058 = vadd.f32 %v1736, %v2006
        %v2059 = vadd.f32 %v1737, %v2011
        %v2060 = vadd.f32 %v1738, %v2014
        %v2061 = vadd.f32 %v1739, %v2019
        %v2062 = vadd.f32 %v1740, %v2022
        %v2063 = vadd.f32 %v1741, %v2027
        %v2064 = vadd.f32 %v1742, %v2030
        %v2065 = vld [vmem:[%s809 + $0x1] sm:$0xff]
        %v2066 = vld [vmem:[%s809 + $0x9] sm:$0xff]
        %v2067 = vld [vmem:[%s809 + $0x19] sm:$0xff]
        %v2068 = vld [vmem:[%s809 + $0x21] sm:$0xff]
        %v2069 = vld [vmem:[%s809 + $0x31] sm:$0xff]
        %v2070 = vld [vmem:[%s809 + $0x39] sm:$0xff]
        %v2071 = vld [vmem:[%s809 + $0x49] sm:$0xff]
        %v2072 = vld [vmem:[%s809 + $0x51] sm:$0xff]
        %v2073 = vld [vmem:[%s809 + $0x61] sm:$0xff]
        %v2074 = vld [vmem:[%s809 + $0x69] sm:$0xff]
        %v2075 = vld [vmem:[%s809 + $0x79] sm:$0xff]
        %v2076 = vld [vmem:[%s809 + $0x81] sm:$0xff]
        %v2077 = vld [vmem:[%s809 + $0x91] sm:$0xff]
        %v2078 = vld [vmem:[%s809 + $0x99] sm:$0xff]
        %v2079 = vld [vmem:[%s809 + $0xa9] sm:$0xff]
        %v2080 = vld [vmem:[%s809 + $0xb1] sm:$0xff]
        %v2081 = vld [vmem:[%s809 + $0xc1] sm:$0xff]
        %v2082 = vld [vmem:[%s809 + $0xc9] sm:$0xff]
        %v2083 = vld [vmem:[%s809 + $0xd9] sm:$0xff]
        %v2084 = vld [vmem:[%s809 + $0xe1] sm:$0xff]
        %v2085 = vld [vmem:[%s809 + $0xf1] sm:$0xff]
        %v2086 = vld [vmem:[%s809 + $0xf9] sm:$0xff]
        %v2087 = vld [vmem:[%s809 + $0x109] sm:$0xff]
        %v2088 = vld [vmem:[%s809 + $0x111] sm:$0xff]
        %v2089 = vld [vmem:[%s809 + $0x121] sm:$0xff]
        %v2090 = vld [vmem:[%s809 + $0x129] sm:$0xff]
        %v2091 = vld [vmem:[%s809 + $0x139] sm:$0xff]
        %v2092 = vld [vmem:[%s809 + $0x141] sm:$0xff]
        %v2093 = vld [vmem:[%s809 + $0x151] sm:$0xff]
        %v2094 = vld [vmem:[%s809 + $0x159] sm:$0xff]
        %v2095 = vld [vmem:[%s809 + $0x169] sm:$0xff]
        %v2096 = vld [vmem:[%s809 + $0x171] sm:$0xff]
        %v2097 = vpack.c.bf16 %v2066, %v2065
        %v2098 = vpack.c.bf16 %v2068, %v2067
        %v2099 = vpack.c.bf16 %v2070, %v2069
        %v2100 = vpack.c.bf16 %v2072, %v2071
        %v2101 = vpack.c.bf16 %v2074, %v2073
        %v2102 = vpack.c.bf16 %v2076, %v2075
        %v2103 = vpack.c.bf16 %v2078, %v2077
        %v2104 = vpack.c.bf16 %v2080, %v2079
        %v2105 = vpack.c.bf16 %v2082, %v2081
        %v2106 = vpack.c.bf16 %v2084, %v2083
        %v2107 = vpack.c.bf16 %v2086, %v2085
        %v2108 = vpack.c.bf16 %v2088, %v2087
        %v2109 = vpack.c.bf16 %v2090, %v2089
        %v2110 = vpack.c.bf16 %v2092, %v2091
        %v2111 = vpack.c.bf16 %v2094, %v2093
        %v2112 = vpack.c.bf16 %v2096, %v2095
        %s2113 = scalar_lea.vmem %s3, 128
        %v2114 = vld [vmem:[%s2113] sm:$0xf]
        %v2115 = vld [vmem:[%s2113 + $0x4] sm:$0xf]
        %v2116 = vld [vmem:[%s2113 + $0x8] sm:$0xf]
        %v2117 = vld [vmem:[%s2113 + $0xc] sm:$0xf]
        %v2118 = vld [vmem:[%s2113 + $0x10] sm:$0xf]
        %v2119 = vld [vmem:[%s2113 + $0x14] sm:$0xf]
        %v2120 = vld [vmem:[%s2113 + $0x18] sm:$0xf]
        %v2121 = vld [vmem:[%s2113 + $0x1c] sm:$0xf]
        %v2130 = vunpack.c.l.b16 %v2114
        %v2131 = vunpack.c.l.b16 %v2115
        %v2132 = vunpack.c.l.b16 %v2116
        %v2133 = vunpack.c.l.b16 %v2117
        %v2134 = vunpack.c.l.b16 %v2118
        %v2135 = vunpack.c.l.b16 %v2119
        %v2136 = vunpack.c.l.b16 %v2120
        %v2137 = vunpack.c.l.b16 %v2121
        %v2138 = vpack.c.b16 %v2131, %v2130
        %v2139 = vpack.c.b16 %v2133, %v2132
        %v2140 = vpack.c.b16 %v2135, %v2134
        %v2141 = vpack.c.b16 %v2137, %v2136
        %v2147 = vsel %vm753, %v2097, 0
        %v2150 = vsel %vm753, %v2098, 0
        %v2153 = vsel %vm753, %v2099, 0
        %v2156 = vsel %vm753, %v2100, 0
        %v2159 = vsel %vm753, %v2101, 0
        %v2162 = vsel %vm753, %v2102, 0
        %v2165 = vsel %vm753, %v2103, 0
        %v2168 = vsel %vm753, %v2104, 0
        %v2171 = vsel %vm753, %v2105, 0
        %v2174 = vsel %vm753, %v2106, 0
        %v2177 = vsel %vm753, %v2107, 0
        %v2180 = vsel %vm753, %v2108, 0
        %v2183 = vsel %vm753, %v2109, 0
        %v2186 = vsel %vm753, %v2110, 0
        %v2189 = vsel %vm753, %v2111, 0
        %v2192 = vsel %vm753, %v2112, 0
        %2194 = vmatprep.subr.bf16.mxu0 0
        %2195 = vmatpush1.bf16.msra.mxu0 %v2138
        %2196 = vmatprep.subr.bf16.mxu0 0
        %2197 = vmatpush1.bf16.msra.mxu0 %v2139
        %2198 = vmatprep.subr.bf16.mxu0 0
        %2199 = vmatpush1.bf16.msra.mxu0 %v2140
        %2200 = vmatprep.subr.bf16.mxu0 0
        %2201 = vmatpush1.bf16.msra.mxu0 %v2141
        %2202 = vmatprep.subr.bf16.mxu0 0
        %2203 = vmatpush1.bf16.msra.mxu0 0
        %2204 = vmatprep.subr.bf16.mxu0 0
        %2205 = vmatpush1.bf16.msra.mxu0 0
        %2206 = vmatprep.subr.bf16.mxu0 0
        %2207 = vmatpush1.bf16.msra.mxu0 0
        %2208 = vmatprep.subr.bf16.mxu0 0
        %2209 = vmatpush1.bf16.msra.mxu0 0
        %2210 = vmatprep.subr.bf16.mxu0 0
        %2211 = vmatpush1.bf16.msra.mxu0 0
        %2212 = vmatprep.subr.bf16.mxu0 0
        %2213 = vmatpush1.bf16.msra.mxu0 0
        %2214 = vmatprep.subr.bf16.mxu0 0
        %2215 = vmatpush1.bf16.msra.mxu0 0
        %2216 = vmatprep.subr.bf16.mxu0 0
        %2217 = vmatpush1.bf16.msra.mxu0 0
        %2218 = vmatprep.subr.bf16.mxu0 0
        %2219 = vmatpush1.bf16.msra.mxu0 0
        %2220 = vmatprep.subr.bf16.mxu0 0
        %2221 = vmatpush1.bf16.msra.mxu0 0
        %2222 = vmatprep.subr.bf16.mxu0 0
        %2223 = vmatpush1.bf16.msra.mxu0 0
        %2224 = vmatprep.subr.bf16.mxu0 0
        %2225 = vmatpush1.bf16.msra.mxu0 0
        %2226 = vmatprep.mubr.bf16.mxu0 0
        %2227 = vmatmul.mubr.bf16.gmra.mrb[0].mxu0 %v2147
        %v2228 = vpop.f32.mrb[0].mxu0
        %v2229 = vadd.f32 0.0, %v2228
        %v2230 = vpop.f32.mrb[0].mxu0
        %v2231 = vpop.f32.mrb[0].mxu0
        %v2232 = vadd.f32 0.0, %v2231
        %v2233 = vpop.f32.mrb[0].mxu0
        %2234 = vmatprep.mubr.bf16.mxu0 0
        %2235 = vmatmul.mubr.bf16.gmra.mrb[0].mxu0 %v2150
        %v2236 = vpop.f32.mrb[0].mxu0
        %v2237 = vadd.f32 0.0, %v2236
        %v2238 = vpop.f32.mrb[0].mxu0
        %v2239 = vpop.f32.mrb[0].mxu0
        %v2240 = vadd.f32 0.0, %v2239
        %v2241 = vpop.f32.mrb[0].mxu0
        %2242 = vmatprep.mubr.bf16.mxu0 0
        %2243 = vmatmul.mubr.bf16.gmra.mrb[0].mxu0 %v2153
        %v2244 = vpop.f32.mrb[0].mxu0
        %v2245 = vadd.f32 0.0, %v2244
        %v2246 = vpop.f32.mrb[0].mxu0
        %v2247 = vpop.f32.mrb[0].mxu0
        %v2248 = vadd.f32 0.0, %v2247
        %v2249 = vpop.f32.mrb[0].mxu0
        %2250 = vmatprep.mubr.bf16.mxu0 0
        %2251 = vmatmul.mubr.bf16.gmra.mrb[0].mxu0 %v2156
        %v2252 = vpop.f32.mrb[0].mxu0
        %v2253 = vadd.f32 0.0, %v2252
        %v2254 = vpop.f32.mrb[0].mxu0
        %v2255 = vpop.f32.mrb[0].mxu0
        %v2256 = vadd.f32 0.0, %v2255
        %v2257 = vpop.f32.mrb[0].mxu0
        %2258 = vmatprep.mubr.bf16.mxu0 0
        %2259 = vmatmul.mubr.bf16.gmra.mrb[0].mxu0 %v2159
        %v2260 = vpop.f32.mrb[0].mxu0
        %v2261 = vadd.f32 0.0, %v2260
        %v2262 = vpop.f32.mrb[0].mxu0
        %v2263 = vpop.f32.mrb[0].mxu0
        %v2264 = vadd.f32 0.0, %v2263
        %v2265 = vpop.f32.mrb[0].mxu0
        %2266 = vmatprep.mubr.bf16.mxu0 0
        %2267 = vmatmul.mubr.bf16.gmra.mrb[0].mxu0 %v2162
        %v2268 = vpop.f32.mrb[0].mxu0
        %v2269 = vadd.f32 0.0, %v2268
        %v2270 = vpop.f32.mrb[0].mxu0
        %v2271 = vpop.f32.mrb[0].mxu0
        %v2272 = vadd.f32 0.0, %v2271
        %v2273 = vpop.f32.mrb[0].mxu0
        %2274 = vmatprep.mubr.bf16.mxu0 0
        %2275 = vmatmul.mubr.bf16.gmra.mrb[0].mxu0 %v2165
        %v2276 = vpop.f32.mrb[0].mxu0
        %v2277 = vadd.f32 0.0, %v2276
        %v2278 = vpop.f32.mrb[0].mxu0
        %v2279 = vpop.f32.mrb[0].mxu0
        %v2280 = vadd.f32 0.0, %v2279
        %v2281 = vpop.f32.mrb[0].mxu0
        %2282 = vmatprep.mubr.bf16.mxu0 0
        %2283 = vmatmul.mubr.bf16.gmra.mrb[0].mxu0 %v2168
        %v2284 = vpop.f32.mrb[0].mxu0
        %v2285 = vadd.f32 0.0, %v2284
        %v2286 = vpop.f32.mrb[0].mxu0
        %v2287 = vpop.f32.mrb[0].mxu0
        %v2288 = vadd.f32 0.0, %v2287
        %v2289 = vpop.f32.mrb[0].mxu0
        %2290 = vmatprep.mubr.bf16.mxu0 0
        %2291 = vmatmul.mubr.bf16.gmra.mrb[0].mxu0 %v2171
        %v2292 = vpop.f32.mrb[0].mxu0
        %v2293 = vadd.f32 0.0, %v2292
        %v2294 = vpop.f32.mrb[0].mxu0
        %v2295 = vpop.f32.mrb[0].mxu0
        %v2296 = vadd.f32 0.0, %v2295
        %v2297 = vpop.f32.mrb[0].mxu0
        %2298 = vmatprep.mubr.bf16.mxu0 0
        %2299 = vmatmul.mubr.bf16.gmra.mrb[0].mxu0 %v2174
        %v2300 = vpop.f32.mrb[0].mxu0
        %v2301 = vadd.f32 0.0, %v2300
        %v2302 = vpop.f32.mrb[0].mxu0
        %v2303 = vpop.f32.mrb[0].mxu0
        %v2304 = vadd.f32 0.0, %v2303
        %v2305 = vpop.f32.mrb[0].mxu0
        %2306 = vmatprep.mubr.bf16.mxu0 0
        %2307 = vmatmul.mubr.bf16.gmra.mrb[0].mxu0 %v2177
        %v2308 = vpop.f32.mrb[0].mxu0
        %v2309 = vadd.f32 0.0, %v2308
        %v2310 = vpop.f32.mrb[0].mxu0
        %v2311 = vpop.f32.mrb[0].mxu0
        %v2312 = vadd.f32 0.0, %v2311
        %v2313 = vpop.f32.mrb[0].mxu0
        %2314 = vmatprep.mubr.bf16.mxu0 0
        %2315 = vmatmul.mubr.bf16.gmra.mrb[0].mxu0 %v2180
        %v2316 = vpop.f32.mrb[0].mxu0
        %v2317 = vadd.f32 0.0, %v2316
        %v2318 = vpop.f32.mrb[0].mxu0
        %v2319 = vpop.f32.mrb[0].mxu0
        %v2320 = vadd.f32 0.0, %v2319
        %v2321 = vpop.f32.mrb[0].mxu0
        %2322 = vmatprep.mubr.bf16.mxu0 0
        %2323 = vmatmul.mubr.bf16.gmra.mrb[0].mxu0 %v2183
        %v2324 = vpop.f32.mrb[0].mxu0
        %v2325 = vadd.f32 0.0, %v2324
        %v2326 = vpop.f32.mrb[0].mxu0
        %v2327 = vpop.f32.mrb[0].mxu0
        %v2328 = vadd.f32 0.0, %v2327
        %v2329 = vpop.f32.mrb[0].mxu0
        %2330 = vmatprep.mubr.bf16.mxu0 0
        %2331 = vmatmul.mubr.bf16.gmra.mrb[0].mxu0 %v2186
        %v2332 = vpop.f32.mrb[0].mxu0
        %v2333 = vadd.f32 0.0, %v2332
        %v2334 = vpop.f32.mrb[0].mxu0
        %v2335 = vpop.f32.mrb[0].mxu0
        %v2336 = vadd.f32 0.0, %v2335
        %v2337 = vpop.f32.mrb[0].mxu0
        %2338 = vmatprep.mubr.bf16.mxu0 0
        %2339 = vmatmul.mubr.bf16.gmra.mrb[0].mxu0 %v2189
        %v2340 = vpop.f32.mrb[0].mxu0
        %v2341 = vadd.f32 0.0, %v2340
        %v2342 = vpop.f32.mrb[0].mxu0
        %v2343 = vpop.f32.mrb[0].mxu0
        %v2344 = vadd.f32 0.0, %v2343
        %v2345 = vpop.f32.mrb[0].mxu0
        %2346 = vmatprep.mubr.bf16.mxu0 0
        %2347 = vmatmul.mubr.bf16.gmra.mrb[0].mxu0 %v2192
        %v2348 = vpop.f32.mrb[0].mxu0
        %v2349 = vadd.f32 0.0, %v2348
        %v2350 = vpop.f32.mrb[0].mxu0
        %v2351 = vpop.f32.mrb[0].mxu0
        %v2352 = vadd.f32 0.0, %v2351
        %v2353 = vpop.f32.mrb[0].mxu0
        %2354 = vdwg.mxu0
        %v2355 = vadd.f32 %v2033, %v2229
        %v2356 = vadd.f32 %v2034, %v2232
        %v2357 = vadd.f32 %v2035, %v2237
        %v2358 = vadd.f32 %v2036, %v2240
        %v2359 = vadd.f32 %v2037, %v2245
        %v2360 = vadd.f32 %v2038, %v2248
        %v2361 = vadd.f32 %v2039, %v2253
        %v2362 = vadd.f32 %v2040, %v2256
        %v2363 = vadd.f32 %v2041, %v2261
        %v2364 = vadd.f32 %v2042, %v2264
        %v2365 = vadd.f32 %v2043, %v2269
        %v2366 = vadd.f32 %v2044, %v2272
        %v2367 = vadd.f32 %v2045, %v2277
        %v2368 = vadd.f32 %v2046, %v2280
        %v2369 = vadd.f32 %v2047, %v2285
        %v2370 = vadd.f32 %v2048, %v2288
        %v2371 = vadd.f32 %v2049, %v2293
        %v2372 = vadd.f32 %v2050, %v2296
        %v2373 = vadd.f32 %v2051, %v2301
        %v2374 = vadd.f32 %v2052, %v2304
        %v2375 = vadd.f32 %v2053, %v2309
        %v2376 = vadd.f32 %v2054, %v2312
        %v2377 = vadd.f32 %v2055, %v2317
        %v2378 = vadd.f32 %v2056, %v2320
        %v2379 = vadd.f32 %v2057, %v2325
        %v2380 = vadd.f32 %v2058, %v2328
        %v2381 = vadd.f32 %v2059, %v2333
        %v2382 = vadd.f32 %v2060, %v2336
        %v2383 = vadd.f32 %v2061, %v2341
        %v2384 = vadd.f32 %v2062, %v2344
        %v2385 = vadd.f32 %v2063, %v2349
        %v2386 = vadd.f32 %v2064, %v2352
        %v2387 = vld [vmem:[%s809 + $0x2] sm:$0xff]
        %v2388 = vld [vmem:[%s809 + $0xa] sm:$0xff]
        %v2389 = vld [vmem:[%s809 + $0x1a] sm:$0xff]
        %v2390 = vld [vmem:[%s809 + $0x22] sm:$0xff]
        %v2391 = vld [vmem:[%s809 + $0x32] sm:$0xff]
        %v2392 = vld [vmem:[%s809 + $0x3a] sm:$0xff]
        %v2393 = vld [vmem:[%s809 + $0x4a] sm:$0xff]
        %v2394 = vld [vmem:[%s809 + $0x52] sm:$0xff]
        %v2395 = vld [vmem:[%s809 + $0x62] sm:$0xff]
        %v2396 = vld [vmem:[%s809 + $0x6a] sm:$0xff]
        %v2397 = vld [vmem:[%s809 + $0x7a] sm:$0xff]
        %v2398 = vld [vmem:[%s809 + $0x82] sm:$0xff]
        %v2399 = vld [vmem:[%s809 + $0x92] sm:$0xff]
        %v2400 = vld [vmem:[%s809 + $0x9a] sm:$0xff]
        %v2401 = vld [vmem:[%s809 + $0xaa] sm:$0xff]
        %v2402 = vld [vmem:[%s809 + $0xb2] sm:$0xff]
        %v2403 = vld [vmem:[%s809 + $0xc2] sm:$0xff]
        %v2404 = vld [vmem:[%s809 + $0xca] sm:$0xff]
        %v2405 = vld [vmem:[%s809 + $0xda] sm:$0xff]
        %v2406 = vld [vmem:[%s809 + $0xe2] sm:$0xff]
        %v2407 = vld [vmem:[%s809 + $0xf2] sm:$0xff]
        %v2408 = vld [vmem:[%s809 + $0xfa] sm:$0xff]
        %v2409 = vld [vmem:[%s809 + $0x10a] sm:$0xff]
        %v2410 = vld [vmem:[%s809 + $0x112] sm:$0xff]
        %v2411 = vld [vmem:[%s809 + $0x122] sm:$0xff]
        %v2412 = vld [vmem:[%s809 + $0x12a] sm:$0xff]
        %v2413 = vld [vmem:[%s809 + $0x13a] sm:$0xff]
        %v2414 = vld [vmem:[%s809 + $0x142] sm:$0xff]
        %v2415 = vld [vmem:[%s809 + $0x152] sm:$0xff]
        %v2416 = vld [vmem:[%s809 + $0x15a] sm:$0xff]
        %v2417 = vld [vmem:[%s809 + $0x16a] sm:$0xff]
        %v2418 = vld [vmem:[%s809 + $0x172] sm:$0xff]
        %v2419 = vpack.c.bf16 %v2388, %v2387
        %v2420 = vpack.c.bf16 %v2390, %v2389
        %v2421 = vpack.c.bf16 %v2392, %v2391
        %v2422 = vpack.c.bf16 %v2394, %v2393
        %v2423 = vpack.c.bf16 %v2396, %v2395
        %v2424 = vpack.c.bf16 %v2398, %v2397
        %v2425 = vpack.c.bf16 %v2400, %v2399
        %v2426 = vpack.c.bf16 %v2402, %v2401
        %v2427 = vpack.c.bf16 %v2404, %v2403
        %v2428 = vpack.c.bf16 %v2406, %v2405
        %v2429 = vpack.c.bf16 %v2408, %v2407
        %v2430 = vpack.c.bf16 %v2410, %v2409
        %v2431 = vpack.c.bf16 %v2412, %v2411
        %v2432 = vpack.c.bf16 %v2414, %v2413
        %v2433 = vpack.c.bf16 %v2416, %v2415
        %v2434 = vpack.c.bf16 %v2418, %v2417
        %s2435 = scalar_lea.vmem %s3, 160
        %v2436 = vld [vmem:[%s2435] sm:$0xf]
        %v2437 = vld [vmem:[%s2435 + $0x4] sm:$0xf]
        %v2438 = vld [vmem:[%s2435 + $0x8] sm:$0xf]
        %v2439 = vld [vmem:[%s2435 + $0xc] sm:$0xf]
        %v2440 = vld [vmem:[%s2435 + $0x10] sm:$0xf]
        %v2441 = vld [vmem:[%s2435 + $0x14] sm:$0xf]
        %v2442 = vld [vmem:[%s2435 + $0x18] sm:$0xf]
        %v2443 = vld [vmem:[%s2435 + $0x1c] sm:$0xf]
        %v2452 = vunpack.c.l.b16 %v2436
        %v2453 = vunpack.c.l.b16 %v2437
        %v2454 = vunpack.c.l.b16 %v2438
        %v2455 = vunpack.c.l.b16 %v2439
        %v2456 = vunpack.c.l.b16 %v2440
        %v2457 = vunpack.c.l.b16 %v2441
        %v2458 = vunpack.c.l.b16 %v2442
        %v2459 = vunpack.c.l.b16 %v2443
        %v2460 = vpack.c.b16 %v2453, %v2452
        %v2461 = vpack.c.b16 %v2455, %v2454
        %v2462 = vpack.c.b16 %v2457, %v2456
        %v2463 = vpack.c.b16 %v2459, %v2458
        %v2469 = vsel %vm753, %v2419, 0
        %v2472 = vsel %vm753, %v2420, 0
        %v2475 = vsel %vm753, %v2421, 0
        %v2478 = vsel %vm753, %v2422, 0
        %v2481 = vsel %vm753, %v2423, 0
        %v2484 = vsel %vm753, %v2424, 0
        %v2487 = vsel %vm753, %v2425, 0
        %v2490 = vsel %vm753, %v2426, 0
        %v2493 = vsel %vm753, %v2427, 0
        %v2496 = vsel %vm753, %v2428, 0
        %v2499 = vsel %vm753, %v2429, 0
        %v2502 = vsel %vm753, %v2430, 0
        %v2505 = vsel %vm753, %v2431, 0
        %v2508 = vsel %vm753, %v2432, 0
        %v2511 = vsel %vm753, %v2433, 0
        %v2514 = vsel %vm753, %v2434, 0
        %2516 = vmatprep.subr.bf16.mxu0 0
        %2517 = vmatpush1.bf16.msra.mxu0 %v2460
        %2518 = vmatprep.subr.bf16.mxu0 0
        %2519 = vmatpush1.bf16.msra.mxu0 %v2461
        %2520 = vmatprep.subr.bf16.mxu0 0
        %2521 = vmatpush1.bf16.msra.mxu0 %v2462
        %2522 = vmatprep.subr.bf16.mxu0 0
        %2523 = vmatpush1.bf16.msra.mxu0 %v2463
        %2524 = vmatprep.subr.bf16.mxu0 0
        %2525 = vmatpush1.bf16.msra.mxu0 0
        %2526 = vmatprep.subr.bf16.mxu0 0
        %2527 = vmatpush1.bf16.msra.mxu0 0
        %2528 = vmatprep.subr.bf16.mxu0 0
        %2529 = vmatpush1.bf16.msra.mxu0 0
        %2530 = vmatprep.subr.bf16.mxu0 0
        %2531 = vmatpush1.bf16.msra.mxu0 0
        %2532 = vmatprep.subr.bf16.mxu0 0
        %2533 = vmatpush1.bf16.msra.mxu0 0
        %2534 = vmatprep.subr.bf16.mxu0 0
        %2535 = vmatpush1.bf16.msra.mxu0 0
        %2536 = vmatprep.subr.bf16.mxu0 0
        %2537 = vmatpush1.bf16.msra.mxu0 0
        %2538 = vmatprep.subr.bf16.mxu0 0
        %2539 = vmatpush1.bf16.msra.mxu0 0
        %2540 = vmatprep.subr.bf16.mxu0 0
        %2541 = vmatpush1.bf16.msra.mxu0 0
        %2542 = vmatprep.subr.bf16.mxu0 0
        %2543 = vmatpush1.bf16.msra.mxu0 0
        %2544 = vmatprep.subr.bf16.mxu0 0
        %2545 = vmatpush1.bf16.msra.mxu0 0
        %2546 = vmatprep.subr.bf16.mxu0 0
        %2547 = vmatpush1.bf16.msra.mxu0 0
        %2548 = vmatprep.mubr.bf16.mxu0 0
        %2549 = vmatmul.mubr.bf16.gmra.mrb[0].mxu0 %v2469
        %v2550 = vpop.f32.mrb[0].mxu0
        %v2551 = vadd.f32 0.0, %v2550
        %v2552 = vpop.f32.mrb[0].mxu0
        %v2553 = vpop.f32.mrb[0].mxu0
        %v2554 = vadd.f32 0.0, %v2553
        %v2555 = vpop.f32.mrb[0].mxu0
        %2556 = vmatprep.mubr.bf16.mxu0 0
        %2557 = vmatmul.mubr.bf16.gmra.mrb[0].mxu0 %v2472
        %v2558 = vpop.f32.mrb[0].mxu0
        %v2559 = vadd.f32 0.0, %v2558
        %v2560 = vpop.f32.mrb[0].mxu0
        %v2561 = vpop.f32.mrb[0].mxu0
        %v2562 = vadd.f32 0.0, %v2561
        %v2563 = vpop.f32.mrb[0].mxu0
        %2564 = vmatprep.mubr.bf16.mxu0 0
        %2565 = vmatmul.mubr.bf16.gmra.mrb[0].mxu0 %v2475
        %v2566 = vpop.f32.mrb[0].mxu0
        %v2567 = vadd.f32 0.0, %v2566
        %v2568 = vpop.f32.mrb[0].mxu0
        %v2569 = vpop.f32.mrb[0].mxu0
        %v2570 = vadd.f32 0.0, %v2569
        %v2571 = vpop.f32.mrb[0].mxu0
        %2572 = vmatprep.mubr.bf16.mxu0 0
        %2573 = vmatmul.mubr.bf16.gmra.mrb[0].mxu0 %v2478
        %v2574 = vpop.f32.mrb[0].mxu0
        %v2575 = vadd.f32 0.0, %v2574
        %v2576 = vpop.f32.mrb[0].mxu0
        %v2577 = vpop.f32.mrb[0].mxu0
        %v2578 = vadd.f32 0.0, %v2577
        %v2579 = vpop.f32.mrb[0].mxu0
        %2580 = vmatprep.mubr.bf16.mxu0 0
        %2581 = vmatmul.mubr.bf16.gmra.mrb[0].mxu0 %v2481
        %v2582 = vpop.f32.mrb[0].mxu0
        %v2583 = vadd.f32 0.0, %v2582
        %v2584 = vpop.f32.mrb[0].mxu0
        %v2585 = vpop.f32.mrb[0].mxu0
        %v2586 = vadd.f32 0.0, %v2585
        %v2587 = vpop.f32.mrb[0].mxu0
        %2588 = vmatprep.mubr.bf16.mxu0 0
        %2589 = vmatmul.mubr.bf16.gmra.mrb[0].mxu0 %v2484
        %v2590 = vpop.f32.mrb[0].mxu0
        %v2591 = vadd.f32 0.0, %v2590
        %v2592 = vpop.f32.mrb[0].mxu0
        %v2593 = vpop.f32.mrb[0].mxu0
        %v2594 = vadd.f32 0.0, %v2593
        %v2595 = vpop.f32.mrb[0].mxu0
        %2596 = vmatprep.mubr.bf16.mxu0 0
        %2597 = vmatmul.mubr.bf16.gmra.mrb[0].mxu0 %v2487
        %v2598 = vpop.f32.mrb[0].mxu0
        %v2599 = vadd.f32 0.0, %v2598
        %v2600 = vpop.f32.mrb[0].mxu0
        %v2601 = vpop.f32.mrb[0].mxu0
        %v2602 = vadd.f32 0.0, %v2601
        %v2603 = vpop.f32.mrb[0].mxu0
        %2604 = vmatprep.mubr.bf16.mxu0 0
        %2605 = vmatmul.mubr.bf16.gmra.mrb[0].mxu0 %v2490
        %v2606 = vpop.f32.mrb[0].mxu0
        %v2607 = vadd.f32 0.0, %v2606
        %v2608 = vpop.f32.mrb[0].mxu0
        %v2609 = vpop.f32.mrb[0].mxu0
        %v2610 = vadd.f32 0.0, %v2609
        %v2611 = vpop.f32.mrb[0].mxu0
        %2612 = vmatprep.mubr.bf16.mxu0 0
        %2613 = vmatmul.mubr.bf16.gmra.mrb[0].mxu0 %v2493
        %v2614 = vpop.f32.mrb[0].mxu0
        %v2615 = vadd.f32 0.0, %v2614
        %v2616 = vpop.f32.mrb[0].mxu0
        %v2617 = vpop.f32.mrb[0].mxu0
        %v2618 = vadd.f32 0.0, %v2617
        %v2619 = vpop.f32.mrb[0].mxu0
        %2620 = vmatprep.mubr.bf16.mxu0 0
        %2621 = vmatmul.mubr.bf16.gmra.mrb[0].mxu0 %v2496
        %v2622 = vpop.f32.mrb[0].mxu0
        %v2623 = vadd.f32 0.0, %v2622
        %v2624 = vpop.f32.mrb[0].mxu0
        %v2625 = vpop.f32.mrb[0].mxu0
        %v2626 = vadd.f32 0.0, %v2625
        %v2627 = vpop.f32.mrb[0].mxu0
        %2628 = vmatprep.mubr.bf16.mxu0 0
        %2629 = vmatmul.mubr.bf16.gmra.mrb[0].mxu0 %v2499
        %v2630 = vpop.f32.mrb[0].mxu0
        %v2631 = vadd.f32 0.0, %v2630
        %v2632 = vpop.f32.mrb[0].mxu0
        %v2633 = vpop.f32.mrb[0].mxu0
        %v2634 = vadd.f32 0.0, %v2633
        %v2635 = vpop.f32.mrb[0].mxu0
        %2636 = vmatprep.mubr.bf16.mxu0 0
        %2637 = vmatmul.mubr.bf16.gmra.mrb[0].mxu0 %v2502
        %v2638 = vpop.f32.mrb[0].mxu0
        %v2639 = vadd.f32 0.0, %v2638
        %v2640 = vpop.f32.mrb[0].mxu0
        %v2641 = vpop.f32.mrb[0].mxu0
        %v2642 = vadd.f32 0.0, %v2641
        %v2643 = vpop.f32.mrb[0].mxu0
        %2644 = vmatprep.mubr.bf16.mxu0 0
        %2645 = vmatmul.mubr.bf16.gmra.mrb[0].mxu0 %v2505
        %v2646 = vpop.f32.mrb[0].mxu0
        %v2647 = vadd.f32 0.0, %v2646
        %v2648 = vpop.f32.mrb[0].mxu0
        %v2649 = vpop.f32.mrb[0].mxu0
        %v2650 = vadd.f32 0.0, %v2649
        %v2651 = vpop.f32.mrb[0].mxu0
        %2652 = vmatprep.mubr.bf16.mxu0 0
        %2653 = vmatmul.mubr.bf16.gmra.mrb[0].mxu0 %v2508
        %v2654 = vpop.f32.mrb[0].mxu0
        %v2655 = vadd.f32 0.0, %v2654
        %v2656 = vpop.f32.mrb[0].mxu0
        %v2657 = vpop.f32.mrb[0].mxu0
        %v2658 = vadd.f32 0.0, %v2657
        %v2659 = vpop.f32.mrb[0].mxu0
        %2660 = vmatprep.mubr.bf16.mxu0 0
        %2661 = vmatmul.mubr.bf16.gmra.mrb[0].mxu0 %v2511
        %v2662 = vpop.f32.mrb[0].mxu0
        %v2663 = vadd.f32 0.0, %v2662
        %v2664 = vpop.f32.mrb[0].mxu0
        %v2665 = vpop.f32.mrb[0].mxu0
        %v2666 = vadd.f32 0.0, %v2665
        %v2667 = vpop.f32.mrb[0].mxu0
        %2668 = vmatprep.mubr.bf16.mxu0 0
        %2669 = vmatmul.mubr.bf16.gmra.mrb[0].mxu0 %v2514
        %v2670 = vpop.f32.mrb[0].mxu0
        %v2671 = vadd.f32 0.0, %v2670
        %v2672 = vpop.f32.mrb[0].mxu0
        %v2673 = vpop.f32.mrb[0].mxu0
        %v2674 = vadd.f32 0.0, %v2673
        %v2675 = vpop.f32.mrb[0].mxu0
        %2676 = vdwg.mxu0
        %v2677 = vadd.f32 %v2355, %v2551
        %v2678 = vadd.f32 %v2356, %v2554
        %v2679 = vadd.f32 %v2357, %v2559
        %v2680 = vadd.f32 %v2358, %v2562
        %v2681 = vadd.f32 %v2359, %v2567
        %v2682 = vadd.f32 %v2360, %v2570
        %v2683 = vadd.f32 %v2361, %v2575
        %v2684 = vadd.f32 %v2362, %v2578
        %v2685 = vadd.f32 %v2363, %v2583
        %v2686 = vadd.f32 %v2364, %v2586
        %v2687 = vadd.f32 %v2365, %v2591
        %v2688 = vadd.f32 %v2366, %v2594
        %v2689 = vadd.f32 %v2367, %v2599
        %v2690 = vadd.f32 %v2368, %v2602
        %v2691 = vadd.f32 %v2369, %v2607
        %v2692 = vadd.f32 %v2370, %v2610
        %v2693 = vadd.f32 %v2371, %v2615
        %v2694 = vadd.f32 %v2372, %v2618
        %v2695 = vadd.f32 %v2373, %v2623
        %v2696 = vadd.f32 %v2374, %v2626
        %v2697 = vadd.f32 %v2375, %v2631
        %v2698 = vadd.f32 %v2376, %v2634
        %v2699 = vadd.f32 %v2377, %v2639
        %v2700 = vadd.f32 %v2378, %v2642
        %v2701 = vadd.f32 %v2379, %v2647
        %v2702 = vadd.f32 %v2380, %v2650
        %v2703 = vadd.f32 %v2381, %v2655
        %v2704 = vadd.f32 %v2382, %v2658
        %v2705 = vadd.f32 %v2383, %v2663
        %v2706 = vadd.f32 %v2384, %v2666
        %v2707 = vadd.f32 %v2385, %v2671
        %v2708 = vadd.f32 %v2386, %v2674
        %s2709 = scalar_lea.vmem [#allocation2], 48
        %v2710 = vld [vmem:[%s2709] sm:$0xff]
        %v2711 = vld [vmem:[%s2709 + $0x8] sm:$0xff]
        %v2712 = vld [vmem:[%s2709 + $0x18] sm:$0xff]
        %v2713 = vld [vmem:[%s2709 + $0x20] sm:$0xff]
        %v2714 = vld [vmem:[%s2709 + $0x30] sm:$0xff]
        %v2715 = vld [vmem:[%s2709 + $0x38] sm:$0xff]
        %v2716 = vld [vmem:[%s2709 + $0x48] sm:$0xff]
        %v2717 = vld [vmem:[%s2709 + $0x50] sm:$0xff]
        %v2718 = vld [vmem:[%s2709 + $0x60] sm:$0xff]
        %v2719 = vld [vmem:[%s2709 + $0x68] sm:$0xff]
        %v2720 = vld [vmem:[%s2709 + $0x78] sm:$0xff]
        %v2721 = vld [vmem:[%s2709 + $0x80] sm:$0xff]
        %v2722 = vld [vmem:[%s2709 + $0x90] sm:$0xff]
        %v2723 = vld [vmem:[%s2709 + $0x98] sm:$0xff]
        %v2724 = vld [vmem:[%s2709 + $0xa8] sm:$0xff]
        %v2725 = vld [vmem:[%s2709 + $0xb0] sm:$0xff]
        %v2726 = vld [vmem:[%s2709 + $0xc0] sm:$0xff]
        %v2727 = vld [vmem:[%s2709 + $0xc8] sm:$0xff]
        %v2728 = vld [vmem:[%s2709 + $0xd8] sm:$0xff]
        %v2729 = vld [vmem:[%s2709 + $0xe0] sm:$0xff]
        %v2730 = vld [vmem:[%s2709 + $0xf0] sm:$0xff]
        %v2731 = vld [vmem:[%s2709 + $0xf8] sm:$0xff]
        %v2732 = vld [vmem:[%s2709 + $0x108] sm:$0xff]
        %v2733 = vld [vmem:[%s2709 + $0x110] sm:$0xff]
        %v2734 = vld [vmem:[%s2709 + $0x120] sm:$0xff]
        %v2735 = vld [vmem:[%s2709 + $0x128] sm:$0xff]
        %v2736 = vld [vmem:[%s2709 + $0x138] sm:$0xff]
        %v2737 = vld [vmem:[%s2709 + $0x140] sm:$0xff]
        %v2738 = vld [vmem:[%s2709 + $0x150] sm:$0xff]
        %v2739 = vld [vmem:[%s2709 + $0x158] sm:$0xff]
        %v2740 = vld [vmem:[%s2709 + $0x168] sm:$0xff]
        %v2741 = vld [vmem:[%s2709 + $0x170] sm:$0xff]
        %v2742 = vpack.c.bf16 %v2711, %v2710
        %v2743 = vpack.c.bf16 %v2713, %v2712
        %v2744 = vpack.c.bf16 %v2715, %v2714
        %v2745 = vpack.c.bf16 %v2717, %v2716
        %v2746 = vpack.c.bf16 %v2719, %v2718
        %v2747 = vpack.c.bf16 %v2721, %v2720
        %v2748 = vpack.c.bf16 %v2723, %v2722
        %v2749 = vpack.c.bf16 %v2725, %v2724
        %v2750 = vpack.c.bf16 %v2727, %v2726
        %v2751 = vpack.c.bf16 %v2729, %v2728
        %v2752 = vpack.c.bf16 %v2731, %v2730
        %v2753 = vpack.c.bf16 %v2733, %v2732
        %v2754 = vpack.c.bf16 %v2735, %v2734
        %v2755 = vpack.c.bf16 %v2737, %v2736
        %v2756 = vpack.c.bf16 %v2739, %v2738
        %v2757 = vpack.c.bf16 %v2741, %v2740
        %s2758 = scalar_lea.vmem %s3, 192
        %v2759 = vld [vmem:[%s2758] sm:$0xf]
        %v2760 = vld [vmem:[%s2758 + $0x4] sm:$0xf]
        %v2761 = vld [vmem:[%s2758 + $0x8] sm:$0xf]
        %v2762 = vld [vmem:[%s2758 + $0xc] sm:$0xf]
        %v2763 = vld [vmem:[%s2758 + $0x10] sm:$0xf]
        %v2764 = vld [vmem:[%s2758 + $0x14] sm:$0xf]
        %v2765 = vld [vmem:[%s2758 + $0x18] sm:$0xf]
        %v2766 = vld [vmem:[%s2758 + $0x1c] sm:$0xf]
        %v2775 = vunpack.c.l.b16 %v2759
        %v2776 = vunpack.c.l.b16 %v2760
        %v2777 = vunpack.c.l.b16 %v2761
        %v2778 = vunpack.c.l.b16 %v2762
        %v2779 = vunpack.c.l.b16 %v2763
        %v2780 = vunpack.c.l.b16 %v2764
        %v2781 = vunpack.c.l.b16 %v2765
        %v2782 = vunpack.c.l.b16 %v2766
        %v2783 = vpack.c.b16 %v2776, %v2775
        %v2784 = vpack.c.b16 %v2778, %v2777
        %v2785 = vpack.c.b16 %v2780, %v2779
        %v2786 = vpack.c.b16 %v2782, %v2781
        %v2792 = vsel %vm753, %v2742, 0
        %v2795 = vsel %vm753, %v2743, 0
        %v2798 = vsel %vm753, %v2744, 0
        %v2801 = vsel %vm753, %v2745, 0
        %v2804 = vsel %vm753, %v2746, 0
        %v2807 = vsel %vm753, %v2747, 0
        %v2810 = vsel %vm753, %v2748, 0
        %v2813 = vsel %vm753, %v2749, 0
        %v2816 = vsel %vm753, %v2750, 0
        %v2819 = vsel %vm753, %v2751, 0
        %v2822 = vsel %vm753, %v2752, 0
        %v2825 = vsel %vm753, %v2753, 0
        %v2828 = vsel %vm753, %v2754, 0
        %v2831 = vsel %vm753, %v2755, 0
        %v2834 = vsel %vm753, %v2756, 0
        %v2837 = vsel %vm753, %v2757, 0
        %2839 = vmatprep.subr.bf16.mxu0 0
        %2840 = vmatpush1.bf16.msra.mxu0 %v2783
        %2841 = vmatprep.subr.bf16.mxu0 0
        %2842 = vmatpush1.bf16.msra.mxu0 %v2784
        %2843 = vmatprep.subr.bf16.mxu0 0
        %2844 = vmatpush1.bf16.msra.mxu0 %v2785
        %2845 = vmatprep.subr.bf16.mxu0 0
        %2846 = vmatpush1.bf16.msra.mxu0 %v2786
        %2847 = vmatprep.subr.bf16.mxu0 0
        %2848 = vmatpush1.bf16.msra.mxu0 0
        %2849 = vmatprep.subr.bf16.mxu0 0
        %2850 = vmatpush1.bf16.msra.mxu0 0
        %2851 = vmatprep.subr.bf16.mxu0 0
        %2852 = vmatpush1.bf16.msra.mxu0 0
        %2853 = vmatprep.subr.bf16.mxu0 0
        %2854 = vmatpush1.bf16.msra.mxu0 0
        %2855 = vmatprep.subr.bf16.mxu0 0
        %2856 = vmatpush1.bf16.msra.mxu0 0
        %2857 = vmatprep.subr.bf16.mxu0 0
        %2858 = vmatpush1.bf16.msra.mxu0 0
        %2859 = vmatprep.subr.bf16.mxu0 0
        %2860 = vmatpush1.bf16.msra.mxu0 0
        %2861 = vmatprep.subr.bf16.mxu0 0
        %2862 = vmatpush1.bf16.msra.mxu0 0
        %2863 = vmatprep.subr.bf16.mxu0 0
        %2864 = vmatpush1.bf16.msra.mxu0 0
        %2865 = vmatprep.subr.bf16.mxu0 0
        %2866 = vmatpush1.bf16.msra.mxu0 0
        %2867 = vmatprep.subr.bf16.mxu0 0
        %2868 = vmatpush1.bf16.msra.mxu0 0
        %2869 = vmatprep.subr.bf16.mxu0 0
        %2870 = vmatpush1.bf16.msra.mxu0 0
        %2871 = vmatprep.mubr.bf16.mxu0 0
        %2872 = vmatmul.mubr.bf16.gmra.mrb[0].mxu0 %v2792
        %v2873 = vpop.f32.mrb[0].mxu0
        %v2874 = vadd.f32 0.0, %v2873
        %v2875 = vpop.f32.mrb[0].mxu0
        %v2876 = vpop.f32.mrb[0].mxu0
        %v2877 = vadd.f32 0.0, %v2876
        %v2878 = vpop.f32.mrb[0].mxu0
        %2879 = vmatprep.mubr.bf16.mxu0 0
        %2880 = vmatmul.mubr.bf16.gmra.mrb[0].mxu0 %v2795
        %v2881 = vpop.f32.mrb[0].mxu0
        %v2882 = vadd.f32 0.0, %v2881
        %v2883 = vpop.f32.mrb[0].mxu0
        %v2884 = vpop.f32.mrb[0].mxu0
        %v2885 = vadd.f32 0.0, %v2884
        %v2886 = vpop.f32.mrb[0].mxu0
        %2887 = vmatprep.mubr.bf16.mxu0 0
        %2888 = vmatmul.mubr.bf16.gmra.mrb[0].mxu0 %v2798
        %v2889 = vpop.f32.mrb[0].mxu0
        %v2890 = vadd.f32 0.0, %v2889
        %v2891 = vpop.f32.mrb[0].mxu0
        %v2892 = vpop.f32.mrb[0].mxu0
        %v2893 = vadd.f32 0.0, %v2892
        %v2894 = vpop.f32.mrb[0].mxu0
        %2895 = vmatprep.mubr.bf16.mxu0 0
        %2896 = vmatmul.mubr.bf16.gmra.mrb[0].mxu0 %v2801
        %v2897 = vpop.f32.mrb[0].mxu0
        %v2898 = vadd.f32 0.0, %v2897
        %v2899 = vpop.f32.mrb[0].mxu0
        %v2900 = vpop.f32.mrb[0].mxu0
        %v2901 = vadd.f32 0.0, %v2900
        %v2902 = vpop.f32.mrb[0].mxu0
        %2903 = vmatprep.mubr.bf16.mxu0 0
        %2904 = vmatmul.mubr.bf16.gmra.mrb[0].mxu0 %v2804
        %v2905 = vpop.f32.mrb[0].mxu0
        %v2906 = vadd.f32 0.0, %v2905
        %v2907 = vpop.f32.mrb[0].mxu0
        %v2908 = vpop.f32.mrb[0].mxu0
        %v2909 = vadd.f32 0.0, %v2908
        %v2910 = vpop.f32.mrb[0].mxu0
        %2911 = vmatprep.mubr.bf16.mxu0 0
        %2912 = vmatmul.mubr.bf16.gmra.mrb[0].mxu0 %v2807
        %v2913 = vpop.f32.mrb[0].mxu0
        %v2914 = vadd.f32 0.0, %v2913
        %v2915 = vpop.f32.mrb[0].mxu0
        %v2916 = vpop.f32.mrb[0].mxu0
        %v2917 = vadd.f32 0.0, %v2916
        %v2918 = vpop.f32.mrb[0].mxu0
        %2919 = vmatprep.mubr.bf16.mxu0 0
        %2920 = vmatmul.mubr.bf16.gmra.mrb[0].mxu0 %v2810
        %v2921 = vpop.f32.mrb[0].mxu0
        %v2922 = vadd.f32 0.0, %v2921
        %v2923 = vpop.f32.mrb[0].mxu0
        %v2924 = vpop.f32.mrb[0].mxu0
        %v2925 = vadd.f32 0.0, %v2924
        %v2926 = vpop.f32.mrb[0].mxu0
        %2927 = vmatprep.mubr.bf16.mxu0 0
        %2928 = vmatmul.mubr.bf16.gmra.mrb[0].mxu0 %v2813
        %v2929 = vpop.f32.mrb[0].mxu0
        %v2930 = vadd.f32 0.0, %v2929
        %v2931 = vpop.f32.mrb[0].mxu0
        %v2932 = vpop.f32.mrb[0].mxu0
        %v2933 = vadd.f32 0.0, %v2932
        %v2934 = vpop.f32.mrb[0].mxu0
        %2935 = vmatprep.mubr.bf16.mxu0 0
        %2936 = vmatmul.mubr.bf16.gmra.mrb[0].mxu0 %v2816
        %v2937 = vpop.f32.mrb[0].mxu0
        %v2938 = vadd.f32 0.0, %v2937
        %v2939 = vpop.f32.mrb[0].mxu0
        %v2940 = vpop.f32.mrb[0].mxu0
        %v2941 = vadd.f32 0.0, %v2940
        %v2942 = vpop.f32.mrb[0].mxu0
        %2943 = vmatprep.mubr.bf16.mxu0 0
        %2944 = vmatmul.mubr.bf16.gmra.mrb[0].mxu0 %v2819
        %v2945 = vpop.f32.mrb[0].mxu0
        %v2946 = vadd.f32 0.0, %v2945
        %v2947 = vpop.f32.mrb[0].mxu0
        %v2948 = vpop.f32.mrb[0].mxu0
        %v2949 = vadd.f32 0.0, %v2948
        %v2950 = vpop.f32.mrb[0].mxu0
        %2951 = vmatprep.mubr.bf16.mxu0 0
        %2952 = vmatmul.mubr.bf16.gmra.mrb[0].mxu0 %v2822
        %v2953 = vpop.f32.mrb[0].mxu0
        %v2954 = vadd.f32 0.0, %v2953
        %v2955 = vpop.f32.mrb[0].mxu0
        %v2956 = vpop.f32.mrb[0].mxu0
        %v2957 = vadd.f32 0.0, %v2956
        %v2958 = vpop.f32.mrb[0].mxu0
        %2959 = vmatprep.mubr.bf16.mxu0 0
        %2960 = vmatmul.mubr.bf16.gmra.mrb[0].mxu0 %v2825
        %v2961 = vpop.f32.mrb[0].mxu0
        %v2962 = vadd.f32 0.0, %v2961
        %v2963 = vpop.f32.mrb[0].mxu0
        %v2964 = vpop.f32.mrb[0].mxu0
        %v2965 = vadd.f32 0.0, %v2964
        %v2966 = vpop.f32.mrb[0].mxu0
        %2967 = vmatprep.mubr.bf16.mxu0 0
        %2968 = vmatmul.mubr.bf16.gmra.mrb[0].mxu0 %v2828
        %v2969 = vpop.f32.mrb[0].mxu0
        %v2970 = vadd.f32 0.0, %v2969
        %v2971 = vpop.f32.mrb[0].mxu0
        %v2972 = vpop.f32.mrb[0].mxu0
        %v2973 = vadd.f32 0.0, %v2972
        %v2974 = vpop.f32.mrb[0].mxu0
        %2975 = vmatprep.mubr.bf16.mxu0 0
        %2976 = vmatmul.mubr.bf16.gmra.mrb[0].mxu0 %v2831
        %v2977 = vpop.f32.mrb[0].mxu0
        %v2978 = vadd.f32 0.0, %v2977
        %v2979 = vpop.f32.mrb[0].mxu0
        %v2980 = vpop.f32.mrb[0].mxu0
        %v2981 = vadd.f32 0.0, %v2980
        %v2982 = vpop.f32.mrb[0].mxu0
        %2983 = vmatprep.mubr.bf16.mxu0 0
        %2984 = vmatmul.mubr.bf16.gmra.mrb[0].mxu0 %v2834
        %v2985 = vpop.f32.mrb[0].mxu0
        %v2986 = vadd.f32 0.0, %v2985
        %v2987 = vpop.f32.mrb[0].mxu0
        %v2988 = vpop.f32.mrb[0].mxu0
        %v2989 = vadd.f32 0.0, %v2988
        %v2990 = vpop.f32.mrb[0].mxu0
        %2991 = vmatprep.mubr.bf16.mxu0 0
        %2992 = vmatmul.mubr.bf16.gmra.mrb[0].mxu0 %v2837
        %v2993 = vpop.f32.mrb[0].mxu0
        %v2994 = vadd.f32 0.0, %v2993
        %v2995 = vpop.f32.mrb[0].mxu0
        %v2996 = vpop.f32.mrb[0].mxu0
        %v2997 = vadd.f32 0.0, %v2996
        %v2998 = vpop.f32.mrb[0].mxu0
        %2999 = vdwg.mxu0
        %v3000 = vadd.f32 %v2677, %v2874
        %v3001 = vadd.f32 %v2678, %v2877
        %v3002 = vadd.f32 %v2679, %v2882
        %v3003 = vadd.f32 %v2680, %v2885
        %v3004 = vadd.f32 %v2681, %v2890
        %v3005 = vadd.f32 %v2682, %v2893
        %v3006 = vadd.f32 %v2683, %v2898
        %v3007 = vadd.f32 %v2684, %v2901
        %v3008 = vadd.f32 %v2685, %v2906
        %v3009 = vadd.f32 %v2686, %v2909
        %v3010 = vadd.f32 %v2687, %v2914
        %v3011 = vadd.f32 %v2688, %v2917
        %v3012 = vadd.f32 %v2689, %v2922
        %v3013 = vadd.f32 %v2690, %v2925
        %v3014 = vadd.f32 %v2691, %v2930
        %v3015 = vadd.f32 %v2692, %v2933
        %v3016 = vadd.f32 %v2693, %v2938
        %v3017 = vadd.f32 %v2694, %v2941
        %v3018 = vadd.f32 %v2695, %v2946
        %v3019 = vadd.f32 %v2696, %v2949
        %v3020 = vadd.f32 %v2697, %v2954
        %v3021 = vadd.f32 %v2698, %v2957
        %v3022 = vadd.f32 %v2699, %v2962
        %v3023 = vadd.f32 %v2700, %v2965
        %v3024 = vadd.f32 %v2701, %v2970
        %v3025 = vadd.f32 %v2702, %v2973
        %v3026 = vadd.f32 %v2703, %v2978
        %v3027 = vadd.f32 %v2704, %v2981
        %v3028 = vadd.f32 %v2705, %v2986
        %v3029 = vadd.f32 %v2706, %v2989
        %v3030 = vadd.f32 %v2707, %v2994
        %v3031 = vadd.f32 %v2708, %v2997
        %v3032 = vld [vmem:[%s2709 + $0x1] sm:$0xff]
        %v3033 = vld [vmem:[%s2709 + $0x9] sm:$0xff]
        %v3034 = vld [vmem:[%s2709 + $0x19] sm:$0xff]
        %v3035 = vld [vmem:[%s2709 + $0x21] sm:$0xff]
        %v3036 = vld [vmem:[%s2709 + $0x31] sm:$0xff]
        %v3037 = vld [vmem:[%s2709 + $0x39] sm:$0xff]
        %v3038 = vld [vmem:[%s2709 + $0x49] sm:$0xff]
        %v3039 = vld [vmem:[%s2709 + $0x51] sm:$0xff]
        %v3040 = vld [vmem:[%s2709 + $0x61] sm:$0xff]
        %v3041 = vld [vmem:[%s2709 + $0x69] sm:$0xff]
        %v3042 = vld [vmem:[%s2709 + $0x79] sm:$0xff]
        %v3043 = vld [vmem:[%s2709 + $0x81] sm:$0xff]
        %v3044 = vld [vmem:[%s2709 + $0x91] sm:$0xff]
        %v3045 = vld [vmem:[%s2709 + $0x99] sm:$0xff]
        %v3046 = vld [vmem:[%s2709 + $0xa9] sm:$0xff]
        %v3047 = vld [vmem:[%s2709 + $0xb1] sm:$0xff]
        %v3048 = vld [vmem:[%s2709 + $0xc1] sm:$0xff]
        %v3049 = vld [vmem:[%s2709 + $0xc9] sm:$0xff]
        %v3050 = vld [vmem:[%s2709 + $0xd9] sm:$0xff]
        %v3051 = vld [vmem:[%s2709 + $0xe1] sm:$0xff]
        %v3052 = vld [vmem:[%s2709 + $0xf1] sm:$0xff]
        %v3053 = vld [vmem:[%s2709 + $0xf9] sm:$0xff]
        %v3054 = vld [vmem:[%s2709 + $0x109] sm:$0xff]
        %v3055 = vld [vmem:[%s2709 + $0x111] sm:$0xff]
        %v3056 = vld [vmem:[%s2709 + $0x121] sm:$0xff]
        %v3057 = vld [vmem:[%s2709 + $0x129] sm:$0xff]
        %v3058 = vld [vmem:[%s2709 + $0x139] sm:$0xff]
        %v3059 = vld [vmem:[%s2709 + $0x141] sm:$0xff]
        %v3060 = vld [vmem:[%s2709 + $0x151] sm:$0xff]
        %v3061 = vld [vmem:[%s2709 + $0x159] sm:$0xff]
        %v3062 = vld [vmem:[%s2709 + $0x169] sm:$0xff]
        %v3063 = vld [vmem:[%s2709 + $0x171] sm:$0xff]
        %v3064 = vpack.c.bf16 %v3033, %v3032
        %v3065 = vpack.c.bf16 %v3035, %v3034
        %v3066 = vpack.c.bf16 %v3037, %v3036
        %v3067 = vpack.c.bf16 %v3039, %v3038
        %v3068 = vpack.c.bf16 %v3041, %v3040
        %v3069 = vpack.c.bf16 %v3043, %v3042
        %v3070 = vpack.c.bf16 %v3045, %v3044
        %v3071 = vpack.c.bf16 %v3047, %v3046
        %v3072 = vpack.c.bf16 %v3049, %v3048
        %v3073 = vpack.c.bf16 %v3051, %v3050
        %v3074 = vpack.c.bf16 %v3053, %v3052
        %v3075 = vpack.c.bf16 %v3055, %v3054
        %v3076 = vpack.c.bf16 %v3057, %v3056
        %v3077 = vpack.c.bf16 %v3059, %v3058
        %v3078 = vpack.c.bf16 %v3061, %v3060
        %v3079 = vpack.c.bf16 %v3063, %v3062
        %s3080 = scalar_lea.vmem %s3, 224
        %v3081 = vld [vmem:[%s3080] sm:$0xf]
        %v3082 = vld [vmem:[%s3080 + $0x4] sm:$0xf]
        %v3083 = vld [vmem:[%s3080 + $0x8] sm:$0xf]
        %v3084 = vld [vmem:[%s3080 + $0xc] sm:$0xf]
        %v3085 = vld [vmem:[%s3080 + $0x10] sm:$0xf]
        %v3086 = vld [vmem:[%s3080 + $0x14] sm:$0xf]
        %v3087 = vld [vmem:[%s3080 + $0x18] sm:$0xf]
        %v3088 = vld [vmem:[%s3080 + $0x1c] sm:$0xf]
        %v3097 = vunpack.c.l.b16 %v3081
        %v3098 = vunpack.c.l.b16 %v3082
        %v3099 = vunpack.c.l.b16 %v3083
        %v3100 = vunpack.c.l.b16 %v3084
        %v3101 = vunpack.c.l.b16 %v3085
        %v3102 = vunpack.c.l.b16 %v3086
        %v3103 = vunpack.c.l.b16 %v3087
        %v3104 = vunpack.c.l.b16 %v3088
        %v3105 = vpack.c.b16 %v3098, %v3097
        %v3106 = vpack.c.b16 %v3100, %v3099
        %v3107 = vpack.c.b16 %v3102, %v3101
        %v3108 = vpack.c.b16 %v3104, %v3103
        %v3114 = vsel %vm753, %v3064, 0
        %v3117 = vsel %vm753, %v3065, 0
        %v3120 = vsel %vm753, %v3066, 0
        %v3123 = vsel %vm753, %v3067, 0
        %v3126 = vsel %vm753, %v3068, 0
        %v3129 = vsel %vm753, %v3069, 0
        %v3132 = vsel %vm753, %v3070, 0
        %v3135 = vsel %vm753, %v3071, 0
        %v3138 = vsel %vm753, %v3072, 0
        %v3141 = vsel %vm753, %v3073, 0
        %v3144 = vsel %vm753, %v3074, 0
        %v3147 = vsel %vm753, %v3075, 0
        %v3150 = vsel %vm753, %v3076, 0
        %v3153 = vsel %vm753, %v3077, 0
        %v3156 = vsel %vm753, %v3078, 0
        %v3159 = vsel %vm753, %v3079, 0
        %3161 = vmatprep.subr.bf16.mxu0 0
        %3162 = vmatpush1.bf16.msra.mxu0 %v3105
        %3163 = vmatprep.subr.bf16.mxu0 0
        %3164 = vmatpush1.bf16.msra.mxu0 %v3106
        %3165 = vmatprep.subr.bf16.mxu0 0
        %3166 = vmatpush1.bf16.msra.mxu0 %v3107
        %3167 = vmatprep.subr.bf16.mxu0 0
        %3168 = vmatpush1.bf16.msra.mxu0 %v3108
        %3169 = vmatprep.subr.bf16.mxu0 0
        %3170 = vmatpush1.bf16.msra.mxu0 0
        %3171 = vmatprep.subr.bf16.mxu0 0
        %3172 = vmatpush1.bf16.msra.mxu0 0
        %3173 = vmatprep.subr.bf16.mxu0 0
        %3174 = vmatpush1.bf16.msra.mxu0 0
        %3175 = vmatprep.subr.bf16.mxu0 0
        %3176 = vmatpush1.bf16.msra.mxu0 0
        %3177 = vmatprep.subr.bf16.mxu0 0
        %3178 = vmatpush1.bf16.msra.mxu0 0
        %3179 = vmatprep.subr.bf16.mxu0 0
        %3180 = vmatpush1.bf16.msra.mxu0 0
        %3181 = vmatprep.subr.bf16.mxu0 0
        %3182 = vmatpush1.bf16.msra.mxu0 0
        %3183 = vmatprep.subr.bf16.mxu0 0
        %3184 = vmatpush1.bf16.msra.mxu0 0
        %3185 = vmatprep.subr.bf16.mxu0 0
        %3186 = vmatpush1.bf16.msra.mxu0 0
        %3187 = vmatprep.subr.bf16.mxu0 0
        %3188 = vmatpush1.bf16.msra.mxu0 0
        %3189 = vmatprep.subr.bf16.mxu0 0
        %3190 = vmatpush1.bf16.msra.mxu0 0
        %3191 = vmatprep.subr.bf16.mxu0 0
        %3192 = vmatpush1.bf16.msra.mxu0 0
        %3193 = vmatprep.mubr.bf16.mxu0 0
        %3194 = vmatmul.mubr.bf16.gmra.mrb[0].mxu0 %v3114
        %v3195 = vpop.f32.mrb[0].mxu0
        %v3196 = vadd.f32 0.0, %v3195
        %v3197 = vpop.f32.mrb[0].mxu0
        %v3198 = vpop.f32.mrb[0].mxu0
        %v3199 = vadd.f32 0.0, %v3198
        %v3200 = vpop.f32.mrb[0].mxu0
        %3201 = vmatprep.mubr.bf16.mxu0 0
        %3202 = vmatmul.mubr.bf16.gmra.mrb[0].mxu0 %v3117
        %v3203 = vpop.f32.mrb[0].mxu0
        %v3204 = vadd.f32 0.0, %v3203
        %v3205 = vpop.f32.mrb[0].mxu0
        %v3206 = vpop.f32.mrb[0].mxu0
        %v3207 = vadd.f32 0.0, %v3206
        %v3208 = vpop.f32.mrb[0].mxu0
        %3209 = vmatprep.mubr.bf16.mxu0 0
        %3210 = vmatmul.mubr.bf16.gmra.mrb[0].mxu0 %v3120
        %v3211 = vpop.f32.mrb[0].mxu0
        %v3212 = vadd.f32 0.0, %v3211
        %v3213 = vpop.f32.mrb[0].mxu0
        %v3214 = vpop.f32.mrb[0].mxu0
        %v3215 = vadd.f32 0.0, %v3214
        %v3216 = vpop.f32.mrb[0].mxu0
        %3217 = vmatprep.mubr.bf16.mxu0 0
        %3218 = vmatmul.mubr.bf16.gmra.mrb[0].mxu0 %v3123
        %v3219 = vpop.f32.mrb[0].mxu0
        %v3220 = vadd.f32 0.0, %v3219
        %v3221 = vpop.f32.mrb[0].mxu0
        %v3222 = vpop.f32.mrb[0].mxu0
        %v3223 = vadd.f32 0.0, %v3222
        %v3224 = vpop.f32.mrb[0].mxu0
        %3225 = vmatprep.mubr.bf16.mxu0 0
        %3226 = vmatmul.mubr.bf16.gmra.mrb[0].mxu0 %v3126
        %v3227 = vpop.f32.mrb[0].mxu0
        %v3228 = vadd.f32 0.0, %v3227
        %v3229 = vpop.f32.mrb[0].mxu0
        %v3230 = vpop.f32.mrb[0].mxu0
        %v3231 = vadd.f32 0.0, %v3230
        %v3232 = vpop.f32.mrb[0].mxu0
        %3233 = vmatprep.mubr.bf16.mxu0 0
        %3234 = vmatmul.mubr.bf16.gmra.mrb[0].mxu0 %v3129
        %v3235 = vpop.f32.mrb[0].mxu0
        %v3236 = vadd.f32 0.0, %v3235
        %v3237 = vpop.f32.mrb[0].mxu0
        %v3238 = vpop.f32.mrb[0].mxu0
        %v3239 = vadd.f32 0.0, %v3238
        %v3240 = vpop.f32.mrb[0].mxu0
        %3241 = vmatprep.mubr.bf16.mxu0 0
        %3242 = vmatmul.mubr.bf16.gmra.mrb[0].mxu0 %v3132
        %v3243 = vpop.f32.mrb[0].mxu0
        %v3244 = vadd.f32 0.0, %v3243
        %v3245 = vpop.f32.mrb[0].mxu0
        %v3246 = vpop.f32.mrb[0].mxu0
        %v3247 = vadd.f32 0.0, %v3246
        %v3248 = vpop.f32.mrb[0].mxu0
        %3249 = vmatprep.mubr.bf16.mxu0 0
        %3250 = vmatmul.mubr.bf16.gmra.mrb[0].mxu0 %v3135
        %v3251 = vpop.f32.mrb[0].mxu0
        %v3252 = vadd.f32 0.0, %v3251
        %v3253 = vpop.f32.mrb[0].mxu0
        %v3254 = vpop.f32.mrb[0].mxu0
        %v3255 = vadd.f32 0.0, %v3254
        %v3256 = vpop.f32.mrb[0].mxu0
        %3257 = vmatprep.mubr.bf16.mxu0 0
        %3258 = vmatmul.mubr.bf16.gmra.mrb[0].mxu0 %v3138
        %v3259 = vpop.f32.mrb[0].mxu0
        %v3260 = vadd.f32 0.0, %v3259
        %v3261 = vpop.f32.mrb[0].mxu0
        %v3262 = vpop.f32.mrb[0].mxu0
        %v3263 = vadd.f32 0.0, %v3262
        %v3264 = vpop.f32.mrb[0].mxu0
        %3265 = vmatprep.mubr.bf16.mxu0 0
        %3266 = vmatmul.mubr.bf16.gmra.mrb[0].mxu0 %v3141
        %v3267 = vpop.f32.mrb[0].mxu0
        %v3268 = vadd.f32 0.0, %v3267
        %v3269 = vpop.f32.mrb[0].mxu0
        %v3270 = vpop.f32.mrb[0].mxu0
        %v3271 = vadd.f32 0.0, %v3270
        %v3272 = vpop.f32.mrb[0].mxu0
        %3273 = vmatprep.mubr.bf16.mxu0 0
        %3274 = vmatmul.mubr.bf16.gmra.mrb[0].mxu0 %v3144
        %v3275 = vpop.f32.mrb[0].mxu0
        %v3276 = vadd.f32 0.0, %v3275
        %v3277 = vpop.f32.mrb[0].mxu0
        %v3278 = vpop.f32.mrb[0].mxu0
        %v3279 = vadd.f32 0.0, %v3278
        %v3280 = vpop.f32.mrb[0].mxu0
        %3281 = vmatprep.mubr.bf16.mxu0 0
        %3282 = vmatmul.mubr.bf16.gmra.mrb[0].mxu0 %v3147
        %v3283 = vpop.f32.mrb[0].mxu0
        %v3284 = vadd.f32 0.0, %v3283
        %v3285 = vpop.f32.mrb[0].mxu0
        %v3286 = vpop.f32.mrb[0].mxu0
        %v3287 = vadd.f32 0.0, %v3286
        %v3288 = vpop.f32.mrb[0].mxu0
        %3289 = vmatprep.mubr.bf16.mxu0 0
        %3290 = vmatmul.mubr.bf16.gmra.mrb[0].mxu0 %v3150
        %v3291 = vpop.f32.mrb[0].mxu0
        %v3292 = vadd.f32 0.0, %v3291
        %v3293 = vpop.f32.mrb[0].mxu0
        %v3294 = vpop.f32.mrb[0].mxu0
        %v3295 = vadd.f32 0.0, %v3294
        %v3296 = vpop.f32.mrb[0].mxu0
        %3297 = vmatprep.mubr.bf16.mxu0 0
        %3298 = vmatmul.mubr.bf16.gmra.mrb[0].mxu0 %v3153
        %v3299 = vpop.f32.mrb[0].mxu0
        %v3300 = vadd.f32 0.0, %v3299
        %v3301 = vpop.f32.mrb[0].mxu0
        %v3302 = vpop.f32.mrb[0].mxu0
        %v3303 = vadd.f32 0.0, %v3302
        %v3304 = vpop.f32.mrb[0].mxu0
        %3305 = vmatprep.mubr.bf16.mxu0 0
        %3306 = vmatmul.mubr.bf16.gmra.mrb[0].mxu0 %v3156
        %v3307 = vpop.f32.mrb[0].mxu0
        %v3308 = vadd.f32 0.0, %v3307
        %v3309 = vpop.f32.mrb[0].mxu0
        %v3310 = vpop.f32.mrb[0].mxu0
        %v3311 = vadd.f32 0.0, %v3310
        %v3312 = vpop.f32.mrb[0].mxu0
        %3313 = vmatprep.mubr.bf16.mxu0 0
        %3314 = vmatmul.mubr.bf16.gmra.mrb[0].mxu0 %v3159
        %v3315 = vpop.f32.mrb[0].mxu0
        %v3316 = vadd.f32 0.0, %v3315
        %v3317 = vpop.f32.mrb[0].mxu0
        %v3318 = vpop.f32.mrb[0].mxu0
        %v3319 = vadd.f32 0.0, %v3318
        %v3320 = vpop.f32.mrb[0].mxu0
        %3321 = vdwg.mxu0
        %v3322 = vadd.f32 %v3000, %v3196
        %v3323 = vadd.f32 %v3001, %v3199
        %v3324 = vadd.f32 %v3002, %v3204
        %v3325 = vadd.f32 %v3003, %v3207
        %v3326 = vadd.f32 %v3004, %v3212
        %v3327 = vadd.f32 %v3005, %v3215
        %v3328 = vadd.f32 %v3006, %v3220
        %v3329 = vadd.f32 %v3007, %v3223
        %v3330 = vadd.f32 %v3008, %v3228
        %v3331 = vadd.f32 %v3009, %v3231
        %v3332 = vadd.f32 %v3010, %v3236
        %v3333 = vadd.f32 %v3011, %v3239
        %v3334 = vadd.f32 %v3012, %v3244
        %v3335 = vadd.f32 %v3013, %v3247
        %v3336 = vadd.f32 %v3014, %v3252
        %v3337 = vadd.f32 %v3015, %v3255
        %v3338 = vadd.f32 %v3016, %v3260
        %v3339 = vadd.f32 %v3017, %v3263
        %v3340 = vadd.f32 %v3018, %v3268
        %v3341 = vadd.f32 %v3019, %v3271
        %v3342 = vadd.f32 %v3020, %v3276
        %v3343 = vadd.f32 %v3021, %v3279
        %v3344 = vadd.f32 %v3022, %v3284
        %v3345 = vadd.f32 %v3023, %v3287
        %v3346 = vadd.f32 %v3024, %v3292
        %v3347 = vadd.f32 %v3025, %v3295
        %v3348 = vadd.f32 %v3026, %v3300
        %v3349 = vadd.f32 %v3027, %v3303
        %v3350 = vadd.f32 %v3028, %v3308
        %v3351 = vadd.f32 %v3029, %v3311
        %v3352 = vadd.f32 %v3030, %v3316
        %v3353 = vadd.f32 %v3031, %v3319
        %v3354 = vld [vmem:[%s2709 + $0x2] sm:$0xff]
        %v3355 = vld [vmem:[%s2709 + $0xa] sm:$0xff]
        %v3356 = vld [vmem:[%s2709 + $0x1a] sm:$0xff]
        %v3357 = vld [vmem:[%s2709 + $0x22] sm:$0xff]
        %v3358 = vld [vmem:[%s2709 + $0x32] sm:$0xff]
        %v3359 = vld [vmem:[%s2709 + $0x3a] sm:$0xff]
        %v3360 = vld [vmem:[%s2709 + $0x4a] sm:$0xff]
        %v3361 = vld [vmem:[%s2709 + $0x52] sm:$0xff]
        %v3362 = vld [vmem:[%s2709 + $0x62] sm:$0xff]
        %v3363 = vld [vmem:[%s2709 + $0x6a] sm:$0xff]
        %v3364 = vld [vmem:[%s2709 + $0x7a] sm:$0xff]
        %v3365 = vld [vmem:[%s2709 + $0x82] sm:$0xff]
        %v3366 = vld [vmem:[%s2709 + $0x92] sm:$0xff]
        %v3367 = vld [vmem:[%s2709 + $0x9a] sm:$0xff]
        %v3368 = vld [vmem:[%s2709 + $0xaa] sm:$0xff]
        %v3369 = vld [vmem:[%s2709 + $0xb2] sm:$0xff]
        %v3370 = vld [vmem:[%s2709 + $0xc2] sm:$0xff]
        %v3371 = vld [vmem:[%s2709 + $0xca] sm:$0xff]
        %v3372 = vld [vmem:[%s2709 + $0xda] sm:$0xff]
        %v3373 = vld [vmem:[%s2709 + $0xe2] sm:$0xff]
        %v3374 = vld [vmem:[%s2709 + $0xf2] sm:$0xff]
        %v3375 = vld [vmem:[%s2709 + $0xfa] sm:$0xff]
        %v3376 = vld [vmem:[%s2709 + $0x10a] sm:$0xff]
        %v3377 = vld [vmem:[%s2709 + $0x112] sm:$0xff]
        %v3378 = vld [vmem:[%s2709 + $0x122] sm:$0xff]
        %v3379 = vld [vmem:[%s2709 + $0x12a] sm:$0xff]
        %v3380 = vld [vmem:[%s2709 + $0x13a] sm:$0xff]
        %v3381 = vld [vmem:[%s2709 + $0x142] sm:$0xff]
        %v3382 = vld [vmem:[%s2709 + $0x152] sm:$0xff]
        %v3383 = vld [vmem:[%s2709 + $0x15a] sm:$0xff]
        %v3384 = vld [vmem:[%s2709 + $0x16a] sm:$0xff]
        %v3385 = vld [vmem:[%s2709 + $0x172] sm:$0xff]
        %v3386 = vpack.c.bf16 %v3355, %v3354
        %v3387 = vpack.c.bf16 %v3357, %v3356
        %v3388 = vpack.c.bf16 %v3359, %v3358
        %v3389 = vpack.c.bf16 %v3361, %v3360
        %v3390 = vpack.c.bf16 %v3363, %v3362
        %v3391 = vpack.c.bf16 %v3365, %v3364
        %v3392 = vpack.c.bf16 %v3367, %v3366
        %v3393 = vpack.c.bf16 %v3369, %v3368
        %v3394 = vpack.c.bf16 %v3371, %v3370
        %v3395 = vpack.c.bf16 %v3373, %v3372
        %v3396 = vpack.c.bf16 %v3375, %v3374
        %v3397 = vpack.c.bf16 %v3377, %v3376
        %v3398 = vpack.c.bf16 %v3379, %v3378
        %v3399 = vpack.c.bf16 %v3381, %v3380
        %v3400 = vpack.c.bf16 %v3383, %v3382
        %v3401 = vpack.c.bf16 %v3385, %v3384
        %s3402 = scalar_lea.vmem %s3, 256
        %v3403 = vld [vmem:[%s3402] sm:$0xf]
        %v3404 = vld [vmem:[%s3402 + $0x4] sm:$0xf]
        %v3405 = vld [vmem:[%s3402 + $0x8] sm:$0xf]
        %v3406 = vld [vmem:[%s3402 + $0xc] sm:$0xf]
        %v3407 = vld [vmem:[%s3402 + $0x10] sm:$0xf]
        %v3408 = vld [vmem:[%s3402 + $0x14] sm:$0xf]
        %v3409 = vld [vmem:[%s3402 + $0x18] sm:$0xf]
        %v3410 = vld [vmem:[%s3402 + $0x1c] sm:$0xf]
        %v3419 = vunpack.c.l.b16 %v3403
        %v3420 = vunpack.c.l.b16 %v3404
        %v3421 = vunpack.c.l.b16 %v3405
        %v3422 = vunpack.c.l.b16 %v3406
        %v3423 = vunpack.c.l.b16 %v3407
        %v3424 = vunpack.c.l.b16 %v3408
        %v3425 = vunpack.c.l.b16 %v3409
        %v3426 = vunpack.c.l.b16 %v3410
        %v3427 = vpack.c.b16 %v3420, %v3419
        %v3428 = vpack.c.b16 %v3422, %v3421
        %v3429 = vpack.c.b16 %v3424, %v3423
        %v3430 = vpack.c.b16 %v3426, %v3425
        %v3436 = vsel %vm753, %v3386, 0
        %v3439 = vsel %vm753, %v3387, 0
        %v3442 = vsel %vm753, %v3388, 0
        %v3445 = vsel %vm753, %v3389, 0
        %v3448 = vsel %vm753, %v3390, 0
        %v3451 = vsel %vm753, %v3391, 0
        %v3454 = vsel %vm753, %v3392, 0
        %v3457 = vsel %vm753, %v3393, 0
        %v3460 = vsel %vm753, %v3394, 0
        %v3463 = vsel %vm753, %v3395, 0
        %v3466 = vsel %vm753, %v3396, 0
        %v3469 = vsel %vm753, %v3397, 0
        %v3472 = vsel %vm753, %v3398, 0
        %v3475 = vsel %vm753, %v3399, 0
        %v3478 = vsel %vm753, %v3400, 0
        %v3481 = vsel %vm753, %v3401, 0
        %3483 = vmatprep.subr.bf16.mxu0 0
        %3484 = vmatpush1.bf16.msra.mxu0 %v3427
        %3485 = vmatprep.subr.bf16.mxu0 0
        %3486 = vmatpush1.bf16.msra.mxu0 %v3428
        %3487 = vmatprep.subr.bf16.mxu0 0
        %3488 = vmatpush1.bf16.msra.mxu0 %v3429
        %3489 = vmatprep.subr.bf16.mxu0 0
        %3490 = vmatpush1.bf16.msra.mxu0 %v3430
        %3491 = vmatprep.subr.bf16.mxu0 0
        %3492 = vmatpush1.bf16.msra.mxu0 0
        %3493 = vmatprep.subr.bf16.mxu0 0
        %3494 = vmatpush1.bf16.msra.mxu0 0
        %3495 = vmatprep.subr.bf16.mxu0 0
        %3496 = vmatpush1.bf16.msra.mxu0 0
        %3497 = vmatprep.subr.bf16.mxu0 0
        %3498 = vmatpush1.bf16.msra.mxu0 0
        %3499 = vmatprep.subr.bf16.mxu0 0
        %3500 = vmatpush1.bf16.msra.mxu0 0
        %3501 = vmatprep.subr.bf16.mxu0 0
        %3502 = vmatpush1.bf16.msra.mxu0 0
        %3503 = vmatprep.subr.bf16.mxu0 0
        %3504 = vmatpush1.bf16.msra.mxu0 0
        %3505 = vmatprep.subr.bf16.mxu0 0
        %3506 = vmatpush1.bf16.msra.mxu0 0
        %3507 = vmatprep.subr.bf16.mxu0 0
        %3508 = vmatpush1.bf16.msra.mxu0 0
        %3509 = vmatprep.subr.bf16.mxu0 0
        %3510 = vmatpush1.bf16.msra.mxu0 0
        %3511 = vmatprep.subr.bf16.mxu0 0
        %3512 = vmatpush1.bf16.msra.mxu0 0
        %3513 = vmatprep.subr.bf16.mxu0 0
        %3514 = vmatpush1.bf16.msra.mxu0 0
        %3515 = vmatprep.mubr.bf16.mxu0 0
        %3516 = vmatmul.mubr.bf16.gmra.mrb[0].mxu0 %v3436
        %v3517 = vpop.f32.mrb[0].mxu0
        %v3518 = vadd.f32 0.0, %v3517
        %v3519 = vpop.f32.mrb[0].mxu0
        %v3520 = vpop.f32.mrb[0].mxu0
        %v3521 = vadd.f32 0.0, %v3520
        %v3522 = vpop.f32.mrb[0].mxu0
        %3523 = vmatprep.mubr.bf16.mxu0 0
        %3524 = vmatmul.mubr.bf16.gmra.mrb[0].mxu0 %v3439
        %v3525 = vpop.f32.mrb[0].mxu0
        %v3526 = vadd.f32 0.0, %v3525
        %v3527 = vpop.f32.mrb[0].mxu0
        %v3528 = vpop.f32.mrb[0].mxu0
        %v3529 = vadd.f32 0.0, %v3528
        %v3530 = vpop.f32.mrb[0].mxu0
        %3531 = vmatprep.mubr.bf16.mxu0 0
        %3532 = vmatmul.mubr.bf16.gmra.mrb[0].mxu0 %v3442
        %v3533 = vpop.f32.mrb[0].mxu0
        %v3534 = vadd.f32 0.0, %v3533
        %v3535 = vpop.f32.mrb[0].mxu0
        %v3536 = vpop.f32.mrb[0].mxu0
        %v3537 = vadd.f32 0.0, %v3536
        %v3538 = vpop.f32.mrb[0].mxu0
        %3539 = vmatprep.mubr.bf16.mxu0 0
        %3540 = vmatmul.mubr.bf16.gmra.mrb[0].mxu0 %v3445
        %v3541 = vpop.f32.mrb[0].mxu0
        %v3542 = vadd.f32 0.0, %v3541
        %v3543 = vpop.f32.mrb[0].mxu0
        %v3544 = vpop.f32.mrb[0].mxu0
        %v3545 = vadd.f32 0.0, %v3544
        %v3546 = vpop.f32.mrb[0].mxu0
        %3547 = vmatprep.mubr.bf16.mxu0 0
        %3548 = vmatmul.mubr.bf16.gmra.mrb[0].mxu0 %v3448
        %v3549 = vpop.f32.mrb[0].mxu0
        %v3550 = vadd.f32 0.0, %v3549
        %v3551 = vpop.f32.mrb[0].mxu0
        %v3552 = vpop.f32.mrb[0].mxu0
        %v3553 = vadd.f32 0.0, %v3552
        %v3554 = vpop.f32.mrb[0].mxu0
        %3555 = vmatprep.mubr.bf16.mxu0 0
        %3556 = vmatmul.mubr.bf16.gmra.mrb[0].mxu0 %v3451
        %v3557 = vpop.f32.mrb[0].mxu0
        %v3558 = vadd.f32 0.0, %v3557
        %v3559 = vpop.f32.mrb[0].mxu0
        %v3560 = vpop.f32.mrb[0].mxu0
        %v3561 = vadd.f32 0.0, %v3560
        %v3562 = vpop.f32.mrb[0].mxu0
        %3563 = vmatprep.mubr.bf16.mxu0 0
        %3564 = vmatmul.mubr.bf16.gmra.mrb[0].mxu0 %v3454
        %v3565 = vpop.f32.mrb[0].mxu0
        %v3566 = vadd.f32 0.0, %v3565
        %v3567 = vpop.f32.mrb[0].mxu0
        %v3568 = vpop.f32.mrb[0].mxu0
        %v3569 = vadd.f32 0.0, %v3568
        %v3570 = vpop.f32.mrb[0].mxu0
        %3571 = vmatprep.mubr.bf16.mxu0 0
        %3572 = vmatmul.mubr.bf16.gmra.mrb[0].mxu0 %v3457
        %v3573 = vpop.f32.mrb[0].mxu0
        %v3574 = vadd.f32 0.0, %v3573
        %v3575 = vpop.f32.mrb[0].mxu0
        %v3576 = vpop.f32.mrb[0].mxu0
        %v3577 = vadd.f32 0.0, %v3576
        %v3578 = vpop.f32.mrb[0].mxu0
        %3579 = vmatprep.mubr.bf16.mxu0 0
        %3580 = vmatmul.mubr.bf16.gmra.mrb[0].mxu0 %v3460
        %v3581 = vpop.f32.mrb[0].mxu0
        %v3582 = vadd.f32 0.0, %v3581
        %v3583 = vpop.f32.mrb[0].mxu0
        %v3584 = vpop.f32.mrb[0].mxu0
        %v3585 = vadd.f32 0.0, %v3584
        %v3586 = vpop.f32.mrb[0].mxu0
        %3587 = vmatprep.mubr.bf16.mxu0 0
        %3588 = vmatmul.mubr.bf16.gmra.mrb[0].mxu0 %v3463
        %v3589 = vpop.f32.mrb[0].mxu0
        %v3590 = vadd.f32 0.0, %v3589
        %v3591 = vpop.f32.mrb[0].mxu0
        %v3592 = vpop.f32.mrb[0].mxu0
        %v3593 = vadd.f32 0.0, %v3592
        %v3594 = vpop.f32.mrb[0].mxu0
        %3595 = vmatprep.mubr.bf16.mxu0 0
        %3596 = vmatmul.mubr.bf16.gmra.mrb[0].mxu0 %v3466
        %v3597 = vpop.f32.mrb[0].mxu0
        %v3598 = vadd.f32 0.0, %v3597
        %v3599 = vpop.f32.mrb[0].mxu0
        %v3600 = vpop.f32.mrb[0].mxu0
        %v3601 = vadd.f32 0.0, %v3600
        %v3602 = vpop.f32.mrb[0].mxu0
        %3603 = vmatprep.mubr.bf16.mxu0 0
        %3604 = vmatmul.mubr.bf16.gmra.mrb[0].mxu0 %v3469
        %v3605 = vpop.f32.mrb[0].mxu0
        %v3606 = vadd.f32 0.0, %v3605
        %v3607 = vpop.f32.mrb[0].mxu0
        %v3608 = vpop.f32.mrb[0].mxu0
        %v3609 = vadd.f32 0.0, %v3608
        %v3610 = vpop.f32.mrb[0].mxu0
        %3611 = vmatprep.mubr.bf16.mxu0 0
        %3612 = vmatmul.mubr.bf16.gmra.mrb[0].mxu0 %v3472
        %v3613 = vpop.f32.mrb[0].mxu0
        %v3614 = vadd.f32 0.0, %v3613
        %v3615 = vpop.f32.mrb[0].mxu0
        %v3616 = vpop.f32.mrb[0].mxu0
        %v3617 = vadd.f32 0.0, %v3616
        %v3618 = vpop.f32.mrb[0].mxu0
        %3619 = vmatprep.mubr.bf16.mxu0 0
        %3620 = vmatmul.mubr.bf16.gmra.mrb[0].mxu0 %v3475
        %v3621 = vpop.f32.mrb[0].mxu0
        %v3622 = vadd.f32 0.0, %v3621
        %v3623 = vpop.f32.mrb[0].mxu0
        %v3624 = vpop.f32.mrb[0].mxu0
        %v3625 = vadd.f32 0.0, %v3624
        %v3626 = vpop.f32.mrb[0].mxu0
        %3627 = vmatprep.mubr.bf16.mxu0 0
        %3628 = vmatmul.mubr.bf16.gmra.mrb[0].mxu0 %v3478
        %v3629 = vpop.f32.mrb[0].mxu0
        %v3630 = vadd.f32 0.0, %v3629
        %v3631 = vpop.f32.mrb[0].mxu0
        %v3632 = vpop.f32.mrb[0].mxu0
        %v3633 = vadd.f32 0.0, %v3632
        %v3634 = vpop.f32.mrb[0].mxu0
        %3635 = vmatprep.mubr.bf16.mxu0 0
        %3636 = vmatmul.mubr.bf16.gmra.mrb[0].mxu0 %v3481
        %v3637 = vpop.f32.mrb[0].mxu0
        %v3638 = vadd.f32 0.0, %v3637
        %v3639 = vpop.f32.mrb[0].mxu0
        %v3640 = vpop.f32.mrb[0].mxu0
        %v3641 = vadd.f32 0.0, %v3640
        %v3642 = vpop.f32.mrb[0].mxu0
        %3643 = vdwg.mxu0
        %v3644 = vadd.f32 %v3322, %v3518
        %v3645 = vadd.f32 %v3323, %v3521
        %v3646 = vadd.f32 %v3324, %v3526
        %v3647 = vadd.f32 %v3325, %v3529
        %v3648 = vadd.f32 %v3326, %v3534
        %v3649 = vadd.f32 %v3327, %v3537
        %v3650 = vadd.f32 %v3328, %v3542
        %v3651 = vadd.f32 %v3329, %v3545
        %v3652 = vadd.f32 %v3330, %v3550
        %v3653 = vadd.f32 %v3331, %v3553
        %v3654 = vadd.f32 %v3332, %v3558
        %v3655 = vadd.f32 %v3333, %v3561
        %v3656 = vadd.f32 %v3334, %v3566
        %v3657 = vadd.f32 %v3335, %v3569
        %v3658 = vadd.f32 %v3336, %v3574
        %v3659 = vadd.f32 %v3337, %v3577
        %v3660 = vadd.f32 %v3338, %v3582
        %v3661 = vadd.f32 %v3339, %v3585
        %v3662 = vadd.f32 %v3340, %v3590
        %v3663 = vadd.f32 %v3341, %v3593
        %v3664 = vadd.f32 %v3342, %v3598
        %v3665 = vadd.f32 %v3343, %v3601
        %v3666 = vadd.f32 %v3344, %v3606
        %v3667 = vadd.f32 %v3345, %v3609
        %v3668 = vadd.f32 %v3346, %v3614
        %v3669 = vadd.f32 %v3347, %v3617
        %v3670 = vadd.f32 %v3348, %v3622
        %v3671 = vadd.f32 %v3349, %v3625
        %v3672 = vadd.f32 %v3350, %v3630
        %v3673 = vadd.f32 %v3351, %v3633
        %v3674 = vadd.f32 %v3352, %v3638
        %v3675 = vadd.f32 %v3353, %v3641
        %v3676 = vld [vmem:[%s4] sm:$0x1]
        %v3678 = vlaneseq
        %v3679 = vshrl.u32 %v3678, 7
        %v3680 = vsub.s32 0, %v3679
        %v3681 = vrot.slane %v3676, %v3680
        %v3683 = vadd.f32 %v3644, %v3681
        %v3684 = vadd.f32 %v3645, %v3681
        %v3685 = vadd.f32 %v3646, %v3681
        %v3686 = vadd.f32 %v3647, %v3681
        %v3687 = vadd.f32 %v3648, %v3681
        %v3688 = vadd.f32 %v3649, %v3681
        %v3689 = vadd.f32 %v3650, %v3681
        %v3690 = vadd.f32 %v3651, %v3681
        %v3691 = vadd.f32 %v3652, %v3681
        %v3692 = vadd.f32 %v3653, %v3681
        %v3693 = vadd.f32 %v3654, %v3681
        %v3694 = vadd.f32 %v3655, %v3681
        %v3695 = vadd.f32 %v3656, %v3681
        %v3696 = vadd.f32 %v3657, %v3681
        %v3697 = vadd.f32 %v3658, %v3681
        %v3698 = vadd.f32 %v3659, %v3681
        %v3699 = vadd.f32 %v3660, %v3681
        %v3700 = vadd.f32 %v3661, %v3681
        %v3701 = vadd.f32 %v3662, %v3681
        %v3702 = vadd.f32 %v3663, %v3681
        %v3703 = vadd.f32 %v3664, %v3681
        %v3704 = vadd.f32 %v3665, %v3681
        %v3705 = vadd.f32 %v3666, %v3681
        %v3706 = vadd.f32 %v3667, %v3681
        %v3707 = vadd.f32 %v3668, %v3681
        %v3708 = vadd.f32 %v3669, %v3681
        %v3709 = vadd.f32 %v3670, %v3681
        %v3710 = vadd.f32 %v3671, %v3681
        %v3711 = vadd.f32 %v3672, %v3681
        %v3712 = vadd.f32 %v3673, %v3681
        %v3713 = vadd.f32 %v3674, %v3681
        %v3714 = vadd.f32 %v3675, %v3681
        %v3715 = vmax.f32 %v3683, 0.0
        %v3716 = vmax.f32 %v3684, 0.0
        %v3717 = vmax.f32 %v3685, 0.0
        %v3718 = vmax.f32 %v3686, 0.0
        %v3719 = vmax.f32 %v3687, 0.0
        %v3720 = vmax.f32 %v3688, 0.0
        %v3721 = vmax.f32 %v3689, 0.0
        %v3722 = vmax.f32 %v3690, 0.0
        %v3723 = vmax.f32 %v3691, 0.0
        %v3724 = vmax.f32 %v3692, 0.0
        %v3725 = vmax.f32 %v3693, 0.0
        %v3726 = vmax.f32 %v3694, 0.0
        %v3727 = vmax.f32 %v3695, 0.0
        %v3728 = vmax.f32 %v3696, 0.0
        %v3729 = vmax.f32 %v3697, 0.0
        %v3730 = vmax.f32 %v3698, 0.0
        %v3731 = vmax.f32 %v3699, 0.0
        %v3732 = vmax.f32 %v3700, 0.0
        %v3733 = vmax.f32 %v3701, 0.0
        %v3734 = vmax.f32 %v3702, 0.0
        %v3735 = vmax.f32 %v3703, 0.0
        %v3736 = vmax.f32 %v3704, 0.0
        %v3737 = vmax.f32 %v3705, 0.0
        %v3738 = vmax.f32 %v3706, 0.0
        %v3739 = vmax.f32 %v3707, 0.0
        %v3740 = vmax.f32 %v3708, 0.0
        %v3741 = vmax.f32 %v3709, 0.0
        %v3742 = vmax.f32 %v3710, 0.0
        %v3743 = vmax.f32 %v3711, 0.0
        %v3744 = vmax.f32 %v3712, 0.0
        %v3745 = vmax.f32 %v3713, 0.0
        %v3746 = vmax.f32 %v3714, 0.0
        %vm3747 = vcmask 261120
        %3748 = vst.msk [vmem:[#allocation3] sm:$0xff] %vm3747, 0.0
        %3749 = vst.msk [vmem:[#allocation3 + $0x8] sm:$0xff] %vm3747, 0.0
        %vm3750 = vcmask 254976
        %3751 = vst.msk [vmem:[#allocation3 + $0x10] sm:$0x3] %vm3750, 0.0
        %3752 = vst.msk [vmem:[#allocation3 + $0x18] sm:$0xff] %vm3747, 0.0
        %3753 = vst.msk [vmem:[#allocation3 + $0x20] sm:$0xff] %vm3747, 0.0
        %3754 = vst.msk [vmem:[#allocation3 + $0x28] sm:$0x3] %vm3750, 0.0
        %3755 = vst.msk [vmem:[#allocation3 + $0x30] sm:$0xff] %vm3747, 0.0
        %3756 = vst.msk [vmem:[#allocation3 + $0x38] sm:$0xff] %vm3747, 0.0
        %3757 = vst.msk [vmem:[#allocation3 + $0x40] sm:$0x3] %vm3750, 0.0
        %3758 = vst.msk [vmem:[#allocation3 + $0x48] sm:$0xff] %vm3747, 0.0
        %3759 = vst.msk [vmem:[#allocation3 + $0x50] sm:$0xff] %vm3747, 0.0
        %3760 = vst.msk [vmem:[#allocation3 + $0x58] sm:$0x3] %vm3750, 0.0
        %3761 = vst.msk [vmem:[#allocation3 + $0x60] sm:$0xff] %vm3747, 0.0
        %3762 = vst.msk [vmem:[#allocation3 + $0x68] sm:$0xff] %vm3747, 0.0
        %3763 = vst.msk [vmem:[#allocation3 + $0x70] sm:$0x3] %vm3750, 0.0
        %3764 = vst.msk [vmem:[#allocation3 + $0x78] sm:$0xff] %vm3747, 0.0
        %3765 = vst.msk [vmem:[#allocation3 + $0x80] sm:$0xff] %vm3747, 0.0
        %3766 = vst.msk [vmem:[#allocation3 + $0x88] sm:$0x3] %vm3750, 0.0
        %3767 = vst.msk [vmem:[#allocation3 + $0x90] sm:$0xff] %vm3747, 0.0
        %3768 = vst.msk [vmem:[#allocation3 + $0x98] sm:$0xff] %vm3747, 0.0
        %3769 = vst.msk [vmem:[#allocation3 + $0xa0] sm:$0x3] %vm3750, 0.0
        %3770 = vst.msk [vmem:[#allocation3 + $0xa8] sm:$0xff] %vm3747, 0.0
        %3771 = vst.msk [vmem:[#allocation3 + $0xb0] sm:$0xff] %vm3747, 0.0
        %3772 = vst.msk [vmem:[#allocation3 + $0xb8] sm:$0x3] %vm3750, 0.0
        %3773 = vst.msk [vmem:[#allocation3 + $0xc0] sm:$0xff] %vm3747, 0.0
        %3774 = vst.msk [vmem:[#allocation3 + $0xc8] sm:$0xff] %vm3747, 0.0
        %3775 = vst.msk [vmem:[#allocation3 + $0xd0] sm:$0x3] %vm3750, 0.0
        %3776 = vst.msk [vmem:[#allocation3 + $0xd8] sm:$0xff] %vm3747, 0.0
        %3777 = vst.msk [vmem:[#allocation3 + $0xe0] sm:$0xff] %vm3747, 0.0
        %3778 = vst.msk [vmem:[#allocation3 + $0xe8] sm:$0x3] %vm3750, 0.0
        %3779 = vst.msk [vmem:[#allocation3 + $0xf0] sm:$0xff] %vm3747, 0.0
        %3780 = vst.msk [vmem:[#allocation3 + $0xf8] sm:$0xff] %vm3747, 0.0
        %3781 = vst.msk [vmem:[#allocation3 + $0x100] sm:$0x3] %vm3750, 0.0
        %3782 = vst.msk [vmem:[#allocation3 + $0x108] sm:$0xff] %vm3747, 0.0
        %3783 = vst.msk [vmem:[#allocation3 + $0x110] sm:$0xff] %vm3747, 0.0
        %3784 = vst.msk [vmem:[#allocation3 + $0x118] sm:$0x3] %vm3750, 0.0
        %3785 = vst.msk [vmem:[#allocation3 + $0x120] sm:$0xff] %vm3747, 0.0
        %3786 = vst.msk [vmem:[#allocation3 + $0x128] sm:$0xff] %vm3747, 0.0
        %3787 = vst.msk [vmem:[#allocation3 + $0x130] sm:$0x3] %vm3750, 0.0
        %3788 = vst.msk [vmem:[#allocation3 + $0x138] sm:$0xff] %vm3747, 0.0
        %3789 = vst.msk [vmem:[#allocation3 + $0x140] sm:$0xff] %vm3747, 0.0
        %3790 = vst.msk [vmem:[#allocation3 + $0x148] sm:$0x3] %vm3750, 0.0
        %3791 = vst.msk [vmem:[#allocation3 + $0x150] sm:$0xff] %vm3747, 0.0
        %3792 = vst.msk [vmem:[#allocation3 + $0x158] sm:$0xff] %vm3747, 0.0
        %3793 = vst.msk [vmem:[#allocation3 + $0x160] sm:$0x3] %vm3750, 0.0
        %3794 = vst.msk [vmem:[#allocation3 + $0x168] sm:$0xff] %vm3747, 0.0
        %3795 = vst.msk [vmem:[#allocation3 + $0x170] sm:$0xff] %vm3747, 0.0
        %3796 = vst.msk [vmem:[#allocation3 + $0x178] sm:$0x3] %vm3750, 0.0
        %3797 = vst.msk [vmem:[#allocation3 + $0x180] sm:$0xff] %vm3747, 0.0
        %3798 = vst.msk [vmem:[#allocation3 + $0x188] sm:$0xff] %vm3747, 0.0
        %3799 = vst.msk [vmem:[#allocation3 + $0x190] sm:$0x3] %vm3750, 0.0
        %3800 = vst.msk [vmem:[#allocation3 + $0x198] sm:$0xff] %vm3747, 0.0
        %3801 = vst.msk [vmem:[#allocation3 + $0x1a0] sm:$0xff] %vm3747, 0.0
        %3802 = vst.msk [vmem:[#allocation3 + $0x1a8] sm:$0x3] %vm3750, 0.0
        %s3803 = scalar_lea.vmem [#allocation3], 24
        %3804 = vst.msk [vmem:[%s3803 + $0x1] sm:$0xff] %vm3747, %v3715
        %3805 = vst.msk [vmem:[%s3803 + $0x9] sm:$0xff] %vm3747, %v3716
        %3806 = vst.msk [vmem:[%s3803 + $0x19] sm:$0xff] %vm3747, %v3717
        %3807 = vst.msk [vmem:[%s3803 + $0x21] sm:$0xff] %vm3747, %v3718
        %3808 = vst.msk [vmem:[%s3803 + $0x31] sm:$0xff] %vm3747, %v3719
        %3809 = vst.msk [vmem:[%s3803 + $0x39] sm:$0xff] %vm3747, %v3720
        %3810 = vst.msk [vmem:[%s3803 + $0x49] sm:$0xff] %vm3747, %v3721
        %3811 = vst.msk [vmem:[%s3803 + $0x51] sm:$0xff] %vm3747, %v3722
        %3812 = vst.msk [vmem:[%s3803 + $0x61] sm:$0xff] %vm3747, %v3723
        %3813 = vst.msk [vmem:[%s3803 + $0x69] sm:$0xff] %vm3747, %v3724
        %3814 = vst.msk [vmem:[%s3803 + $0x79] sm:$0xff] %vm3747, %v3725
        %3815 = vst.msk [vmem:[%s3803 + $0x81] sm:$0xff] %vm3747, %v3726
        %3816 = vst.msk [vmem:[%s3803 + $0x91] sm:$0xff] %vm3747, %v3727
        %3817 = vst.msk [vmem:[%s3803 + $0x99] sm:$0xff] %vm3747, %v3728
        %3818 = vst.msk [vmem:[%s3803 + $0xa9] sm:$0xff] %vm3747, %v3729
        %3819 = vst.msk [vmem:[%s3803 + $0xb1] sm:$0xff] %vm3747, %v3730
        %3820 = vst.msk [vmem:[%s3803 + $0xc1] sm:$0xff] %vm3747, %v3731
        %3821 = vst.msk [vmem:[%s3803 + $0xc9] sm:$0xff] %vm3747, %v3732
        %3822 = vst.msk [vmem:[%s3803 + $0xd9] sm:$0xff] %vm3747, %v3733
        %3823 = vst.msk [vmem:[%s3803 + $0xe1] sm:$0xff] %vm3747, %v3734
        %3824 = vst.msk [vmem:[%s3803 + $0xf1] sm:$0xff] %vm3747, %v3735
        %3825 = vst.msk [vmem:[%s3803 + $0xf9] sm:$0xff] %vm3747, %v3736
        %3826 = vst.msk [vmem:[%s3803 + $0x109] sm:$0xff] %vm3747, %v3737
        %3827 = vst.msk [vmem:[%s3803 + $0x111] sm:$0xff] %vm3747, %v3738
        %3828 = vst.msk [vmem:[%s3803 + $0x121] sm:$0xff] %vm3747, %v3739
        %3829 = vst.msk [vmem:[%s3803 + $0x129] sm:$0xff] %vm3747, %v3740
        %3830 = vst.msk [vmem:[%s3803 + $0x139] sm:$0xff] %vm3747, %v3741
        %3831 = vst.msk [vmem:[%s3803 + $0x141] sm:$0xff] %vm3747, %v3742
        %3832 = vst.msk [vmem:[%s3803 + $0x151] sm:$0xff] %vm3747, %v3743
        %3833 = vst.msk [vmem:[%s3803 + $0x159] sm:$0xff] %vm3747, %v3744
        %3834 = vst.msk [vmem:[%s3803 + $0x169] sm:$0xff] %vm3747, %v3745
        %3835 = vst.msk [vmem:[%s3803 + $0x171] sm:$0xff] %vm3747, %v3746
        %v3836 = vld [vmem:[#allocation3] sm:$0xff]
        %v3837 = vld [vmem:[#allocation3 + $0x8] sm:$0xff]
        %v3838 = vld [vmem:[#allocation3 + $0x18] sm:$0xff]
        %v3839 = vld [vmem:[#allocation3 + $0x20] sm:$0xff]
        %v3840 = vld [vmem:[#allocation3 + $0x30] sm:$0xff]
        %v3841 = vld [vmem:[#allocation3 + $0x38] sm:$0xff]
        %v3842 = vld [vmem:[#allocation3 + $0x48] sm:$0xff]
        %v3843 = vld [vmem:[#allocation3 + $0x50] sm:$0xff]
        %v3844 = vld [vmem:[#allocation3 + $0x60] sm:$0xff]
        %v3845 = vld [vmem:[#allocation3 + $0x68] sm:$0xff]
        %v3846 = vld [vmem:[#allocation3 + $0x78] sm:$0xff]
        %v3847 = vld [vmem:[#allocation3 + $0x80] sm:$0xff]
        %v3848 = vld [vmem:[#allocation3 + $0x90] sm:$0xff]
        %v3849 = vld [vmem:[#allocation3 + $0x98] sm:$0xff]
        %v3850 = vld [vmem:[#allocation3 + $0xa8] sm:$0xff]
        %v3851 = vld [vmem:[#allocation3 + $0xb0] sm:$0xff]
        %v3852 = vld [vmem:[#allocation3 + $0xc0] sm:$0xff]
        %v3853 = vld [vmem:[#allocation3 + $0xc8] sm:$0xff]
        %v3854 = vld [vmem:[#allocation3 + $0xd8] sm:$0xff]
        %v3855 = vld [vmem:[#allocation3 + $0xe0] sm:$0xff]
        %v3856 = vld [vmem:[#allocation3 + $0xf0] sm:$0xff]
        %v3857 = vld [vmem:[#allocation3 + $0xf8] sm:$0xff]
        %v3858 = vld [vmem:[#allocation3 + $0x108] sm:$0xff]
        %v3859 = vld [vmem:[#allocation3 + $0x110] sm:$0xff]
        %v3860 = vld [vmem:[#allocation3 + $0x120] sm:$0xff]
        %v3861 = vld [vmem:[#allocation3 + $0x128] sm:$0xff]
        %v3862 = vld [vmem:[#allocation3 + $0x138] sm:$0xff]
        %v3863 = vld [vmem:[#allocation3 + $0x140] sm:$0xff]
        %v3864 = vld [vmem:[#allocation3 + $0x150] sm:$0xff]
        %v3865 = vld [vmem:[#allocation3 + $0x158] sm:$0xff]
        %v3866 = vld [vmem:[#allocation3 + $0x168] sm:$0xff]
        %v3867 = vld [vmem:[#allocation3 + $0x170] sm:$0xff]
        %v3868 = vpack.c.bf16 %v3837, %v3836
        %v3869 = vpack.c.bf16 %v3839, %v3838
        %v3870 = vpack.c.bf16 %v3841, %v3840
        %v3871 = vpack.c.bf16 %v3843, %v3842
        %v3872 = vpack.c.bf16 %v3845, %v3844
        %v3873 = vpack.c.bf16 %v3847, %v3846
        %v3874 = vpack.c.bf16 %v3849, %v3848
        %v3875 = vpack.c.bf16 %v3851, %v3850
        %v3876 = vpack.c.bf16 %v3853, %v3852
        %v3877 = vpack.c.bf16 %v3855, %v3854
        %v3878 = vpack.c.bf16 %v3857, %v3856
        %v3879 = vpack.c.bf16 %v3859, %v3858
        %v3880 = vpack.c.bf16 %v3861, %v3860
        %v3881 = vpack.c.bf16 %v3863, %v3862
        %v3882 = vpack.c.bf16 %v3865, %v3864
        %v3883 = vpack.c.bf16 %v3867, %v3866
        %v3884 = vld [vmem:[%s5] sm:$0x3]
        %v3885 = vld [vmem:[#allocation3 + $0x1] sm:$0xff]
        %v3886 = vld [vmem:[#allocation3 + $0x9] sm:$0xff]
        %v3887 = vld [vmem:[#allocation3 + $0x19] sm:$0xff]
        %v3888 = vld [vmem:[#allocation3 + $0x21] sm:$0xff]
        %v3889 = vld [vmem:[#allocation3 + $0x31] sm:$0xff]
        %v3890 = vld [vmem:[#allocation3 + $0x39] sm:$0xff]
        %v3891 = vld [vmem:[#allocation3 + $0x49] sm:$0xff]
        %v3892 = vld [vmem:[#allocation3 + $0x51] sm:$0xff]
        %v3893 = vld [vmem:[#allocation3 + $0x61] sm:$0xff]
        %v3894 = vld [vmem:[#allocation3 + $0x69] sm:$0xff]
        %v3895 = vld [vmem:[#allocation3 + $0x79] sm:$0xff]
        %v3896 = vld [vmem:[#allocation3 + $0x81] sm:$0xff]
        %v3897 = vld [vmem:[#allocation3 + $0x91] sm:$0xff]
        %v3898 = vld [vmem:[#allocation3 + $0x99] sm:$0xff]
        %v3899 = vld [vmem:[#allocation3 + $0xa9] sm:$0xff]
        %v3900 = vld [vmem:[#allocation3 + $0xb1] sm:$0xff]
        %v3901 = vld [vmem:[#allocation3 + $0xc1] sm:$0xff]
        %v3902 = vld [vmem:[#allocation3 + $0xc9] sm:$0xff]
        %v3903 = vld [vmem:[#allocation3 + $0xd9] sm:$0xff]
        %v3904 = vld [vmem:[#allocation3 + $0xe1] sm:$0xff]
        %v3905 = vld [vmem:[#allocation3 + $0xf1] sm:$0xff]
        %v3906 = vld [vmem:[#allocation3 + $0xf9] sm:$0xff]
        %v3907 = vld [vmem:[#allocation3 + $0x109] sm:$0xff]
        %v3908 = vld [vmem:[#allocation3 + $0x111] sm:$0xff]
        %v3909 = vld [vmem:[#allocation3 + $0x121] sm:$0xff]
        %v3910 = vld [vmem:[#allocation3 + $0x129] sm:$0xff]
        %v3911 = vld [vmem:[#allocation3 + $0x139] sm:$0xff]
        %v3912 = vld [vmem:[#allocation3 + $0x141] sm:$0xff]
        %v3913 = vld [vmem:[#allocation3 + $0x151] sm:$0xff]
        %v3914 = vld [vmem:[#allocation3 + $0x159] sm:$0xff]
        %v3915 = vld [vmem:[#allocation3 + $0x169] sm:$0xff]
        %v3916 = vld [vmem:[#allocation3 + $0x171] sm:$0xff]
        %v3917 = vpack.c.bf16 %v3886, %v3885
        %v3918 = vpack.c.bf16 %v3888, %v3887
        %v3919 = vpack.c.bf16 %v3890, %v3889
        %v3920 = vpack.c.bf16 %v3892, %v3891
        %v3921 = vpack.c.bf16 %v3894, %v3893
        %v3922 = vpack.c.bf16 %v3896, %v3895
        %v3923 = vpack.c.bf16 %v3898, %v3897
        %v3924 = vpack.c.bf16 %v3900, %v3899
        %v3925 = vpack.c.bf16 %v3902, %v3901
        %v3926 = vpack.c.bf16 %v3904, %v3903
        %v3927 = vpack.c.bf16 %v3906, %v3905
        %v3928 = vpack.c.bf16 %v3908, %v3907
        %v3929 = vpack.c.bf16 %v3910, %v3909
        %v3930 = vpack.c.bf16 %v3912, %v3911
        %v3931 = vpack.c.bf16 %v3914, %v3913
        %v3932 = vpack.c.bf16 %v3916, %v3915
        %s3933 = scalar_lea.vmem %s5, 2
        %v3934 = vld [vmem:[%s3933] sm:$0x3]
        %v3936 = vsel %vm3747, %v3934, 0
        %v3939 = vsel %vm3747, %v3917, 0
        %v3942 = vsel %vm3747, %v3918, 0
        %v3945 = vsel %vm3747, %v3919, 0
        %v3948 = vsel %vm3747, %v3920, 0
        %v3951 = vsel %vm3747, %v3921, 0
        %v3954 = vsel %vm3747, %v3922, 0
        %v3957 = vsel %vm3747, %v3923, 0
        %v3960 = vsel %vm3747, %v3924, 0
        %v3963 = vsel %vm3747, %v3925, 0
        %v3966 = vsel %vm3747, %v3926, 0
        %v3969 = vsel %vm3747, %v3927, 0
        %v3972 = vsel %vm3747, %v3928, 0
        %v3975 = vsel %vm3747, %v3929, 0
        %v3978 = vsel %vm3747, %v3930, 0
        %v3981 = vsel %vm3747, %v3931, 0
        %v3984 = vsel %vm3747, %v3932, 0
        %3986 = vmatprep.subr.bf16.mxu0 0
        %3987 = vmatpush1.bf16.xpose.msra.mxu0 %v3939
        %3988 = vmatprep.subr.bf16.mxu0 0
        %3989 = vmatpush1.bf16.xpose.msra.mxu0 %v3942
        %3990 = vmatprep.subr.bf16.mxu0 0
        %3991 = vmatpush1.bf16.xpose.msra.mxu0 %v3945
        %3992 = vmatprep.subr.bf16.mxu0 0
        %3993 = vmatpush1.bf16.xpose.msra.mxu0 %v3948
        %3994 = vmatprep.subr.bf16.mxu0 0
        %3995 = vmatpush1.bf16.xpose.msra.mxu0 %v3951
        %3996 = vmatprep.subr.bf16.mxu0 0
        %3997 = vmatpush1.bf16.xpose.msra.mxu0 %v3954
        %3998 = vmatprep.subr.bf16.mxu0 0
        %3999 = vmatpush1.bf16.xpose.msra.mxu0 %v3957
        %4000 = vmatprep.subr.bf16.mxu0 0
        %4001 = vmatpush1.bf16.xpose.msra.mxu0 %v3960
        %4002 = vmatprep.subr.bf16.mxu0 0
        %4003 = vmatpush1.bf16.xpose.msra.mxu0 %v3963
        %4004 = vmatprep.subr.bf16.mxu0 0
        %4005 = vmatpush1.bf16.xpose.msra.mxu0 %v3966
        %4006 = vmatprep.subr.bf16.mxu0 0
        %4007 = vmatpush1.bf16.xpose.msra.mxu0 %v3969
        %4008 = vmatprep.subr.bf16.mxu0 0
        %4009 = vmatpush1.bf16.xpose.msra.mxu0 %v3972
        %4010 = vmatprep.subr.bf16.mxu0 0
        %4011 = vmatpush1.bf16.xpose.msra.mxu0 %v3975
        %4012 = vmatprep.subr.bf16.mxu0 0
        %4013 = vmatpush1.bf16.xpose.msra.mxu0 %v3978
        %4014 = vmatprep.subr.bf16.mxu0 0
        %4015 = vmatpush1.bf16.xpose.msra.mxu0 %v3981
        %4016 = vmatprep.subr.bf16.mxu0 0
        %4017 = vmatpush1.bf16.xpose.msra.mxu0 %v3984
        %4018 = vmatprep.mubr.bf16.mxu0 0
        %4019 = vmatmul.mubr.bf16.gmra.mrb[0].mxu0 %v3936
        %v4020 = vpop.f32.mrb[0].mxu0
        %v4021 = vadd.f32 0.0, %v4020
        %v4022 = vpop.f32.mrb[0].mxu0
        %v4023 = vadd.f32 0.0, %v4022
        %v4024 = vpop.f32.mrb[0].mxu0
        %v4025 = vpop.f32.mrb[0].mxu0
        %4026 = vdwg.mxu0
        %v4028 = vsel %vm3747, %v3884, 0
        %v4031 = vsel %vm3747, %v3868, 0
        %v4034 = vsel %vm3747, %v3869, 0
        %v4037 = vsel %vm3747, %v3870, 0
        %v4040 = vsel %vm3747, %v3871, 0
        %v4043 = vsel %vm3747, %v3872, 0
        %v4046 = vsel %vm3747, %v3873, 0
        %v4049 = vsel %vm3747, %v3874, 0
        %v4052 = vsel %vm3747, %v3875, 0
        %v4055 = vsel %vm3747, %v3876, 0
        %v4058 = vsel %vm3747, %v3877, 0
        %v4061 = vsel %vm3747, %v3878, 0
        %v4064 = vsel %vm3747, %v3879, 0
        %v4067 = vsel %vm3747, %v3880, 0
        %v4070 = vsel %vm3747, %v3881, 0
        %v4073 = vsel %vm3747, %v3882, 0
        %v4076 = vsel %vm3747, %v3883, 0
        %4078 = vmatprep.subr.bf16.mxu0 0
        %4079 = vmatpush1.bf16.xpose.msra.mxu0 %v4031
        %4080 = vmatprep.subr.bf16.mxu0 0
        %4081 = vmatpush1.bf16.xpose.msra.mxu0 %v4034
        %4082 = vmatprep.subr.bf16.mxu0 0
        %4083 = vmatpush1.bf16.xpose.msra.mxu0 %v4037
        %4084 = vmatprep.subr.bf16.mxu0 0
        %4085 = vmatpush1.bf16.xpose.msra.mxu0 %v4040
        %4086 = vmatprep.subr.bf16.mxu0 0
        %4087 = vmatpush1.bf16.xpose.msra.mxu0 %v4043
        %4088 = vmatprep.subr.bf16.mxu0 0
        %4089 = vmatpush1.bf16.xpose.msra.mxu0 %v4046
        %4090 = vmatprep.subr.bf16.mxu0 0
        %4091 = vmatpush1.bf16.xpose.msra.mxu0 %v4049
        %4092 = vmatprep.subr.bf16.mxu0 0
        %4093 = vmatpush1.bf16.xpose.msra.mxu0 %v4052
        %4094 = vmatprep.subr.bf16.mxu0 0
        %4095 = vmatpush1.bf16.xpose.msra.mxu0 %v4055
        %4096 = vmatprep.subr.bf16.mxu0 0
        %4097 = vmatpush1.bf16.xpose.msra.mxu0 %v4058
        %4098 = vmatprep.subr.bf16.mxu0 0
        %4099 = vmatpush1.bf16.xpose.msra.mxu0 %v4061
        %4100 = vmatprep.subr.bf16.mxu0 0
        %4101 = vmatpush1.bf16.xpose.msra.mxu0 %v4064
        %4102 = vmatprep.subr.bf16.mxu0 0
        %4103 = vmatpush1.bf16.xpose.msra.mxu0 %v4067
        %4104 = vmatprep.subr.bf16.mxu0 0
        %4105 = vmatpush1.bf16.xpose.msra.mxu0 %v4070
        %4106 = vmatprep.subr.bf16.mxu0 0
        %4107 = vmatpush1.bf16.xpose.msra.mxu0 %v4073
        %4108 = vmatprep.subr.bf16.mxu0 0
        %4109 = vmatpush1.bf16.xpose.msra.mxu0 %v4076
        %4110 = vmatprep.mubr.bf16.mxu0 0
        %4111 = vmatmul.mubr.bf16.gmra.mrb[0].mxu0 %v4028
        %v4112 = vpop.f32.mrb[0].mxu0
        %v4113 = vadd.f32 %v4021, %v4112
        %v4114 = vpop.f32.mrb[0].mxu0
        %v4115 = vadd.f32 %v4023, %v4114
        %v4116 = vpop.f32.mrb[0].mxu0
        %v4117 = vpop.f32.mrb[0].mxu0
        %4118 = vdwg.mxu0
        %v4119 = vld [vmem:[#allocation3 + $0x2] sm:$0xff]
        %v4120 = vld [vmem:[#allocation3 + $0xa] sm:$0xff]
        %v4121 = vld [vmem:[#allocation3 + $0x1a] sm:$0xff]
        %v4122 = vld [vmem:[#allocation3 + $0x22] sm:$0xff]
        %v4123 = vld [vmem:[#allocation3 + $0x32] sm:$0xff]
        %v4124 = vld [vmem:[#allocation3 + $0x3a] sm:$0xff]
        %v4125 = vld [vmem:[#allocation3 + $0x4a] sm:$0xff]
        %v4126 = vld [vmem:[#allocation3 + $0x52] sm:$0xff]
        %v4127 = vld [vmem:[#allocation3 + $0x62] sm:$0xff]
        %v4128 = vld [vmem:[#allocation3 + $0x6a] sm:$0xff]
        %v4129 = vld [vmem:[#allocation3 + $0x7a] sm:$0xff]
        %v4130 = vld [vmem:[#allocation3 + $0x82] sm:$0xff]
        %v4131 = vld [vmem:[#allocation3 + $0x92] sm:$0xff]
        %v4132 = vld [vmem:[#allocation3 + $0x9a] sm:$0xff]
        %v4133 = vld [vmem:[#allocation3 + $0xaa] sm:$0xff]
        %v4134 = vld [vmem:[#allocation3 + $0xb2] sm:$0xff]
        %v4135 = vld [vmem:[#allocation3 + $0xc2] sm:$0xff]
        %v4136 = vld [vmem:[#allocation3 + $0xca] sm:$0xff]
        %v4137 = vld [vmem:[#allocation3 + $0xda] sm:$0xff]
        %v4138 = vld [vmem:[#allocation3 + $0xe2] sm:$0xff]
        %v4139 = vld [vmem:[#allocation3 + $0xf2] sm:$0xff]
        %v4140 = vld [vmem:[#allocation3 + $0xfa] sm:$0xff]
        %v4141 = vld [vmem:[#allocation3 + $0x10a] sm:$0xff]
        %v4142 = vld [vmem:[#allocation3 + $0x112] sm:$0xff]
        %v4143 = vld [vmem:[#allocation3 + $0x122] sm:$0xff]
        %v4144 = vld [vmem:[#allocation3 + $0x12a] sm:$0xff]
        %v4145 = vld [vmem:[#allocation3 + $0x13a] sm:$0xff]
        %v4146 = vld [vmem:[#allocation3 + $0x142] sm:$0xff]
        %v4147 = vld [vmem:[#allocation3 + $0x152] sm:$0xff]
        %v4148 = vld [vmem:[#allocation3 + $0x15a] sm:$0xff]
        %v4149 = vld [vmem:[#allocation3 + $0x16a] sm:$0xff]
        %v4150 = vld [vmem:[#allocation3 + $0x172] sm:$0xff]
        %v4151 = vpack.c.bf16 %v4120, %v4119
        %v4152 = vpack.c.bf16 %v4122, %v4121
        %v4153 = vpack.c.bf16 %v4124, %v4123
        %v4154 = vpack.c.bf16 %v4126, %v4125
        %v4155 = vpack.c.bf16 %v4128, %v4127
        %v4156 = vpack.c.bf16 %v4130, %v4129
        %v4157 = vpack.c.bf16 %v4132, %v4131
        %v4158 = vpack.c.bf16 %v4134, %v4133
        %v4159 = vpack.c.bf16 %v4136, %v4135
        %v4160 = vpack.c.bf16 %v4138, %v4137
        %v4161 = vpack.c.bf16 %v4140, %v4139
        %v4162 = vpack.c.bf16 %v4142, %v4141
        %v4163 = vpack.c.bf16 %v4144, %v4143
        %v4164 = vpack.c.bf16 %v4146, %v4145
        %v4165 = vpack.c.bf16 %v4148, %v4147
        %v4166 = vpack.c.bf16 %v4150, %v4149
        %s4167 = scalar_lea.vmem %s5, 4
        %v4168 = vld [vmem:[%s4167] sm:$0x3]
        %v4170 = vsel %vm3747, %v4168, 0
        %v4173 = vsel %vm3747, %v4151, 0
        %v4176 = vsel %vm3747, %v4152, 0
        %v4179 = vsel %vm3747, %v4153, 0
        %v4182 = vsel %vm3747, %v4154, 0
        %v4185 = vsel %vm3747, %v4155, 0
        %v4188 = vsel %vm3747, %v4156, 0
        %v4191 = vsel %vm3747, %v4157, 0
        %v4194 = vsel %vm3747, %v4158, 0
        %v4197 = vsel %vm3747, %v4159, 0
        %v4200 = vsel %vm3747, %v4160, 0
        %v4203 = vsel %vm3747, %v4161, 0
        %v4206 = vsel %vm3747, %v4162, 0
        %v4209 = vsel %vm3747, %v4163, 0
        %v4212 = vsel %vm3747, %v4164, 0
        %v4215 = vsel %vm3747, %v4165, 0
        %v4218 = vsel %vm3747, %v4166, 0
        %4220 = vmatprep.subr.bf16.mxu0 0
        %4221 = vmatpush1.bf16.xpose.msra.mxu0 %v4173
        %4222 = vmatprep.subr.bf16.mxu0 0
        %4223 = vmatpush1.bf16.xpose.msra.mxu0 %v4176
        %4224 = vmatprep.subr.bf16.mxu0 0
        %4225 = vmatpush1.bf16.xpose.msra.mxu0 %v4179
        %4226 = vmatprep.subr.bf16.mxu0 0
        %4227 = vmatpush1.bf16.xpose.msra.mxu0 %v4182
        %4228 = vmatprep.subr.bf16.mxu0 0
        %4229 = vmatpush1.bf16.xpose.msra.mxu0 %v4185
        %4230 = vmatprep.subr.bf16.mxu0 0
        %4231 = vmatpush1.bf16.xpose.msra.mxu0 %v4188
        %4232 = vmatprep.subr.bf16.mxu0 0
        %4233 = vmatpush1.bf16.xpose.msra.mxu0 %v4191
        %4234 = vmatprep.subr.bf16.mxu0 0
        %4235 = vmatpush1.bf16.xpose.msra.mxu0 %v4194
        %4236 = vmatprep.subr.bf16.mxu0 0
        %4237 = vmatpush1.bf16.xpose.msra.mxu0 %v4197
        %4238 = vmatprep.subr.bf16.mxu0 0
        %4239 = vmatpush1.bf16.xpose.msra.mxu0 %v4200
        %4240 = vmatprep.subr.bf16.mxu0 0
        %4241 = vmatpush1.bf16.xpose.msra.mxu0 %v4203
        %4242 = vmatprep.subr.bf16.mxu0 0
        %4243 = vmatpush1.bf16.xpose.msra.mxu0 %v4206
        %4244 = vmatprep.subr.bf16.mxu0 0
        %4245 = vmatpush1.bf16.xpose.msra.mxu0 %v4209
        %4246 = vmatprep.subr.bf16.mxu0 0
        %4247 = vmatpush1.bf16.xpose.msra.mxu0 %v4212
        %4248 = vmatprep.subr.bf16.mxu0 0
        %4249 = vmatpush1.bf16.xpose.msra.mxu0 %v4215
        %4250 = vmatprep.subr.bf16.mxu0 0
        %4251 = vmatpush1.bf16.xpose.msra.mxu0 %v4218
        %4252 = vmatprep.mubr.bf16.mxu0 0
        %4253 = vmatmul.mubr.bf16.gmra.mrb[0].mxu0 %v4170
        %v4254 = vpop.f32.mrb[0].mxu0
        %v4255 = vadd.f32 0.0, %v4254
        %v4256 = vpop.f32.mrb[0].mxu0
        %v4257 = vadd.f32 0.0, %v4256
        %v4258 = vpop.f32.mrb[0].mxu0
        %v4259 = vpop.f32.mrb[0].mxu0
        %4260 = vdwg.mxu0
        %v4261 = vadd.f32 %v4113, %v4255
        %v4262 = vadd.f32 %v4115, %v4257
        %v4263 = vld [vmem:[%s3803] sm:$0xff]
        %v4264 = vld [vmem:[%s3803 + $0x8] sm:$0xff]
        %v4265 = vld [vmem:[%s3803 + $0x18] sm:$0xff]
        %v4266 = vld [vmem:[%s3803 + $0x20] sm:$0xff]
        %v4267 = vld [vmem:[%s3803 + $0x30] sm:$0xff]
        %v4268 = vld [vmem:[%s3803 + $0x38] sm:$0xff]
        %v4269 = vld [vmem:[%s3803 + $0x48] sm:$0xff]
        %v4270 = vld [vmem:[%s3803 + $0x50] sm:$0xff]
        %v4271 = vld [vmem:[%s3803 + $0x60] sm:$0xff]
        %v4272 = vld [vmem:[%s3803 + $0x68] sm:$0xff]
        %v4273 = vld [vmem:[%s3803 + $0x78] sm:$0xff]
        %v4274 = vld [vmem:[%s3803 + $0x80] sm:$0xff]
        %v4275 = vld [vmem:[%s3803 + $0x90] sm:$0xff]
        %v4276 = vld [vmem:[%s3803 + $0x98] sm:$0xff]
        %v4277 = vld [vmem:[%s3803 + $0xa8] sm:$0xff]
        %v4278 = vld [vmem:[%s3803 + $0xb0] sm:$0xff]
        %v4279 = vld [vmem:[%s3803 + $0xc0] sm:$0xff]
        %v4280 = vld [vmem:[%s3803 + $0xc8] sm:$0xff]
        %v4281 = vld [vmem:[%s3803 + $0xd8] sm:$0xff]
        %v4282 = vld [vmem:[%s3803 + $0xe0] sm:$0xff]
        %v4283 = vld [vmem:[%s3803 + $0xf0] sm:$0xff]
        %v4284 = vld [vmem:[%s3803 + $0xf8] sm:$0xff]
        %v4285 = vld [vmem:[%s3803 + $0x108] sm:$0xff]
        %v4286 = vld [vmem:[%s3803 + $0x110] sm:$0xff]
        %v4287 = vld [vmem:[%s3803 + $0x120] sm:$0xff]
        %v4288 = vld [vmem:[%s3803 + $0x128] sm:$0xff]
        %v4289 = vld [vmem:[%s3803 + $0x138] sm:$0xff]
        %v4290 = vld [vmem:[%s3803 + $0x140] sm:$0xff]
        %v4291 = vld [vmem:[%s3803 + $0x150] sm:$0xff]
        %v4292 = vld [vmem:[%s3803 + $0x158] sm:$0xff]
        %v4293 = vld [vmem:[%s3803 + $0x168] sm:$0xff]
        %v4294 = vld [vmem:[%s3803 + $0x170] sm:$0xff]
        %v4295 = vpack.c.bf16 %v4264, %v4263
        %v4296 = vpack.c.bf16 %v4266, %v4265
        %v4297 = vpack.c.bf16 %v4268, %v4267
        %v4298 = vpack.c.bf16 %v4270, %v4269
        %v4299 = vpack.c.bf16 %v4272, %v4271
        %v4300 = vpack.c.bf16 %v4274, %v4273
        %v4301 = vpack.c.bf16 %v4276, %v4275
        %v4302 = vpack.c.bf16 %v4278, %v4277
        %v4303 = vpack.c.bf16 %v4280, %v4279
        %v4304 = vpack.c.bf16 %v4282, %v4281
        %v4305 = vpack.c.bf16 %v4284, %v4283
        %v4306 = vpack.c.bf16 %v4286, %v4285
        %v4307 = vpack.c.bf16 %v4288, %v4287
        %v4308 = vpack.c.bf16 %v4290, %v4289
        %v4309 = vpack.c.bf16 %v4292, %v4291
        %v4310 = vpack.c.bf16 %v4294, %v4293
        %s4311 = scalar_lea.vmem %s5, 6
        %v4312 = vld [vmem:[%s4311] sm:$0x3]
        %v4314 = vsel %vm3747, %v4312, 0
        %v4317 = vsel %vm3747, %v4295, 0
        %v4320 = vsel %vm3747, %v4296, 0
        %v4323 = vsel %vm3747, %v4297, 0
        %v4326 = vsel %vm3747, %v4298, 0
        %v4329 = vsel %vm3747, %v4299, 0
        %v4332 = vsel %vm3747, %v4300, 0
        %v4335 = vsel %vm3747, %v4301, 0
        %v4338 = vsel %vm3747, %v4302, 0
        %v4341 = vsel %vm3747, %v4303, 0
        %v4344 = vsel %vm3747, %v4304, 0
        %v4347 = vsel %vm3747, %v4305, 0
        %v4350 = vsel %vm3747, %v4306, 0
        %v4353 = vsel %vm3747, %v4307, 0
        %v4356 = vsel %vm3747, %v4308, 0
        %v4359 = vsel %vm3747, %v4309, 0
        %v4362 = vsel %vm3747, %v4310, 0
        %4364 = vmatprep.subr.bf16.mxu0 0
        %4365 = vmatpush1.bf16.xpose.msra.mxu0 %v4317
        %4366 = vmatprep.subr.bf16.mxu0 0
        %4367 = vmatpush1.bf16.xpose.msra.mxu0 %v4320
        %4368 = vmatprep.subr.bf16.mxu0 0
        %4369 = vmatpush1.bf16.xpose.msra.mxu0 %v4323
        %4370 = vmatprep.subr.bf16.mxu0 0
        %4371 = vmatpush1.bf16.xpose.msra.mxu0 %v4326
        %4372 = vmatprep.subr.bf16.mxu0 0
        %4373 = vmatpush1.bf16.xpose.msra.mxu0 %v4329
        %4374 = vmatprep.subr.bf16.mxu0 0
        %4375 = vmatpush1.bf16.xpose.msra.mxu0 %v4332
        %4376 = vmatprep.subr.bf16.mxu0 0
        %4377 = vmatpush1.bf16.xpose.msra.mxu0 %v4335
        %4378 = vmatprep.subr.bf16.mxu0 0
        %4379 = vmatpush1.bf16.xpose.msra.mxu0 %v4338
        %4380 = vmatprep.subr.bf16.mxu0 0
        %4381 = vmatpush1.bf16.xpose.msra.mxu0 %v4341
        %4382 = vmatprep.subr.bf16.mxu0 0
        %4383 = vmatpush1.bf16.xpose.msra.mxu0 %v4344
        %4384 = vmatprep.subr.bf16.mxu0 0
        %4385 = vmatpush1.bf16.xpose.msra.mxu0 %v4347
        %4386 = vmatprep.subr.bf16.mxu0 0
        %4387 = vmatpush1.bf16.xpose.msra.mxu0 %v4350
        %4388 = vmatprep.subr.bf16.mxu0 0
        %4389 = vmatpush1.bf16.xpose.msra.mxu0 %v4353
        %4390 = vmatprep.subr.bf16.mxu0 0
        %4391 = vmatpush1.bf16.xpose.msra.mxu0 %v4356
        %4392 = vmatprep.subr.bf16.mxu0 0
        %4393 = vmatpush1.bf16.xpose.msra.mxu0 %v4359
        %4394 = vmatprep.subr.bf16.mxu0 0
        %4395 = vmatpush1.bf16.xpose.msra.mxu0 %v4362
        %4396 = vmatprep.mubr.bf16.mxu0 0
        %4397 = vmatmul.mubr.bf16.gmra.mrb[0].mxu0 %v4314
        %v4398 = vpop.f32.mrb[0].mxu0
        %v4399 = vadd.f32 0.0, %v4398
        %v4400 = vpop.f32.mrb[0].mxu0
        %v4401 = vadd.f32 0.0, %v4400
        %v4402 = vpop.f32.mrb[0].mxu0
        %v4403 = vpop.f32.mrb[0].mxu0
        %4404 = vdwg.mxu0
        %v4405 = vadd.f32 %v4261, %v4399
        %v4406 = vadd.f32 %v4262, %v4401
        %v4407 = vld [vmem:[%s3803 + $0x1] sm:$0xff]
        %v4408 = vld [vmem:[%s3803 + $0x9] sm:$0xff]
        %v4409 = vld [vmem:[%s3803 + $0x19] sm:$0xff]
        %v4410 = vld [vmem:[%s3803 + $0x21] sm:$0xff]
        %v4411 = vld [vmem:[%s3803 + $0x31] sm:$0xff]
        %v4412 = vld [vmem:[%s3803 + $0x39] sm:$0xff]
        %v4413 = vld [vmem:[%s3803 + $0x49] sm:$0xff]
        %v4414 = vld [vmem:[%s3803 + $0x51] sm:$0xff]
        %v4415 = vld [vmem:[%s3803 + $0x61] sm:$0xff]
        %v4416 = vld [vmem:[%s3803 + $0x69] sm:$0xff]
        %v4417 = vld [vmem:[%s3803 + $0x79] sm:$0xff]
        %v4418 = vld [vmem:[%s3803 + $0x81] sm:$0xff]
        %v4419 = vld [vmem:[%s3803 + $0x91] sm:$0xff]
        %v4420 = vld [vmem:[%s3803 + $0x99] sm:$0xff]
        %v4421 = vld [vmem:[%s3803 + $0xa9] sm:$0xff]
        %v4422 = vld [vmem:[%s3803 + $0xb1] sm:$0xff]
        %v4423 = vld [vmem:[%s3803 + $0xc1] sm:$0xff]
        %v4424 = vld [vmem:[%s3803 + $0xc9] sm:$0xff]
        %v4425 = vld [vmem:[%s3803 + $0xd9] sm:$0xff]
        %v4426 = vld [vmem:[%s3803 + $0xe1] sm:$0xff]
        %v4427 = vld [vmem:[%s3803 + $0xf1] sm:$0xff]
        %v4428 = vld [vmem:[%s3803 + $0xf9] sm:$0xff]
        %v4429 = vld [vmem:[%s3803 + $0x109] sm:$0xff]
        %v4430 = vld [vmem:[%s3803 + $0x111] sm:$0xff]
        %v4431 = vld [vmem:[%s3803 + $0x121] sm:$0xff]
        %v4432 = vld [vmem:[%s3803 + $0x129] sm:$0xff]
        %v4433 = vld [vmem:[%s3803 + $0x139] sm:$0xff]
        %v4434 = vld [vmem:[%s3803 + $0x141] sm:$0xff]
        %v4435 = vld [vmem:[%s3803 + $0x151] sm:$0xff]
        %v4436 = vld [vmem:[%s3803 + $0x159] sm:$0xff]
        %v4437 = vld [vmem:[%s3803 + $0x169] sm:$0xff]
        %v4438 = vld [vmem:[%s3803 + $0x171] sm:$0xff]
        %v4439 = vpack.c.bf16 %v4408, %v4407
        %v4440 = vpack.c.bf16 %v4410, %v4409
        %v4441 = vpack.c.bf16 %v4412, %v4411
        %v4442 = vpack.c.bf16 %v4414, %v4413
        %v4443 = vpack.c.bf16 %v4416, %v4415
        %v4444 = vpack.c.bf16 %v4418, %v4417
        %v4445 = vpack.c.bf16 %v4420, %v4419
        %v4446 = vpack.c.bf16 %v4422, %v4421
        %v4447 = vpack.c.bf16 %v4424, %v4423
        %v4448 = vpack.c.bf16 %v4426, %v4425
        %v4449 = vpack.c.bf16 %v4428, %v4427
        %v4450 = vpack.c.bf16 %v4430, %v4429
        %v4451 = vpack.c.bf16 %v4432, %v4431
        %v4452 = vpack.c.bf16 %v4434, %v4433
        %v4453 = vpack.c.bf16 %v4436, %v4435
        %v4454 = vpack.c.bf16 %v4438, %v4437
        %s4455 = scalar_lea.vmem %s5, 8
        %v4456 = vld [vmem:[%s4455] sm:$0x3]
        %v4458 = vsel %vm3747, %v4456, 0
        %v4461 = vsel %vm3747, %v4439, 0
        %v4464 = vsel %vm3747, %v4440, 0
        %v4467 = vsel %vm3747, %v4441, 0
        %v4470 = vsel %vm3747, %v4442, 0
        %v4473 = vsel %vm3747, %v4443, 0
        %v4476 = vsel %vm3747, %v4444, 0
        %v4479 = vsel %vm3747, %v4445, 0
        %v4482 = vsel %vm3747, %v4446, 0
        %v4485 = vsel %vm3747, %v4447, 0
        %v4488 = vsel %vm3747, %v4448, 0
        %v4491 = vsel %vm3747, %v4449, 0
        %v4494 = vsel %vm3747, %v4450, 0
        %v4497 = vsel %vm3747, %v4451, 0
        %v4500 = vsel %vm3747, %v4452, 0
        %v4503 = vsel %vm3747, %v4453, 0
        %v4506 = vsel %vm3747, %v4454, 0
        %4508 = vmatprep.subr.bf16.mxu0 0
        %4509 = vmatpush1.bf16.xpose.msra.mxu0 %v4461
        %4510 = vmatprep.subr.bf16.mxu0 0
        %4511 = vmatpush1.bf16.xpose.msra.mxu0 %v4464
        %4512 = vmatprep.subr.bf16.mxu0 0
        %4513 = vmatpush1.bf16.xpose.msra.mxu0 %v4467
        %4514 = vmatprep.subr.bf16.mxu0 0
        %4515 = vmatpush1.bf16.xpose.msra.mxu0 %v4470
        %4516 = vmatprep.subr.bf16.mxu0 0
        %4517 = vmatpush1.bf16.xpose.msra.mxu0 %v4473
        %4518 = vmatprep.subr.bf16.mxu0 0
        %4519 = vmatpush1.bf16.xpose.msra.mxu0 %v4476
        %4520 = vmatprep.subr.bf16.mxu0 0
        %4521 = vmatpush1.bf16.xpose.msra.mxu0 %v4479
        %4522 = vmatprep.subr.bf16.mxu0 0
        %4523 = vmatpush1.bf16.xpose.msra.mxu0 %v4482
        %4524 = vmatprep.subr.bf16.mxu0 0
        %4525 = vmatpush1.bf16.xpose.msra.mxu0 %v4485
        %4526 = vmatprep.subr.bf16.mxu0 0
        %4527 = vmatpush1.bf16.xpose.msra.mxu0 %v4488
        %4528 = vmatprep.subr.bf16.mxu0 0
        %4529 = vmatpush1.bf16.xpose.msra.mxu0 %v4491
        %4530 = vmatprep.subr.bf16.mxu0 0
        %4531 = vmatpush1.bf16.xpose.msra.mxu0 %v4494
        %4532 = vmatprep.subr.bf16.mxu0 0
        %4533 = vmatpush1.bf16.xpose.msra.mxu0 %v4497
        %4534 = vmatprep.subr.bf16.mxu0 0
        %4535 = vmatpush1.bf16.xpose.msra.mxu0 %v4500
        %4536 = vmatprep.subr.bf16.mxu0 0
        %4537 = vmatpush1.bf16.xpose.msra.mxu0 %v4503
        %4538 = vmatprep.subr.bf16.mxu0 0
        %4539 = vmatpush1.bf16.xpose.msra.mxu0 %v4506
        %4540 = vmatprep.mubr.bf16.mxu0 0
        %4541 = vmatmul.mubr.bf16.gmra.mrb[0].mxu0 %v4458
        %v4542 = vpop.f32.mrb[0].mxu0
        %v4543 = vadd.f32 0.0, %v4542
        %v4544 = vpop.f32.mrb[0].mxu0
        %v4545 = vadd.f32 0.0, %v4544
        %v4546 = vpop.f32.mrb[0].mxu0
        %v4547 = vpop.f32.mrb[0].mxu0
        %4548 = vdwg.mxu0
        %v4549 = vadd.f32 %v4405, %v4543
        %v4550 = vadd.f32 %v4406, %v4545
        %v4551 = vld [vmem:[%s3803 + $0x2] sm:$0xff]
        %v4552 = vld [vmem:[%s3803 + $0xa] sm:$0xff]
        %v4553 = vld [vmem:[%s3803 + $0x1a] sm:$0xff]
        %v4554 = vld [vmem:[%s3803 + $0x22] sm:$0xff]
        %v4555 = vld [vmem:[%s3803 + $0x32] sm:$0xff]
        %v4556 = vld [vmem:[%s3803 + $0x3a] sm:$0xff]
        %v4557 = vld [vmem:[%s3803 + $0x4a] sm:$0xff]
        %v4558 = vld [vmem:[%s3803 + $0x52] sm:$0xff]
        %v4559 = vld [vmem:[%s3803 + $0x62] sm:$0xff]
        %v4560 = vld [vmem:[%s3803 + $0x6a] sm:$0xff]
        %v4561 = vld [vmem:[%s3803 + $0x7a] sm:$0xff]
        %v4562 = vld [vmem:[%s3803 + $0x82] sm:$0xff]
        %v4563 = vld [vmem:[%s3803 + $0x92] sm:$0xff]
        %v4564 = vld [vmem:[%s3803 + $0x9a] sm:$0xff]
        %v4565 = vld [vmem:[%s3803 + $0xaa] sm:$0xff]
        %v4566 = vld [vmem:[%s3803 + $0xb2] sm:$0xff]
        %v4567 = vld [vmem:[%s3803 + $0xc2] sm:$0xff]
        %v4568 = vld [vmem:[%s3803 + $0xca] sm:$0xff]
        %v4569 = vld [vmem:[%s3803 + $0xda] sm:$0xff]
        %v4570 = vld [vmem:[%s3803 + $0xe2] sm:$0xff]
        %v4571 = vld [vmem:[%s3803 + $0xf2] sm:$0xff]
        %v4572 = vld [vmem:[%s3803 + $0xfa] sm:$0xff]
        %v4573 = vld [vmem:[%s3803 + $0x10a] sm:$0xff]
        %v4574 = vld [vmem:[%s3803 + $0x112] sm:$0xff]
        %v4575 = vld [vmem:[%s3803 + $0x122] sm:$0xff]
        %v4576 = vld [vmem:[%s3803 + $0x12a] sm:$0xff]
        %v4577 = vld [vmem:[%s3803 + $0x13a] sm:$0xff]
        %v4578 = vld [vmem:[%s3803 + $0x142] sm:$0xff]
        %v4579 = vld [vmem:[%s3803 + $0x152] sm:$0xff]
        %v4580 = vld [vmem:[%s3803 + $0x15a] sm:$0xff]
        %v4581 = vld [vmem:[%s3803 + $0x16a] sm:$0xff]
        %v4582 = vld [vmem:[%s3803 + $0x172] sm:$0xff]
        %v4583 = vpack.c.bf16 %v4552, %v4551
        %v4584 = vpack.c.bf16 %v4554, %v4553
        %v4585 = vpack.c.bf16 %v4556, %v4555
        %v4586 = vpack.c.bf16 %v4558, %v4557
        %v4587 = vpack.c.bf16 %v4560, %v4559
        %v4588 = vpack.c.bf16 %v4562, %v4561
        %v4589 = vpack.c.bf16 %v4564, %v4563
        %v4590 = vpack.c.bf16 %v4566, %v4565
        %v4591 = vpack.c.bf16 %v4568, %v4567
        %v4592 = vpack.c.bf16 %v4570, %v4569
        %v4593 = vpack.c.bf16 %v4572, %v4571
        %v4594 = vpack.c.bf16 %v4574, %v4573
        %v4595 = vpack.c.bf16 %v4576, %v4575
        %v4596 = vpack.c.bf16 %v4578, %v4577
        %v4597 = vpack.c.bf16 %v4580, %v4579
        %v4598 = vpack.c.bf16 %v4582, %v4581
        %s4599 = scalar_lea.vmem %s5, 10
        %v4600 = vld [vmem:[%s4599] sm:$0x3]
        %v4602 = vsel %vm3747, %v4600, 0
        %v4605 = vsel %vm3747, %v4583, 0
        %v4608 = vsel %vm3747, %v4584, 0
        %v4611 = vsel %vm3747, %v4585, 0
        %v4614 = vsel %vm3747, %v4586, 0
        %v4617 = vsel %vm3747, %v4587, 0
        %v4620 = vsel %vm3747, %v4588, 0
        %v4623 = vsel %vm3747, %v4589, 0
        %v4626 = vsel %vm3747, %v4590, 0
        %v4629 = vsel %vm3747, %v4591, 0
        %v4632 = vsel %vm3747, %v4592, 0
        %v4635 = vsel %vm3747, %v4593, 0
        %v4638 = vsel %vm3747, %v4594, 0
        %v4641 = vsel %vm3747, %v4595, 0
        %v4644 = vsel %vm3747, %v4596, 0
        %v4647 = vsel %vm3747, %v4597, 0
        %v4650 = vsel %vm3747, %v4598, 0
        %4652 = vmatprep.subr.bf16.mxu0 0
        %4653 = vmatpush1.bf16.xpose.msra.mxu0 %v4605
        %4654 = vmatprep.subr.bf16.mxu0 0
        %4655 = vmatpush1.bf16.xpose.msra.mxu0 %v4608
        %4656 = vmatprep.subr.bf16.mxu0 0
        %4657 = vmatpush1.bf16.xpose.msra.mxu0 %v4611
        %4658 = vmatprep.subr.bf16.mxu0 0
        %4659 = vmatpush1.bf16.xpose.msra.mxu0 %v4614
        %4660 = vmatprep.subr.bf16.mxu0 0
        %4661 = vmatpush1.bf16.xpose.msra.mxu0 %v4617
        %4662 = vmatprep.subr.bf16.mxu0 0
        %4663 = vmatpush1.bf16.xpose.msra.mxu0 %v4620
        %4664 = vmatprep.subr.bf16.mxu0 0
        %4665 = vmatpush1.bf16.xpose.msra.mxu0 %v4623
        %4666 = vmatprep.subr.bf16.mxu0 0
        %4667 = vmatpush1.bf16.xpose.msra.mxu0 %v4626
        %4668 = vmatprep.subr.bf16.mxu0 0
        %4669 = vmatpush1.bf16.xpose.msra.mxu0 %v4629
        %4670 = vmatprep.subr.bf16.mxu0 0
        %4671 = vmatpush1.bf16.xpose.msra.mxu0 %v4632
        %4672 = vmatprep.subr.bf16.mxu0 0
        %4673 = vmatpush1.bf16.xpose.msra.mxu0 %v4635
        %4674 = vmatprep.subr.bf16.mxu0 0
        %4675 = vmatpush1.bf16.xpose.msra.mxu0 %v4638
        %4676 = vmatprep.subr.bf16.mxu0 0
        %4677 = vmatpush1.bf16.xpose.msra.mxu0 %v4641
        %4678 = vmatprep.subr.bf16.mxu0 0
        %4679 = vmatpush1.bf16.xpose.msra.mxu0 %v4644
        %4680 = vmatprep.subr.bf16.mxu0 0
        %4681 = vmatpush1.bf16.xpose.msra.mxu0 %v4647
        %4682 = vmatprep.subr.bf16.mxu0 0
        %4683 = vmatpush1.bf16.xpose.msra.mxu0 %v4650
        %4684 = vmatprep.mubr.bf16.mxu0 0
        %4685 = vmatmul.mubr.bf16.gmra.mrb[0].mxu0 %v4602
        %v4686 = vpop.f32.mrb[0].mxu0
        %v4687 = vadd.f32 0.0, %v4686
        %v4688 = vpop.f32.mrb[0].mxu0
        %v4689 = vadd.f32 0.0, %v4688
        %v4690 = vpop.f32.mrb[0].mxu0
        %v4691 = vpop.f32.mrb[0].mxu0
        %4692 = vdwg.mxu0
        %v4693 = vadd.f32 %v4549, %v4687
        %v4694 = vadd.f32 %v4550, %v4689
        %s4695 = scalar_lea.vmem [#allocation3], 48
        %v4696 = vld [vmem:[%s4695] sm:$0xff]
        %v4697 = vld [vmem:[%s4695 + $0x8] sm:$0xff]
        %v4698 = vld [vmem:[%s4695 + $0x18] sm:$0xff]
        %v4699 = vld [vmem:[%s4695 + $0x20] sm:$0xff]
        %v4700 = vld [vmem:[%s4695 + $0x30] sm:$0xff]
        %v4701 = vld [vmem:[%s4695 + $0x38] sm:$0xff]
        %v4702 = vld [vmem:[%s4695 + $0x48] sm:$0xff]
        %v4703 = vld [vmem:[%s4695 + $0x50] sm:$0xff]
        %v4704 = vld [vmem:[%s4695 + $0x60] sm:$0xff]
        %v4705 = vld [vmem:[%s4695 + $0x68] sm:$0xff]
        %v4706 = vld [vmem:[%s4695 + $0x78] sm:$0xff]
        %v4707 = vld [vmem:[%s4695 + $0x80] sm:$0xff]
        %v4708 = vld [vmem:[%s4695 + $0x90] sm:$0xff]
        %v4709 = vld [vmem:[%s4695 + $0x98] sm:$0xff]
        %v4710 = vld [vmem:[%s4695 + $0xa8] sm:$0xff]
        %v4711 = vld [vmem:[%s4695 + $0xb0] sm:$0xff]
        %v4712 = vld [vmem:[%s4695 + $0xc0] sm:$0xff]
        %v4713 = vld [vmem:[%s4695 + $0xc8] sm:$0xff]
        %v4714 = vld [vmem:[%s4695 + $0xd8] sm:$0xff]
        %v4715 = vld [vmem:[%s4695 + $0xe0] sm:$0xff]
        %v4716 = vld [vmem:[%s4695 + $0xf0] sm:$0xff]
        %v4717 = vld [vmem:[%s4695 + $0xf8] sm:$0xff]
        %v4718 = vld [vmem:[%s4695 + $0x108] sm:$0xff]
        %v4719 = vld [vmem:[%s4695 + $0x110] sm:$0xff]
        %v4720 = vld [vmem:[%s4695 + $0x120] sm:$0xff]
        %v4721 = vld [vmem:[%s4695 + $0x128] sm:$0xff]
        %v4722 = vld [vmem:[%s4695 + $0x138] sm:$0xff]
        %v4723 = vld [vmem:[%s4695 + $0x140] sm:$0xff]
        %v4724 = vld [vmem:[%s4695 + $0x150] sm:$0xff]
        %v4725 = vld [vmem:[%s4695 + $0x158] sm:$0xff]
        %v4726 = vld [vmem:[%s4695 + $0x168] sm:$0xff]
        %v4727 = vld [vmem:[%s4695 + $0x170] sm:$0xff]
        %v4728 = vpack.c.bf16 %v4697, %v4696
        %v4729 = vpack.c.bf16 %v4699, %v4698
        %v4730 = vpack.c.bf16 %v4701, %v4700
        %v4731 = vpack.c.bf16 %v4703, %v4702
        %v4732 = vpack.c.bf16 %v4705, %v4704
        %v4733 = vpack.c.bf16 %v4707, %v4706
        %v4734 = vpack.c.bf16 %v4709, %v4708
        %v4735 = vpack.c.bf16 %v4711, %v4710
        %v4736 = vpack.c.bf16 %v4713, %v4712
        %v4737 = vpack.c.bf16 %v4715, %v4714
        %v4738 = vpack.c.bf16 %v4717, %v4716
        %v4739 = vpack.c.bf16 %v4719, %v4718
        %v4740 = vpack.c.bf16 %v4721, %v4720
        %v4741 = vpack.c.bf16 %v4723, %v4722
        %v4742 = vpack.c.bf16 %v4725, %v4724
        %v4743 = vpack.c.bf16 %v4727, %v4726
        %s4744 = scalar_lea.vmem %s5, 12
        %v4745 = vld [vmem:[%s4744] sm:$0x3]
        %v4747 = vsel %vm3747, %v4745, 0
        %v4750 = vsel %vm3747, %v4728, 0
        %v4753 = vsel %vm3747, %v4729, 0
        %v4756 = vsel %vm3747, %v4730, 0
        %v4759 = vsel %vm3747, %v4731, 0
        %v4762 = vsel %vm3747, %v4732, 0
        %v4765 = vsel %vm3747, %v4733, 0
        %v4768 = vsel %vm3747, %v4734, 0
        %v4771 = vsel %vm3747, %v4735, 0
        %v4774 = vsel %vm3747, %v4736, 0
        %v4777 = vsel %vm3747, %v4737, 0
        %v4780 = vsel %vm3747, %v4738, 0
        %v4783 = vsel %vm3747, %v4739, 0
        %v4786 = vsel %vm3747, %v4740, 0
        %v4789 = vsel %vm3747, %v4741, 0
        %v4792 = vsel %vm3747, %v4742, 0
        %v4795 = vsel %vm3747, %v4743, 0
        %4797 = vmatprep.subr.bf16.mxu0 0
        %4798 = vmatpush1.bf16.xpose.msra.mxu0 %v4750
        %4799 = vmatprep.subr.bf16.mxu0 0
        %4800 = vmatpush1.bf16.xpose.msra.mxu0 %v4753
        %4801 = vmatprep.subr.bf16.mxu0 0
        %4802 = vmatpush1.bf16.xpose.msra.mxu0 %v4756
        %4803 = vmatprep.subr.bf16.mxu0 0
        %4804 = vmatpush1.bf16.xpose.msra.mxu0 %v4759
        %4805 = vmatprep.subr.bf16.mxu0 0
        %4806 = vmatpush1.bf16.xpose.msra.mxu0 %v4762
        %4807 = vmatprep.subr.bf16.mxu0 0
        %4808 = vmatpush1.bf16.xpose.msra.mxu0 %v4765
        %4809 = vmatprep.subr.bf16.mxu0 0
        %4810 = vmatpush1.bf16.xpose.msra.mxu0 %v4768
        %4811 = vmatprep.subr.bf16.mxu0 0
        %4812 = vmatpush1.bf16.xpose.msra.mxu0 %v4771
        %4813 = vmatprep.subr.bf16.mxu0 0
        %4814 = vmatpush1.bf16.xpose.msra.mxu0 %v4774
        %4815 = vmatprep.subr.bf16.mxu0 0
        %4816 = vmatpush1.bf16.xpose.msra.mxu0 %v4777
        %4817 = vmatprep.subr.bf16.mxu0 0
        %4818 = vmatpush1.bf16.xpose.msra.mxu0 %v4780
        %4819 = vmatprep.subr.bf16.mxu0 0
        %4820 = vmatpush1.bf16.xpose.msra.mxu0 %v4783
        %4821 = vmatprep.subr.bf16.mxu0 0
        %4822 = vmatpush1.bf16.xpose.msra.mxu0 %v4786
        %4823 = vmatprep.subr.bf16.mxu0 0
        %4824 = vmatpush1.bf16.xpose.msra.mxu0 %v4789
        %4825 = vmatprep.subr.bf16.mxu0 0
        %4826 = vmatpush1.bf16.xpose.msra.mxu0 %v4792
        %4827 = vmatprep.subr.bf16.mxu0 0
        %4828 = vmatpush1.bf16.xpose.msra.mxu0 %v4795
        %4829 = vmatprep.mubr.bf16.mxu0 0
        %4830 = vmatmul.mubr.bf16.gmra.mrb[0].mxu0 %v4747
        %v4831 = vpop.f32.mrb[0].mxu0
        %v4832 = vadd.f32 0.0, %v4831
        %v4833 = vpop.f32.mrb[0].mxu0
        %v4834 = vadd.f32 0.0, %v4833
        %v4835 = vpop.f32.mrb[0].mxu0
        %v4836 = vpop.f32.mrb[0].mxu0
        %4837 = vdwg.mxu0
        %v4838 = vadd.f32 %v4693, %v4832
        %v4839 = vadd.f32 %v4694, %v4834
        %v4840 = vld [vmem:[%s4695 + $0x1] sm:$0xff]
        %v4841 = vld [vmem:[%s4695 + $0x9] sm:$0xff]
        %v4842 = vld [vmem:[%s4695 + $0x19] sm:$0xff]
        %v4843 = vld [vmem:[%s4695 + $0x21] sm:$0xff]
        %v4844 = vld [vmem:[%s4695 + $0x31] sm:$0xff]
        %v4845 = vld [vmem:[%s4695 + $0x39] sm:$0xff]
        %v4846 = vld [vmem:[%s4695 + $0x49] sm:$0xff]
        %v4847 = vld [vmem:[%s4695 + $0x51] sm:$0xff]
        %v4848 = vld [vmem:[%s4695 + $0x61] sm:$0xff]
        %v4849 = vld [vmem:[%s4695 + $0x69] sm:$0xff]
        %v4850 = vld [vmem:[%s4695 + $0x79] sm:$0xff]
        %v4851 = vld [vmem:[%s4695 + $0x81] sm:$0xff]
        %v4852 = vld [vmem:[%s4695 + $0x91] sm:$0xff]
        %v4853 = vld [vmem:[%s4695 + $0x99] sm:$0xff]
        %v4854 = vld [vmem:[%s4695 + $0xa9] sm:$0xff]
        %v4855 = vld [vmem:[%s4695 + $0xb1] sm:$0xff]
        %v4856 = vld [vmem:[%s4695 + $0xc1] sm:$0xff]
        %v4857 = vld [vmem:[%s4695 + $0xc9] sm:$0xff]
        %v4858 = vld [vmem:[%s4695 + $0xd9] sm:$0xff]
        %v4859 = vld [vmem:[%s4695 + $0xe1] sm:$0xff]
        %v4860 = vld [vmem:[%s4695 + $0xf1] sm:$0xff]
        %v4861 = vld [vmem:[%s4695 + $0xf9] sm:$0xff]
        %v4862 = vld [vmem:[%s4695 + $0x109] sm:$0xff]
        %v4863 = vld [vmem:[%s4695 + $0x111] sm:$0xff]
        %v4864 = vld [vmem:[%s4695 + $0x121] sm:$0xff]
        %v4865 = vld [vmem:[%s4695 + $0x129] sm:$0xff]
        %v4866 = vld [vmem:[%s4695 + $0x139] sm:$0xff]
        %v4867 = vld [vmem:[%s4695 + $0x141] sm:$0xff]
        %v4868 = vld [vmem:[%s4695 + $0x151] sm:$0xff]
        %v4869 = vld [vmem:[%s4695 + $0x159] sm:$0xff]
        %v4870 = vld [vmem:[%s4695 + $0x169] sm:$0xff]
        %v4871 = vld [vmem:[%s4695 + $0x171] sm:$0xff]
        %v4872 = vpack.c.bf16 %v4841, %v4840
        %v4873 = vpack.c.bf16 %v4843, %v4842
        %v4874 = vpack.c.bf16 %v4845, %v4844
        %v4875 = vpack.c.bf16 %v4847, %v4846
        %v4876 = vpack.c.bf16 %v4849, %v4848
        %v4877 = vpack.c.bf16 %v4851, %v4850
        %v4878 = vpack.c.bf16 %v4853, %v4852
        %v4879 = vpack.c.bf16 %v4855, %v4854
        %v4880 = vpack.c.bf16 %v4857, %v4856
        %v4881 = vpack.c.bf16 %v4859, %v4858
        %v4882 = vpack.c.bf16 %v4861, %v4860
        %v4883 = vpack.c.bf16 %v4863, %v4862
        %v4884 = vpack.c.bf16 %v4865, %v4864
        %v4885 = vpack.c.bf16 %v4867, %v4866
        %v4886 = vpack.c.bf16 %v4869, %v4868
        %v4887 = vpack.c.bf16 %v4871, %v4870
        %s4888 = scalar_lea.vmem %s5, 14
        %v4889 = vld [vmem:[%s4888] sm:$0x3]
        %v4891 = vsel %vm3747, %v4889, 0
        %v4894 = vsel %vm3747, %v4872, 0
        %v4897 = vsel %vm3747, %v4873, 0
        %v4900 = vsel %vm3747, %v4874, 0
        %v4903 = vsel %vm3747, %v4875, 0
        %v4906 = vsel %vm3747, %v4876, 0
        %v4909 = vsel %vm3747, %v4877, 0
        %v4912 = vsel %vm3747, %v4878, 0
        %v4915 = vsel %vm3747, %v4879, 0
        %v4918 = vsel %vm3747, %v4880, 0
        %v4921 = vsel %vm3747, %v4881, 0
        %v4924 = vsel %vm3747, %v4882, 0
        %v4927 = vsel %vm3747, %v4883, 0
        %v4930 = vsel %vm3747, %v4884, 0
        %v4933 = vsel %vm3747, %v4885, 0
        %v4936 = vsel %vm3747, %v4886, 0
        %v4939 = vsel %vm3747, %v4887, 0
        %4941 = vmatprep.subr.bf16.mxu0 0
        %4942 = vmatpush1.bf16.xpose.msra.mxu0 %v4894
        %4943 = vmatprep.subr.bf16.mxu0 0
        %4944 = vmatpush1.bf16.xpose.msra.mxu0 %v4897
        %4945 = vmatprep.subr.bf16.mxu0 0
        %4946 = vmatpush1.bf16.xpose.msra.mxu0 %v4900
        %4947 = vmatprep.subr.bf16.mxu0 0
        %4948 = vmatpush1.bf16.xpose.msra.mxu0 %v4903
        %4949 = vmatprep.subr.bf16.mxu0 0
        %4950 = vmatpush1.bf16.xpose.msra.mxu0 %v4906
        %4951 = vmatprep.subr.bf16.mxu0 0
        %4952 = vmatpush1.bf16.xpose.msra.mxu0 %v4909
        %4953 = vmatprep.subr.bf16.mxu0 0
        %4954 = vmatpush1.bf16.xpose.msra.mxu0 %v4912
        %4955 = vmatprep.subr.bf16.mxu0 0
        %4956 = vmatpush1.bf16.xpose.msra.mxu0 %v4915
        %4957 = vmatprep.subr.bf16.mxu0 0
        %4958 = vmatpush1.bf16.xpose.msra.mxu0 %v4918
        %4959 = vmatprep.subr.bf16.mxu0 0
        %4960 = vmatpush1.bf16.xpose.msra.mxu0 %v4921
        %4961 = vmatprep.subr.bf16.mxu0 0
        %4962 = vmatpush1.bf16.xpose.msra.mxu0 %v4924
        %4963 = vmatprep.subr.bf16.mxu0 0
        %4964 = vmatpush1.bf16.xpose.msra.mxu0 %v4927
        %4965 = vmatprep.subr.bf16.mxu0 0
        %4966 = vmatpush1.bf16.xpose.msra.mxu0 %v4930
        %4967 = vmatprep.subr.bf16.mxu0 0
        %4968 = vmatpush1.bf16.xpose.msra.mxu0 %v4933
        %4969 = vmatprep.subr.bf16.mxu0 0
        %4970 = vmatpush1.bf16.xpose.msra.mxu0 %v4936
        %4971 = vmatprep.subr.bf16.mxu0 0
        %4972 = vmatpush1.bf16.xpose.msra.mxu0 %v4939
        %4973 = vmatprep.mubr.bf16.mxu0 0
        %4974 = vmatmul.mubr.bf16.gmra.mrb[0].mxu0 %v4891
        %v4975 = vpop.f32.mrb[0].mxu0
        %v4976 = vadd.f32 0.0, %v4975
        %v4977 = vpop.f32.mrb[0].mxu0
        %v4978 = vadd.f32 0.0, %v4977
        %v4979 = vpop.f32.mrb[0].mxu0
        %v4980 = vpop.f32.mrb[0].mxu0
        %4981 = vdwg.mxu0
        %v4982 = vadd.f32 %v4838, %v4976
        %v4983 = vadd.f32 %v4839, %v4978
        %v4984 = vld [vmem:[%s4695 + $0x2] sm:$0xff]
        %v4985 = vld [vmem:[%s4695 + $0xa] sm:$0xff]
        %v4986 = vld [vmem:[%s4695 + $0x1a] sm:$0xff]
        %v4987 = vld [vmem:[%s4695 + $0x22] sm:$0xff]
        %v4988 = vld [vmem:[%s4695 + $0x32] sm:$0xff]
        %v4989 = vld [vmem:[%s4695 + $0x3a] sm:$0xff]
        %v4990 = vld [vmem:[%s4695 + $0x4a] sm:$0xff]
        %v4991 = vld [vmem:[%s4695 + $0x52] sm:$0xff]
        %v4992 = vld [vmem:[%s4695 + $0x62] sm:$0xff]
        %v4993 = vld [vmem:[%s4695 + $0x6a] sm:$0xff]
        %v4994 = vld [vmem:[%s4695 + $0x7a] sm:$0xff]
        %v4995 = vld [vmem:[%s4695 + $0x82] sm:$0xff]
        %v4996 = vld [vmem:[%s4695 + $0x92] sm:$0xff]
        %v4997 = vld [vmem:[%s4695 + $0x9a] sm:$0xff]
        %v4998 = vld [vmem:[%s4695 + $0xaa] sm:$0xff]
        %v4999 = vld [vmem:[%s4695 + $0xb2] sm:$0xff]
        %v5000 = vld [vmem:[%s4695 + $0xc2] sm:$0xff]
        %v5001 = vld [vmem:[%s4695 + $0xca] sm:$0xff]
        %v5002 = vld [vmem:[%s4695 + $0xda] sm:$0xff]
        %v5003 = vld [vmem:[%s4695 + $0xe2] sm:$0xff]
        %v5004 = vld [vmem:[%s4695 + $0xf2] sm:$0xff]
        %v5005 = vld [vmem:[%s4695 + $0xfa] sm:$0xff]
        %v5006 = vld [vmem:[%s4695 + $0x10a] sm:$0xff]
        %v5007 = vld [vmem:[%s4695 + $0x112] sm:$0xff]
        %v5008 = vld [vmem:[%s4695 + $0x122] sm:$0xff]
        %v5009 = vld [vmem:[%s4695 + $0x12a] sm:$0xff]
        %v5010 = vld [vmem:[%s4695 + $0x13a] sm:$0xff]
        %v5011 = vld [vmem:[%s4695 + $0x142] sm:$0xff]
        %v5012 = vld [vmem:[%s4695 + $0x152] sm:$0xff]
        %v5013 = vld [vmem:[%s4695 + $0x15a] sm:$0xff]
        %v5014 = vld [vmem:[%s4695 + $0x16a] sm:$0xff]
        %v5015 = vld [vmem:[%s4695 + $0x172] sm:$0xff]
        %v5016 = vpack.c.bf16 %v4985, %v4984
        %v5017 = vpack.c.bf16 %v4987, %v4986
        %v5018 = vpack.c.bf16 %v4989, %v4988
        %v5019 = vpack.c.bf16 %v4991, %v4990
        %v5020 = vpack.c.bf16 %v4993, %v4992
        %v5021 = vpack.c.bf16 %v4995, %v4994
        %v5022 = vpack.c.bf16 %v4997, %v4996
        %v5023 = vpack.c.bf16 %v4999, %v4998
        %v5024 = vpack.c.bf16 %v5001, %v5000
        %v5025 = vpack.c.bf16 %v5003, %v5002
        %v5026 = vpack.c.bf16 %v5005, %v5004
        %v5027 = vpack.c.bf16 %v5007, %v5006
        %v5028 = vpack.c.bf16 %v5009, %v5008
        %v5029 = vpack.c.bf16 %v5011, %v5010
        %v5030 = vpack.c.bf16 %v5013, %v5012
        %v5031 = vpack.c.bf16 %v5015, %v5014
        %s5032 = scalar_lea.vmem %s5, 16
        %v5033 = vld [vmem:[%s5032] sm:$0x3]
        %v5035 = vsel %vm3747, %v5033, 0
        %v5038 = vsel %vm3747, %v5016, 0
        %v5041 = vsel %vm3747, %v5017, 0
        %v5044 = vsel %vm3747, %v5018, 0
        %v5047 = vsel %vm3747, %v5019, 0
        %v5050 = vsel %vm3747, %v5020, 0
        %v5053 = vsel %vm3747, %v5021, 0
        %v5056 = vsel %vm3747, %v5022, 0
        %v5059 = vsel %vm3747, %v5023, 0
        %v5062 = vsel %vm3747, %v5024, 0
        %v5065 = vsel %vm3747, %v5025, 0
        %v5068 = vsel %vm3747, %v5026, 0
        %v5071 = vsel %vm3747, %v5027, 0
        %v5074 = vsel %vm3747, %v5028, 0
        %v5077 = vsel %vm3747, %v5029, 0
        %v5080 = vsel %vm3747, %v5030, 0
        %v5083 = vsel %vm3747, %v5031, 0
        %5085 = vmatprep.subr.bf16.mxu0 0
        %5086 = vmatpush1.bf16.xpose.msra.mxu0 %v5038
        %5087 = vmatprep.subr.bf16.mxu0 0
        %5088 = vmatpush1.bf16.xpose.msra.mxu0 %v5041
        %5089 = vmatprep.subr.bf16.mxu0 0
        %5090 = vmatpush1.bf16.xpose.msra.mxu0 %v5044
        %5091 = vmatprep.subr.bf16.mxu0 0
        %5092 = vmatpush1.bf16.xpose.msra.mxu0 %v5047
        %5093 = vmatprep.subr.bf16.mxu0 0
        %5094 = vmatpush1.bf16.xpose.msra.mxu0 %v5050
        %5095 = vmatprep.subr.bf16.mxu0 0
        %5096 = vmatpush1.bf16.xpose.msra.mxu0 %v5053
        %5097 = vmatprep.subr.bf16.mxu0 0
        %5098 = vmatpush1.bf16.xpose.msra.mxu0 %v5056
        %5099 = vmatprep.subr.bf16.mxu0 0
        %5100 = vmatpush1.bf16.xpose.msra.mxu0 %v5059
        %5101 = vmatprep.subr.bf16.mxu0 0
        %5102 = vmatpush1.bf16.xpose.msra.mxu0 %v5062
        %5103 = vmatprep.subr.bf16.mxu0 0
        %5104 = vmatpush1.bf16.xpose.msra.mxu0 %v5065
        %5105 = vmatprep.subr.bf16.mxu0 0
        %5106 = vmatpush1.bf16.xpose.msra.mxu0 %v5068
        %5107 = vmatprep.subr.bf16.mxu0 0
        %5108 = vmatpush1.bf16.xpose.msra.mxu0 %v5071
        %5109 = vmatprep.subr.bf16.mxu0 0
        %5110 = vmatpush1.bf16.xpose.msra.mxu0 %v5074
        %5111 = vmatprep.subr.bf16.mxu0 0
        %5112 = vmatpush1.bf16.xpose.msra.mxu0 %v5077
        %5113 = vmatprep.subr.bf16.mxu0 0
        %5114 = vmatpush1.bf16.xpose.msra.mxu0 %v5080
        %5115 = vmatprep.subr.bf16.mxu0 0
        %5116 = vmatpush1.bf16.xpose.msra.mxu0 %v5083
        %5117 = vmatprep.mubr.bf16.mxu0 0
        %5118 = vmatmul.mubr.bf16.gmra.mrb[0].mxu0 %v5035
        %v5119 = vpop.f32.mrb[0].mxu0
        %v5120 = vadd.f32 0.0, %v5119
        %v5121 = vpop.f32.mrb[0].mxu0
        %v5122 = vadd.f32 0.0, %v5121
        %v5123 = vpop.f32.mrb[0].mxu0
        %v5124 = vpop.f32.mrb[0].mxu0
        %5125 = vdwg.mxu0
        %v5126 = vadd.f32 %v4982, %v5120
        %v5127 = vadd.f32 %v4983, %v5122
        %v5130 = vcombine.low %v5126, %v5127
        %5132 = vst [vmem:[#allocation4] sm:$0x77] %v5130
        %v5133 = vld [vmem:[#allocation4] sm:$0x7]
        %v5136 = vunpack.c.l.s4 1966171168
        %v5137 = vunpack.c.0.s8 %v5136
        %v5138 = vlaneseq
        %v5139 = vshrl.u32 %v5138, 7
        %v5140 = vsub.s32 %v5137, %v5139
        %v5141 = vrot.slane %v5133, %v5140
        %v5142 = vcombine.high %v5141, %v5141
        %v5144 = vunpack.c.l.s4 1966171168
        %v5145 = vunpack.c.0.s8 %v5144
        %v5146 = vlaneseq
        %v5147 = vshrl.u32 %v5146, 7
        %v5148 = vsub.s32 %v5145, %v5147
        %v5149 = vrot.slane %v5141, %v5148
        %v5151 = vunpack.c.l.s4 1966171168
        %v5152 = vunpack.c.0.s8 %v5151
        %v5153 = vlaneseq
        %v5154 = vshrl.u32 %v5153, 7
        %v5155 = vsub.s32 %v5152, %v5154
        %v5156 = vrot.slane %v5142, %v5155
        %v5157 = vcombine.high %v5149, %v5149
        %vm5161 = vcmask 122880
        %5162 = vst.msk [vmem:[#allocation5] sm:$0x1] %vm5161, %v5149
        %5163 = vst.msk [vmem:[#allocation5 + $0x10] sm:$0x1] %vm5161, %v5156
        %5164 = vst.msk [vmem:[#allocation5 + $0x20] sm:$0x1] %vm5161, %v5157
        %v5165 = vld [vmem:[#allocation4] sm:$0x7]
        %v5168 = vunpack.c.l.s4 1966171168
        %v5169 = vunpack.c.0.s8 %v5168
        %v5170 = vlaneseq
        %v5171 = vshrl.u32 %v5170, 7
        %v5172 = vsub.s32 %v5169, %v5171
        %v5173 = vrot.slane %v5165, %v5172
        %v5174 = vcombine.high %v5173, %v5173
        %v5176 = vunpack.c.l.s4 1966171168
        %v5177 = vunpack.c.0.s8 %v5176
        %v5178 = vlaneseq
        %v5179 = vshrl.u32 %v5178, 7
        %v5180 = vsub.s32 %v5177, %v5179
        %v5181 = vrot.slane %v5173, %v5180
        %v5183 = vunpack.c.l.s4 1966171168
        %v5184 = vunpack.c.0.s8 %v5183
        %v5185 = vlaneseq
        %v5186 = vshrl.u32 %v5185, 7
        %v5187 = vsub.s32 %v5184, %v5186
        %v5188 = vrot.slane %v5174, %v5187
        %v5189 = vcombine.high %v5181, %v5181
        %v5190 = vlaneseq
        %v5191 = vshrl.u32 %v5190, 7
        %v5192 = vsub.s32 0, %v5191
        %v5193 = vrot.slane %v5181, %v5192
        %v5194 = vlaneseq
        %v5195 = vshrl.u32 %v5194, 7
        %v5196 = vsub.s32 0, %v5195
        %v5197 = vrot.slane %v5188, %v5196
        %v5198 = vlaneseq
        %v5199 = vshrl.u32 %v5198, 7
        %v5200 = vsub.s32 0, %v5199
        %v5201 = vrot.slane %v5189, %v5200
        %5202 = vrot.lane.b32.xlu0 %v5193, 112
        %v5203 = vpop.permute.xlu0 %5202
        %5204 = vrot.lane.b32.xlu0 %v5197, 112
        %v5205 = vpop.permute.xlu0 %5204
        %5206 = vrot.lane.b32.xlu0 %v5201, 112
        %v5207 = vpop.permute.xlu0 %5206
        %5211 = vst.msk [vmem:[#allocation5 + $0x1] sm:$0x1] %vm5161, %v5203
        %5212 = vst.msk [vmem:[#allocation5 + $0x11] sm:$0x1] %vm5161, %v5205
        %5213 = vst.msk [vmem:[#allocation5 + $0x21] sm:$0x1] %vm5161, %v5207
        %v5214 = vld [vmem:[#allocation4] sm:$0x7]
        %v5217 = vunpack.c.l.s4 1966171168
        %v5218 = vunpack.c.0.s8 %v5217
        %v5219 = vlaneseq
        %v5220 = vshrl.u32 %v5219, 7
        %v5221 = vsub.s32 %v5218, %v5220
        %v5222 = vrot.slane %v5214, %v5221
        %v5223 = vcombine.high %v5222, %v5222
        %v5225 = vunpack.c.l.s4 1966171168
        %v5226 = vunpack.c.0.s8 %v5225
        %v5227 = vlaneseq
        %v5228 = vshrl.u32 %v5227, 7
        %v5229 = vsub.s32 %v5226, %v5228
        %v5230 = vrot.slane %v5222, %v5229
        %v5232 = vunpack.c.l.s4 1966171168
        %v5233 = vunpack.c.0.s8 %v5232
        %v5234 = vlaneseq
        %v5235 = vshrl.u32 %v5234, 7
        %v5236 = vsub.s32 %v5233, %v5235
        %v5237 = vrot.slane %v5223, %v5236
        %v5238 = vcombine.high %v5230, %v5230
        %v5239 = vlaneseq
        %v5240 = vshrl.u32 %v5239, 7
        %v5241 = vsub.s32 0, %v5240
        %v5242 = vrot.slane %v5230, %v5241
        %v5243 = vlaneseq
        %v5244 = vshrl.u32 %v5243, 7
        %v5245 = vsub.s32 0, %v5244
        %v5246 = vrot.slane %v5237, %v5245
        %v5247 = vlaneseq
        %v5248 = vshrl.u32 %v5247, 7
        %v5249 = vsub.s32 0, %v5248
        %v5250 = vrot.slane %v5238, %v5249
        %5251 = vrot.lane.b32.xlu0 %v5242, 96
        %v5252 = vpop.permute.xlu0 %5251
        %5253 = vrot.lane.b32.xlu0 %v5246, 96
        %v5254 = vpop.permute.xlu0 %5253
        %5255 = vrot.lane.b32.xlu0 %v5250, 96
        %v5256 = vpop.permute.xlu0 %5255
        %5260 = vst.msk [vmem:[#allocation5 + $0x2] sm:$0x1] %vm5161, %v5252
        %5261 = vst.msk [vmem:[#allocation5 + $0x12] sm:$0x1] %vm5161, %v5254
        %5262 = vst.msk [vmem:[#allocation5 + $0x22] sm:$0x1] %vm5161, %v5256
        %v5263 = vld [vmem:[#allocation4] sm:$0x7]
        %v5266 = vunpack.c.l.s4 1966171168
        %v5267 = vunpack.c.0.s8 %v5266
        %v5268 = vlaneseq
        %v5269 = vshrl.u32 %v5268, 7
        %v5270 = vsub.s32 %v5267, %v5269
        %v5271 = vrot.slane %v5263, %v5270
        %v5272 = vcombine.high %v5271, %v5271
        %v5274 = vunpack.c.l.s4 1966171168
        %v5275 = vunpack.c.0.s8 %v5274
        %v5276 = vlaneseq
        %v5277 = vshrl.u32 %v5276, 7
        %v5278 = vsub.s32 %v5275, %v5277
        %v5279 = vrot.slane %v5271, %v5278
        %v5281 = vunpack.c.l.s4 1966171168
        %v5282 = vunpack.c.0.s8 %v5281
        %v5283 = vlaneseq
        %v5284 = vshrl.u32 %v5283, 7
        %v5285 = vsub.s32 %v5282, %v5284
        %v5286 = vrot.slane %v5272, %v5285
        %v5287 = vcombine.high %v5279, %v5279
        %v5288 = vlaneseq
        %v5289 = vshrl.u32 %v5288, 7
        %v5290 = vsub.s32 0, %v5289
        %v5291 = vrot.slane %v5279, %v5290
        %v5292 = vlaneseq
        %v5293 = vshrl.u32 %v5292, 7
        %v5294 = vsub.s32 0, %v5293
        %v5295 = vrot.slane %v5286, %v5294
        %v5296 = vlaneseq
        %v5297 = vshrl.u32 %v5296, 7
        %v5298 = vsub.s32 0, %v5297
        %v5299 = vrot.slane %v5287, %v5298
        %5300 = vrot.lane.b32.xlu0 %v5291, 80
        %v5301 = vpop.permute.xlu0 %5300
        %5302 = vrot.lane.b32.xlu0 %v5295, 80
        %v5303 = vpop.permute.xlu0 %5302
        %5304 = vrot.lane.b32.xlu0 %v5299, 80
        %v5305 = vpop.permute.xlu0 %5304
        %5309 = vst.msk [vmem:[#allocation5 + $0x3] sm:$0x1] %vm5161, %v5301
        %5310 = vst.msk [vmem:[#allocation5 + $0x13] sm:$0x1] %vm5161, %v5303
        %5311 = vst.msk [vmem:[#allocation5 + $0x23] sm:$0x1] %vm5161, %v5305
        %v5312 = vld [vmem:[#allocation4] sm:$0x7]
        %v5315 = vunpack.c.l.s4 1966171168
        %v5316 = vunpack.c.0.s8 %v5315
        %v5317 = vlaneseq
        %v5318 = vshrl.u32 %v5317, 7
        %v5319 = vsub.s32 %v5316, %v5318
        %v5320 = vrot.slane %v5312, %v5319
        %v5321 = vcombine.high %v5320, %v5320
        %v5323 = vunpack.c.l.s4 1966171168
        %v5324 = vunpack.c.0.s8 %v5323
        %v5325 = vlaneseq
        %v5326 = vshrl.u32 %v5325, 7
        %v5327 = vsub.s32 %v5324, %v5326
        %v5328 = vrot.slane %v5320, %v5327
        %v5330 = vunpack.c.l.s4 1966171168
        %v5331 = vunpack.c.0.s8 %v5330
        %v5332 = vlaneseq
        %v5333 = vshrl.u32 %v5332, 7
        %v5334 = vsub.s32 %v5331, %v5333
        %v5335 = vrot.slane %v5321, %v5334
        %v5336 = vcombine.high %v5328, %v5328
        %v5337 = vlaneseq
        %v5338 = vshrl.u32 %v5337, 7
        %v5339 = vsub.s32 0, %v5338
        %v5340 = vrot.slane %v5328, %v5339
        %v5341 = vlaneseq
        %v5342 = vshrl.u32 %v5341, 7
        %v5343 = vsub.s32 0, %v5342
        %v5344 = vrot.slane %v5335, %v5343
        %v5345 = vlaneseq
        %v5346 = vshrl.u32 %v5345, 7
        %v5347 = vsub.s32 0, %v5346
        %v5348 = vrot.slane %v5336, %v5347
        %5349 = vrot.lane.b32.xlu0 %v5340, 64
        %v5350 = vpop.permute.xlu0 %5349
        %5351 = vrot.lane.b32.xlu0 %v5344, 64
        %v5352 = vpop.permute.xlu0 %5351
        %5353 = vrot.lane.b32.xlu0 %v5348, 64
        %v5354 = vpop.permute.xlu0 %5353
        %5358 = vst.msk [vmem:[#allocation5 + $0x4] sm:$0x1] %vm5161, %v5350
        %5359 = vst.msk [vmem:[#allocation5 + $0x14] sm:$0x1] %vm5161, %v5352
        %5360 = vst.msk [vmem:[#allocation5 + $0x24] sm:$0x1] %vm5161, %v5354
        %v5361 = vld [vmem:[#allocation4] sm:$0x7]
        %v5364 = vunpack.c.l.s4 1966171168
        %v5365 = vunpack.c.0.s8 %v5364
        %v5366 = vlaneseq
        %v5367 = vshrl.u32 %v5366, 7
        %v5368 = vsub.s32 %v5365, %v5367
        %v5369 = vrot.slane %v5361, %v5368
        %v5370 = vcombine.high %v5369, %v5369
        %v5372 = vunpack.c.l.s4 1966171168
        %v5373 = vunpack.c.0.s8 %v5372
        %v5374 = vlaneseq
        %v5375 = vshrl.u32 %v5374, 7
        %v5376 = vsub.s32 %v5373, %v5375
        %v5377 = vrot.slane %v5369, %v5376
        %v5379 = vunpack.c.l.s4 1966171168
        %v5380 = vunpack.c.0.s8 %v5379
        %v5381 = vlaneseq
        %v5382 = vshrl.u32 %v5381, 7
        %v5383 = vsub.s32 %v5380, %v5382
        %v5384 = vrot.slane %v5370, %v5383
        %v5385 = vcombine.high %v5377, %v5377
        %v5386 = vlaneseq
        %v5387 = vshrl.u32 %v5386, 7
        %v5388 = vsub.s32 0, %v5387
        %v5389 = vrot.slane %v5377, %v5388
        %v5390 = vlaneseq
        %v5391 = vshrl.u32 %v5390, 7
        %v5392 = vsub.s32 0, %v5391
        %v5393 = vrot.slane %v5384, %v5392
        %v5394 = vlaneseq
        %v5395 = vshrl.u32 %v5394, 7
        %v5396 = vsub.s32 0, %v5395
        %v5397 = vrot.slane %v5385, %v5396
        %5398 = vrot.lane.b32.xlu0 %v5389, 48
        %v5399 = vpop.permute.xlu0 %5398
        %5400 = vrot.lane.b32.xlu0 %v5393, 48
        %v5401 = vpop.permute.xlu0 %5400
        %5402 = vrot.lane.b32.xlu0 %v5397, 48
        %v5403 = vpop.permute.xlu0 %5402
        %5407 = vst.msk [vmem:[#allocation5 + $0x5] sm:$0x1] %vm5161, %v5399
        %5408 = vst.msk [vmem:[#allocation5 + $0x15] sm:$0x1] %vm5161, %v5401
        %5409 = vst.msk [vmem:[#allocation5 + $0x25] sm:$0x1] %vm5161, %v5403
        %v5410 = vld [vmem:[#allocation4] sm:$0x7]
        %v5413 = vunpack.c.l.s4 1966171168
        %v5414 = vunpack.c.0.s8 %v5413
        %v5415 = vlaneseq
        %v5416 = vshrl.u32 %v5415, 7
        %v5417 = vsub.s32 %v5414, %v5416
        %v5418 = vrot.slane %v5410, %v5417
        %v5419 = vcombine.high %v5418, %v5418
        %v5421 = vunpack.c.l.s4 1966171168
        %v5422 = vunpack.c.0.s8 %v5421
        %v5423 = vlaneseq
        %v5424 = vshrl.u32 %v5423, 7
        %v5425 = vsub.s32 %v5422, %v5424
        %v5426 = vrot.slane %v5418, %v5425
        %v5428 = vunpack.c.l.s4 1966171168
        %v5429 = vunpack.c.0.s8 %v5428
        %v5430 = vlaneseq
        %v5431 = vshrl.u32 %v5430, 7
        %v5432 = vsub.s32 %v5429, %v5431
        %v5433 = vrot.slane %v5419, %v5432
        %v5434 = vcombine.high %v5426, %v5426
        %v5435 = vlaneseq
        %v5436 = vshrl.u32 %v5435, 7
        %v5437 = vsub.s32 0, %v5436
        %v5438 = vrot.slane %v5426, %v5437
        %v5439 = vlaneseq
        %v5440 = vshrl.u32 %v5439, 7
        %v5441 = vsub.s32 0, %v5440
        %v5442 = vrot.slane %v5433, %v5441
        %v5443 = vlaneseq
        %v5444 = vshrl.u32 %v5443, 7
        %v5445 = vsub.s32 0, %v5444
        %v5446 = vrot.slane %v5434, %v5445
        %5447 = vrot.lane.b32.xlu0 %v5438, 32
        %v5448 = vpop.permute.xlu0 %5447
        %5449 = vrot.lane.b32.xlu0 %v5442, 32
        %v5450 = vpop.permute.xlu0 %5449
        %5451 = vrot.lane.b32.xlu0 %v5446, 32
        %v5452 = vpop.permute.xlu0 %5451
        %5456 = vst.msk [vmem:[#allocation5 + $0x6] sm:$0x1] %vm5161, %v5448
        %5457 = vst.msk [vmem:[#allocation5 + $0x16] sm:$0x1] %vm5161, %v5450
        %5458 = vst.msk [vmem:[#allocation5 + $0x26] sm:$0x1] %vm5161, %v5452
        %v5459 = vld [vmem:[#allocation4] sm:$0x7]
        %v5462 = vunpack.c.l.s4 1966171168
        %v5463 = vunpack.c.0.s8 %v5462
        %v5464 = vlaneseq
        %v5465 = vshrl.u32 %v5464, 7
        %v5466 = vsub.s32 %v5463, %v5465
        %v5467 = vrot.slane %v5459, %v5466
        %v5468 = vcombine.high %v5467, %v5467
        %v5470 = vunpack.c.l.s4 1966171168
        %v5471 = vunpack.c.0.s8 %v5470
        %v5472 = vlaneseq
        %v5473 = vshrl.u32 %v5472, 7
        %v5474 = vsub.s32 %v5471, %v5473
        %v5475 = vrot.slane %v5467, %v5474
        %v5477 = vunpack.c.l.s4 1966171168
        %v5478 = vunpack.c.0.s8 %v5477
        %v5479 = vlaneseq
        %v5480 = vshrl.u32 %v5479, 7
        %v5481 = vsub.s32 %v5478, %v5480
        %v5482 = vrot.slane %v5468, %v5481
        %v5483 = vcombine.high %v5475, %v5475
        %v5484 = vlaneseq
        %v5485 = vshrl.u32 %v5484, 7
        %v5486 = vsub.s32 0, %v5485
        %v5487 = vrot.slane %v5475, %v5486
        %v5488 = vlaneseq
        %v5489 = vshrl.u32 %v5488, 7
        %v5490 = vsub.s32 0, %v5489
        %v5491 = vrot.slane %v5482, %v5490
        %v5492 = vlaneseq
        %v5493 = vshrl.u32 %v5492, 7
        %v5494 = vsub.s32 0, %v5493
        %v5495 = vrot.slane %v5483, %v5494
        %5496 = vrot.lane.b32.xlu0 %v5487, 16
        %v5497 = vpop.permute.xlu0 %5496
        %5498 = vrot.lane.b32.xlu0 %v5491, 16
        %v5499 = vpop.permute.xlu0 %5498
        %5500 = vrot.lane.b32.xlu0 %v5495, 16
        %v5501 = vpop.permute.xlu0 %5500
        %5505 = vst.msk [vmem:[#allocation5 + $0x7] sm:$0x1] %vm5161, %v5497
        %5506 = vst.msk [vmem:[#allocation5 + $0x17] sm:$0x1] %vm5161, %v5499
        %5507 = vst.msk [vmem:[#allocation5 + $0x27] sm:$0x1] %vm5161, %v5501
        %v5508 = vld [vmem:[#allocation4 + $0x4] sm:$0x7]
        %v5511 = vunpack.c.l.s4 1966171168
        %v5512 = vunpack.c.0.s8 %v5511
        %v5513 = vlaneseq
        %v5514 = vshrl.u32 %v5513, 7
        %v5515 = vsub.s32 %v5512, %v5514
        %v5516 = vrot.slane %v5508, %v5515
        %v5517 = vcombine.high %v5516, %v5516
        %v5519 = vunpack.c.l.s4 1966171168
        %v5520 = vunpack.c.0.s8 %v5519
        %v5521 = vlaneseq
        %v5522 = vshrl.u32 %v5521, 7
        %v5523 = vsub.s32 %v5520, %v5522
        %v5524 = vrot.slane %v5516, %v5523
        %v5526 = vunpack.c.l.s4 1966171168
        %v5527 = vunpack.c.0.s8 %v5526
        %v5528 = vlaneseq
        %v5529 = vshrl.u32 %v5528, 7
        %v5530 = vsub.s32 %v5527, %v5529
        %v5531 = vrot.slane %v5517, %v5530
        %v5532 = vcombine.high %v5524, %v5524
        %5536 = vst.msk [vmem:[#allocation5 + $0x8] sm:$0x1] %vm5161, %v5524
        %5537 = vst.msk [vmem:[#allocation5 + $0x18] sm:$0x1] %vm5161, %v5531
        %5538 = vst.msk [vmem:[#allocation5 + $0x28] sm:$0x1] %vm5161, %v5532
        %v5539 = vld [vmem:[#allocation4 + $0x4] sm:$0x7]
        %v5542 = vunpack.c.l.s4 1966171168
        %v5543 = vunpack.c.0.s8 %v5542
        %v5544 = vlaneseq
        %v5545 = vshrl.u32 %v5544, 7
        %v5546 = vsub.s32 %v5543, %v5545
        %v5547 = vrot.slane %v5539, %v5546
        %v5548 = vcombine.high %v5547, %v5547
        %v5550 = vunpack.c.l.s4 1966171168
        %v5551 = vunpack.c.0.s8 %v5550
        %v5552 = vlaneseq
        %v5553 = vshrl.u32 %v5552, 7
        %v5554 = vsub.s32 %v5551, %v5553
        %v5555 = vrot.slane %v5547, %v5554
        %v5557 = vunpack.c.l.s4 1966171168
        %v5558 = vunpack.c.0.s8 %v5557
        %v5559 = vlaneseq
        %v5560 = vshrl.u32 %v5559, 7
        %v5561 = vsub.s32 %v5558, %v5560
        %v5562 = vrot.slane %v5548, %v5561
        %v5563 = vcombine.high %v5555, %v5555
        %v5564 = vlaneseq
        %v5565 = vshrl.u32 %v5564, 7
        %v5566 = vsub.s32 0, %v5565
        %v5567 = vrot.slane %v5555, %v5566
        %v5568 = vlaneseq
        %v5569 = vshrl.u32 %v5568, 7
        %v5570 = vsub.s32 0, %v5569
        %v5571 = vrot.slane %v5562, %v5570
        %v5572 = vlaneseq
        %v5573 = vshrl.u32 %v5572, 7
        %v5574 = vsub.s32 0, %v5573
        %v5575 = vrot.slane %v5563, %v5574
        %5576 = vrot.lane.b32.xlu0 %v5567, 112
        %v5577 = vpop.permute.xlu0 %5576
        %5578 = vrot.lane.b32.xlu0 %v5571, 112
        %v5579 = vpop.permute.xlu0 %5578
        %5580 = vrot.lane.b32.xlu0 %v5575, 112
        %v5581 = vpop.permute.xlu0 %5580
        %5585 = vst.msk [vmem:[#allocation5 + $0x9] sm:$0x1] %vm5161, %v5577
        %5586 = vst.msk [vmem:[#allocation5 + $0x19] sm:$0x1] %vm5161, %v5579
        %5587 = vst.msk [vmem:[#allocation5 + $0x29] sm:$0x1] %vm5161, %v5581
        %v5588 = vld [vmem:[#allocation4 + $0x4] sm:$0x7]
        %v5591 = vunpack.c.l.s4 1966171168
        %v5592 = vunpack.c.0.s8 %v5591
        %v5593 = vlaneseq
        %v5594 = vshrl.u32 %v5593, 7
        %v5595 = vsub.s32 %v5592, %v5594
        %v5596 = vrot.slane %v5588, %v5595
        %v5597 = vcombine.high %v5596, %v5596
        %v5599 = vunpack.c.l.s4 1966171168
        %v5600 = vunpack.c.0.s8 %v5599
        %v5601 = vlaneseq
        %v5602 = vshrl.u32 %v5601, 7
        %v5603 = vsub.s32 %v5600, %v5602
        %v5604 = vrot.slane %v5596, %v5603
        %v5606 = vunpack.c.l.s4 1966171168
        %v5607 = vunpack.c.0.s8 %v5606
        %v5608 = vlaneseq
        %v5609 = vshrl.u32 %v5608, 7
        %v5610 = vsub.s32 %v5607, %v5609
        %v5611 = vrot.slane %v5597, %v5610
        %v5612 = vcombine.high %v5604, %v5604
        %v5613 = vlaneseq
        %v5614 = vshrl.u32 %v5613, 7
        %v5615 = vsub.s32 0, %v5614
        %v5616 = vrot.slane %v5604, %v5615
        %v5617 = vlaneseq
        %v5618 = vshrl.u32 %v5617, 7
        %v5619 = vsub.s32 0, %v5618
        %v5620 = vrot.slane %v5611, %v5619
        %v5621 = vlaneseq
        %v5622 = vshrl.u32 %v5621, 7
        %v5623 = vsub.s32 0, %v5622
        %v5624 = vrot.slane %v5612, %v5623
        %5625 = vrot.lane.b32.xlu0 %v5616, 96
        %v5626 = vpop.permute.xlu0 %5625
        %5627 = vrot.lane.b32.xlu0 %v5620, 96
        %v5628 = vpop.permute.xlu0 %5627
        %5629 = vrot.lane.b32.xlu0 %v5624, 96
        %v5630 = vpop.permute.xlu0 %5629
        %5634 = vst.msk [vmem:[#allocation5 + $0xa] sm:$0x1] %vm5161, %v5626
        %5635 = vst.msk [vmem:[#allocation5 + $0x1a] sm:$0x1] %vm5161, %v5628
        %5636 = vst.msk [vmem:[#allocation5 + $0x2a] sm:$0x1] %vm5161, %v5630
        %v5637 = vld [vmem:[#allocation4 + $0x4] sm:$0x7]
        %v5640 = vunpack.c.l.s4 1966171168
        %v5641 = vunpack.c.0.s8 %v5640
        %v5642 = vlaneseq
        %v5643 = vshrl.u32 %v5642, 7
        %v5644 = vsub.s32 %v5641, %v5643
        %v5645 = vrot.slane %v5637, %v5644
        %v5646 = vcombine.high %v5645, %v5645
        %v5648 = vunpack.c.l.s4 1966171168
        %v5649 = vunpack.c.0.s8 %v5648
        %v5650 = vlaneseq
        %v5651 = vshrl.u32 %v5650, 7
        %v5652 = vsub.s32 %v5649, %v5651
        %v5653 = vrot.slane %v5645, %v5652
        %v5655 = vunpack.c.l.s4 1966171168
        %v5656 = vunpack.c.0.s8 %v5655
        %v5657 = vlaneseq
        %v5658 = vshrl.u32 %v5657, 7
        %v5659 = vsub.s32 %v5656, %v5658
        %v5660 = vrot.slane %v5646, %v5659
        %v5661 = vcombine.high %v5653, %v5653
        %v5662 = vlaneseq
        %v5663 = vshrl.u32 %v5662, 7
        %v5664 = vsub.s32 0, %v5663
        %v5665 = vrot.slane %v5653, %v5664
        %v5666 = vlaneseq
        %v5667 = vshrl.u32 %v5666, 7
        %v5668 = vsub.s32 0, %v5667
        %v5669 = vrot.slane %v5660, %v5668
        %v5670 = vlaneseq
        %v5671 = vshrl.u32 %v5670, 7
        %v5672 = vsub.s32 0, %v5671
        %v5673 = vrot.slane %v5661, %v5672
        %5674 = vrot.lane.b32.xlu0 %v5665, 80
        %v5675 = vpop.permute.xlu0 %5674
        %5676 = vrot.lane.b32.xlu0 %v5669, 80
        %v5677 = vpop.permute.xlu0 %5676
        %5678 = vrot.lane.b32.xlu0 %v5673, 80
        %v5679 = vpop.permute.xlu0 %5678
        %5683 = vst.msk [vmem:[#allocation5 + $0xb] sm:$0x1] %vm5161, %v5675
        %5684 = vst.msk [vmem:[#allocation5 + $0x1b] sm:$0x1] %vm5161, %v5677
        %5685 = vst.msk [vmem:[#allocation5 + $0x2b] sm:$0x1] %vm5161, %v5679
        %v5686 = vld [vmem:[#allocation4 + $0x4] sm:$0x7]
        %v5689 = vunpack.c.l.s4 1966171168
        %v5690 = vunpack.c.0.s8 %v5689
        %v5691 = vlaneseq
        %v5692 = vshrl.u32 %v5691, 7
        %v5693 = vsub.s32 %v5690, %v5692
        %v5694 = vrot.slane %v5686, %v5693
        %v5695 = vcombine.high %v5694, %v5694
        %v5697 = vunpack.c.l.s4 1966171168
        %v5698 = vunpack.c.0.s8 %v5697
        %v5699 = vlaneseq
        %v5700 = vshrl.u32 %v5699, 7
        %v5701 = vsub.s32 %v5698, %v5700
        %v5702 = vrot.slane %v5694, %v5701
        %v5704 = vunpack.c.l.s4 1966171168
        %v5705 = vunpack.c.0.s8 %v5704
        %v5706 = vlaneseq
        %v5707 = vshrl.u32 %v5706, 7
        %v5708 = vsub.s32 %v5705, %v5707
        %v5709 = vrot.slane %v5695, %v5708
        %v5710 = vcombine.high %v5702, %v5702
        %v5711 = vlaneseq
        %v5712 = vshrl.u32 %v5711, 7
        %v5713 = vsub.s32 0, %v5712
        %v5714 = vrot.slane %v5702, %v5713
        %v5715 = vlaneseq
        %v5716 = vshrl.u32 %v5715, 7
        %v5717 = vsub.s32 0, %v5716
        %v5718 = vrot.slane %v5709, %v5717
        %v5719 = vlaneseq
        %v5720 = vshrl.u32 %v5719, 7
        %v5721 = vsub.s32 0, %v5720
        %v5722 = vrot.slane %v5710, %v5721
        %5723 = vrot.lane.b32.xlu0 %v5714, 64
        %v5724 = vpop.permute.xlu0 %5723
        %5725 = vrot.lane.b32.xlu0 %v5718, 64
        %v5726 = vpop.permute.xlu0 %5725
        %5727 = vrot.lane.b32.xlu0 %v5722, 64
        %v5728 = vpop.permute.xlu0 %5727
        %5732 = vst.msk [vmem:[#allocation5 + $0xc] sm:$0x1] %vm5161, %v5724
        %5733 = vst.msk [vmem:[#allocation5 + $0x1c] sm:$0x1] %vm5161, %v5726
        %5734 = vst.msk [vmem:[#allocation5 + $0x2c] sm:$0x1] %vm5161, %v5728
        %v5735 = vld [vmem:[#allocation4 + $0x4] sm:$0x7]
        %v5738 = vunpack.c.l.s4 1966171168
        %v5739 = vunpack.c.0.s8 %v5738
        %v5740 = vlaneseq
        %v5741 = vshrl.u32 %v5740, 7
        %v5742 = vsub.s32 %v5739, %v5741
        %v5743 = vrot.slane %v5735, %v5742
        %v5744 = vcombine.high %v5743, %v5743
        %v5746 = vunpack.c.l.s4 1966171168
        %v5747 = vunpack.c.0.s8 %v5746
        %v5748 = vlaneseq
        %v5749 = vshrl.u32 %v5748, 7
        %v5750 = vsub.s32 %v5747, %v5749
        %v5751 = vrot.slane %v5743, %v5750
        %v5753 = vunpack.c.l.s4 1966171168
        %v5754 = vunpack.c.0.s8 %v5753
        %v5755 = vlaneseq
        %v5756 = vshrl.u32 %v5755, 7
        %v5757 = vsub.s32 %v5754, %v5756
        %v5758 = vrot.slane %v5744, %v5757
        %v5759 = vcombine.high %v5751, %v5751
        %v5760 = vlaneseq
        %v5761 = vshrl.u32 %v5760, 7
        %v5762 = vsub.s32 0, %v5761
        %v5763 = vrot.slane %v5751, %v5762
        %v5764 = vlaneseq
        %v5765 = vshrl.u32 %v5764, 7
        %v5766 = vsub.s32 0, %v5765
        %v5767 = vrot.slane %v5758, %v5766
        %v5768 = vlaneseq
        %v5769 = vshrl.u32 %v5768, 7
        %v5770 = vsub.s32 0, %v5769
        %v5771 = vrot.slane %v5759, %v5770
        %5772 = vrot.lane.b32.xlu0 %v5763, 48
        %v5773 = vpop.permute.xlu0 %5772
        %5774 = vrot.lane.b32.xlu0 %v5767, 48
        %v5775 = vpop.permute.xlu0 %5774
        %5776 = vrot.lane.b32.xlu0 %v5771, 48
        %v5777 = vpop.permute.xlu0 %5776
        %5781 = vst.msk [vmem:[#allocation5 + $0xd] sm:$0x1] %vm5161, %v5773
        %5782 = vst.msk [vmem:[#allocation5 + $0x1d] sm:$0x1] %vm5161, %v5775
        %5783 = vst.msk [vmem:[#allocation5 + $0x2d] sm:$0x1] %vm5161, %v5777
        %v5784 = vld [vmem:[#allocation4 + $0x4] sm:$0x7]
        %v5787 = vunpack.c.l.s4 1966171168
        %v5788 = vunpack.c.0.s8 %v5787
        %v5789 = vlaneseq
        %v5790 = vshrl.u32 %v5789, 7
        %v5791 = vsub.s32 %v5788, %v5790
        %v5792 = vrot.slane %v5784, %v5791
        %v5793 = vcombine.high %v5792, %v5792
        %v5795 = vunpack.c.l.s4 1966171168
        %v5796 = vunpack.c.0.s8 %v5795
        %v5797 = vlaneseq
        %v5798 = vshrl.u32 %v5797, 7
        %v5799 = vsub.s32 %v5796, %v5798
        %v5800 = vrot.slane %v5792, %v5799
        %v5802 = vunpack.c.l.s4 1966171168
        %v5803 = vunpack.c.0.s8 %v5802
        %v5804 = vlaneseq
        %v5805 = vshrl.u32 %v5804, 7
        %v5806 = vsub.s32 %v5803, %v5805
        %v5807 = vrot.slane %v5793, %v5806
        %v5808 = vcombine.high %v5800, %v5800
        %v5809 = vlaneseq
        %v5810 = vshrl.u32 %v5809, 7
        %v5811 = vsub.s32 0, %v5810
        %v5812 = vrot.slane %v5800, %v5811
        %v5813 = vlaneseq
        %v5814 = vshrl.u32 %v5813, 7
        %v5815 = vsub.s32 0, %v5814
        %v5816 = vrot.slane %v5807, %v5815
        %v5817 = vlaneseq
        %v5818 = vshrl.u32 %v5817, 7
        %v5819 = vsub.s32 0, %v5818
        %v5820 = vrot.slane %v5808, %v5819
        %5821 = vrot.lane.b32.xlu0 %v5812, 32
        %v5822 = vpop.permute.xlu0 %5821
        %5823 = vrot.lane.b32.xlu0 %v5816, 32
        %v5824 = vpop.permute.xlu0 %5823
        %5825 = vrot.lane.b32.xlu0 %v5820, 32
        %v5826 = vpop.permute.xlu0 %5825
        %5830 = vst.msk [vmem:[#allocation5 + $0xe] sm:$0x1] %vm5161, %v5822
        %5831 = vst.msk [vmem:[#allocation5 + $0x1e] sm:$0x1] %vm5161, %v5824
        %5832 = vst.msk [vmem:[#allocation5 + $0x2e] sm:$0x1] %vm5161, %v5826
        %v5833 = vld [vmem:[#allocation4 + $0x4] sm:$0x7]
        %v5836 = vunpack.c.l.s4 1966171168
        %v5837 = vunpack.c.0.s8 %v5836
        %v5838 = vlaneseq
        %v5839 = vshrl.u32 %v5838, 7
        %v5840 = vsub.s32 %v5837, %v5839
        %v5841 = vrot.slane %v5833, %v5840
        %v5842 = vcombine.high %v5841, %v5841
        %v5844 = vunpack.c.l.s4 1966171168
        %v5845 = vunpack.c.0.s8 %v5844
        %v5846 = vlaneseq
        %v5847 = vshrl.u32 %v5846, 7
        %v5848 = vsub.s32 %v5845, %v5847
        %v5849 = vrot.slane %v5841, %v5848
        %v5851 = vunpack.c.l.s4 1966171168
        %v5852 = vunpack.c.0.s8 %v5851
        %v5853 = vlaneseq
        %v5854 = vshrl.u32 %v5853, 7
        %v5855 = vsub.s32 %v5852, %v5854
        %v5856 = vrot.slane %v5842, %v5855
        %v5857 = vcombine.high %v5849, %v5849
        %v5858 = vlaneseq
        %v5859 = vshrl.u32 %v5858, 7
        %v5860 = vsub.s32 0, %v5859
        %v5861 = vrot.slane %v5849, %v5860
        %v5862 = vlaneseq
        %v5863 = vshrl.u32 %v5862, 7
        %v5864 = vsub.s32 0, %v5863
        %v5865 = vrot.slane %v5856, %v5864
        %v5866 = vlaneseq
        %v5867 = vshrl.u32 %v5866, 7
        %v5868 = vsub.s32 0, %v5867
        %v5869 = vrot.slane %v5857, %v5868
        %5870 = vrot.lane.b32.xlu0 %v5861, 16
        %v5871 = vpop.permute.xlu0 %5870
        %5872 = vrot.lane.b32.xlu0 %v5865, 16
        %v5873 = vpop.permute.xlu0 %5872
        %5874 = vrot.lane.b32.xlu0 %v5869, 16
        %v5875 = vpop.permute.xlu0 %5874
        %5879 = vst.msk [vmem:[#allocation5 + $0xf] sm:$0x1] %vm5161, %v5871
        %5880 = vst.msk [vmem:[#allocation5 + $0x1f] sm:$0x1] %vm5161, %v5873
        %5881 = vst.msk [vmem:[#allocation5 + $0x2f] sm:$0x1] %vm5161, %v5875
        %v5882 = vld [vmem:[#allocation5] sm:$0xff]
        %v5883 = vld [vmem:[#allocation5 + $0x8] sm:$0xff]
        %v5884 = vld [vmem:[#allocation5 + $0x10] sm:$0xff]
        %v5885 = vld [vmem:[#allocation5 + $0x18] sm:$0xff]
        %v5886 = vld [vmem:[#allocation5 + $0x20] sm:$0xff]
        %v5887 = vld [vmem:[#allocation5 + $0x28] sm:$0xff]
        %v5888 = vld [vmem:[%s8] sm:$0xff]
        %v5889 = vld [vmem:[%s8 + $0x8] sm:$0xff]
        %vm5890 = vcmask 130048
        %v5892 = vsel %vm5890, %v5882, 0
        %v5895 = vsel %vm5890, %v5883, 0
        %v5898 = vsel %vm5890, %v5884, 0
        %v5901 = vsel %vm5890, %v5885, 0
        %v5904 = vsel %vm5890, %v5886, 0
        %v5907 = vsel %vm5890, %v5887, 0
        %5909 = vmatprep.subr.mxu0 0.0
        %5910 = vmatpush1.msra.mxu0 %v5888
        %5911 = vmatprep.subr.mxu0 0.0
        %5912 = vmatpush1.msra.mxu0 %v5889
        %5913 = vmatprep.subr.mxu0 0.0
        %5914 = vmatpush1.msra.mxu0 0.0
        %5915 = vmatprep.subr.mxu0 0.0
        %5916 = vmatpush1.msra.mxu0 0.0
        %5917 = vmatprep.subr.mxu0 0.0
        %5918 = vmatpush1.msra.mxu0 0.0
        %5919 = vmatprep.subr.mxu0 0.0
        %5920 = vmatpush1.msra.mxu0 0.0
        %5921 = vmatprep.subr.mxu0 0.0
        %5922 = vmatpush1.msra.mxu0 0.0
        %5923 = vmatprep.subr.mxu0 0.0
        %5924 = vmatpush1.msra.mxu0 0.0
        %5925 = vmatprep.subr.mxu0 0.0
        %5926 = vmatpush1.msra.mxu0 0.0
        %5927 = vmatprep.subr.mxu0 0.0
        %5928 = vmatpush1.msra.mxu0 0.0
        %5929 = vmatprep.subr.mxu0 0.0
        %5930 = vmatpush1.msra.mxu0 0.0
        %5931 = vmatprep.subr.mxu0 0.0
        %5932 = vmatpush1.msra.mxu0 0.0
        %5933 = vmatprep.subr.mxu0 0.0
        %5934 = vmatpush1.msra.mxu0 0.0
        %5935 = vmatprep.subr.mxu0 0.0
        %5936 = vmatpush1.msra.mxu0 0.0
        %5937 = vmatprep.subr.mxu0 0.0
        %5938 = vmatpush1.msra.mxu0 0.0
        %5939 = vmatprep.subr.mxu0 0.0
        %5940 = vmatpush1.msra.mxu0 0.0
        %5941 = vmatprep.subr.mxu0 0.0
        %5942 = vmatpush1.msra.mxu0 0.0
        %5943 = vmatprep.subr.mxu0 0.0
        %5944 = vmatpush1.msra.mxu0 0.0
        %5945 = vmatprep.subr.mxu0 0.0
        %5946 = vmatpush1.msra.mxu0 0.0
        %5947 = vmatprep.subr.mxu0 0.0
        %5948 = vmatpush1.msra.mxu0 0.0
        %5949 = vmatprep.subr.mxu0 0.0
        %5950 = vmatpush1.msra.mxu0 0.0
        %5951 = vmatprep.subr.mxu0 0.0
        %5952 = vmatpush1.msra.mxu0 0.0
        %5953 = vmatprep.subr.mxu0 0.0
        %5954 = vmatpush1.msra.mxu0 0.0
        %5955 = vmatprep.subr.mxu0 0.0
        %5956 = vmatpush1.msra.mxu0 0.0
        %5957 = vmatprep.subr.mxu0 0.0
        %5958 = vmatpush1.msra.mxu0 0.0
        %5959 = vmatprep.subr.mxu0 0.0
        %5960 = vmatpush1.msra.mxu0 0.0
        %5961 = vmatprep.subr.mxu0 0.0
        %5962 = vmatpush1.msra.mxu0 0.0
        %5963 = vmatprep.subr.mxu0 0.0
        %5964 = vmatpush1.msra.mxu0 0.0
        %5965 = vmatprep.subr.mxu0 0.0
        %5966 = vmatpush1.msra.mxu0 0.0
        %5967 = vmatprep.subr.mxu0 0.0
        %5968 = vmatpush1.msra.mxu0 0.0
        %5969 = vmatprep.subr.mxu0 0.0
        %5970 = vmatpush1.msra.mxu0 0.0
        %5971 = vmatprep.subr.mxu0 0.0
        %5972 = vmatpush1.msra.mxu0 0.0
        %5973 = vmatprep.mubr.f32.mxu0 0.0
        %5974 = vmatmul.mubr.f32.gmra.mrb[0].mxu0 %v5892
        %v5975 = vpop.f32.mrb[0].mxu0
        %v5976 = vadd.f32 0.0, %v5975
        %v5977 = vpop.f32.mrb[0].mxu0
        %5978 = vmatprep.mubr.f32.mxu0 0.0
        %5979 = vmatmul.mubr.f32.gmra.mrb[0].mxu0 %v5895
        %v5980 = vpop.f32.mrb[0].mxu0
        %v5981 = vadd.f32 0.0, %v5980
        %v5982 = vpop.f32.mrb[0].mxu0
        %5983 = vmatprep.mubr.f32.mxu0 0.0
        %5984 = vmatmul.mubr.f32.gmra.mrb[0].mxu0 %v5898
        %v5985 = vpop.f32.mrb[0].mxu0
        %v5986 = vadd.f32 0.0, %v5985
        %v5987 = vpop.f32.mrb[0].mxu0
        %5988 = vmatprep.mubr.f32.mxu0 0.0
        %5989 = vmatmul.mubr.f32.gmra.mrb[0].mxu0 %v5901
        %v5990 = vpop.f32.mrb[0].mxu0
        %v5991 = vadd.f32 0.0, %v5990
        %v5992 = vpop.f32.mrb[0].mxu0
        %5993 = vmatprep.mubr.f32.mxu0 0.0
        %5994 = vmatmul.mubr.f32.gmra.mrb[0].mxu0 %v5904
        %v5995 = vpop.f32.mrb[0].mxu0
        %v5996 = vadd.f32 0.0, %v5995
        %v5997 = vpop.f32.mrb[0].mxu0
        %5998 = vmatprep.mubr.f32.mxu0 0.0
        %5999 = vmatmul.mubr.f32.gmra.mrb[0].mxu0 %v5907
        %v6000 = vpop.f32.mrb[0].mxu0
        %v6001 = vadd.f32 0.0, %v6000
        %v6002 = vpop.f32.mrb[0].mxu0
        %6003 = vdwg.mxu0
        %v6004 = vld [vmem:[%s7] sm:$0xff]
        %v6005 = vld [vmem:[%s7 + $0x8] sm:$0xff]
        %v6006 = vld [vmem:[%s7 + $0x10] sm:$0xff]
        %v6007 = vld [vmem:[%s7 + $0x18] sm:$0xff]
        %v6008 = vld [vmem:[%s7 + $0x20] sm:$0xff]
        %v6009 = vld [vmem:[%s7 + $0x28] sm:$0xff]
        %v6010 = vld [vmem:[%s7 + $0x30] sm:$0xff]
        %v6011 = vld [vmem:[%s7 + $0x38] sm:$0xff]
        %s6012 = sld [smem:[#allocation6]]
        %v6013 = vstv %s6012
        %v6015 = vsel %vm5890, %v6004, 0
        %v6018 = vsel %vm5890, %v6005, 0
        %v6021 = vsel %vm5890, %v6006, 0
        %v6024 = vsel %vm5890, %v6007, 0
        %v6027 = vsel %vm5890, %v6008, 0
        %v6030 = vsel %vm5890, %v6009, 0
        %v6033 = vsel %vm5890, %v6010, 0
        %v6036 = vsel %vm5890, %v6011, 0
        %6038 = vmatprep.subr.mxu0 0.0
        %6039 = vmatpush1.msra.mxu0 %v5976
        %6040 = vmatprep.subr.mxu0 0.0
        %6041 = vmatpush1.msra.mxu0 %v5981
        %6042 = vmatprep.subr.mxu0 0.0
        %6043 = vmatpush1.msra.mxu0 0.0
        %6044 = vmatprep.subr.mxu0 0.0
        %6045 = vmatpush1.msra.mxu0 0.0
        %6046 = vmatprep.subr.mxu0 0.0
        %6047 = vmatpush1.msra.mxu0 0.0
        %6048 = vmatprep.subr.mxu0 0.0
        %6049 = vmatpush1.msra.mxu0 0.0
        %6050 = vmatprep.subr.mxu0 0.0
        %6051 = vmatpush1.msra.mxu0 0.0
        %6052 = vmatprep.subr.mxu0 0.0
        %6053 = vmatpush1.msra.mxu0 0.0
        %6054 = vmatprep.subr.mxu0 0.0
        %6055 = vmatpush1.msra.mxu0 0.0
        %6056 = vmatprep.subr.mxu0 0.0
        %6057 = vmatpush1.msra.mxu0 0.0
        %6058 = vmatprep.subr.mxu0 0.0
        %6059 = vmatpush1.msra.mxu0 0.0
        %6060 = vmatprep.subr.mxu0 0.0
        %6061 = vmatpush1.msra.mxu0 0.0
        %6062 = vmatprep.subr.mxu0 0.0
        %6063 = vmatpush1.msra.mxu0 0.0
        %6064 = vmatprep.subr.mxu0 0.0
        %6065 = vmatpush1.msra.mxu0 0.0
        %6066 = vmatprep.subr.mxu0 0.0
        %6067 = vmatpush1.msra.mxu0 0.0
        %6068 = vmatprep.subr.mxu0 0.0
        %6069 = vmatpush1.msra.mxu0 0.0
        %6070 = vmatprep.subr.mxu0 0.0
        %6071 = vmatpush1.msra.mxu0 0.0
        %6072 = vmatprep.subr.mxu0 0.0
        %6073 = vmatpush1.msra.mxu0 0.0
        %6074 = vmatprep.subr.mxu0 0.0
        %6075 = vmatpush1.msra.mxu0 0.0
        %6076 = vmatprep.subr.mxu0 0.0
        %6077 = vmatpush1.msra.mxu0 0.0
        %6078 = vmatprep.subr.mxu0 0.0
        %6079 = vmatpush1.msra.mxu0 0.0
        %6080 = vmatprep.subr.mxu0 0.0
        %6081 = vmatpush1.msra.mxu0 0.0
        %6082 = vmatprep.subr.mxu0 0.0
        %6083 = vmatpush1.msra.mxu0 0.0
        %6084 = vmatprep.subr.mxu0 0.0
        %6085 = vmatpush1.msra.mxu0 0.0
        %6086 = vmatprep.subr.mxu0 0.0
        %6087 = vmatpush1.msra.mxu0 0.0
        %6088 = vmatprep.subr.mxu0 0.0
        %6089 = vmatpush1.msra.mxu0 0.0
        %6090 = vmatprep.subr.mxu0 0.0
        %6091 = vmatpush1.msra.mxu0 0.0
        %6092 = vmatprep.subr.mxu0 0.0
        %6093 = vmatpush1.msra.mxu0 0.0
        %6094 = vmatprep.subr.mxu0 0.0
        %6095 = vmatpush1.msra.mxu0 0.0
        %6096 = vmatprep.subr.mxu0 0.0
        %6097 = vmatpush1.msra.mxu0 0.0
        %6098 = vmatprep.subr.mxu0 0.0
        %6099 = vmatpush1.msra.mxu0 0.0
        %6100 = vmatprep.subr.mxu0 0.0
        %6101 = vmatpush1.msra.mxu0 0.0
        %6102 = vmatprep.mubr.f32.mxu0 0.0
        %6103 = vmatmul.mubr.f32.gmra.mrb[0].mxu0 %v6015
        %v6104 = vpop.f32.mrb[0].mxu0
        %v6105 = vadd.f32 %v6013, %v6104
        %v6106 = vpop.f32.mrb[0].mxu0
        %6107 = vmatprep.mubr.f32.mxu0 0.0
        %6108 = vmatmul.mubr.f32.gmra.mrb[0].mxu0 %v6018
        %v6109 = vpop.f32.mrb[0].mxu0
        %v6110 = vadd.f32 %v6013, %v6109
        %v6111 = vpop.f32.mrb[0].mxu0
        %6112 = vmatprep.mubr.f32.mxu0 0.0
        %6113 = vmatmul.mubr.f32.gmra.mrb[0].mxu0 %v6021
        %v6114 = vpop.f32.mrb[0].mxu0
        %v6115 = vadd.f32 %v6013, %v6114
        %v6116 = vpop.f32.mrb[0].mxu0
        %6117 = vmatprep.mubr.f32.mxu0 0.0
        %6118 = vmatmul.mubr.f32.gmra.mrb[0].mxu0 %v6024
        %v6119 = vpop.f32.mrb[0].mxu0
        %v6120 = vadd.f32 %v6013, %v6119
        %v6121 = vpop.f32.mrb[0].mxu0
        %6122 = vmatprep.mubr.f32.mxu0 0.0
        %6123 = vmatmul.mubr.f32.gmra.mrb[0].mxu0 %v6027
        %v6124 = vpop.f32.mrb[0].mxu0
        %v6125 = vadd.f32 %v6013, %v6124
        %v6126 = vpop.f32.mrb[0].mxu0
        %6127 = vmatprep.mubr.f32.mxu0 0.0
        %6128 = vmatmul.mubr.f32.gmra.mrb[0].mxu0 %v6030
        %v6129 = vpop.f32.mrb[0].mxu0
        %v6130 = vadd.f32 %v6013, %v6129
        %v6131 = vpop.f32.mrb[0].mxu0
        %6132 = vmatprep.mubr.f32.mxu0 0.0
        %6133 = vmatmul.mubr.f32.gmra.mrb[0].mxu0 %v6033
        %v6134 = vpop.f32.mrb[0].mxu0
        %v6135 = vadd.f32 %v6013, %v6134
        %v6136 = vpop.f32.mrb[0].mxu0
        %6137 = vmatprep.mubr.f32.mxu0 0.0
        %6138 = vmatmul.mubr.f32.gmra.mrb[0].mxu0 %v6036
        %v6139 = vpop.f32.mrb[0].mxu0
        %v6140 = vadd.f32 %v6013, %v6139
        %v6141 = vpop.f32.mrb[0].mxu0
        %6142 = vdwg.mxu0
        %6143 = vst.msk [vmem:[%s339] sm:$0xff] %vm753, %v6105
        %6144 = vst.msk [vmem:[%s339 + $0x8] sm:$0xff] %vm753, %v6110
        %6145 = vst.msk [vmem:[%s339 + $0x10] sm:$0xff] %vm753, %v6115
        %6146 = vst.msk [vmem:[%s339 + $0x18] sm:$0xff] %vm753, %v6120
        %6147 = vst.msk [vmem:[%s339 + $0x20] sm:$0xff] %vm753, %v6125
        %6148 = vst.msk [vmem:[%s339 + $0x28] sm:$0xff] %vm753, %v6130
        %6149 = vst.msk [vmem:[%s339 + $0x30] sm:$0xff] %vm753, %v6135
        %6150 = vst.msk [vmem:[%s339 + $0x38] sm:$0xff] %vm753, %v6140
        %s6151 = sld [smem:[#allocation6 + $0x1]]
        %v6152 = vstv %s6151
        %6153 = vmatprep.subr.mxu0 0.0
        %6154 = vmatpush1.msra.mxu0 %v5986
        %6155 = vmatprep.subr.mxu0 0.0
        %6156 = vmatpush1.msra.mxu0 %v5991
        %6157 = vmatprep.subr.mxu0 0.0
        %6158 = vmatpush1.msra.mxu0 0.0
        %6159 = vmatprep.subr.mxu0 0.0
        %6160 = vmatpush1.msra.mxu0 0.0
        %6161 = vmatprep.subr.mxu0 0.0
        %6162 = vmatpush1.msra.mxu0 0.0
        %6163 = vmatprep.subr.mxu0 0.0
        %6164 = vmatpush1.msra.mxu0 0.0
        %6165 = vmatprep.subr.mxu0 0.0
        %6166 = vmatpush1.msra.mxu0 0.0
        %6167 = vmatprep.subr.mxu0 0.0
        %6168 = vmatpush1.msra.mxu0 0.0
        %6169 = vmatprep.subr.mxu0 0.0
        %6170 = vmatpush1.msra.mxu0 0.0
        %6171 = vmatprep.subr.mxu0 0.0
        %6172 = vmatpush1.msra.mxu0 0.0
        %6173 = vmatprep.subr.mxu0 0.0
        %6174 = vmatpush1.msra.mxu0 0.0
        %6175 = vmatprep.subr.mxu0 0.0
        %6176 = vmatpush1.msra.mxu0 0.0
        %6177 = vmatprep.subr.mxu0 0.0
        %6178 = vmatpush1.msra.mxu0 0.0
        %6179 = vmatprep.subr.mxu0 0.0
        %6180 = vmatpush1.msra.mxu0 0.0
        %6181 = vmatprep.subr.mxu0 0.0
        %6182 = vmatpush1.msra.mxu0 0.0
        %6183 = vmatprep.subr.mxu0 0.0
        %6184 = vmatpush1.msra.mxu0 0.0
        %6185 = vmatprep.subr.mxu0 0.0
        %6186 = vmatpush1.msra.mxu0 0.0
        %6187 = vmatprep.subr.mxu0 0.0
        %6188 = vmatpush1.msra.mxu0 0.0
        %6189 = vmatprep.subr.mxu0 0.0
        %6190 = vmatpush1.msra.mxu0 0.0
        %6191 = vmatprep.subr.mxu0 0.0
        %6192 = vmatpush1.msra.mxu0 0.0
        %6193 = vmatprep.subr.mxu0 0.0
        %6194 = vmatpush1.msra.mxu0 0.0
        %6195 = vmatprep.subr.mxu0 0.0
        %6196 = vmatpush1.msra.mxu0 0.0
        %6197 = vmatprep.subr.mxu0 0.0
        %6198 = vmatpush1.msra.mxu0 0.0
        %6199 = vmatprep.subr.mxu0 0.0
        %6200 = vmatpush1.msra.mxu0 0.0
        %6201 = vmatprep.subr.mxu0 0.0
        %6202 = vmatpush1.msra.mxu0 0.0
        %6203 = vmatprep.subr.mxu0 0.0
        %6204 = vmatpush1.msra.mxu0 0.0
        %6205 = vmatprep.subr.mxu0 0.0
        %6206 = vmatpush1.msra.mxu0 0.0
        %6207 = vmatprep.subr.mxu0 0.0
        %6208 = vmatpush1.msra.mxu0 0.0
        %6209 = vmatprep.subr.mxu0 0.0
        %6210 = vmatpush1.msra.mxu0 0.0
        %6211 = vmatprep.subr.mxu0 0.0
        %6212 = vmatpush1.msra.mxu0 0.0
        %6213 = vmatprep.subr.mxu0 0.0
        %6214 = vmatpush1.msra.mxu0 0.0
        %6215 = vmatprep.subr.mxu0 0.0
        %6216 = vmatpush1.msra.mxu0 0.0
        %6217 = vmatprep.mubr.f32.mxu0 0.0
        %6218 = vmatmul.mubr.f32.gmra.mrb[0].mxu0 %v6015
        %v6219 = vpop.f32.mrb[0].mxu0
        %v6220 = vadd.f32 %v6152, %v6219
        %v6221 = vpop.f32.mrb[0].mxu0
        %6222 = vmatprep.mubr.f32.mxu0 0.0
        %6223 = vmatmul.mubr.f32.gmra.mrb[0].mxu0 %v6018
        %v6224 = vpop.f32.mrb[0].mxu0
        %v6225 = vadd.f32 %v6152, %v6224
        %v6226 = vpop.f32.mrb[0].mxu0
        %6227 = vmatprep.mubr.f32.mxu0 0.0
        %6228 = vmatmul.mubr.f32.gmra.mrb[0].mxu0 %v6021
        %v6229 = vpop.f32.mrb[0].mxu0
        %v6230 = vadd.f32 %v6152, %v6229
        %v6231 = vpop.f32.mrb[0].mxu0
        %6232 = vmatprep.mubr.f32.mxu0 0.0
        %6233 = vmatmul.mubr.f32.gmra.mrb[0].mxu0 %v6024
        %v6234 = vpop.f32.mrb[0].mxu0
        %v6235 = vadd.f32 %v6152, %v6234
        %v6236 = vpop.f32.mrb[0].mxu0
        %6237 = vmatprep.mubr.f32.mxu0 0.0
        %6238 = vmatmul.mubr.f32.gmra.mrb[0].mxu0 %v6027
        %v6239 = vpop.f32.mrb[0].mxu0
        %v6240 = vadd.f32 %v6152, %v6239
        %v6241 = vpop.f32.mrb[0].mxu0
        %6242 = vmatprep.mubr.f32.mxu0 0.0
        %6243 = vmatmul.mubr.f32.gmra.mrb[0].mxu0 %v6030
        %v6244 = vpop.f32.mrb[0].mxu0
        %v6245 = vadd.f32 %v6152, %v6244
        %v6246 = vpop.f32.mrb[0].mxu0
        %6247 = vmatprep.mubr.f32.mxu0 0.0
        %6248 = vmatmul.mubr.f32.gmra.mrb[0].mxu0 %v6033
        %v6249 = vpop.f32.mrb[0].mxu0
        %v6250 = vadd.f32 %v6152, %v6249
        %v6251 = vpop.f32.mrb[0].mxu0
        %6252 = vmatprep.mubr.f32.mxu0 0.0
        %6253 = vmatmul.mubr.f32.gmra.mrb[0].mxu0 %v6036
        %v6254 = vpop.f32.mrb[0].mxu0
        %v6255 = vadd.f32 %v6152, %v6254
        %v6256 = vpop.f32.mrb[0].mxu0
        %6257 = vdwg.mxu0
        %s6258 = scalar_lea.vmem %s339, 64 [#allocation9]
        %6259 = vst.msk [vmem:[%s6258] sm:$0xff] %vm753, %v6220
        %6260 = vst.msk [vmem:[%s6258 + $0x8] sm:$0xff] %vm753, %v6225
        %6261 = vst.msk [vmem:[%s6258 + $0x10] sm:$0xff] %vm753, %v6230
        %6262 = vst.msk [vmem:[%s6258 + $0x18] sm:$0xff] %vm753, %v6235
        %6263 = vst.msk [vmem:[%s6258 + $0x20] sm:$0xff] %vm753, %v6240
        %6264 = vst.msk [vmem:[%s6258 + $0x28] sm:$0xff] %vm753, %v6245
        %6265 = vst.msk [vmem:[%s6258 + $0x30] sm:$0xff] %vm753, %v6250
        %6266 = vst.msk [vmem:[%s6258 + $0x38] sm:$0xff] %vm753, %v6255
        %s6267 = sld [smem:[#allocation6 + $0x2]]
        %v6268 = vstv %s6267
        %6269 = vmatprep.subr.mxu0 0.0
        %6270 = vmatpush1.msra.mxu0 %v5996
        %6271 = vmatprep.subr.mxu0 0.0
        %6272 = vmatpush1.msra.mxu0 %v6001
        %6273 = vmatprep.subr.mxu0 0.0
        %6274 = vmatpush1.msra.mxu0 0.0
        %6275 = vmatprep.subr.mxu0 0.0
        %6276 = vmatpush1.msra.mxu0 0.0
        %6277 = vmatprep.subr.mxu0 0.0
        %6278 = vmatpush1.msra.mxu0 0.0
        %6279 = vmatprep.subr.mxu0 0.0
        %6280 = vmatpush1.msra.mxu0 0.0
        %6281 = vmatprep.subr.mxu0 0.0
        %6282 = vmatpush1.msra.mxu0 0.0
        %6283 = vmatprep.subr.mxu0 0.0
        %6284 = vmatpush1.msra.mxu0 0.0
        %6285 = vmatprep.subr.mxu0 0.0
        %6286 = vmatpush1.msra.mxu0 0.0
        %6287 = vmatprep.subr.mxu0 0.0
        %6288 = vmatpush1.msra.mxu0 0.0
        %6289 = vmatprep.subr.mxu0 0.0
        %6290 = vmatpush1.msra.mxu0 0.0
        %6291 = vmatprep.subr.mxu0 0.0
        %6292 = vmatpush1.msra.mxu0 0.0
        %6293 = vmatprep.subr.mxu0 0.0
        %6294 = vmatpush1.msra.mxu0 0.0
        %6295 = vmatprep.subr.mxu0 0.0
        %6296 = vmatpush1.msra.mxu0 0.0
        %6297 = vmatprep.subr.mxu0 0.0
        %6298 = vmatpush1.msra.mxu0 0.0
        %6299 = vmatprep.subr.mxu0 0.0
        %6300 = vmatpush1.msra.mxu0 0.0
        %6301 = vmatprep.subr.mxu0 0.0
        %6302 = vmatpush1.msra.mxu0 0.0
        %6303 = vmatprep.subr.mxu0 0.0
        %6304 = vmatpush1.msra.mxu0 0.0
        %6305 = vmatprep.subr.mxu0 0.0
        %6306 = vmatpush1.msra.mxu0 0.0
        %6307 = vmatprep.subr.mxu0 0.0
        %6308 = vmatpush1.msra.mxu0 0.0
        %6309 = vmatprep.subr.mxu0 0.0
        %6310 = vmatpush1.msra.mxu0 0.0
        %6311 = vmatprep.subr.mxu0 0.0
        %6312 = vmatpush1.msra.mxu0 0.0
        %6313 = vmatprep.subr.mxu0 0.0
        %6314 = vmatpush1.msra.mxu0 0.0
        %6315 = vmatprep.subr.mxu0 0.0
        %6316 = vmatpush1.msra.mxu0 0.0
        %6317 = vmatprep.subr.mxu0 0.0
        %6318 = vmatpush1.msra.mxu0 0.0
        %6319 = vmatprep.subr.mxu0 0.0
        %6320 = vmatpush1.msra.mxu0 0.0
        %6321 = vmatprep.subr.mxu0 0.0
        %6322 = vmatpush1.msra.mxu0 0.0
        %6323 = vmatprep.subr.mxu0 0.0
        %6324 = vmatpush1.msra.mxu0 0.0
        %6325 = vmatprep.subr.mxu0 0.0
        %6326 = vmatpush1.msra.mxu0 0.0
        %6327 = vmatprep.subr.mxu0 0.0
        %6328 = vmatpush1.msra.mxu0 0.0
        %6329 = vmatprep.subr.mxu0 0.0
        %6330 = vmatpush1.msra.mxu0 0.0
        %6331 = vmatprep.subr.mxu0 0.0
        %6332 = vmatpush1.msra.mxu0 0.0
        %6333 = vmatprep.mubr.f32.mxu0 0.0
        %6334 = vmatmul.mubr.f32.gmra.mrb[0].mxu0 %v6015
        %v6335 = vpop.f32.mrb[0].mxu0
        %v6336 = vadd.f32 %v6268, %v6335
        %v6337 = vpop.f32.mrb[0].mxu0
        %6338 = vmatprep.mubr.f32.mxu0 0.0
        %6339 = vmatmul.mubr.f32.gmra.mrb[0].mxu0 %v6018
        %v6340 = vpop.f32.mrb[0].mxu0
        %v6341 = vadd.f32 %v6268, %v6340
        %v6342 = vpop.f32.mrb[0].mxu0
        %6343 = vmatprep.mubr.f32.mxu0 0.0
        %6344 = vmatmul.mubr.f32.gmra.mrb[0].mxu0 %v6021
        %v6345 = vpop.f32.mrb[0].mxu0
        %v6346 = vadd.f32 %v6268, %v6345
        %v6347 = vpop.f32.mrb[0].mxu0
        %6348 = vmatprep.mubr.f32.mxu0 0.0
        %6349 = vmatmul.mubr.f32.gmra.mrb[0].mxu0 %v6024
        %v6350 = vpop.f32.mrb[0].mxu0
        %v6351 = vadd.f32 %v6268, %v6350
        %v6352 = vpop.f32.mrb[0].mxu0
        %6353 = vmatprep.mubr.f32.mxu0 0.0
        %6354 = vmatmul.mubr.f32.gmra.mrb[0].mxu0 %v6027
        %v6355 = vpop.f32.mrb[0].mxu0
        %v6356 = vadd.f32 %v6268, %v6355
        %v6357 = vpop.f32.mrb[0].mxu0
        %6358 = vmatprep.mubr.f32.mxu0 0.0
        %6359 = vmatmul.mubr.f32.gmra.mrb[0].mxu0 %v6030
        %v6360 = vpop.f32.mrb[0].mxu0
        %v6361 = vadd.f32 %v6268, %v6360
        %v6362 = vpop.f32.mrb[0].mxu0
        %6363 = vmatprep.mubr.f32.mxu0 0.0
        %6364 = vmatmul.mubr.f32.gmra.mrb[0].mxu0 %v6033
        %v6365 = vpop.f32.mrb[0].mxu0
        %v6366 = vadd.f32 %v6268, %v6365
        %v6367 = vpop.f32.mrb[0].mxu0
        %6368 = vmatprep.mubr.f32.mxu0 0.0
        %6369 = vmatmul.mubr.f32.gmra.mrb[0].mxu0 %v6036
        %v6370 = vpop.f32.mrb[0].mxu0
        %v6371 = vadd.f32 %v6268, %v6370
        %v6372 = vpop.f32.mrb[0].mxu0
        %6373 = vdwg.mxu0
        %s6374 = scalar_lea.vmem %s339, 128 [#allocation9]
        %6375 = vst.msk [vmem:[%s6374] sm:$0xff] %vm753, %v6336
        %6376 = vst.msk [vmem:[%s6374 + $0x8] sm:$0xff] %vm753, %v6341
        %6377 = vst.msk [vmem:[%s6374 + $0x10] sm:$0xff] %vm753, %v6346
        %6378 = vst.msk [vmem:[%s6374 + $0x18] sm:$0xff] %vm753, %v6351
        %6379 = vst.msk [vmem:[%s6374 + $0x20] sm:$0xff] %vm753, %v6356
        %6380 = vst.msk [vmem:[%s6374 + $0x28] sm:$0xff] %vm753, %v6361
        %6381 = vst.msk [vmem:[%s6374 + $0x30] sm:$0xff] %vm753, %v6366
        %6382 = vst.msk [vmem:[%s6374 + $0x38] sm:$0xff] %vm753, %v6371
        %s6383 = sand.u32 %s226, 1
        %s6384 = scalar_lea.sflag [#allocation7], %s6383
        %s6385 = sand.u32 %s226, 1
        %s6386 = smul.addr %s6385, 192
        %s6387 = scalar_lea.vmem [#allocation9], %s6386
        // Predicated region
        $region61: #{super_resolution_forward.1} parent=55 // pred_check
          %p6388 = pneg %p236
        $region62: #{super_resolution_forward.1} parent=55 // pred_check_branch
          %6390 = sbr.rel (%p6388) target = $region64
        $region63: #{super_resolution_forward.1} parent=55 // pred_region
          %s6392 = ssub.s32 3072, 3072
          %6393 = vsyncadd %s6384, %s6392
          %s6394 = smul.addr %s24, 24
          %s6395 = smul.addr %s6394, 128
          %s6396 = scalar_lea.hbm %s9, %s6395
          %s6397 = sshll.u32 %s6387, 4
          %s6398 = int_to_ptr.vmem [resolvable:$true] %s6397
          %6403 = dma.vmem_to_hbm [thread:$0]  %s6398, 3072, %s6396, %s6384, 128, 128, 8
        $region64: #{super_resolution_forward.1} parent=55 // pred_fallthru
          _
      $region56: #{super_resolution_forward.1} parent=5 // pred_fallthru
        _
      %p6404 = scmp.le.s32.totalorder 2, %s19
      // Predicated region
      $region65: #{super_resolution_forward.1} parent=5 // pred_check
        %p6405 = pneg %p6404
      $region66: #{super_resolution_forward.1} parent=5 // pred_check_branch
        %6407 = sbr.rel (%p6405) target = $region68
      $region67: #{super_resolution_forward.1} parent=5 // pred_region
        %s6408 = ssub.s32 %s19, 2
        // Predicated region
        $region69: #{super_resolution_forward.1} parent=67 // pred_check
          %p6409 = pneg %p242
        $region70: #{super_resolution_forward.1} parent=67 // pred_check_branch
          %6411 = sbr.rel (%p6409) target = $region72
        $region71: #{super_resolution_forward.1} parent=67 // pred_region
          %s6412 = sand.u32 %s227, 1
          %s6413 = scalar_lea.sflag [#allocation7], %s6412
          %s6414 = sand.u32 %s227, 1
          %s6415 = smul.addr %s6414, 192
          %s6416 = scalar_lea.vmem [#allocation9], %s6415
          %6417 = dma.done %s6413, 3072
        $region72: #{super_resolution_forward.1} parent=67 // pred_fallthru
          _
      $region68: #{super_resolution_forward.1} parent=5 // pred_fallthru
        _
    $region6: #{super_resolution_forward.1} parent=1 // loop_footer
      %s23 = sadd.s32 1, %s19
    $region7: #{super_resolution_forward.1} parent=1 // loop_footer_branch
      %18 = sbr.rel target = $region3
    $region8: #{super_resolution_forward.1} parent=1 // loop_exit
      _
    %6418 = vsyncpa [#allocation7], 1
    %s6419 = scalar_lea.sflag [#allocation7], 1
    %6420 = vsyncpa %s6419, 1
    %6421 = vsyncpa [#allocation8], 1
    %s6422 = scalar_lea.sflag [#allocation8], 1
    %6423 = vsyncpa %s6422, 1

</llo_original>
